<compile_context>
chip_gen: v5e
topology: v5e:2x2
jax: 0.10.0
libtpu: 0.0.40
codegen_flags: <defaults>
</compile_context>

<pallas_src>
import functools

import jax
import jax.numpy as jnp
from jax.experimental import pallas as pl
from jax.experimental.pallas import tpu as pltpu

VOCAB = 5000
D = 768
N_LAYERS = 12
N_CLASSES = 2
LAYERS_PER_STEP = 4  # 12 layers -> 3 grid steps


def _model_kernel(x_ref, w_ref, b_ref, cw_ref, cb_ref, out_ref, h_ref, *, B, S):
    """Grid axis = layer-group index (sequential / 'arbitrary').

    x_ref:   (N, D)               f32   flattened embeddings (same block every step)
    w_ref:   (LAYERS_PER_STEP, D, D) bf16  weights of the current layer group
    b_ref:   (1, LAYERS_PER_STEP, D) f32   biases of the current layer group
    cw_ref:  (D, 2)               f32   classifier weight (pre-transposed)
    cb_ref:  (1, 2)               f32   classifier bias
    out_ref: (B, 2)               f32   logits (written on the last grid step)
    h_ref:   (N, D)               f32 VMEM resident activation accumulator
    """
    g = pl.program_id(0)

    @pl.when(g == 0)
    def _():
        h_ref[...] = x_ref[...]

    # LAYERS_PER_STEP fused layers: y = x @ W + b (bf16 MXU, f32 accumulate).
    for k in range(LAYERS_PER_STEP):
        bias = b_ref[0, pl.ds(k, 1), :]                      # (1, D) f32
        h_ref[...] = (
            jnp.dot(h_ref[...].astype(jnp.bfloat16), w_ref[k],
                    preferred_element_type=jnp.float32)
            + bias
        )

    @pl.when(g == pl.num_programs(0) - 1)
    def _():
        # mean over seq: (B*S, D) -> (B, S, D) -> (B, D); S=8 split is
        # aligned with the (8,128) sublane tile, so the reshape is free.
        pooled = jnp.mean(h_ref[...].reshape(B, S, D), axis=1)
        out_ref[...] = (
            jnp.dot(pooled, cw_ref[...], preferred_element_type=jnp.float32)
            + cb_ref[...]
        )


def simple_model_forward(ipt, emb_table, w_stack_bf16, b_stack, clf_w, clf_b):
    """ipt: (B, S) int32 token ids. Returns (B, 2) float32 logits."""
    B, S = ipt.shape
    N = B * S  # multiple of 8 so the (N, D) activation slab is tile-aligned
    assert N_LAYERS % LAYERS_PER_STEP == 0
    n_groups = N_LAYERS // LAYERS_PER_STEP

    # Glue: embedding gather + flatten (B, S, D) -> (N, D)
    # TODO(synk): embedding gather stays in plain JAX; a data-dependent row
    # gather inside the kernel would need manual DMA and is not worth it here.
    x = jnp.take(emb_table, ipt.reshape(-1), axis=0).astype(jnp.float32)

    # Group biases so each grid step gets a fully static (1, LPS, D) block.
    b_groups = b_stack.reshape(n_groups, LAYERS_PER_STEP, D)

    kernel = functools.partial(_model_kernel, B=B, S=S)
    out = pl.pallas_call(
        kernel,
        out_shape=jax.ShapeDtypeStruct((B, N_CLASSES), jnp.float32),
        grid_spec=pltpu.PrefetchScalarGridSpec(
            num_scalar_prefetch=0,
            grid=(n_groups,),
            in_specs=[
                pl.BlockSpec((N, D), lambda g: (0, 0)),                        # x
                pl.BlockSpec((LAYERS_PER_STEP, D, D), lambda g: (g, 0, 0)),    # W group (bf16)
                pl.BlockSpec((1, LAYERS_PER_STEP, D), lambda g: (g, 0, 0)),    # bias group
                pl.BlockSpec((D, N_CLASSES), lambda g: (0, 0)),                # clf W
                pl.BlockSpec((1, N_CLASSES), lambda g: (0, 0)),                # clf b
            ],
            out_specs=pl.BlockSpec((B, N_CLASSES), lambda g: (0, 0)),
            scratch_shapes=[pltpu.VMEM((N, D), jnp.float32)],
        ),
        compiler_params=pltpu.CompilerParams(
            dimension_semantics=("arbitrary",),
            vmem_limit_bytes=32 * 1024 * 1024,
        ),
    )(x, w_stack_bf16, b_groups, clf_w, clf_b)
    return out


def _init_params(key):
    """Deterministic synthetic parameters matching the nn.Module shapes."""
    k = jax.random.split(key, 5)
    emb_table = jax.random.normal(k[0], (VOCAB, D), jnp.float32) * 0.02
    # PyTorch Linear: y = x @ W.T + b with W (out,in). We store pre-transposed (in,out).
    w_stack = jax.random.normal(k[1], (N_LAYERS, D, D), jnp.float32) * (1.0 / jnp.sqrt(D))
    b_stack = jax.random.normal(k[2], (N_LAYERS, D), jnp.float32) * 0.01
    clf_w = jax.random.normal(k[3], (D, N_CLASSES), jnp.float32) * (1.0 / jnp.sqrt(D))
    clf_b = jax.random.normal(k[4], (1, N_CLASSES), jnp.float32) * 0.01
    return emb_table, w_stack, b_stack, clf_w, clf_b


if __name__ == "__main__":
    key = jax.random.PRNGKey(0)
    pkey, ikey = jax.random.split(key)

    emb_table, w_stack, b_stack, clf_w, clf_b = _init_params(pkey)
    # Stream the 12 layer weights as bf16 (halves the dominant HBM traffic);
    # all matmuls still accumulate in f32 inside the kernel.
    w_stack_bf16 = w_stack.astype(jnp.bfloat16)

    B, S = 2, 8  # B*S = 16 -> multiple of 8; D = 768 -> multiple of 128
    ipt = jax.random.randint(ikey, (B, S), 0, VOCAB, dtype=jnp.int32)

    logits = simple_model_forward(ipt, emb_table, w_stack_bf16, b_stack, clf_w, clf_b)
    logits = jax.block_until_ready(logits)

    # Pure-JAX reference replicating the kernel numerics
    # (bf16 weights, f32 activations/accumulation).
    x_ref = jnp.take(emb_table, ipt.reshape(-1), axis=0).astype(jnp.float32)
    h = x_ref
    for l in range(N_LAYERS):
        h = jnp.dot(h.astype(jnp.bfloat16), w_stack_bf16[l],
                    preferred_element_type=jnp.float32) + b_stack[l]
    pooled = jnp.mean(h.reshape(B, S, D), axis=1)
    ref = jnp.dot(pooled, clf_w, preferred_element_type=jnp.float32) + clf_b

    assert logits.shape == (B, N_CLASSES)
    assert jnp.allclose(logits, ref, rtol=2e-3, atol=2e-3), (logits, ref)

    print("KERNEL_OK")
</pallas_src>

<mosaic_0001>
module attributes {stable_mosaic.version = 11 : i64} {
  func.func @_model_kernel(%arg0: i32, %arg1: memref<16x768xf32, #tpu.memory_space<vmem>>, %arg2: memref<4x768x768xbf16, #tpu.memory_space<vmem>>, %arg3: memref<1x4x768xf32, #tpu.memory_space<vmem>>, %arg4: memref<768x2xf32, #tpu.memory_space<vmem>>, %arg5: memref<1x2xf32, #tpu.memory_space<vmem>>, %arg6: memref<2x2xf32, #tpu.memory_space<vmem>>, %arg7: memref<16x768xf32, #tpu.memory_space<vmem>>) attributes {dimension_semantics = [#tpu.dimension_semantics<arbitrary>], iteration_bounds = array<i64: 3>, scalar_prefetch = 0 : i64, scratch_operands = 1 : i64, tpu.core_type = #tpu.core_type<tc>, window_params = [{pipeline_mode = #tpu.pipeline_mode<synchronous>, transform_indices = @transform_0, window_bounds = array<i64: 16, 768>}, {transform_indices = @transform_1, window_bounds = array<i64: 4, 768, 768>}, {transform_indices = @transform_2, window_bounds = array<i64: 1, 4, 768>}, {pipeline_mode = #tpu.pipeline_mode<synchronous>, transform_indices = @transform_3, window_bounds = array<i64: 768, 2>}, {pipeline_mode = #tpu.pipeline_mode<synchronous>, transform_indices = @transform_4, window_bounds = array<i64: 1, 2>}, {pipeline_mode = #tpu.pipeline_mode<synchronous>, transform_indices = @transform_5, window_bounds = array<i64: 2, 2>}]} {
    %c0_i32 = arith.constant 0 : i32
    %0 = arith.cmpi eq, %arg0, %c0_i32 : i32
    %1 = arith.extui %0 : i1 to i32
    %c0_i32_0 = arith.constant 0 : i32
    %2 = arith.cmpi ne, %1, %c0_i32_0 : i32
    scf.if %2 {
      %c0_41 = arith.constant 0 : index
      %c0_42 = arith.constant 0 : index
      %46 = vector.load %arg1[%c0_41, %c0_42] : memref<16x768xf32, #tpu.memory_space<vmem>>, vector<16x768xf32>
      %c0_43 = arith.constant 0 : index
      %c0_44 = arith.constant 0 : index
      %47 = vector.load %arg7[%c0_43, %c0_44] : memref<16x768xf32, #tpu.memory_space<vmem>>, vector<16x768xf32>
      tpu.vector_store %arg7[%c0_43, %c0_44], %46 {strides = array<i32>} : memref<16x768xf32, #tpu.memory_space<vmem>>, vector<16x768xf32>,
    } else {
    }
    %c0 = arith.constant 0 : index
    %c0_1 = arith.constant 0 : index
    %c0_2 = arith.constant 0 : index
    %3 = vector.load %arg3[%c0, %c0_1, %c0_2] : memref<1x4x768xf32, #tpu.memory_space<vmem>>, vector<1x1x768xf32>
    %4 = vector.shape_cast %3 : vector<1x1x768xf32> to vector<1x768xf32>
    %c0_3 = arith.constant 0 : index
    %c0_4 = arith.constant 0 : index
    %5 = vector.load %arg7[%c0_3, %c0_4] : memref<16x768xf32, #tpu.memory_space<vmem>>, vector<16x768xf32>
    %6 = arith.truncf %5 : vector<16x768xf32> to vector<16x768xbf16>
    %c0_5 = arith.constant 0 : index
    %c0_6 = arith.constant 0 : index
    %c0_7 = arith.constant 0 : index
    %7 = vector.load %arg2[%c0_5, %c0_6, %c0_7] : memref<4x768x768xbf16, #tpu.memory_space<vmem>>, vector<1x768x768xbf16>
    %8 = vector.shape_cast %7 : vector<1x768x768xbf16> to vector<768x768xbf16>
    %cst = arith.constant dense<0.000000e+00> : vector<16x768xf32>
    %9 = tpu.matmul %6, %8, %cst {dimension_numbers = #tpu.dot_dimension_numbers<[1], [0], [0], [1], [0, 0, 1, 1], [], []>} : vector<16x768xbf16>, vector<768x768xbf16>, vector<16x768xf32> -> vector<16x768xf32>
    %10 = vector.broadcast %4 : vector<1x768xf32> to vector<16x768xf32>
    %11 = arith.addf %9, %10 : vector<16x768xf32>
    %c0_8 = arith.constant 0 : index
    %c0_9 = arith.constant 0 : index
    %12 = vector.load %arg7[%c0_8, %c0_9] : memref<16x768xf32, #tpu.memory_space<vmem>>, vector<16x768xf32>
    tpu.vector_store %arg7[%c0_8, %c0_9], %11 {strides = array<i32>} : memref<16x768xf32, #tpu.memory_space<vmem>>, vector<16x768xf32>,
    %c0_10 = arith.constant 0 : index
    %c1 = arith.constant 1 : index
    %c0_11 = arith.constant 0 : index
    %13 = vector.load %arg3[%c0_10, %c1, %c0_11] : memref<1x4x768xf32, #tpu.memory_space<vmem>>, vector<1x1x768xf32>
    %14 = vector.shape_cast %13 : vector<1x1x768xf32> to vector<1x768xf32>
    %c0_12 = arith.constant 0 : index
    %c0_13 = arith.constant 0 : index
    %15 = vector.load %arg7[%c0_12, %c0_13] : memref<16x768xf32, #tpu.memory_space<vmem>>, vector<16x768xf32>
    %16 = arith.truncf %15 : vector<16x768xf32> to vector<16x768xbf16>
    %c1_14 = arith.constant 1 : index
    %c0_15 = arith.constant 0 : index
    %c0_16 = arith.constant 0 : index
    %17 = vector.load %arg2[%c1_14, %c0_15, %c0_16] : memref<4x768x768xbf16, #tpu.memory_space<vmem>>, vector<1x768x768xbf16>
    %18 = vector.shape_cast %17 : vector<1x768x768xbf16> to vector<768x768xbf16>
    %cst_17 = arith.constant dense<0.000000e+00> : vector<16x768xf32>
    %19 = tpu.matmul %16, %18, %cst_17 {dimension_numbers = #tpu.dot_dimension_numbers<[1], [0], [0], [1], [0, 0, 1, 1], [], []>} : vector<16x768xbf16>, vector<768x768xbf16>, vector<16x768xf32> -> vector<16x768xf32>
    %20 = vector.broadcast %14 : vector<1x768xf32> to vector<16x768xf32>
    %21 = arith.addf %19, %20 : vector<16x768xf32>
    %c0_18 = arith.constant 0 : index
    %c0_19 = arith.constant 0 : index
    %22 = vector.load %arg7[%c0_18, %c0_19] : memref<16x768xf32, #tpu.memory_space<vmem>>, vector<16x768xf32>
    tpu.vector_store %arg7[%c0_18, %c0_19], %21 {strides = array<i32>} : memref<16x768xf32, #tpu.memory_space<vmem>>, vector<16x768xf32>,
    %c0_20 = arith.constant 0 : index
    %c2 = arith.constant 2 : index
    %c0_21 = arith.constant 0 : index
    %23 = vector.load %arg3[%c0_20, %c2, %c0_21] : memref<1x4x768xf32, #tpu.memory_space<vmem>>, vector<1x1x768xf32>
    %24 = vector.shape_cast %23 : vector<1x1x768xf32> to vector<1x768xf32>
    %c0_22 = arith.constant 0 : index
    %c0_23 = arith.constant 0 : index
    %25 = vector.load %arg7[%c0_22, %c0_23] : memref<16x768xf32, #tpu.memory_space<vmem>>, vector<16x768xf32>
    %26 = arith.truncf %25 : vector<16x768xf32> to vector<16x768xbf16>
    %c2_24 = arith.constant 2 : index
    %c0_25 = arith.constant 0 : index
    %c0_26 = arith.constant 0 : index
    %27 = vector.load %arg2[%c2_24, %c0_25, %c0_26] : memref<4x768x768xbf16, #tpu.memory_space<vmem>>, vector<1x768x768xbf16>
    %28 = vector.shape_cast %27 : vector<1x768x768xbf16> to vector<768x768xbf16>
    %cst_27 = arith.constant dense<0.000000e+00> : vector<16x768xf32>
    %29 = tpu.matmul %26, %28, %cst_27 {dimension_numbers = #tpu.dot_dimension_numbers<[1], [0], [0], [1], [0, 0, 1, 1], [], []>} : vector<16x768xbf16>, vector<768x768xbf16>, vector<16x768xf32> -> vector<16x768xf32>
    %30 = vector.broadcast %24 : vector<1x768xf32> to vector<16x768xf32>
    %31 = arith.addf %29, %30 : vector<16x768xf32>
    %c0_28 = arith.constant 0 : index
    %c0_29 = arith.constant 0 : index
    %32 = vector.load %arg7[%c0_28, %c0_29] : memref<16x768xf32, #tpu.memory_space<vmem>>, vector<16x768xf32>
    tpu.vector_store %arg7[%c0_28, %c0_29], %31 {strides = array<i32>} : memref<16x768xf32, #tpu.memory_space<vmem>>, vector<16x768xf32>,
    %c0_30 = arith.constant 0 : index
    %c3 = arith.constant 3 : index
    %c0_31 = arith.constant 0 : index
    %33 = vector.load %arg3[%c0_30, %c3, %c0_31] : memref<1x4x768xf32, #tpu.memory_space<vmem>>, vector<1x1x768xf32>
    %34 = vector.shape_cast %33 : vector<1x1x768xf32> to vector<1x768xf32>
    %c0_32 = arith.constant 0 : index
    %c0_33 = arith.constant 0 : index
    %35 = vector.load %arg7[%c0_32, %c0_33] : memref<16x768xf32, #tpu.memory_space<vmem>>, vector<16x768xf32>
    %36 = arith.truncf %35 : vector<16x768xf32> to vector<16x768xbf16>
    %c3_34 = arith.constant 3 : index
    %c0_35 = arith.constant 0 : index
    %c0_36 = arith.constant 0 : index
    %37 = vector.load %arg2[%c3_34, %c0_35, %c0_36] : memref<4x768x768xbf16, #tpu.memory_space<vmem>>, vector<1x768x768xbf16>
    %38 = vector.shape_cast %37 : vector<1x768x768xbf16> to vector<768x768xbf16>
    %cst_37 = arith.constant dense<0.000000e+00> : vector<16x768xf32>
    %39 = tpu.matmul %36, %38, %cst_37 {dimension_numbers = #tpu.dot_dimension_numbers<[1], [0], [0], [1], [0, 0, 1, 1], [], []>} : vector<16x768xbf16>, vector<768x768xbf16>, vector<16x768xf32> -> vector<16x768xf32>
    %40 = vector.broadcast %34 : vector<1x768xf32> to vector<16x768xf32>
    %41 = arith.addf %39, %40 : vector<16x768xf32>
    %c0_38 = arith.constant 0 : index
    %c0_39 = arith.constant 0 : index
    %42 = vector.load %arg7[%c0_38, %c0_39] : memref<16x768xf32, #tpu.memory_space<vmem>>, vector<16x768xf32>
    tpu.vector_store %arg7[%c0_38, %c0_39], %41 {strides = array<i32>} : memref<16x768xf32, #tpu.memory_space<vmem>>, vector<16x768xf32>,
    %c2_i32 = arith.constant 2 : i32
    %43 = arith.cmpi eq, %arg0, %c2_i32 : i32
    %44 = arith.extui %43 : i1 to i32
    %c0_i32_40 = arith.constant 0 : i32
    %45 = arith.cmpi ne, %44, %c0_i32_40 : i32
    scf.if %45 {
      %c0_41 = arith.constant 0 : index
      %c0_42 = arith.constant 0 : index
      %46 = vector.load %arg7[%c0_41, %c0_42] : memref<16x768xf32, #tpu.memory_space<vmem>>, vector<16x768xf32>
      %47 = vector.shape_cast %46 : vector<16x768xf32> to vector<2x8x768xf32>
      %cst_43 = arith.constant dense<0.000000e+00> : vector<2x768xf32>
      %48 = vector.multi_reduction <add>, %47, %cst_43 [1] : vector<2x8x768xf32> to vector<2x768xf32>
      %cst_44 = arith.constant 8.000000e+00 : f32
      %49 = vector.broadcast %cst_44 : f32 to vector<2x768xf32>
      %50 = arith.divf %48, %49 : vector<2x768xf32>
      %c0_45 = arith.constant 0 : index
      %c0_46 = arith.constant 0 : index
      %51 = vector.load %arg4[%c0_45, %c0_46] : memref<768x2xf32, #tpu.memory_space<vmem>>, vector<768x2xf32>
      %cst_47 = arith.constant dense<0.000000e+00> : vector<2x2xf32>
      %52 = tpu.matmul %50, %51, %cst_47 {dimension_numbers = #tpu.dot_dimension_numbers<[1], [0], [0], [1], [0, 0, 1, 1], [], []>} : vector<2x768xf32>, vector<768x2xf32>, vector<2x2xf32> -> vector<2x2xf32>
      %c0_48 = arith.constant 0 : index
      %c0_49 = arith.constant 0 : index
      %53 = vector.load %arg5[%c0_48, %c0_49] : memref<1x2xf32, #tpu.memory_space<vmem>>, vector<1x2xf32>
      %54 = vector.broadcast %53 : vector<1x2xf32> to vector<2x2xf32>
      %55 = arith.addf %52, %54 : vector<2x2xf32>
      %c0_50 = arith.constant 0 : index
      %c0_51 = arith.constant 0 : index
      %56 = vector.load %arg6[%c0_50, %c0_51] : memref<2x2xf32, #tpu.memory_space<vmem>>, vector<2x2xf32>
      tpu.vector_store %arg6[%c0_50, %c0_51], %55 {strides = array<i32>} : memref<2x2xf32, #tpu.memory_space<vmem>>, vector<2x2xf32>,
    } else {
    }
    return
  }
  func.func @transform_0(%arg0: i32) -> (i32, i32) {
    %c0_i32 = arith.constant 0 : i32
    %c0_i32_0 = arith.constant 0 : i32
    %c0_i32_1 = arith.constant 0 : i32
    return %c0_i32, %c0_i32_0 : i32, i32
  }
  func.func @transform_1(%arg0: i32) -> (i32, i32, i32) {
    %c0_i32 = arith.constant 0 : i32
    %c0_i32_0 = arith.constant 0 : i32
    %c0_i32_1 = arith.constant 0 : i32
    return %arg0, %c0_i32, %c0_i32_0 : i32, i32, i32
  }
  func.func @transform_2(%arg0: i32) -> (i32, i32, i32) {
    %c0_i32 = arith.constant 0 : i32
    %c0_i32_0 = arith.constant 0 : i32
    %c0_i32_1 = arith.constant 0 : i32
    return %arg0, %c0_i32, %c0_i32_0 : i32, i32, i32
  }
  func.func @transform_3(%arg0: i32) -> (i32, i32) {
    %c0_i32 = arith.constant 0 : i32
    %c0_i32_0 = arith.constant 0 : i32
    %c0_i32_1 = arith.constant 0 : i32
    return %c0_i32, %c0_i32_0 : i32, i32
  }
  func.func @transform_4(%arg0: i32) -> (i32, i32) {
    %c0_i32 = arith.constant 0 : i32
    %c0_i32_0 = arith.constant 0 : i32
    %c0_i32_1 = arith.constant 0 : i32
    return %c0_i32, %c0_i32_0 : i32, i32
  }
  func.func @transform_5(%arg0: i32) -> (i32, i32) {
    %c0_i32 = arith.constant 0 : i32
    %c0_i32_0 = arith.constant 0 : i32
    %c0_i32_1 = arith.constant 0 : i32
    return %c0_i32, %c0_i32_0 : i32, i32
  }
}

</mosaic_0001>

<llo_original>
// kernel: tpu_custom_call.1
$region0: #{tpu_custom_call.1}
  #allocation0 [shape = 'u32[]', space=smem, size = 0x4, offset = 0x4, fixed_abs, tag = 'smem constant byte address 0x4 - core index']
  #allocation1 [shape = 'u32[72,128]{1,0:T(1,128)}', space=vmem, size = 0x9000, scoped, tag = 'internal scratch']
  #allocation2 [shape = 'f32[16,768]{1,0:T(8,128)}', space=vmem, size = 0xc000, scoped, tag = 'scratch operand']
  %s0 = inlined_call_operand.hbm [shape: f32[16,768], index: 0, kind: input, shape index: {}]
  %s1 = inlined_call_operand.hbm [shape: bf16[12,768,768], index: 1, kind: input, shape index: {}]
  %s2 = inlined_call_operand.hbm [shape: f32[3,4,768], index: 2, kind: input, shape index: {}]
  %s3 = inlined_call_operand.vmem [shape: f32[768,2], index: 3, kind: input, shape index: {}]
  %s4 = inlined_call_operand.hbm [shape: f32[1,2], index: 4, kind: input, shape index: {}]
  %s5 = inlined_call_operand.hbm [shape: f32[2,2], index: 5, kind: output, shape index: {}]
  %s6 = sld [smem:[#allocation0]]
  $region77: #{tpu_custom_call.1} parent=0
    _
  %s8 = ssub.s32 1, %s6
  %s9 = scalar_select 0, %s8, %s6
  $region1: #{tpu_custom_call.1} parent=0
    #allocation3 [shape = 'u8[49152]{0}', space=vmem, size = 0xc000, scoped, tag = 'input window, operand 0, single buffered']
    #allocation4 [shape = 's32[2]{0}', space=sflag, size = 0x8, scoped, tag = 'scoped memory for tpu_custom_call.1']
    #allocation5 [shape = 's32[2]{0}', space=sflag, size = 0x8, scoped, tag = 'scoped memory for tpu_custom_call.1']
    #allocation6 [shape = 'u8[9437184]{0}', space=vmem, size = 0x900000, scoped, tag = 'input window, operand 1']
    #allocation7 [shape = 's32[2]{0}', space=sflag, size = 0x8, scoped, tag = 'scoped memory for tpu_custom_call.1']
    #allocation8 [shape = 'u8[24576]{0}', space=vmem, size = 0x6000, scoped, tag = 'input window, operand 2']
    #allocation9 [shape = 'u8[512]{0}', space=vmem, size = 0x400, scoped, tag = 'input window, operand 4, single buffered']
    #allocation10 [shape = 's32[1]{0}', space=sflag, size = 0x4, scoped, tag = 'scoped memory for tpu_custom_call.1']
    #allocation11 [shape = 'u8[1024]{0}', space=vmem, size = 0x400, scoped, tag = 'output window, operand 0, single buffered']
    %10 = vsyncpa [#allocation4], 0
    %11 = vsyncpa [#allocation7], 0
    %s12 = scalar_lea.sflag [#allocation7], 1
    %13 = vsyncpa %s12, 0
    %14 = vsyncpa [#allocation10], 0
    %15 = vsyncpa [#allocation5], 0
    loop: start=0, step=1, limit=5
    $region2: #{tpu_custom_call.1} parent=1 // loop_pre_header
      _
    $region3: #{tpu_custom_call.1} parent=1 // loop_header
      %s17 = sphi 0, %s21
      %p18 = scmp.ge.s32.totalorder %s17, 5
      %s25 = sphi 0, %s25
      %s27 = sphi 0, %s25
      %s28 = sphi 0, %s27
      %s42 = sphi 0, %s28
      %s48 = sphi 0, %s50
      %s51 = sphi 0, %s48
      %s52 = sphi 0, %s51
      %s68 = sphi 0, %s52
      %s74 = sphi 0, %s76
      %s77 = sphi 0, %s74
      %s78 = sphi 0, %s77
      %s94 = sphi 0, %s78
      %s98 = sphi 0, %s98
      %s100 = sphi 0, %s98
      %s101 = sphi 0, %s100
      %s115 = sphi 0, %s101
      %s119 = sphi 0, %s119
      %s121 = sphi 0, %s119
      %s122 = sphi 0, %s121
      %s136 = sphi 0, %s122
      %s140 = sphi 0, %s140
      %s142 = sphi 0, %s140
      %s143 = sphi 0, %s142
      %s157 = sphi 0, %s143
    $region4: #{tpu_custom_call.1} parent=1 // loop_header_branch
      %20 = sbr.rel (%p18) target = $region8
    $region5: #{tpu_custom_call.1} parent=1 // loop_body
      %s22 = ssub.s32 %s17, 1
      %s23 = ssub.s32 %s17, 2
      %s24 = sadd.s32 %s17, 1
      %s26 = sadd.s32 %s25, 1
      %p29 = scmp.eq.s32.totalorder %s17, 2
      %p30 = scmp.ne.s32.totalorder %s25, %s27
      %p31 = scmp.eq.s32.totalorder %s17, 0
      %p32 = por %p30, %p31
      %p33 = scmp.ne.s32.totalorder %s25, %s27
      %p34 = scmp.eq.s32.totalorder %s22, 2
      %p35 = por %p33, %p34
      %p36 = scmp.ne.s32.totalorder %s27, %s28
      %p37 = scmp.eq.s32.totalorder %s22, 0
      %p38 = por %p36, %p37
      %p39 = scmp.ne.s32.totalorder %s27, %s28
      %p40 = scmp.eq.s32.totalorder %s23, 2
      %p41 = por %p39, %p40
      %p43 = scmp.ne.s32.totalorder %s28, %s42
      %p44 = scmp.eq.s32.totalorder %s23, 0
      %p45 = por %p43, %p44
      %s46 = ssub.s32 %s17, %s24
      %p47 = scmp.eq.s32.totalorder %s46, 0
      %s49 = sadd.s32 %s48, 1
      %s50 = scalar_select %p47, %s48, %s49
      %p53 = pneg %p47
      %p54 = scmp.eq.s32.totalorder %s17, 2
      %p55 = por %p53, %p54
      %p56 = scmp.ne.s32.totalorder %s48, %s51
      %p57 = scmp.eq.s32.totalorder %s17, 0
      %p58 = por %p56, %p57
      %p59 = scmp.ne.s32.totalorder %s48, %s51
      %p60 = scmp.eq.s32.totalorder %s22, 2
      %p61 = por %p59, %p60
      %p62 = scmp.ne.s32.totalorder %s51, %s52
      %p63 = scmp.eq.s32.totalorder %s22, 0
      %p64 = por %p62, %p63
      %p65 = scmp.ne.s32.totalorder %s51, %s52
      %p66 = scmp.eq.s32.totalorder %s23, 2
      %p67 = por %p65, %p66
      %p69 = scmp.ne.s32.totalorder %s52, %s68
      %p70 = scmp.eq.s32.totalorder %s23, 0
      %p71 = por %p69, %p70
      %s72 = ssub.s32 %s17, %s24
      %p73 = scmp.eq.s32.totalorder %s72, 0
      %s75 = sadd.s32 %s74, 1
      %s76 = scalar_select %p73, %s74, %s75
      %p79 = pneg %p73
      %p80 = scmp.eq.s32.totalorder %s17, 2
      %p81 = por %p79, %p80
      %p82 = scmp.ne.s32.totalorder %s74, %s77
      %p83 = scmp.eq.s32.totalorder %s17, 0
      %p84 = por %p82, %p83
      %p85 = scmp.ne.s32.totalorder %s74, %s77
      %p86 = scmp.eq.s32.totalorder %s22, 2
      %p87 = por %p85, %p86
      %p88 = scmp.ne.s32.totalorder %s77, %s78
      %p89 = scmp.eq.s32.totalorder %s22, 0
      %p90 = por %p88, %p89
      %p91 = scmp.ne.s32.totalorder %s77, %s78
      %p92 = scmp.eq.s32.totalorder %s23, 2
      %p93 = por %p91, %p92
      %p95 = scmp.ne.s32.totalorder %s78, %s94
      %p96 = scmp.eq.s32.totalorder %s23, 0
      %p97 = por %p95, %p96
      %s99 = sadd.s32 %s98, 1
      %p102 = scmp.eq.s32.totalorder %s17, 2
      %p103 = scmp.ne.s32.totalorder %s98, %s100
      %p104 = scmp.eq.s32.totalorder %s17, 0
      %p105 = por %p103, %p104
      %p106 = scmp.ne.s32.totalorder %s98, %s100
      %p107 = scmp.eq.s32.totalorder %s22, 2
      %p108 = por %p106, %p107
      %p109 = scmp.ne.s32.totalorder %s100, %s101
      %p110 = scmp.eq.s32.totalorder %s22, 0
      %p111 = por %p109, %p110
      %p112 = scmp.ne.s32.totalorder %s100, %s101
      %p113 = scmp.eq.s32.totalorder %s23, 2
      %p114 = por %p112, %p113
      %p116 = scmp.ne.s32.totalorder %s101, %s115
      %p117 = scmp.eq.s32.totalorder %s23, 0
      %p118 = por %p116, %p117
      %s120 = sadd.s32 %s119, 1
      %p123 = scmp.eq.s32.totalorder %s17, 2
      %p124 = scmp.ne.s32.totalorder %s119, %s121
      %p125 = scmp.eq.s32.totalorder %s17, 0
      %p126 = por %p124, %p125
      %p127 = scmp.ne.s32.totalorder %s119, %s121
      %p128 = scmp.eq.s32.totalorder %s22, 2
      %p129 = por %p127, %p128
      %p130 = scmp.ne.s32.totalorder %s121, %s122
      %p131 = scmp.eq.s32.totalorder %s22, 0
      %p132 = por %p130, %p131
      %p133 = scmp.ne.s32.totalorder %s121, %s122
      %p134 = scmp.eq.s32.totalorder %s23, 2
      %p135 = por %p133, %p134
      %p137 = scmp.ne.s32.totalorder %s122, %s136
      %p138 = scmp.eq.s32.totalorder %s23, 0
      %p139 = por %p137, %p138
      %s141 = sadd.s32 %s140, 1
      %p144 = scmp.eq.s32.totalorder %s17, 2
      %p145 = scmp.ne.s32.totalorder %s140, %s142
      %p146 = scmp.eq.s32.totalorder %s17, 0
      %p147 = por %p145, %p146
      %p148 = scmp.ne.s32.totalorder %s140, %s142
      %p149 = scmp.eq.s32.totalorder %s22, 2
      %p150 = por %p148, %p149
      %p151 = scmp.ne.s32.totalorder %s142, %s143
      %p152 = scmp.eq.s32.totalorder %s22, 0
      %p153 = por %p151, %p152
      %p154 = scmp.ne.s32.totalorder %s142, %s143
      %p155 = scmp.eq.s32.totalorder %s23, 2
      %p156 = por %p154, %p155
      %p158 = scmp.ne.s32.totalorder %s143, %s157
      %p159 = scmp.eq.s32.totalorder %s23, 0
      %p160 = por %p158, %p159
      %p161 = scmp.le.s32.totalorder 1, %s17
      %p162 = scmp.lt.s32.totalorder %s17, 4
      %p163 = pnand %p161, %p162
      %p164 = pneg %p163
      // Predicated region
      $region9: #{tpu_custom_call.1} parent=5 // pred_check
        _
      $region10: #{tpu_custom_call.1} parent=5 // pred_check_branch
        %166 = sbr.rel (%p163) target = $region12
      $region11: #{tpu_custom_call.1} parent=5 // pred_region
        %s167 = ssub.s32 %s17, 1
        // Predicated region
        $region13: #{tpu_custom_call.1} parent=11 // pred_check
          %p168 = pneg %p38
        $region14: #{tpu_custom_call.1} parent=11 // pred_check_branch
          %170 = sbr.rel (%p168) target = $region16
        $region15: #{tpu_custom_call.1} parent=11 // pred_region
          %172 = vsyncadd [#allocation4], 0
          %s173 = sshll.u32 %s0, 4
          %s174 = int_to_ptr.hbm [resolvable:$true] %s173
          %s175 = sshll.u32 [#allocation3], 4
          %s176 = int_to_ptr.vmem [resolvable:$true] %s175
          %181 = dma.hbm_to_vmem [thread:$0]  %s174, 1536, %s176, [#allocation4], 768, 768, 48
        $region16: #{tpu_custom_call.1} parent=11 // pred_fallthru
          _
        // Predicated region
        $region17: #{tpu_custom_call.1} parent=11 // pred_check
          %p182 = pneg %p111
        $region18: #{tpu_custom_call.1} parent=11 // pred_check_branch
          %184 = sbr.rel (%p182) target = $region20
        $region19: #{tpu_custom_call.1} parent=11 // pred_region
          _
        $region20: #{tpu_custom_call.1} parent=11 // pred_fallthru
          _
        // Predicated region
        $region21: #{tpu_custom_call.1} parent=11 // pred_check
          %p185 = pneg %p132
        $region22: #{tpu_custom_call.1} parent=11 // pred_check_branch
          %187 = sbr.rel (%p185) target = $region24
        $region23: #{tpu_custom_call.1} parent=11 // pred_region
          %189 = vsyncadd [#allocation10], 0
          %s191 = sshll.u32 %s4, 4
          %s192 = int_to_ptr.hbm [resolvable:$true] %s191
          %s193 = sshll.u32 [#allocation9], 4
          %s194 = int_to_ptr.vmem [resolvable:$true] %s193
          %196 = dma.hbm_to_vmem [thread:$0]  %s192, 16, %s194, [#allocation10]
        $region24: #{tpu_custom_call.1} parent=11 // pred_fallthru
          _
      $region12: #{tpu_custom_call.1} parent=5 // pred_fallthru
        _
      %p197 = scmp.lt.s32.totalorder %s17, 3
      // Predicated region
      $region25: #{tpu_custom_call.1} parent=5 // pred_check
        %p198 = pneg %p197
      $region26: #{tpu_custom_call.1} parent=5 // pred_check_branch
        %200 = sbr.rel (%p198) target = $region28
      $region27: #{tpu_custom_call.1} parent=5 // pred_region
        // Predicated region
        $region29: #{tpu_custom_call.1} parent=27 // pred_check
          %p201 = pneg %p58
        $region30: #{tpu_custom_call.1} parent=27 // pred_check_branch
          %203 = sbr.rel (%p201) target = $region32
        $region31: #{tpu_custom_call.1} parent=27 // pred_region
          %s204 = sand.u32 %s17, 1
          %s205 = scalar_lea.sflag [#allocation7], %s204
          %s206 = sand.u32 %s48, 1
          %s207 = smul.addr %s206, 9216
          %s208 = scalar_lea.vmem [#allocation6], %s207
          %s209 = smul.u32 4, %s17
          %211 = vsyncadd %s205, 0
          %s212 = smul.addr %s209, 576
          %s213 = smul.addr %s212, 4
          %s214 = scalar_lea.hbm %s1, %s213
          %s215 = sshll.u32 %s214, 4
          %s216 = int_to_ptr.hbm [resolvable:$true] %s215
          %s217 = sshll.u32 %s208, 4
          %s218 = int_to_ptr.vmem [resolvable:$true] %s217
          %223 = dma.hbm_to_vmem [thread:$0]  %s216, 147456, %s218, %s205, 384, 384, 24
        $region32: #{tpu_custom_call.1} parent=27 // pred_fallthru
          _
        // Predicated region
        $region33: #{tpu_custom_call.1} parent=27 // pred_check
          %p224 = pneg %p84
        $region34: #{tpu_custom_call.1} parent=27 // pred_check_branch
          %226 = sbr.rel (%p224) target = $region36
        $region35: #{tpu_custom_call.1} parent=27 // pred_region
          %s227 = sand.u32 %s17, 1
          %s228 = scalar_lea.sflag [#allocation7], %s227
          %s229 = sand.u32 %s74, 1
          %s230 = smul.addr %s229, 24
          %s231 = scalar_lea.vmem [#allocation8], %s230
          %233 = vsyncadd %s228, 0
          %s234 = smul.addr %s17, 6
          %s235 = smul.addr %s234, 4
          %s236 = scalar_lea.hbm %s2, %s235
          %s238 = sshll.u32 %s236, 4
          %s239 = int_to_ptr.hbm [resolvable:$true] %s238
          %s240 = sshll.u32 %s231, 4
          %s241 = int_to_ptr.vmem [resolvable:$true] %s240
          %243 = dma.hbm_to_vmem [thread:$0]  %s239, 384, %s241, %s228
        $region36: #{tpu_custom_call.1} parent=27 // pred_fallthru
          _
      $region28: #{tpu_custom_call.1} parent=5 // pred_fallthru
        _
      %p244 = scmp.le.s32.totalorder 1, %s17
      %p245 = scmp.lt.s32.totalorder %s17, 4
      %p246 = pnand %p244, %p245
      %p247 = pneg %p246
      // Predicated region
      $region37: #{tpu_custom_call.1} parent=5 // pred_check
        _
      $region38: #{tpu_custom_call.1} parent=5 // pred_check_branch
        %249 = sbr.rel (%p246) target = $region40
      $region39: #{tpu_custom_call.1} parent=5 // pred_region
        %s250 = ssub.s32 %s17, 1
        // Predicated region
        $region41: #{tpu_custom_call.1} parent=39 // pred_check
          %p251 = pneg %p38
        $region42: #{tpu_custom_call.1} parent=39 // pred_check_branch
          %253 = sbr.rel (%p251) target = $region44
        $region43: #{tpu_custom_call.1} parent=39 // pred_region
          %255 = dma.done [#allocation4], 1536
        $region44: #{tpu_custom_call.1} parent=39 // pred_fallthru
          _
        %s256 = sand.u32 %s22, 1
        %s257 = scalar_lea.sflag [#allocation7], %s256
        %s258 = sand.u32 %s51, 1
        %s259 = smul.addr %s258, 9216
        %s260 = scalar_lea.vmem [#allocation6], %s259
        // Predicated region
        $region45: #{tpu_custom_call.1} parent=39 // pred_check
          %p261 = pneg %p64
        $region46: #{tpu_custom_call.1} parent=39 // pred_check_branch
          %263 = sbr.rel (%p261) target = $region48
        $region47: #{tpu_custom_call.1} parent=39 // pred_region
          %265 = dma.done %s257, 147456
        $region48: #{tpu_custom_call.1} parent=39 // pred_fallthru
          _
        %s266 = sand.u32 %s22, 1
        %s267 = scalar_lea.sflag [#allocation7], %s266
        %s268 = sand.u32 %s77, 1
        %s269 = smul.addr %s268, 24
        %s270 = scalar_lea.vmem [#allocation8], %s269
        // Predicated region
        $region49: #{tpu_custom_call.1} parent=39 // pred_check
          %p271 = pneg %p90
        $region50: #{tpu_custom_call.1} parent=39 // pred_check_branch
          %273 = sbr.rel (%p271) target = $region52
        $region51: #{tpu_custom_call.1} parent=39 // pred_region
          %275 = dma.done %s267, 384
        $region52: #{tpu_custom_call.1} parent=39 // pred_fallthru
          _
        // Predicated region
        $region53: #{tpu_custom_call.1} parent=39 // pred_check
          %p276 = pneg %p132
        $region54: #{tpu_custom_call.1} parent=39 // pred_check_branch
          %278 = sbr.rel (%p276) target = $region56
        $region55: #{tpu_custom_call.1} parent=39 // pred_region
          %280 = dma.done [#allocation10], 16
        $region56: #{tpu_custom_call.1} parent=39 // pred_fallthru
          _
        %p281 = pneg %p38
        %p282 = pneg %p35
        %s283 = sand.u32 %s22, 1
        %s284 = scalar_lea.sflag [#allocation7], %s283
        %s285 = sand.u32 %s51, 1
        %s286 = smul.addr %s285, 9216
        %s287 = scalar_lea.vmem [#allocation6], %s286
        %p288 = pneg %p64
        %p289 = pneg %p61
        %s290 = sand.u32 %s22, 1
        %s291 = scalar_lea.sflag [#allocation7], %s290
        %s292 = sand.u32 %s77, 1
        %s293 = smul.addr %s292, 24
        %s294 = scalar_lea.vmem [#allocation8], %s293
        %p295 = pneg %p90
        %p296 = pneg %p87
        %p297 = pneg %p111
        %p298 = pneg %p108
        %p299 = pneg %p132
        %p300 = pneg %p129
        %p301 = pneg %p153
        %p302 = pneg %p150
        %s303 = smul.u32 4, %s22
        %p304 = scmp.eq.s32.totalorder %s22, 0
        // Predicated region
        $region57: #{tpu_custom_call.1} parent=39 // pred_check
          %p305 = pneg %p304
        $region58: #{tpu_custom_call.1} parent=39 // pred_check_branch
          %307 = sbr.rel (%p305) target = $region60
        $region59: #{tpu_custom_call.1} parent=39 // pred_region
          %v308 = vld [vmem:[#allocation3] sm:$0xff]
          %v309 = vld [vmem:[#allocation3 + $0x8] sm:$0xff]
          %v310 = vld [vmem:[#allocation3 + $0x10] sm:$0xff]
          %v311 = vld [vmem:[#allocation3 + $0x18] sm:$0xff]
          %v312 = vld [vmem:[#allocation3 + $0x20] sm:$0xff]
          %v313 = vld [vmem:[#allocation3 + $0x28] sm:$0xff]
          %v314 = vld [vmem:[#allocation3 + $0x30] sm:$0xff]
          %v315 = vld [vmem:[#allocation3 + $0x38] sm:$0xff]
          %v316 = vld [vmem:[#allocation3 + $0x40] sm:$0xff]
          %v317 = vld [vmem:[#allocation3 + $0x48] sm:$0xff]
          %v318 = vld [vmem:[#allocation3 + $0x50] sm:$0xff]
          %v319 = vld [vmem:[#allocation3 + $0x58] sm:$0xff]
          %320 = vst [vmem:[#allocation2] sm:$0xff] %v308
          %321 = vst [vmem:[#allocation2 + $0x8] sm:$0xff] %v309
          %322 = vst [vmem:[#allocation2 + $0x10] sm:$0xff] %v310
          %323 = vst [vmem:[#allocation2 + $0x18] sm:$0xff] %v311
          %324 = vst [vmem:[#allocation2 + $0x20] sm:$0xff] %v312
          %325 = vst [vmem:[#allocation2 + $0x28] sm:$0xff] %v313
          %326 = vst [vmem:[#allocation2 + $0x30] sm:$0xff] %v314
          %327 = vst [vmem:[#allocation2 + $0x38] sm:$0xff] %v315
          %328 = vst [vmem:[#allocation2 + $0x40] sm:$0xff] %v316
          %329 = vst [vmem:[#allocation2 + $0x48] sm:$0xff] %v317
          %330 = vst [vmem:[#allocation2 + $0x50] sm:$0xff] %v318
          %331 = vst [vmem:[#allocation2 + $0x58] sm:$0xff] %v319
        $region60: #{tpu_custom_call.1} parent=39 // pred_fallthru
          _
        %v332 = vld [vmem:[%s270] ss:$4 sm:$0x3f]
        %v333 = vld [vmem:[#allocation2] sm:$0xff]
        %v334 = vld [vmem:[#allocation2 + $0x8] sm:$0xff]
        %v335 = vld [vmem:[#allocation2 + $0x10] sm:$0xff]
        %v336 = vld [vmem:[#allocation2 + $0x18] sm:$0xff]
        %v337 = vld [vmem:[#allocation2 + $0x20] sm:$0xff]
        %v338 = vld [vmem:[#allocation2 + $0x28] sm:$0xff]
        %v339 = vld [vmem:[#allocation2 + $0x30] sm:$0xff]
        %v340 = vld [vmem:[#allocation2 + $0x38] sm:$0xff]
        %v341 = vld [vmem:[#allocation2 + $0x40] sm:$0xff]
        %v342 = vld [vmem:[#allocation2 + $0x48] sm:$0xff]
        %v343 = vld [vmem:[#allocation2 + $0x50] sm:$0xff]
        %v344 = vld [vmem:[#allocation2 + $0x58] sm:$0xff]
        %v345 = vpack.c.bf16 %v339, %v333
        %v346 = vpack.c.bf16 %v340, %v334
        %v347 = vpack.c.bf16 %v341, %v335
        %v348 = vpack.c.bf16 %v342, %v336
        %v349 = vpack.c.bf16 %v343, %v337
        %v350 = vpack.c.bf16 %v344, %v338
        %v351 = vld [vmem:[%s260] sm:$0xff]
        %v352 = vld [vmem:[%s260 + $0x8] sm:$0xff]
        %v353 = vld [vmem:[%s260 + $0x10] sm:$0xff]
        %v354 = vld [vmem:[%s260 + $0x18] sm:$0xff]
        %v355 = vld [vmem:[%s260 + $0x20] sm:$0xff]
        %v356 = vld [vmem:[%s260 + $0x28] sm:$0xff]
        %v357 = vld [vmem:[%s260 + $0x30] sm:$0xff]
        %v358 = vld [vmem:[%s260 + $0x38] sm:$0xff]
        %v359 = vld [vmem:[%s260 + $0x40] sm:$0xff]
        %v360 = vld [vmem:[%s260 + $0x48] sm:$0xff]
        %v361 = vld [vmem:[%s260 + $0x50] sm:$0xff]
        %v362 = vld [vmem:[%s260 + $0x58] sm:$0xff]
        %v363 = vld [vmem:[%s260 + $0x60] sm:$0xff]
        %v364 = vld [vmem:[%s260 + $0x68] sm:$0xff]
        %v365 = vld [vmem:[%s260 + $0x70] sm:$0xff]
        %v366 = vld [vmem:[%s260 + $0x78] sm:$0xff]
        %v367 = vld [vmem:[%s260 + $0x80] sm:$0xff]
        %v368 = vld [vmem:[%s260 + $0x88] sm:$0xff]
        %v369 = vld [vmem:[%s260 + $0x90] sm:$0xff]
        %v370 = vld [vmem:[%s260 + $0x98] sm:$0xff]
        %v371 = vld [vmem:[%s260 + $0xa0] sm:$0xff]
        %v372 = vld [vmem:[%s260 + $0xa8] sm:$0xff]
        %v373 = vld [vmem:[%s260 + $0xb0] sm:$0xff]
        %v374 = vld [vmem:[%s260 + $0xb8] sm:$0xff]
        %v375 = vld [vmem:[%s260 + $0xc0] sm:$0xff]
        %v376 = vld [vmem:[%s260 + $0xc8] sm:$0xff]
        %v377 = vld [vmem:[%s260 + $0xd0] sm:$0xff]
        %v378 = vld [vmem:[%s260 + $0xd8] sm:$0xff]
        %v379 = vld [vmem:[%s260 + $0xe0] sm:$0xff]
        %v380 = vld [vmem:[%s260 + $0xe8] sm:$0xff]
        %v381 = vld [vmem:[%s260 + $0xf0] sm:$0xff]
        %v382 = vld [vmem:[%s260 + $0xf8] sm:$0xff]
        %v383 = vld [vmem:[%s260 + $0x100] sm:$0xff]
        %v384 = vld [vmem:[%s260 + $0x108] sm:$0xff]
        %v385 = vld [vmem:[%s260 + $0x110] sm:$0xff]
        %v386 = vld [vmem:[%s260 + $0x118] sm:$0xff]
        %v387 = vld [vmem:[%s260 + $0x120] sm:$0xff]
        %v388 = vld [vmem:[%s260 + $0x128] sm:$0xff]
        %v389 = vld [vmem:[%s260 + $0x130] sm:$0xff]
        %v390 = vld [vmem:[%s260 + $0x138] sm:$0xff]
        %v391 = vld [vmem:[%s260 + $0x140] sm:$0xff]
        %v392 = vld [vmem:[%s260 + $0x148] sm:$0xff]
        %v393 = vld [vmem:[%s260 + $0x150] sm:$0xff]
        %v394 = vld [vmem:[%s260 + $0x158] sm:$0xff]
        %v395 = vld [vmem:[%s260 + $0x160] sm:$0xff]
        %v396 = vld [vmem:[%s260 + $0x168] sm:$0xff]
        %v397 = vld [vmem:[%s260 + $0x170] sm:$0xff]
        %v398 = vld [vmem:[%s260 + $0x178] sm:$0xff]
        %v399 = vld [vmem:[%s260 + $0x180] sm:$0xff]
        %v400 = vld [vmem:[%s260 + $0x188] sm:$0xff]
        %v401 = vld [vmem:[%s260 + $0x190] sm:$0xff]
        %v402 = vld [vmem:[%s260 + $0x198] sm:$0xff]
        %v403 = vld [vmem:[%s260 + $0x1a0] sm:$0xff]
        %v404 = vld [vmem:[%s260 + $0x1a8] sm:$0xff]
        %v405 = vld [vmem:[%s260 + $0x1b0] sm:$0xff]
        %v406 = vld [vmem:[%s260 + $0x1b8] sm:$0xff]
        %v407 = vld [vmem:[%s260 + $0x1c0] sm:$0xff]
        %v408 = vld [vmem:[%s260 + $0x1c8] sm:$0xff]
        %v409 = vld [vmem:[%s260 + $0x1d0] sm:$0xff]
        %v410 = vld [vmem:[%s260 + $0x1d8] sm:$0xff]
        %v411 = vld [vmem:[%s260 + $0x1e0] sm:$0xff]
        %v412 = vld [vmem:[%s260 + $0x1e8] sm:$0xff]
        %v413 = vld [vmem:[%s260 + $0x1f0] sm:$0xff]
        %v414 = vld [vmem:[%s260 + $0x1f8] sm:$0xff]
        %v415 = vld [vmem:[%s260 + $0x200] sm:$0xff]
        %v416 = vld [vmem:[%s260 + $0x208] sm:$0xff]
        %v417 = vld [vmem:[%s260 + $0x210] sm:$0xff]
        %v418 = vld [vmem:[%s260 + $0x218] sm:$0xff]
        %v419 = vld [vmem:[%s260 + $0x220] sm:$0xff]
        %v420 = vld [vmem:[%s260 + $0x228] sm:$0xff]
        %v421 = vld [vmem:[%s260 + $0x230] sm:$0xff]
        %v422 = vld [vmem:[%s260 + $0x238] sm:$0xff]
        %v423 = vld [vmem:[%s260 + $0x240] sm:$0xff]
        %v424 = vld [vmem:[%s260 + $0x248] sm:$0xff]
        %v425 = vld [vmem:[%s260 + $0x250] sm:$0xff]
        %v426 = vld [vmem:[%s260 + $0x258] sm:$0xff]
        %v427 = vld [vmem:[%s260 + $0x260] sm:$0xff]
        %v428 = vld [vmem:[%s260 + $0x268] sm:$0xff]
        %v429 = vld [vmem:[%s260 + $0x270] sm:$0xff]
        %v430 = vld [vmem:[%s260 + $0x278] sm:$0xff]
        %v431 = vld [vmem:[%s260 + $0x280] sm:$0xff]
        %v432 = vld [vmem:[%s260 + $0x288] sm:$0xff]
        %v433 = vld [vmem:[%s260 + $0x290] sm:$0xff]
        %v434 = vld [vmem:[%s260 + $0x298] sm:$0xff]
        %v435 = vld [vmem:[%s260 + $0x2a0] sm:$0xff]
        %v436 = vld [vmem:[%s260 + $0x2a8] sm:$0xff]
        %v437 = vld [vmem:[%s260 + $0x2b0] sm:$0xff]
        %v438 = vld [vmem:[%s260 + $0x2b8] sm:$0xff]
        %v439 = vld [vmem:[%s260 + $0x2c0] sm:$0xff]
        %v440 = vld [vmem:[%s260 + $0x2c8] sm:$0xff]
        %v441 = vld [vmem:[%s260 + $0x2d0] sm:$0xff]
        %v442 = vld [vmem:[%s260 + $0x2d8] sm:$0xff]
        %v443 = vld [vmem:[%s260 + $0x2e0] sm:$0xff]
        %v444 = vld [vmem:[%s260 + $0x2e8] sm:$0xff]
        %v445 = vld [vmem:[%s260 + $0x2f0] sm:$0xff]
        %v446 = vld [vmem:[%s260 + $0x2f8] sm:$0xff]
        %v447 = vld [vmem:[%s260 + $0x300] sm:$0xff]
        %v448 = vld [vmem:[%s260 + $0x308] sm:$0xff]
        %v449 = vld [vmem:[%s260 + $0x310] sm:$0xff]
        %v450 = vld [vmem:[%s260 + $0x318] sm:$0xff]
        %v451 = vld [vmem:[%s260 + $0x320] sm:$0xff]
        %v452 = vld [vmem:[%s260 + $0x328] sm:$0xff]
        %v453 = vld [vmem:[%s260 + $0x330] sm:$0xff]
        %v454 = vld [vmem:[%s260 + $0x338] sm:$0xff]
        %v455 = vld [vmem:[%s260 + $0x340] sm:$0xff]
        %v456 = vld [vmem:[%s260 + $0x348] sm:$0xff]
        %v457 = vld [vmem:[%s260 + $0x350] sm:$0xff]
        %v458 = vld [vmem:[%s260 + $0x358] sm:$0xff]
        %v459 = vld [vmem:[%s260 + $0x360] sm:$0xff]
        %v460 = vld [vmem:[%s260 + $0x368] sm:$0xff]
        %v461 = vld [vmem:[%s260 + $0x370] sm:$0xff]
        %v462 = vld [vmem:[%s260 + $0x378] sm:$0xff]
        %v463 = vld [vmem:[%s260 + $0x380] sm:$0xff]
        %v464 = vld [vmem:[%s260 + $0x388] sm:$0xff]
        %v465 = vld [vmem:[%s260 + $0x390] sm:$0xff]
        %v466 = vld [vmem:[%s260 + $0x398] sm:$0xff]
        %v467 = vld [vmem:[%s260 + $0x3a0] sm:$0xff]
        %v468 = vld [vmem:[%s260 + $0x3a8] sm:$0xff]
        %v469 = vld [vmem:[%s260 + $0x3b0] sm:$0xff]
        %v470 = vld [vmem:[%s260 + $0x3b8] sm:$0xff]
        %v471 = vld [vmem:[%s260 + $0x3c0] sm:$0xff]
        %v472 = vld [vmem:[%s260 + $0x3c8] sm:$0xff]
        %v473 = vld [vmem:[%s260 + $0x3d0] sm:$0xff]
        %v474 = vld [vmem:[%s260 + $0x3d8] sm:$0xff]
        %v475 = vld [vmem:[%s260 + $0x3e0] sm:$0xff]
        %v476 = vld [vmem:[%s260 + $0x3e8] sm:$0xff]
        %v477 = vld [vmem:[%s260 + $0x3f0] sm:$0xff]
        %v478 = vld [vmem:[%s260 + $0x3f8] sm:$0xff]
        %v479 = vld [vmem:[%s260 + $0x400] sm:$0xff]
        %v480 = vld [vmem:[%s260 + $0x408] sm:$0xff]
        %v481 = vld [vmem:[%s260 + $0x410] sm:$0xff]
        %v482 = vld [vmem:[%s260 + $0x418] sm:$0xff]
        %v483 = vld [vmem:[%s260 + $0x420] sm:$0xff]
        %v484 = vld [vmem:[%s260 + $0x428] sm:$0xff]
        %v485 = vld [vmem:[%s260 + $0x430] sm:$0xff]
        %v486 = vld [vmem:[%s260 + $0x438] sm:$0xff]
        %v487 = vld [vmem:[%s260 + $0x440] sm:$0xff]
        %v488 = vld [vmem:[%s260 + $0x448] sm:$0xff]
        %v489 = vld [vmem:[%s260 + $0x450] sm:$0xff]
        %v490 = vld [vmem:[%s260 + $0x458] sm:$0xff]
        %v491 = vld [vmem:[%s260 + $0x460] sm:$0xff]
        %v492 = vld [vmem:[%s260 + $0x468] sm:$0xff]
        %v493 = vld [vmem:[%s260 + $0x470] sm:$0xff]
        %v494 = vld [vmem:[%s260 + $0x478] sm:$0xff]
        %v495 = vld [vmem:[%s260 + $0x480] sm:$0xff]
        %v496 = vld [vmem:[%s260 + $0x488] sm:$0xff]
        %v497 = vld [vmem:[%s260 + $0x490] sm:$0xff]
        %v498 = vld [vmem:[%s260 + $0x498] sm:$0xff]
        %v499 = vld [vmem:[%s260 + $0x4a0] sm:$0xff]
        %v500 = vld [vmem:[%s260 + $0x4a8] sm:$0xff]
        %v501 = vld [vmem:[%s260 + $0x4b0] sm:$0xff]
        %v502 = vld [vmem:[%s260 + $0x4b8] sm:$0xff]
        %v503 = vld [vmem:[%s260 + $0x4c0] sm:$0xff]
        %v504 = vld [vmem:[%s260 + $0x4c8] sm:$0xff]
        %v505 = vld [vmem:[%s260 + $0x4d0] sm:$0xff]
        %v506 = vld [vmem:[%s260 + $0x4d8] sm:$0xff]
        %v507 = vld [vmem:[%s260 + $0x4e0] sm:$0xff]
        %v508 = vld [vmem:[%s260 + $0x4e8] sm:$0xff]
        %v509 = vld [vmem:[%s260 + $0x4f0] sm:$0xff]
        %v510 = vld [vmem:[%s260 + $0x4f8] sm:$0xff]
        %v511 = vld [vmem:[%s260 + $0x500] sm:$0xff]
        %v512 = vld [vmem:[%s260 + $0x508] sm:$0xff]
        %v513 = vld [vmem:[%s260 + $0x510] sm:$0xff]
        %v514 = vld [vmem:[%s260 + $0x518] sm:$0xff]
        %v515 = vld [vmem:[%s260 + $0x520] sm:$0xff]
        %v516 = vld [vmem:[%s260 + $0x528] sm:$0xff]
        %v517 = vld [vmem:[%s260 + $0x530] sm:$0xff]
        %v518 = vld [vmem:[%s260 + $0x538] sm:$0xff]
        %v519 = vld [vmem:[%s260 + $0x540] sm:$0xff]
        %v520 = vld [vmem:[%s260 + $0x548] sm:$0xff]
        %v521 = vld [vmem:[%s260 + $0x550] sm:$0xff]
        %v522 = vld [vmem:[%s260 + $0x558] sm:$0xff]
        %v523 = vld [vmem:[%s260 + $0x560] sm:$0xff]
        %v524 = vld [vmem:[%s260 + $0x568] sm:$0xff]
        %v525 = vld [vmem:[%s260 + $0x570] sm:$0xff]
        %v526 = vld [vmem:[%s260 + $0x578] sm:$0xff]
        %v527 = vld [vmem:[%s260 + $0x580] sm:$0xff]
        %v528 = vld [vmem:[%s260 + $0x588] sm:$0xff]
        %v529 = vld [vmem:[%s260 + $0x590] sm:$0xff]
        %v530 = vld [vmem:[%s260 + $0x598] sm:$0xff]
        %v531 = vld [vmem:[%s260 + $0x5a0] sm:$0xff]
        %v532 = vld [vmem:[%s260 + $0x5a8] sm:$0xff]
        %v533 = vld [vmem:[%s260 + $0x5b0] sm:$0xff]
        %v534 = vld [vmem:[%s260 + $0x5b8] sm:$0xff]
        %v535 = vld [vmem:[%s260 + $0x5c0] sm:$0xff]
        %v536 = vld [vmem:[%s260 + $0x5c8] sm:$0xff]
        %v537 = vld [vmem:[%s260 + $0x5d0] sm:$0xff]
        %v538 = vld [vmem:[%s260 + $0x5d8] sm:$0xff]
        %v539 = vld [vmem:[%s260 + $0x5e0] sm:$0xff]
        %v540 = vld [vmem:[%s260 + $0x5e8] sm:$0xff]
        %v541 = vld [vmem:[%s260 + $0x5f0] sm:$0xff]
        %v542 = vld [vmem:[%s260 + $0x5f8] sm:$0xff]
        %v543 = vld [vmem:[%s260 + $0x600] sm:$0xff]
        %v544 = vld [vmem:[%s260 + $0x608] sm:$0xff]
        %v545 = vld [vmem:[%s260 + $0x610] sm:$0xff]
        %v546 = vld [vmem:[%s260 + $0x618] sm:$0xff]
        %v547 = vld [vmem:[%s260 + $0x620] sm:$0xff]
        %v548 = vld [vmem:[%s260 + $0x628] sm:$0xff]
        %v549 = vld [vmem:[%s260 + $0x630] sm:$0xff]
        %v550 = vld [vmem:[%s260 + $0x638] sm:$0xff]
        %v551 = vld [vmem:[%s260 + $0x640] sm:$0xff]
        %v552 = vld [vmem:[%s260 + $0x648] sm:$0xff]
        %v553 = vld [vmem:[%s260 + $0x650] sm:$0xff]
        %v554 = vld [vmem:[%s260 + $0x658] sm:$0xff]
        %v555 = vld [vmem:[%s260 + $0x660] sm:$0xff]
        %v556 = vld [vmem:[%s260 + $0x668] sm:$0xff]
        %v557 = vld [vmem:[%s260 + $0x670] sm:$0xff]
        %v558 = vld [vmem:[%s260 + $0x678] sm:$0xff]
        %v559 = vld [vmem:[%s260 + $0x680] sm:$0xff]
        %v560 = vld [vmem:[%s260 + $0x688] sm:$0xff]
        %v561 = vld [vmem:[%s260 + $0x690] sm:$0xff]
        %v562 = vld [vmem:[%s260 + $0x698] sm:$0xff]
        %v563 = vld [vmem:[%s260 + $0x6a0] sm:$0xff]
        %v564 = vld [vmem:[%s260 + $0x6a8] sm:$0xff]
        %v565 = vld [vmem:[%s260 + $0x6b0] sm:$0xff]
        %v566 = vld [vmem:[%s260 + $0x6b8] sm:$0xff]
        %v567 = vld [vmem:[%s260 + $0x6c0] sm:$0xff]
        %v568 = vld [vmem:[%s260 + $0x6c8] sm:$0xff]
        %v569 = vld [vmem:[%s260 + $0x6d0] sm:$0xff]
        %v570 = vld [vmem:[%s260 + $0x6d8] sm:$0xff]
        %v571 = vld [vmem:[%s260 + $0x6e0] sm:$0xff]
        %v572 = vld [vmem:[%s260 + $0x6e8] sm:$0xff]
        %v573 = vld [vmem:[%s260 + $0x6f0] sm:$0xff]
        %v574 = vld [vmem:[%s260 + $0x6f8] sm:$0xff]
        %v575 = vld [vmem:[%s260 + $0x700] sm:$0xff]
        %v576 = vld [vmem:[%s260 + $0x708] sm:$0xff]
        %v577 = vld [vmem:[%s260 + $0x710] sm:$0xff]
        %v578 = vld [vmem:[%s260 + $0x718] sm:$0xff]
        %v579 = vld [vmem:[%s260 + $0x720] sm:$0xff]
        %v580 = vld [vmem:[%s260 + $0x728] sm:$0xff]
        %v581 = vld [vmem:[%s260 + $0x730] sm:$0xff]
        %v582 = vld [vmem:[%s260 + $0x738] sm:$0xff]
        %v583 = vld [vmem:[%s260 + $0x740] sm:$0xff]
        %v584 = vld [vmem:[%s260 + $0x748] sm:$0xff]
        %v585 = vld [vmem:[%s260 + $0x750] sm:$0xff]
        %v586 = vld [vmem:[%s260 + $0x758] sm:$0xff]
        %v587 = vld [vmem:[%s260 + $0x760] sm:$0xff]
        %v588 = vld [vmem:[%s260 + $0x768] sm:$0xff]
        %v589 = vld [vmem:[%s260 + $0x770] sm:$0xff]
        %v590 = vld [vmem:[%s260 + $0x778] sm:$0xff]
        %v591 = vld [vmem:[%s260 + $0x780] sm:$0xff]
        %v592 = vld [vmem:[%s260 + $0x788] sm:$0xff]
        %v593 = vld [vmem:[%s260 + $0x790] sm:$0xff]
        %v594 = vld [vmem:[%s260 + $0x798] sm:$0xff]
        %v595 = vld [vmem:[%s260 + $0x7a0] sm:$0xff]
        %v596 = vld [vmem:[%s260 + $0x7a8] sm:$0xff]
        %v597 = vld [vmem:[%s260 + $0x7b0] sm:$0xff]
        %v598 = vld [vmem:[%s260 + $0x7b8] sm:$0xff]
        %v599 = vld [vmem:[%s260 + $0x7c0] sm:$0xff]
        %v600 = vld [vmem:[%s260 + $0x7c8] sm:$0xff]
        %v601 = vld [vmem:[%s260 + $0x7d0] sm:$0xff]
        %v602 = vld [vmem:[%s260 + $0x7d8] sm:$0xff]
        %v603 = vld [vmem:[%s260 + $0x7e0] sm:$0xff]
        %v604 = vld [vmem:[%s260 + $0x7e8] sm:$0xff]
        %v605 = vld [vmem:[%s260 + $0x7f0] sm:$0xff]
        %v606 = vld [vmem:[%s260 + $0x7f8] sm:$0xff]
        %v607 = vld [vmem:[%s260 + $0x800] sm:$0xff]
        %v608 = vld [vmem:[%s260 + $0x808] sm:$0xff]
        %v609 = vld [vmem:[%s260 + $0x810] sm:$0xff]
        %v610 = vld [vmem:[%s260 + $0x818] sm:$0xff]
        %v611 = vld [vmem:[%s260 + $0x820] sm:$0xff]
        %v612 = vld [vmem:[%s260 + $0x828] sm:$0xff]
        %v613 = vld [vmem:[%s260 + $0x830] sm:$0xff]
        %v614 = vld [vmem:[%s260 + $0x838] sm:$0xff]
        %v615 = vld [vmem:[%s260 + $0x840] sm:$0xff]
        %v616 = vld [vmem:[%s260 + $0x848] sm:$0xff]
        %v617 = vld [vmem:[%s260 + $0x850] sm:$0xff]
        %v618 = vld [vmem:[%s260 + $0x858] sm:$0xff]
        %v619 = vld [vmem:[%s260 + $0x860] sm:$0xff]
        %v620 = vld [vmem:[%s260 + $0x868] sm:$0xff]
        %v621 = vld [vmem:[%s260 + $0x870] sm:$0xff]
        %v622 = vld [vmem:[%s260 + $0x878] sm:$0xff]
        %v623 = vld [vmem:[%s260 + $0x880] sm:$0xff]
        %v624 = vld [vmem:[%s260 + $0x888] sm:$0xff]
        %v625 = vld [vmem:[%s260 + $0x890] sm:$0xff]
        %v626 = vld [vmem:[%s260 + $0x898] sm:$0xff]
        %v627 = vld [vmem:[%s260 + $0x8a0] sm:$0xff]
        %v628 = vld [vmem:[%s260 + $0x8a8] sm:$0xff]
        %v629 = vld [vmem:[%s260 + $0x8b0] sm:$0xff]
        %v630 = vld [vmem:[%s260 + $0x8b8] sm:$0xff]
        %v631 = vld [vmem:[%s260 + $0x8c0] sm:$0xff]
        %v632 = vld [vmem:[%s260 + $0x8c8] sm:$0xff]
        %v633 = vld [vmem:[%s260 + $0x8d0] sm:$0xff]
        %v634 = vld [vmem:[%s260 + $0x8d8] sm:$0xff]
        %v635 = vld [vmem:[%s260 + $0x8e0] sm:$0xff]
        %v636 = vld [vmem:[%s260 + $0x8e8] sm:$0xff]
        %v637 = vld [vmem:[%s260 + $0x8f0] sm:$0xff]
        %v638 = vld [vmem:[%s260 + $0x8f8] sm:$0xff]
        %v640 = vperm.slane %v332, 0
        %v641 = vperm.slane %v332, 1
        %v642 = vperm.slane %v332, 2
        %v643 = vperm.slane %v332, 3
        %v644 = vperm.slane %v332, 4
        %v645 = vperm.slane %v332, 5
        %v940 = vunpack.c.l.b16 %v351
        %v941 = vunpack.c.h.b16 %v351
        %v942 = vunpack.c.l.b16 %v352
        %v943 = vunpack.c.h.b16 %v352
        %v944 = vunpack.c.l.b16 %v353
        %v945 = vunpack.c.h.b16 %v353
        %v946 = vunpack.c.l.b16 %v354
        %v947 = vunpack.c.h.b16 %v354
        %v948 = vunpack.c.l.b16 %v355
        %v949 = vunpack.c.h.b16 %v355
        %v950 = vunpack.c.l.b16 %v356
        %v951 = vunpack.c.h.b16 %v356
        %v952 = vunpack.c.l.b16 %v357
        %v953 = vunpack.c.h.b16 %v357
        %v954 = vunpack.c.l.b16 %v358
        %v955 = vunpack.c.h.b16 %v358
        %v956 = vunpack.c.l.b16 %v359
        %v957 = vunpack.c.h.b16 %v359
        %v958 = vunpack.c.l.b16 %v360
        %v959 = vunpack.c.h.b16 %v360
        %v960 = vunpack.c.l.b16 %v361
        %v961 = vunpack.c.h.b16 %v361
        %v962 = vunpack.c.l.b16 %v362
        %v963 = vunpack.c.h.b16 %v362
        %v964 = vunpack.c.l.b16 %v363
        %v965 = vunpack.c.h.b16 %v363
        %v966 = vunpack.c.l.b16 %v364
        %v967 = vunpack.c.h.b16 %v364
        %v968 = vunpack.c.l.b16 %v365
        %v969 = vunpack.c.h.b16 %v365
        %v970 = vunpack.c.l.b16 %v366
        %v971 = vunpack.c.h.b16 %v366
        %v972 = vunpack.c.l.b16 %v367
        %v973 = vunpack.c.h.b16 %v367
        %v974 = vunpack.c.l.b16 %v368
        %v975 = vunpack.c.h.b16 %v368
        %v976 = vunpack.c.l.b16 %v369
        %v977 = vunpack.c.h.b16 %v369
        %v978 = vunpack.c.l.b16 %v370
        %v979 = vunpack.c.h.b16 %v370
        %v980 = vunpack.c.l.b16 %v371
        %v981 = vunpack.c.h.b16 %v371
        %v982 = vunpack.c.l.b16 %v372
        %v983 = vunpack.c.h.b16 %v372
        %v984 = vunpack.c.l.b16 %v373
        %v985 = vunpack.c.h.b16 %v373
        %v986 = vunpack.c.l.b16 %v374
        %v987 = vunpack.c.h.b16 %v374
        %v988 = vunpack.c.l.b16 %v375
        %v989 = vunpack.c.h.b16 %v375
        %v990 = vunpack.c.l.b16 %v376
        %v991 = vunpack.c.h.b16 %v376
        %v992 = vunpack.c.l.b16 %v377
        %v993 = vunpack.c.h.b16 %v377
        %v994 = vunpack.c.l.b16 %v378
        %v995 = vunpack.c.h.b16 %v378
        %v996 = vunpack.c.l.b16 %v379
        %v997 = vunpack.c.h.b16 %v379
        %v998 = vunpack.c.l.b16 %v380
        %v999 = vunpack.c.h.b16 %v380
        %v1000 = vunpack.c.l.b16 %v381
        %v1001 = vunpack.c.h.b16 %v381
        %v1002 = vunpack.c.l.b16 %v382
        %v1003 = vunpack.c.h.b16 %v382
        %v1004 = vunpack.c.l.b16 %v383
        %v1005 = vunpack.c.h.b16 %v383
        %v1006 = vunpack.c.l.b16 %v384
        %v1007 = vunpack.c.h.b16 %v384
        %v1008 = vunpack.c.l.b16 %v385
        %v1009 = vunpack.c.h.b16 %v385
        %v1010 = vunpack.c.l.b16 %v386
        %v1011 = vunpack.c.h.b16 %v386
        %v1012 = vunpack.c.l.b16 %v387
        %v1013 = vunpack.c.h.b16 %v387
        %v1014 = vunpack.c.l.b16 %v388
        %v1015 = vunpack.c.h.b16 %v388
        %v1016 = vunpack.c.l.b16 %v389
        %v1017 = vunpack.c.h.b16 %v389
        %v1018 = vunpack.c.l.b16 %v390
        %v1019 = vunpack.c.h.b16 %v390
        %v1020 = vunpack.c.l.b16 %v391
        %v1021 = vunpack.c.h.b16 %v391
        %v1022 = vunpack.c.l.b16 %v392
        %v1023 = vunpack.c.h.b16 %v392
        %v1024 = vunpack.c.l.b16 %v393
        %v1025 = vunpack.c.h.b16 %v393
        %v1026 = vunpack.c.l.b16 %v394
        %v1027 = vunpack.c.h.b16 %v394
        %v1028 = vunpack.c.l.b16 %v395
        %v1029 = vunpack.c.h.b16 %v395
        %v1030 = vunpack.c.l.b16 %v396
        %v1031 = vunpack.c.h.b16 %v396
        %v1032 = vunpack.c.l.b16 %v397
        %v1033 = vunpack.c.h.b16 %v397
        %v1034 = vunpack.c.l.b16 %v398
        %v1035 = vunpack.c.h.b16 %v398
        %v1036 = vunpack.c.l.b16 %v399
        %v1037 = vunpack.c.h.b16 %v399
        %v1038 = vunpack.c.l.b16 %v400
        %v1039 = vunpack.c.h.b16 %v400
        %v1040 = vunpack.c.l.b16 %v401
        %v1041 = vunpack.c.h.b16 %v401
        %v1042 = vunpack.c.l.b16 %v402
        %v1043 = vunpack.c.h.b16 %v402
        %v1044 = vunpack.c.l.b16 %v403
        %v1045 = vunpack.c.h.b16 %v403
        %v1046 = vunpack.c.l.b16 %v404
        %v1047 = vunpack.c.h.b16 %v404
        %v1048 = vunpack.c.l.b16 %v405
        %v1049 = vunpack.c.h.b16 %v405
        %v1050 = vunpack.c.l.b16 %v406
        %v1051 = vunpack.c.h.b16 %v406
        %v1052 = vunpack.c.l.b16 %v407
        %v1053 = vunpack.c.h.b16 %v407
        %v1054 = vunpack.c.l.b16 %v408
        %v1055 = vunpack.c.h.b16 %v408
        %v1056 = vunpack.c.l.b16 %v409
        %v1057 = vunpack.c.h.b16 %v409
        %v1058 = vunpack.c.l.b16 %v410
        %v1059 = vunpack.c.h.b16 %v410
        %v1060 = vunpack.c.l.b16 %v411
        %v1061 = vunpack.c.h.b16 %v411
        %v1062 = vunpack.c.l.b16 %v412
        %v1063 = vunpack.c.h.b16 %v412
        %v1064 = vunpack.c.l.b16 %v413
        %v1065 = vunpack.c.h.b16 %v413
        %v1066 = vunpack.c.l.b16 %v414
        %v1067 = vunpack.c.h.b16 %v414
        %v1068 = vunpack.c.l.b16 %v415
        %v1069 = vunpack.c.h.b16 %v415
        %v1070 = vunpack.c.l.b16 %v416
        %v1071 = vunpack.c.h.b16 %v416
        %v1072 = vunpack.c.l.b16 %v417
        %v1073 = vunpack.c.h.b16 %v417
        %v1074 = vunpack.c.l.b16 %v418
        %v1075 = vunpack.c.h.b16 %v418
        %v1076 = vunpack.c.l.b16 %v419
        %v1077 = vunpack.c.h.b16 %v419
        %v1078 = vunpack.c.l.b16 %v420
        %v1079 = vunpack.c.h.b16 %v420
        %v1080 = vunpack.c.l.b16 %v421
        %v1081 = vunpack.c.h.b16 %v421
        %v1082 = vunpack.c.l.b16 %v422
        %v1083 = vunpack.c.h.b16 %v422
        %v1084 = vunpack.c.l.b16 %v423
        %v1085 = vunpack.c.h.b16 %v423
        %v1086 = vunpack.c.l.b16 %v424
        %v1087 = vunpack.c.h.b16 %v424
        %v1088 = vunpack.c.l.b16 %v425
        %v1089 = vunpack.c.h.b16 %v425
        %v1090 = vunpack.c.l.b16 %v426
        %v1091 = vunpack.c.h.b16 %v426
        %v1092 = vunpack.c.l.b16 %v427
        %v1093 = vunpack.c.h.b16 %v427
        %v1094 = vunpack.c.l.b16 %v428
        %v1095 = vunpack.c.h.b16 %v428
        %v1096 = vunpack.c.l.b16 %v429
        %v1097 = vunpack.c.h.b16 %v429
        %v1098 = vunpack.c.l.b16 %v430
        %v1099 = vunpack.c.h.b16 %v430
        %v1100 = vunpack.c.l.b16 %v431
        %v1101 = vunpack.c.h.b16 %v431
        %v1102 = vunpack.c.l.b16 %v432
        %v1103 = vunpack.c.h.b16 %v432
        %v1104 = vunpack.c.l.b16 %v433
        %v1105 = vunpack.c.h.b16 %v433
        %v1106 = vunpack.c.l.b16 %v434
        %v1107 = vunpack.c.h.b16 %v434
        %v1108 = vunpack.c.l.b16 %v435
        %v1109 = vunpack.c.h.b16 %v435
        %v1110 = vunpack.c.l.b16 %v436
        %v1111 = vunpack.c.h.b16 %v436
        %v1112 = vunpack.c.l.b16 %v437
        %v1113 = vunpack.c.h.b16 %v437
        %v1114 = vunpack.c.l.b16 %v438
        %v1115 = vunpack.c.h.b16 %v438
        %v1116 = vunpack.c.l.b16 %v439
        %v1117 = vunpack.c.h.b16 %v439
        %v1118 = vunpack.c.l.b16 %v440
        %v1119 = vunpack.c.h.b16 %v440
        %v1120 = vunpack.c.l.b16 %v441
        %v1121 = vunpack.c.h.b16 %v441
        %v1122 = vunpack.c.l.b16 %v442
        %v1123 = vunpack.c.h.b16 %v442
        %v1124 = vunpack.c.l.b16 %v443
        %v1125 = vunpack.c.h.b16 %v443
        %v1126 = vunpack.c.l.b16 %v444
        %v1127 = vunpack.c.h.b16 %v444
        %v1128 = vunpack.c.l.b16 %v445
        %v1129 = vunpack.c.h.b16 %v445
        %v1130 = vunpack.c.l.b16 %v446
        %v1131 = vunpack.c.h.b16 %v446
        %v1132 = vunpack.c.l.b16 %v447
        %v1133 = vunpack.c.h.b16 %v447
        %v1134 = vunpack.c.l.b16 %v448
        %v1135 = vunpack.c.h.b16 %v448
        %v1136 = vunpack.c.l.b16 %v449
        %v1137 = vunpack.c.h.b16 %v449
        %v1138 = vunpack.c.l.b16 %v450
        %v1139 = vunpack.c.h.b16 %v450
        %v1140 = vunpack.c.l.b16 %v451
        %v1141 = vunpack.c.h.b16 %v451
        %v1142 = vunpack.c.l.b16 %v452
        %v1143 = vunpack.c.h.b16 %v452
        %v1144 = vunpack.c.l.b16 %v453
        %v1145 = vunpack.c.h.b16 %v453
        %v1146 = vunpack.c.l.b16 %v454
        %v1147 = vunpack.c.h.b16 %v454
        %v1148 = vunpack.c.l.b16 %v455
        %v1149 = vunpack.c.h.b16 %v455
        %v1150 = vunpack.c.l.b16 %v456
        %v1151 = vunpack.c.h.b16 %v456
        %v1152 = vunpack.c.l.b16 %v457
        %v1153 = vunpack.c.h.b16 %v457
        %v1154 = vunpack.c.l.b16 %v458
        %v1155 = vunpack.c.h.b16 %v458
        %v1156 = vunpack.c.l.b16 %v459
        %v1157 = vunpack.c.h.b16 %v459
        %v1158 = vunpack.c.l.b16 %v460
        %v1159 = vunpack.c.h.b16 %v460
        %v1160 = vunpack.c.l.b16 %v461
        %v1161 = vunpack.c.h.b16 %v461
        %v1162 = vunpack.c.l.b16 %v462
        %v1163 = vunpack.c.h.b16 %v462
        %v1164 = vunpack.c.l.b16 %v463
        %v1165 = vunpack.c.h.b16 %v463
        %v1166 = vunpack.c.l.b16 %v464
        %v1167 = vunpack.c.h.b16 %v464
        %v1168 = vunpack.c.l.b16 %v465
        %v1169 = vunpack.c.h.b16 %v465
        %v1170 = vunpack.c.l.b16 %v466
        %v1171 = vunpack.c.h.b16 %v466
        %v1172 = vunpack.c.l.b16 %v467
        %v1173 = vunpack.c.h.b16 %v467
        %v1174 = vunpack.c.l.b16 %v468
        %v1175 = vunpack.c.h.b16 %v468
        %v1176 = vunpack.c.l.b16 %v469
        %v1177 = vunpack.c.h.b16 %v469
        %v1178 = vunpack.c.l.b16 %v470
        %v1179 = vunpack.c.h.b16 %v470
        %v1180 = vunpack.c.l.b16 %v471
        %v1181 = vunpack.c.h.b16 %v471
        %v1182 = vunpack.c.l.b16 %v472
        %v1183 = vunpack.c.h.b16 %v472
        %v1184 = vunpack.c.l.b16 %v473
        %v1185 = vunpack.c.h.b16 %v473
        %v1186 = vunpack.c.l.b16 %v474
        %v1187 = vunpack.c.h.b16 %v474
        %v1188 = vunpack.c.l.b16 %v475
        %v1189 = vunpack.c.h.b16 %v475
        %v1190 = vunpack.c.l.b16 %v476
        %v1191 = vunpack.c.h.b16 %v476
        %v1192 = vunpack.c.l.b16 %v477
        %v1193 = vunpack.c.h.b16 %v477
        %v1194 = vunpack.c.l.b16 %v478
        %v1195 = vunpack.c.h.b16 %v478
        %v1196 = vunpack.c.l.b16 %v479
        %v1197 = vunpack.c.h.b16 %v479
        %v1198 = vunpack.c.l.b16 %v480
        %v1199 = vunpack.c.h.b16 %v480
        %v1200 = vunpack.c.l.b16 %v481
        %v1201 = vunpack.c.h.b16 %v481
        %v1202 = vunpack.c.l.b16 %v482
        %v1203 = vunpack.c.h.b16 %v482
        %v1204 = vunpack.c.l.b16 %v483
        %v1205 = vunpack.c.h.b16 %v483
        %v1206 = vunpack.c.l.b16 %v484
        %v1207 = vunpack.c.h.b16 %v484
        %v1208 = vunpack.c.l.b16 %v485
        %v1209 = vunpack.c.h.b16 %v485
        %v1210 = vunpack.c.l.b16 %v486
        %v1211 = vunpack.c.h.b16 %v486
        %v1212 = vunpack.c.l.b16 %v487
        %v1213 = vunpack.c.h.b16 %v487
        %v1214 = vunpack.c.l.b16 %v488
        %v1215 = vunpack.c.h.b16 %v488
        %v1216 = vunpack.c.l.b16 %v489
        %v1217 = vunpack.c.h.b16 %v489
        %v1218 = vunpack.c.l.b16 %v490
        %v1219 = vunpack.c.h.b16 %v490
        %v1220 = vunpack.c.l.b16 %v491
        %v1221 = vunpack.c.h.b16 %v491
        %v1222 = vunpack.c.l.b16 %v492
        %v1223 = vunpack.c.h.b16 %v492
        %v1224 = vunpack.c.l.b16 %v493
        %v1225 = vunpack.c.h.b16 %v493
        %v1226 = vunpack.c.l.b16 %v494
        %v1227 = vunpack.c.h.b16 %v494
        %v1228 = vunpack.c.l.b16 %v495
        %v1229 = vunpack.c.h.b16 %v495
        %v1230 = vunpack.c.l.b16 %v496
        %v1231 = vunpack.c.h.b16 %v496
        %v1232 = vunpack.c.l.b16 %v497
        %v1233 = vunpack.c.h.b16 %v497
        %v1234 = vunpack.c.l.b16 %v498
        %v1235 = vunpack.c.h.b16 %v498
        %v1236 = vunpack.c.l.b16 %v499
        %v1237 = vunpack.c.h.b16 %v499
        %v1238 = vunpack.c.l.b16 %v500
        %v1239 = vunpack.c.h.b16 %v500
        %v1240 = vunpack.c.l.b16 %v501
        %v1241 = vunpack.c.h.b16 %v501
        %v1242 = vunpack.c.l.b16 %v502
        %v1243 = vunpack.c.h.b16 %v502
        %v1244 = vunpack.c.l.b16 %v503
        %v1245 = vunpack.c.h.b16 %v503
        %v1246 = vunpack.c.l.b16 %v504
        %v1247 = vunpack.c.h.b16 %v504
        %v1248 = vunpack.c.l.b16 %v505
        %v1249 = vunpack.c.h.b16 %v505
        %v1250 = vunpack.c.l.b16 %v506
        %v1251 = vunpack.c.h.b16 %v506
        %v1252 = vunpack.c.l.b16 %v507
        %v1253 = vunpack.c.h.b16 %v507
        %v1254 = vunpack.c.l.b16 %v508
        %v1255 = vunpack.c.h.b16 %v508
        %v1256 = vunpack.c.l.b16 %v509
        %v1257 = vunpack.c.h.b16 %v509
        %v1258 = vunpack.c.l.b16 %v510
        %v1259 = vunpack.c.h.b16 %v510
        %v1260 = vunpack.c.l.b16 %v511
        %v1261 = vunpack.c.h.b16 %v511
        %v1262 = vunpack.c.l.b16 %v512
        %v1263 = vunpack.c.h.b16 %v512
        %v1264 = vunpack.c.l.b16 %v513
        %v1265 = vunpack.c.h.b16 %v513
        %v1266 = vunpack.c.l.b16 %v514
        %v1267 = vunpack.c.h.b16 %v514
        %v1268 = vunpack.c.l.b16 %v515
        %v1269 = vunpack.c.h.b16 %v515
        %v1270 = vunpack.c.l.b16 %v516
        %v1271 = vunpack.c.h.b16 %v516
        %v1272 = vunpack.c.l.b16 %v517
        %v1273 = vunpack.c.h.b16 %v517
        %v1274 = vunpack.c.l.b16 %v518
        %v1275 = vunpack.c.h.b16 %v518
        %v1276 = vunpack.c.l.b16 %v519
        %v1277 = vunpack.c.h.b16 %v519
        %v1278 = vunpack.c.l.b16 %v520
        %v1279 = vunpack.c.h.b16 %v520
        %v1280 = vunpack.c.l.b16 %v521
        %v1281 = vunpack.c.h.b16 %v521
        %v1282 = vunpack.c.l.b16 %v522
        %v1283 = vunpack.c.h.b16 %v522
        %v1284 = vunpack.c.l.b16 %v523
        %v1285 = vunpack.c.h.b16 %v523
        %v1286 = vunpack.c.l.b16 %v524
        %v1287 = vunpack.c.h.b16 %v524
        %v1288 = vunpack.c.l.b16 %v525
        %v1289 = vunpack.c.h.b16 %v525
        %v1290 = vunpack.c.l.b16 %v526
        %v1291 = vunpack.c.h.b16 %v526
        %v1292 = vunpack.c.l.b16 %v527
        %v1293 = vunpack.c.h.b16 %v527
        %v1294 = vunpack.c.l.b16 %v528
        %v1295 = vunpack.c.h.b16 %v528
        %v1296 = vunpack.c.l.b16 %v529
        %v1297 = vunpack.c.h.b16 %v529
        %v1298 = vunpack.c.l.b16 %v530
        %v1299 = vunpack.c.h.b16 %v530
        %v1300 = vunpack.c.l.b16 %v531
        %v1301 = vunpack.c.h.b16 %v531
        %v1302 = vunpack.c.l.b16 %v532
        %v1303 = vunpack.c.h.b16 %v532
        %v1304 = vunpack.c.l.b16 %v533
        %v1305 = vunpack.c.h.b16 %v533
        %v1306 = vunpack.c.l.b16 %v534
        %v1307 = vunpack.c.h.b16 %v534
        %v1308 = vunpack.c.l.b16 %v535
        %v1309 = vunpack.c.h.b16 %v535
        %v1310 = vunpack.c.l.b16 %v536
        %v1311 = vunpack.c.h.b16 %v536
        %v1312 = vunpack.c.l.b16 %v537
        %v1313 = vunpack.c.h.b16 %v537
        %v1314 = vunpack.c.l.b16 %v538
        %v1315 = vunpack.c.h.b16 %v538
        %v1316 = vunpack.c.l.b16 %v539
        %v1317 = vunpack.c.h.b16 %v539
        %v1318 = vunpack.c.l.b16 %v540
        %v1319 = vunpack.c.h.b16 %v540
        %v1320 = vunpack.c.l.b16 %v541
        %v1321 = vunpack.c.h.b16 %v541
        %v1322 = vunpack.c.l.b16 %v542
        %v1323 = vunpack.c.h.b16 %v542
        %v1324 = vunpack.c.l.b16 %v543
        %v1325 = vunpack.c.h.b16 %v543
        %v1326 = vunpack.c.l.b16 %v544
        %v1327 = vunpack.c.h.b16 %v544
        %v1328 = vunpack.c.l.b16 %v545
        %v1329 = vunpack.c.h.b16 %v545
        %v1330 = vunpack.c.l.b16 %v546
        %v1331 = vunpack.c.h.b16 %v546
        %v1332 = vunpack.c.l.b16 %v547
        %v1333 = vunpack.c.h.b16 %v547
        %v1334 = vunpack.c.l.b16 %v548
        %v1335 = vunpack.c.h.b16 %v548
        %v1336 = vunpack.c.l.b16 %v549
        %v1337 = vunpack.c.h.b16 %v549
        %v1338 = vunpack.c.l.b16 %v550
        %v1339 = vunpack.c.h.b16 %v550
        %v1340 = vunpack.c.l.b16 %v551
        %v1341 = vunpack.c.h.b16 %v551
        %v1342 = vunpack.c.l.b16 %v552
        %v1343 = vunpack.c.h.b16 %v552
        %v1344 = vunpack.c.l.b16 %v553
        %v1345 = vunpack.c.h.b16 %v553
        %v1346 = vunpack.c.l.b16 %v554
        %v1347 = vunpack.c.h.b16 %v554
        %v1348 = vunpack.c.l.b16 %v555
        %v1349 = vunpack.c.h.b16 %v555
        %v1350 = vunpack.c.l.b16 %v556
        %v1351 = vunpack.c.h.b16 %v556
        %v1352 = vunpack.c.l.b16 %v557
        %v1353 = vunpack.c.h.b16 %v557
        %v1354 = vunpack.c.l.b16 %v558
        %v1355 = vunpack.c.h.b16 %v558
        %v1356 = vunpack.c.l.b16 %v559
        %v1357 = vunpack.c.h.b16 %v559
        %v1358 = vunpack.c.l.b16 %v560
        %v1359 = vunpack.c.h.b16 %v560
        %v1360 = vunpack.c.l.b16 %v561
        %v1361 = vunpack.c.h.b16 %v561
        %v1362 = vunpack.c.l.b16 %v562
        %v1363 = vunpack.c.h.b16 %v562
        %v1364 = vunpack.c.l.b16 %v563
        %v1365 = vunpack.c.h.b16 %v563
        %v1366 = vunpack.c.l.b16 %v564
        %v1367 = vunpack.c.h.b16 %v564
        %v1368 = vunpack.c.l.b16 %v565
        %v1369 = vunpack.c.h.b16 %v565
        %v1370 = vunpack.c.l.b16 %v566
        %v1371 = vunpack.c.h.b16 %v566
        %v1372 = vunpack.c.l.b16 %v567
        %v1373 = vunpack.c.h.b16 %v567
        %v1374 = vunpack.c.l.b16 %v568
        %v1375 = vunpack.c.h.b16 %v568
        %v1376 = vunpack.c.l.b16 %v569
        %v1377 = vunpack.c.h.b16 %v569
        %v1378 = vunpack.c.l.b16 %v570
        %v1379 = vunpack.c.h.b16 %v570
        %v1380 = vunpack.c.l.b16 %v571
        %v1381 = vunpack.c.h.b16 %v571
        %v1382 = vunpack.c.l.b16 %v572
        %v1383 = vunpack.c.h.b16 %v572
        %v1384 = vunpack.c.l.b16 %v573
        %v1385 = vunpack.c.h.b16 %v573
        %v1386 = vunpack.c.l.b16 %v574
        %v1387 = vunpack.c.h.b16 %v574
        %v1388 = vunpack.c.l.b16 %v575
        %v1389 = vunpack.c.h.b16 %v575
        %v1390 = vunpack.c.l.b16 %v576
        %v1391 = vunpack.c.h.b16 %v576
        %v1392 = vunpack.c.l.b16 %v577
        %v1393 = vunpack.c.h.b16 %v577
        %v1394 = vunpack.c.l.b16 %v578
        %v1395 = vunpack.c.h.b16 %v578
        %v1396 = vunpack.c.l.b16 %v579
        %v1397 = vunpack.c.h.b16 %v579
        %v1398 = vunpack.c.l.b16 %v580
        %v1399 = vunpack.c.h.b16 %v580
        %v1400 = vunpack.c.l.b16 %v581
        %v1401 = vunpack.c.h.b16 %v581
        %v1402 = vunpack.c.l.b16 %v582
        %v1403 = vunpack.c.h.b16 %v582
        %v1404 = vunpack.c.l.b16 %v583
        %v1405 = vunpack.c.h.b16 %v583
        %v1406 = vunpack.c.l.b16 %v584
        %v1407 = vunpack.c.h.b16 %v584
        %v1408 = vunpack.c.l.b16 %v585
        %v1409 = vunpack.c.h.b16 %v585
        %v1410 = vunpack.c.l.b16 %v586
        %v1411 = vunpack.c.h.b16 %v586
        %v1412 = vunpack.c.l.b16 %v587
        %v1413 = vunpack.c.h.b16 %v587
        %v1414 = vunpack.c.l.b16 %v588
        %v1415 = vunpack.c.h.b16 %v588
        %v1416 = vunpack.c.l.b16 %v589
        %v1417 = vunpack.c.h.b16 %v589
        %v1418 = vunpack.c.l.b16 %v590
        %v1419 = vunpack.c.h.b16 %v590
        %v1420 = vunpack.c.l.b16 %v591
        %v1421 = vunpack.c.h.b16 %v591
        %v1422 = vunpack.c.l.b16 %v592
        %v1423 = vunpack.c.h.b16 %v592
        %v1424 = vunpack.c.l.b16 %v593
        %v1425 = vunpack.c.h.b16 %v593
        %v1426 = vunpack.c.l.b16 %v594
        %v1427 = vunpack.c.h.b16 %v594
        %v1428 = vunpack.c.l.b16 %v595
        %v1429 = vunpack.c.h.b16 %v595
        %v1430 = vunpack.c.l.b16 %v596
        %v1431 = vunpack.c.h.b16 %v596
        %v1432 = vunpack.c.l.b16 %v597
        %v1433 = vunpack.c.h.b16 %v597
        %v1434 = vunpack.c.l.b16 %v598
        %v1435 = vunpack.c.h.b16 %v598
        %v1436 = vunpack.c.l.b16 %v599
        %v1437 = vunpack.c.h.b16 %v599
        %v1438 = vunpack.c.l.b16 %v600
        %v1439 = vunpack.c.h.b16 %v600
        %v1440 = vunpack.c.l.b16 %v601
        %v1441 = vunpack.c.h.b16 %v601
        %v1442 = vunpack.c.l.b16 %v602
        %v1443 = vunpack.c.h.b16 %v602
        %v1444 = vunpack.c.l.b16 %v603
        %v1445 = vunpack.c.h.b16 %v603
        %v1446 = vunpack.c.l.b16 %v604
        %v1447 = vunpack.c.h.b16 %v604
        %v1448 = vunpack.c.l.b16 %v605
        %v1449 = vunpack.c.h.b16 %v605
        %v1450 = vunpack.c.l.b16 %v606
        %v1451 = vunpack.c.h.b16 %v606
        %v1452 = vunpack.c.l.b16 %v607
        %v1453 = vunpack.c.h.b16 %v607
        %v1454 = vunpack.c.l.b16 %v608
        %v1455 = vunpack.c.h.b16 %v608
        %v1456 = vunpack.c.l.b16 %v609
        %v1457 = vunpack.c.h.b16 %v609
        %v1458 = vunpack.c.l.b16 %v610
        %v1459 = vunpack.c.h.b16 %v610
        %v1460 = vunpack.c.l.b16 %v611
        %v1461 = vunpack.c.h.b16 %v611
        %v1462 = vunpack.c.l.b16 %v612
        %v1463 = vunpack.c.h.b16 %v612
        %v1464 = vunpack.c.l.b16 %v613
        %v1465 = vunpack.c.h.b16 %v613
        %v1466 = vunpack.c.l.b16 %v614
        %v1467 = vunpack.c.h.b16 %v614
        %v1468 = vunpack.c.l.b16 %v615
        %v1469 = vunpack.c.h.b16 %v615
        %v1470 = vunpack.c.l.b16 %v616
        %v1471 = vunpack.c.h.b16 %v616
        %v1472 = vunpack.c.l.b16 %v617
        %v1473 = vunpack.c.h.b16 %v617
        %v1474 = vunpack.c.l.b16 %v618
        %v1475 = vunpack.c.h.b16 %v618
        %v1476 = vunpack.c.l.b16 %v619
        %v1477 = vunpack.c.h.b16 %v619
        %v1478 = vunpack.c.l.b16 %v620
        %v1479 = vunpack.c.h.b16 %v620
        %v1480 = vunpack.c.l.b16 %v621
        %v1481 = vunpack.c.h.b16 %v621
        %v1482 = vunpack.c.l.b16 %v622
        %v1483 = vunpack.c.h.b16 %v622
        %v1484 = vunpack.c.l.b16 %v623
        %v1485 = vunpack.c.h.b16 %v623
        %v1486 = vunpack.c.l.b16 %v624
        %v1487 = vunpack.c.h.b16 %v624
        %v1488 = vunpack.c.l.b16 %v625
        %v1489 = vunpack.c.h.b16 %v625
        %v1490 = vunpack.c.l.b16 %v626
        %v1491 = vunpack.c.h.b16 %v626
        %v1492 = vunpack.c.l.b16 %v627
        %v1493 = vunpack.c.h.b16 %v627
        %v1494 = vunpack.c.l.b16 %v628
        %v1495 = vunpack.c.h.b16 %v628
        %v1496 = vunpack.c.l.b16 %v629
        %v1497 = vunpack.c.h.b16 %v629
        %v1498 = vunpack.c.l.b16 %v630
        %v1499 = vunpack.c.h.b16 %v630
        %v1500 = vunpack.c.l.b16 %v631
        %v1501 = vunpack.c.h.b16 %v631
        %v1502 = vunpack.c.l.b16 %v632
        %v1503 = vunpack.c.h.b16 %v632
        %v1504 = vunpack.c.l.b16 %v633
        %v1505 = vunpack.c.h.b16 %v633
        %v1506 = vunpack.c.l.b16 %v634
        %v1507 = vunpack.c.h.b16 %v634
        %v1508 = vunpack.c.l.b16 %v635
        %v1509 = vunpack.c.h.b16 %v635
        %v1510 = vunpack.c.l.b16 %v636
        %v1511 = vunpack.c.h.b16 %v636
        %v1512 = vunpack.c.l.b16 %v637
        %v1513 = vunpack.c.h.b16 %v637
        %v1514 = vunpack.c.l.b16 %v638
        %v1515 = vunpack.c.h.b16 %v638
        %v1516 = vpack.c.b16 %v946, %v940
        %v1517 = vpack.c.b16 %v947, %v941
        %v1518 = vpack.c.b16 %v948, %v942
        %v1519 = vpack.c.b16 %v949, %v943
        %v1520 = vpack.c.b16 %v950, %v944
        %v1521 = vpack.c.b16 %v951, %v945
        %v1522 = vpack.c.b16 %v958, %v952
        %v1523 = vpack.c.b16 %v959, %v953
        %v1524 = vpack.c.b16 %v960, %v954
        %v1525 = vpack.c.b16 %v961, %v955
        %v1526 = vpack.c.b16 %v962, %v956
        %v1527 = vpack.c.b16 %v963, %v957
        %v1528 = vpack.c.b16 %v970, %v964
        %v1529 = vpack.c.b16 %v971, %v965
        %v1530 = vpack.c.b16 %v972, %v966
        %v1531 = vpack.c.b16 %v973, %v967
        %v1532 = vpack.c.b16 %v974, %v968
        %v1533 = vpack.c.b16 %v975, %v969
        %v1534 = vpack.c.b16 %v982, %v976
        %v1535 = vpack.c.b16 %v983, %v977
        %v1536 = vpack.c.b16 %v984, %v978
        %v1537 = vpack.c.b16 %v985, %v979
        %v1538 = vpack.c.b16 %v986, %v980
        %v1539 = vpack.c.b16 %v987, %v981
        %v1540 = vpack.c.b16 %v994, %v988
        %v1541 = vpack.c.b16 %v995, %v989
        %v1542 = vpack.c.b16 %v996, %v990
        %v1543 = vpack.c.b16 %v997, %v991
        %v1544 = vpack.c.b16 %v998, %v992
        %v1545 = vpack.c.b16 %v999, %v993
        %v1546 = vpack.c.b16 %v1006, %v1000
        %v1547 = vpack.c.b16 %v1007, %v1001
        %v1548 = vpack.c.b16 %v1008, %v1002
        %v1549 = vpack.c.b16 %v1009, %v1003
        %v1550 = vpack.c.b16 %v1010, %v1004
        %v1551 = vpack.c.b16 %v1011, %v1005
        %v1552 = vpack.c.b16 %v1018, %v1012
        %v1553 = vpack.c.b16 %v1019, %v1013
        %v1554 = vpack.c.b16 %v1020, %v1014
        %v1555 = vpack.c.b16 %v1021, %v1015
        %v1556 = vpack.c.b16 %v1022, %v1016
        %v1557 = vpack.c.b16 %v1023, %v1017
        %v1558 = vpack.c.b16 %v1030, %v1024
        %v1559 = vpack.c.b16 %v1031, %v1025
        %v1560 = vpack.c.b16 %v1032, %v1026
        %v1561 = vpack.c.b16 %v1033, %v1027
        %v1562 = vpack.c.b16 %v1034, %v1028
        %v1563 = vpack.c.b16 %v1035, %v1029
        %v1564 = vpack.c.b16 %v1042, %v1036
        %v1565 = vpack.c.b16 %v1043, %v1037
        %v1566 = vpack.c.b16 %v1044, %v1038
        %v1567 = vpack.c.b16 %v1045, %v1039
        %v1568 = vpack.c.b16 %v1046, %v1040
        %v1569 = vpack.c.b16 %v1047, %v1041
        %v1570 = vpack.c.b16 %v1054, %v1048
        %v1571 = vpack.c.b16 %v1055, %v1049
        %v1572 = vpack.c.b16 %v1056, %v1050
        %v1573 = vpack.c.b16 %v1057, %v1051
        %v1574 = vpack.c.b16 %v1058, %v1052
        %v1575 = vpack.c.b16 %v1059, %v1053
        %v1576 = vpack.c.b16 %v1066, %v1060
        %v1577 = vpack.c.b16 %v1067, %v1061
        %v1578 = vpack.c.b16 %v1068, %v1062
        %v1579 = vpack.c.b16 %v1069, %v1063
        %v1580 = vpack.c.b16 %v1070, %v1064
        %v1581 = vpack.c.b16 %v1071, %v1065
        %v1582 = vpack.c.b16 %v1078, %v1072
        %v1583 = vpack.c.b16 %v1079, %v1073
        %v1584 = vpack.c.b16 %v1080, %v1074
        %v1585 = vpack.c.b16 %v1081, %v1075
        %v1586 = vpack.c.b16 %v1082, %v1076
        %v1587 = vpack.c.b16 %v1083, %v1077
        %v1588 = vpack.c.b16 %v1090, %v1084
        %v1589 = vpack.c.b16 %v1091, %v1085
        %v1590 = vpack.c.b16 %v1092, %v1086
        %v1591 = vpack.c.b16 %v1093, %v1087
        %v1592 = vpack.c.b16 %v1094, %v1088
        %v1593 = vpack.c.b16 %v1095, %v1089
        %v1594 = vpack.c.b16 %v1102, %v1096
        %v1595 = vpack.c.b16 %v1103, %v1097
        %v1596 = vpack.c.b16 %v1104, %v1098
        %v1597 = vpack.c.b16 %v1105, %v1099
        %v1598 = vpack.c.b16 %v1106, %v1100
        %v1599 = vpack.c.b16 %v1107, %v1101
        %v1600 = vpack.c.b16 %v1114, %v1108
        %v1601 = vpack.c.b16 %v1115, %v1109
        %v1602 = vpack.c.b16 %v1116, %v1110
        %v1603 = vpack.c.b16 %v1117, %v1111
        %v1604 = vpack.c.b16 %v1118, %v1112
        %v1605 = vpack.c.b16 %v1119, %v1113
        %v1606 = vpack.c.b16 %v1126, %v1120
        %v1607 = vpack.c.b16 %v1127, %v1121
        %v1608 = vpack.c.b16 %v1128, %v1122
        %v1609 = vpack.c.b16 %v1129, %v1123
        %v1610 = vpack.c.b16 %v1130, %v1124
        %v1611 = vpack.c.b16 %v1131, %v1125
        %v1612 = vpack.c.b16 %v1138, %v1132
        %v1613 = vpack.c.b16 %v1139, %v1133
        %v1614 = vpack.c.b16 %v1140, %v1134
        %v1615 = vpack.c.b16 %v1141, %v1135
        %v1616 = vpack.c.b16 %v1142, %v1136
        %v1617 = vpack.c.b16 %v1143, %v1137
        %v1618 = vpack.c.b16 %v1150, %v1144
        %v1619 = vpack.c.b16 %v1151, %v1145
        %v1620 = vpack.c.b16 %v1152, %v1146
        %v1621 = vpack.c.b16 %v1153, %v1147
        %v1622 = vpack.c.b16 %v1154, %v1148
        %v1623 = vpack.c.b16 %v1155, %v1149
        %v1624 = vpack.c.b16 %v1162, %v1156
        %v1625 = vpack.c.b16 %v1163, %v1157
        %v1626 = vpack.c.b16 %v1164, %v1158
        %v1627 = vpack.c.b16 %v1165, %v1159
        %v1628 = vpack.c.b16 %v1166, %v1160
        %v1629 = vpack.c.b16 %v1167, %v1161
        %v1630 = vpack.c.b16 %v1174, %v1168
        %v1631 = vpack.c.b16 %v1175, %v1169
        %v1632 = vpack.c.b16 %v1176, %v1170
        %v1633 = vpack.c.b16 %v1177, %v1171
        %v1634 = vpack.c.b16 %v1178, %v1172
        %v1635 = vpack.c.b16 %v1179, %v1173
        %v1636 = vpack.c.b16 %v1186, %v1180
        %v1637 = vpack.c.b16 %v1187, %v1181
        %v1638 = vpack.c.b16 %v1188, %v1182
        %v1639 = vpack.c.b16 %v1189, %v1183
        %v1640 = vpack.c.b16 %v1190, %v1184
        %v1641 = vpack.c.b16 %v1191, %v1185
        %v1642 = vpack.c.b16 %v1198, %v1192
        %v1643 = vpack.c.b16 %v1199, %v1193
        %v1644 = vpack.c.b16 %v1200, %v1194
        %v1645 = vpack.c.b16 %v1201, %v1195
        %v1646 = vpack.c.b16 %v1202, %v1196
        %v1647 = vpack.c.b16 %v1203, %v1197
        %v1648 = vpack.c.b16 %v1210, %v1204
        %v1649 = vpack.c.b16 %v1211, %v1205
        %v1650 = vpack.c.b16 %v1212, %v1206
        %v1651 = vpack.c.b16 %v1213, %v1207
        %v1652 = vpack.c.b16 %v1214, %v1208
        %v1653 = vpack.c.b16 %v1215, %v1209
        %v1654 = vpack.c.b16 %v1222, %v1216
        %v1655 = vpack.c.b16 %v1223, %v1217
        %v1656 = vpack.c.b16 %v1224, %v1218
        %v1657 = vpack.c.b16 %v1225, %v1219
        %v1658 = vpack.c.b16 %v1226, %v1220
        %v1659 = vpack.c.b16 %v1227, %v1221
        %v1660 = vpack.c.b16 %v1234, %v1228
        %v1661 = vpack.c.b16 %v1235, %v1229
        %v1662 = vpack.c.b16 %v1236, %v1230
        %v1663 = vpack.c.b16 %v1237, %v1231
        %v1664 = vpack.c.b16 %v1238, %v1232
        %v1665 = vpack.c.b16 %v1239, %v1233
        %v1666 = vpack.c.b16 %v1246, %v1240
        %v1667 = vpack.c.b16 %v1247, %v1241
        %v1668 = vpack.c.b16 %v1248, %v1242
        %v1669 = vpack.c.b16 %v1249, %v1243
        %v1670 = vpack.c.b16 %v1250, %v1244
        %v1671 = vpack.c.b16 %v1251, %v1245
        %v1672 = vpack.c.b16 %v1258, %v1252
        %v1673 = vpack.c.b16 %v1259, %v1253
        %v1674 = vpack.c.b16 %v1260, %v1254
        %v1675 = vpack.c.b16 %v1261, %v1255
        %v1676 = vpack.c.b16 %v1262, %v1256
        %v1677 = vpack.c.b16 %v1263, %v1257
        %v1678 = vpack.c.b16 %v1270, %v1264
        %v1679 = vpack.c.b16 %v1271, %v1265
        %v1680 = vpack.c.b16 %v1272, %v1266
        %v1681 = vpack.c.b16 %v1273, %v1267
        %v1682 = vpack.c.b16 %v1274, %v1268
        %v1683 = vpack.c.b16 %v1275, %v1269
        %v1684 = vpack.c.b16 %v1282, %v1276
        %v1685 = vpack.c.b16 %v1283, %v1277
        %v1686 = vpack.c.b16 %v1284, %v1278
        %v1687 = vpack.c.b16 %v1285, %v1279
        %v1688 = vpack.c.b16 %v1286, %v1280
        %v1689 = vpack.c.b16 %v1287, %v1281
        %v1690 = vpack.c.b16 %v1294, %v1288
        %v1691 = vpack.c.b16 %v1295, %v1289
        %v1692 = vpack.c.b16 %v1296, %v1290
        %v1693 = vpack.c.b16 %v1297, %v1291
        %v1694 = vpack.c.b16 %v1298, %v1292
        %v1695 = vpack.c.b16 %v1299, %v1293
        %v1696 = vpack.c.b16 %v1306, %v1300
        %v1697 = vpack.c.b16 %v1307, %v1301
        %v1698 = vpack.c.b16 %v1308, %v1302
        %v1699 = vpack.c.b16 %v1309, %v1303
        %v1700 = vpack.c.b16 %v1310, %v1304
        %v1701 = vpack.c.b16 %v1311, %v1305
        %v1702 = vpack.c.b16 %v1318, %v1312
        %v1703 = vpack.c.b16 %v1319, %v1313
        %v1704 = vpack.c.b16 %v1320, %v1314
        %v1705 = vpack.c.b16 %v1321, %v1315
        %v1706 = vpack.c.b16 %v1322, %v1316
        %v1707 = vpack.c.b16 %v1323, %v1317
        %v1708 = vpack.c.b16 %v1330, %v1324
        %v1709 = vpack.c.b16 %v1331, %v1325
        %v1710 = vpack.c.b16 %v1332, %v1326
        %v1711 = vpack.c.b16 %v1333, %v1327
        %v1712 = vpack.c.b16 %v1334, %v1328
        %v1713 = vpack.c.b16 %v1335, %v1329
        %v1714 = vpack.c.b16 %v1342, %v1336
        %v1715 = vpack.c.b16 %v1343, %v1337
        %v1716 = vpack.c.b16 %v1344, %v1338
        %v1717 = vpack.c.b16 %v1345, %v1339
        %v1718 = vpack.c.b16 %v1346, %v1340
        %v1719 = vpack.c.b16 %v1347, %v1341
        %v1720 = vpack.c.b16 %v1354, %v1348
        %v1721 = vpack.c.b16 %v1355, %v1349
        %v1722 = vpack.c.b16 %v1356, %v1350
        %v1723 = vpack.c.b16 %v1357, %v1351
        %v1724 = vpack.c.b16 %v1358, %v1352
        %v1725 = vpack.c.b16 %v1359, %v1353
        %v1726 = vpack.c.b16 %v1366, %v1360
        %v1727 = vpack.c.b16 %v1367, %v1361
        %v1728 = vpack.c.b16 %v1368, %v1362
        %v1729 = vpack.c.b16 %v1369, %v1363
        %v1730 = vpack.c.b16 %v1370, %v1364
        %v1731 = vpack.c.b16 %v1371, %v1365
        %v1732 = vpack.c.b16 %v1378, %v1372
        %v1733 = vpack.c.b16 %v1379, %v1373
        %v1734 = vpack.c.b16 %v1380, %v1374
        %v1735 = vpack.c.b16 %v1381, %v1375
        %v1736 = vpack.c.b16 %v1382, %v1376
        %v1737 = vpack.c.b16 %v1383, %v1377
        %v1738 = vpack.c.b16 %v1390, %v1384
        %v1739 = vpack.c.b16 %v1391, %v1385
        %v1740 = vpack.c.b16 %v1392, %v1386
        %v1741 = vpack.c.b16 %v1393, %v1387
        %v1742 = vpack.c.b16 %v1394, %v1388
        %v1743 = vpack.c.b16 %v1395, %v1389
        %v1744 = vpack.c.b16 %v1402, %v1396
        %v1745 = vpack.c.b16 %v1403, %v1397
        %v1746 = vpack.c.b16 %v1404, %v1398
        %v1747 = vpack.c.b16 %v1405, %v1399
        %v1748 = vpack.c.b16 %v1406, %v1400
        %v1749 = vpack.c.b16 %v1407, %v1401
        %v1750 = vpack.c.b16 %v1414, %v1408
        %v1751 = vpack.c.b16 %v1415, %v1409
        %v1752 = vpack.c.b16 %v1416, %v1410
        %v1753 = vpack.c.b16 %v1417, %v1411
        %v1754 = vpack.c.b16 %v1418, %v1412
        %v1755 = vpack.c.b16 %v1419, %v1413
        %v1756 = vpack.c.b16 %v1426, %v1420
        %v1757 = vpack.c.b16 %v1427, %v1421
        %v1758 = vpack.c.b16 %v1428, %v1422
        %v1759 = vpack.c.b16 %v1429, %v1423
        %v1760 = vpack.c.b16 %v1430, %v1424
        %v1761 = vpack.c.b16 %v1431, %v1425
        %v1762 = vpack.c.b16 %v1438, %v1432
        %v1763 = vpack.c.b16 %v1439, %v1433
        %v1764 = vpack.c.b16 %v1440, %v1434
        %v1765 = vpack.c.b16 %v1441, %v1435
        %v1766 = vpack.c.b16 %v1442, %v1436
        %v1767 = vpack.c.b16 %v1443, %v1437
        %v1768 = vpack.c.b16 %v1450, %v1444
        %v1769 = vpack.c.b16 %v1451, %v1445
        %v1770 = vpack.c.b16 %v1452, %v1446
        %v1771 = vpack.c.b16 %v1453, %v1447
        %v1772 = vpack.c.b16 %v1454, %v1448
        %v1773 = vpack.c.b16 %v1455, %v1449
        %v1774 = vpack.c.b16 %v1462, %v1456
        %v1775 = vpack.c.b16 %v1463, %v1457
        %v1776 = vpack.c.b16 %v1464, %v1458
        %v1777 = vpack.c.b16 %v1465, %v1459
        %v1778 = vpack.c.b16 %v1466, %v1460
        %v1779 = vpack.c.b16 %v1467, %v1461
        %v1780 = vpack.c.b16 %v1474, %v1468
        %v1781 = vpack.c.b16 %v1475, %v1469
        %v1782 = vpack.c.b16 %v1476, %v1470
        %v1783 = vpack.c.b16 %v1477, %v1471
        %v1784 = vpack.c.b16 %v1478, %v1472
        %v1785 = vpack.c.b16 %v1479, %v1473
        %v1786 = vpack.c.b16 %v1486, %v1480
        %v1787 = vpack.c.b16 %v1487, %v1481
        %v1788 = vpack.c.b16 %v1488, %v1482
        %v1789 = vpack.c.b16 %v1489, %v1483
        %v1790 = vpack.c.b16 %v1490, %v1484
        %v1791 = vpack.c.b16 %v1491, %v1485
        %v1792 = vpack.c.b16 %v1498, %v1492
        %v1793 = vpack.c.b16 %v1499, %v1493
        %v1794 = vpack.c.b16 %v1500, %v1494
        %v1795 = vpack.c.b16 %v1501, %v1495
        %v1796 = vpack.c.b16 %v1502, %v1496
        %v1797 = vpack.c.b16 %v1503, %v1497
        %v1798 = vpack.c.b16 %v1510, %v1504
        %v1799 = vpack.c.b16 %v1511, %v1505
        %v1800 = vpack.c.b16 %v1512, %v1506
        %v1801 = vpack.c.b16 %v1513, %v1507
        %v1802 = vpack.c.b16 %v1514, %v1508
        %v1803 = vpack.c.b16 %v1515, %v1509
        %2092 = vmatpush.bf16.msra.mxu0 %v1558
        %2093 = vmatpush.bf16.msra.mxu0 %v1552
        %2094 = vmatpush.bf16.msra.mxu0 %v1546
        %2095 = vmatpush.bf16.msra.mxu0 %v1540
        %2096 = vmatpush.bf16.msra.mxu0 %v1534
        %2097 = vmatpush.bf16.msra.mxu0 %v1528
        %2098 = vmatpush.bf16.msra.mxu0 %v1522
        %2099 = vmatpush.bf16.msra.mxu0 %v1516
        %2100 = vmatmul.bf16.gmra.mxu0 %v345
        %v2101 = vpop.f32.mrf.mxu0
        %v2102 = vadd.f32 %v640, %v2101
        %v2103 = vpop.f32.mrf.mxu0
        %v2104 = vadd.f32 %v640, %v2103
        %2105 = vdwg.mxu0
        %2106 = vmatpush.bf16.msra.mxu0 %v1606
        %2107 = vmatpush.bf16.msra.mxu0 %v1600
        %2108 = vmatpush.bf16.msra.mxu0 %v1594
        %2109 = vmatpush.bf16.msra.mxu0 %v1588
        %2110 = vmatpush.bf16.msra.mxu0 %v1582
        %2111 = vmatpush.bf16.msra.mxu0 %v1576
        %2112 = vmatpush.bf16.msra.mxu0 %v1570
        %2113 = vmatpush.bf16.msra.mxu0 %v1564
        %2114 = vmatmul.bf16.gmra.mxu0 %v346
        %v2115 = vpop.f32.mrf.mxu0
        %v2116 = vadd.f32 %v2102, %v2115
        %v2117 = vpop.f32.mrf.mxu0
        %v2118 = vadd.f32 %v2104, %v2117
        %2119 = vdwg.mxu0
        %2120 = vmatpush.bf16.msra.mxu0 %v1654
        %2121 = vmatpush.bf16.msra.mxu0 %v1648
        %2122 = vmatpush.bf16.msra.mxu0 %v1642
        %2123 = vmatpush.bf16.msra.mxu0 %v1636
        %2124 = vmatpush.bf16.msra.mxu0 %v1630
        %2125 = vmatpush.bf16.msra.mxu0 %v1624
        %2126 = vmatpush.bf16.msra.mxu0 %v1618
        %2127 = vmatpush.bf16.msra.mxu0 %v1612
        %2128 = vmatmul.bf16.gmra.mxu0 %v347
        %v2129 = vpop.f32.mrf.mxu0
        %v2130 = vadd.f32 %v2116, %v2129
        %v2131 = vpop.f32.mrf.mxu0
        %v2132 = vadd.f32 %v2118, %v2131
        %2133 = vdwg.mxu0
        %2134 = vmatpush.bf16.msra.mxu0 %v1702
        %2135 = vmatpush.bf16.msra.mxu0 %v1696
        %2136 = vmatpush.bf16.msra.mxu0 %v1690
        %2137 = vmatpush.bf16.msra.mxu0 %v1684
        %2138 = vmatpush.bf16.msra.mxu0 %v1678
        %2139 = vmatpush.bf16.msra.mxu0 %v1672
        %2140 = vmatpush.bf16.msra.mxu0 %v1666
        %2141 = vmatpush.bf16.msra.mxu0 %v1660
        %2142 = vmatmul.bf16.gmra.mxu0 %v348
        %v2143 = vpop.f32.mrf.mxu0
        %v2144 = vadd.f32 %v2130, %v2143
        %v2145 = vpop.f32.mrf.mxu0
        %v2146 = vadd.f32 %v2132, %v2145
        %2147 = vdwg.mxu0
        %2148 = vmatpush.bf16.msra.mxu0 %v1750
        %2149 = vmatpush.bf16.msra.mxu0 %v1744
        %2150 = vmatpush.bf16.msra.mxu0 %v1738
        %2151 = vmatpush.bf16.msra.mxu0 %v1732
        %2152 = vmatpush.bf16.msra.mxu0 %v1726
        %2153 = vmatpush.bf16.msra.mxu0 %v1720
        %2154 = vmatpush.bf16.msra.mxu0 %v1714
        %2155 = vmatpush.bf16.msra.mxu0 %v1708
        %2156 = vmatmul.bf16.gmra.mxu0 %v349
        %v2157 = vpop.f32.mrf.mxu0
        %v2158 = vadd.f32 %v2144, %v2157
        %v2159 = vpop.f32.mrf.mxu0
        %v2160 = vadd.f32 %v2146, %v2159
        %2161 = vdwg.mxu0
        %2162 = vmatpush.bf16.msra.mxu0 %v1798
        %2163 = vmatpush.bf16.msra.mxu0 %v1792
        %2164 = vmatpush.bf16.msra.mxu0 %v1786
        %2165 = vmatpush.bf16.msra.mxu0 %v1780
        %2166 = vmatpush.bf16.msra.mxu0 %v1774
        %2167 = vmatpush.bf16.msra.mxu0 %v1768
        %2168 = vmatpush.bf16.msra.mxu0 %v1762
        %2169 = vmatpush.bf16.msra.mxu0 %v1756
        %2170 = vmatmul.bf16.gmra.mxu0 %v350
        %v2171 = vpop.f32.mrf.mxu0
        %v2172 = vadd.f32 %v2158, %v2171
        %v2173 = vpop.f32.mrf.mxu0
        %v2174 = vadd.f32 %v2160, %v2173
        %2175 = vdwg.mxu0
        %2176 = vmatpush.bf16.msra.mxu0 %v1559
        %2177 = vmatpush.bf16.msra.mxu0 %v1553
        %2178 = vmatpush.bf16.msra.mxu0 %v1547
        %2179 = vmatpush.bf16.msra.mxu0 %v1541
        %2180 = vmatpush.bf16.msra.mxu0 %v1535
        %2181 = vmatpush.bf16.msra.mxu0 %v1529
        %2182 = vmatpush.bf16.msra.mxu0 %v1523
        %2183 = vmatpush.bf16.msra.mxu0 %v1517
        %2184 = vmatmul.bf16.gmra.mxu0 %v345
        %v2185 = vpop.f32.mrf.mxu0
        %v2186 = vadd.f32 %v641, %v2185
        %v2187 = vpop.f32.mrf.mxu0
        %v2188 = vadd.f32 %v641, %v2187
        %2189 = vdwg.mxu0
        %2190 = vmatpush.bf16.msra.mxu0 %v1607
        %2191 = vmatpush.bf16.msra.mxu0 %v1601
        %2192 = vmatpush.bf16.msra.mxu0 %v1595
        %2193 = vmatpush.bf16.msra.mxu0 %v1589
        %2194 = vmatpush.bf16.msra.mxu0 %v1583
        %2195 = vmatpush.bf16.msra.mxu0 %v1577
        %2196 = vmatpush.bf16.msra.mxu0 %v1571
        %2197 = vmatpush.bf16.msra.mxu0 %v1565
        %2198 = vmatmul.bf16.gmra.mxu0 %v346
        %v2199 = vpop.f32.mrf.mxu0
        %v2200 = vadd.f32 %v2186, %v2199
        %v2201 = vpop.f32.mrf.mxu0
        %v2202 = vadd.f32 %v2188, %v2201
        %2203 = vdwg.mxu0
        %2204 = vmatpush.bf16.msra.mxu0 %v1655
        %2205 = vmatpush.bf16.msra.mxu0 %v1649
        %2206 = vmatpush.bf16.msra.mxu0 %v1643
        %2207 = vmatpush.bf16.msra.mxu0 %v1637
        %2208 = vmatpush.bf16.msra.mxu0 %v1631
        %2209 = vmatpush.bf16.msra.mxu0 %v1625
        %2210 = vmatpush.bf16.msra.mxu0 %v1619
        %2211 = vmatpush.bf16.msra.mxu0 %v1613
        %2212 = vmatmul.bf16.gmra.mxu0 %v347
        %v2213 = vpop.f32.mrf.mxu0
        %v2214 = vadd.f32 %v2200, %v2213
        %v2215 = vpop.f32.mrf.mxu0
        %v2216 = vadd.f32 %v2202, %v2215
        %2217 = vdwg.mxu0
        %2218 = vmatpush.bf16.msra.mxu0 %v1703
        %2219 = vmatpush.bf16.msra.mxu0 %v1697
        %2220 = vmatpush.bf16.msra.mxu0 %v1691
        %2221 = vmatpush.bf16.msra.mxu0 %v1685
        %2222 = vmatpush.bf16.msra.mxu0 %v1679
        %2223 = vmatpush.bf16.msra.mxu0 %v1673
        %2224 = vmatpush.bf16.msra.mxu0 %v1667
        %2225 = vmatpush.bf16.msra.mxu0 %v1661
        %2226 = vmatmul.bf16.gmra.mxu0 %v348
        %v2227 = vpop.f32.mrf.mxu0
        %v2228 = vadd.f32 %v2214, %v2227
        %v2229 = vpop.f32.mrf.mxu0
        %v2230 = vadd.f32 %v2216, %v2229
        %2231 = vdwg.mxu0
        %2232 = vmatpush.bf16.msra.mxu0 %v1751
        %2233 = vmatpush.bf16.msra.mxu0 %v1745
        %2234 = vmatpush.bf16.msra.mxu0 %v1739
        %2235 = vmatpush.bf16.msra.mxu0 %v1733
        %2236 = vmatpush.bf16.msra.mxu0 %v1727
        %2237 = vmatpush.bf16.msra.mxu0 %v1721
        %2238 = vmatpush.bf16.msra.mxu0 %v1715
        %2239 = vmatpush.bf16.msra.mxu0 %v1709
        %2240 = vmatmul.bf16.gmra.mxu0 %v349
        %v2241 = vpop.f32.mrf.mxu0
        %v2242 = vadd.f32 %v2228, %v2241
        %v2243 = vpop.f32.mrf.mxu0
        %v2244 = vadd.f32 %v2230, %v2243
        %2245 = vdwg.mxu0
        %2246 = vmatpush.bf16.msra.mxu0 %v1799
        %2247 = vmatpush.bf16.msra.mxu0 %v1793
        %2248 = vmatpush.bf16.msra.mxu0 %v1787
        %2249 = vmatpush.bf16.msra.mxu0 %v1781
        %2250 = vmatpush.bf16.msra.mxu0 %v1775
        %2251 = vmatpush.bf16.msra.mxu0 %v1769
        %2252 = vmatpush.bf16.msra.mxu0 %v1763
        %2253 = vmatpush.bf16.msra.mxu0 %v1757
        %2254 = vmatmul.bf16.gmra.mxu0 %v350
        %v2255 = vpop.f32.mrf.mxu0
        %v2256 = vadd.f32 %v2242, %v2255
        %v2257 = vpop.f32.mrf.mxu0
        %v2258 = vadd.f32 %v2244, %v2257
        %2259 = vdwg.mxu0
        %2260 = vmatpush.bf16.msra.mxu0 %v1560
        %2261 = vmatpush.bf16.msra.mxu0 %v1554
        %2262 = vmatpush.bf16.msra.mxu0 %v1548
        %2263 = vmatpush.bf16.msra.mxu0 %v1542
        %2264 = vmatpush.bf16.msra.mxu0 %v1536
        %2265 = vmatpush.bf16.msra.mxu0 %v1530
        %2266 = vmatpush.bf16.msra.mxu0 %v1524
        %2267 = vmatpush.bf16.msra.mxu0 %v1518
        %2268 = vmatmul.bf16.gmra.mxu0 %v345
        %v2269 = vpop.f32.mrf.mxu0
        %v2270 = vadd.f32 %v642, %v2269
        %v2271 = vpop.f32.mrf.mxu0
        %v2272 = vadd.f32 %v642, %v2271
        %2273 = vdwg.mxu0
        %2274 = vmatpush.bf16.msra.mxu0 %v1608
        %2275 = vmatpush.bf16.msra.mxu0 %v1602
        %2276 = vmatpush.bf16.msra.mxu0 %v1596
        %2277 = vmatpush.bf16.msra.mxu0 %v1590
        %2278 = vmatpush.bf16.msra.mxu0 %v1584
        %2279 = vmatpush.bf16.msra.mxu0 %v1578
        %2280 = vmatpush.bf16.msra.mxu0 %v1572
        %2281 = vmatpush.bf16.msra.mxu0 %v1566
        %2282 = vmatmul.bf16.gmra.mxu0 %v346
        %v2283 = vpop.f32.mrf.mxu0
        %v2284 = vadd.f32 %v2270, %v2283
        %v2285 = vpop.f32.mrf.mxu0
        %v2286 = vadd.f32 %v2272, %v2285
        %2287 = vdwg.mxu0
        %2288 = vmatpush.bf16.msra.mxu0 %v1656
        %2289 = vmatpush.bf16.msra.mxu0 %v1650
        %2290 = vmatpush.bf16.msra.mxu0 %v1644
        %2291 = vmatpush.bf16.msra.mxu0 %v1638
        %2292 = vmatpush.bf16.msra.mxu0 %v1632
        %2293 = vmatpush.bf16.msra.mxu0 %v1626
        %2294 = vmatpush.bf16.msra.mxu0 %v1620
        %2295 = vmatpush.bf16.msra.mxu0 %v1614
        %2296 = vmatmul.bf16.gmra.mxu0 %v347
        %v2297 = vpop.f32.mrf.mxu0
        %v2298 = vadd.f32 %v2284, %v2297
        %v2299 = vpop.f32.mrf.mxu0
        %v2300 = vadd.f32 %v2286, %v2299
        %2301 = vdwg.mxu0
        %2302 = vmatpush.bf16.msra.mxu0 %v1704
        %2303 = vmatpush.bf16.msra.mxu0 %v1698
        %2304 = vmatpush.bf16.msra.mxu0 %v1692
        %2305 = vmatpush.bf16.msra.mxu0 %v1686
        %2306 = vmatpush.bf16.msra.mxu0 %v1680
        %2307 = vmatpush.bf16.msra.mxu0 %v1674
        %2308 = vmatpush.bf16.msra.mxu0 %v1668
        %2309 = vmatpush.bf16.msra.mxu0 %v1662
        %2310 = vmatmul.bf16.gmra.mxu0 %v348
        %v2311 = vpop.f32.mrf.mxu0
        %v2312 = vadd.f32 %v2298, %v2311
        %v2313 = vpop.f32.mrf.mxu0
        %v2314 = vadd.f32 %v2300, %v2313
        %2315 = vdwg.mxu0
        %2316 = vmatpush.bf16.msra.mxu0 %v1752
        %2317 = vmatpush.bf16.msra.mxu0 %v1746
        %2318 = vmatpush.bf16.msra.mxu0 %v1740
        %2319 = vmatpush.bf16.msra.mxu0 %v1734
        %2320 = vmatpush.bf16.msra.mxu0 %v1728
        %2321 = vmatpush.bf16.msra.mxu0 %v1722
        %2322 = vmatpush.bf16.msra.mxu0 %v1716
        %2323 = vmatpush.bf16.msra.mxu0 %v1710
        %2324 = vmatmul.bf16.gmra.mxu0 %v349
        %v2325 = vpop.f32.mrf.mxu0
        %v2326 = vadd.f32 %v2312, %v2325
        %v2327 = vpop.f32.mrf.mxu0
        %v2328 = vadd.f32 %v2314, %v2327
        %2329 = vdwg.mxu0
        %2330 = vmatpush.bf16.msra.mxu0 %v1800
        %2331 = vmatpush.bf16.msra.mxu0 %v1794
        %2332 = vmatpush.bf16.msra.mxu0 %v1788
        %2333 = vmatpush.bf16.msra.mxu0 %v1782
        %2334 = vmatpush.bf16.msra.mxu0 %v1776
        %2335 = vmatpush.bf16.msra.mxu0 %v1770
        %2336 = vmatpush.bf16.msra.mxu0 %v1764
        %2337 = vmatpush.bf16.msra.mxu0 %v1758
        %2338 = vmatmul.bf16.gmra.mxu0 %v350
        %v2339 = vpop.f32.mrf.mxu0
        %v2340 = vadd.f32 %v2326, %v2339
        %v2341 = vpop.f32.mrf.mxu0
        %v2342 = vadd.f32 %v2328, %v2341
        %2343 = vdwg.mxu0
        %2344 = vmatpush.bf16.msra.mxu0 %v1561
        %2345 = vmatpush.bf16.msra.mxu0 %v1555
        %2346 = vmatpush.bf16.msra.mxu0 %v1549
        %2347 = vmatpush.bf16.msra.mxu0 %v1543
        %2348 = vmatpush.bf16.msra.mxu0 %v1537
        %2349 = vmatpush.bf16.msra.mxu0 %v1531
        %2350 = vmatpush.bf16.msra.mxu0 %v1525
        %2351 = vmatpush.bf16.msra.mxu0 %v1519
        %2352 = vmatmul.bf16.gmra.mxu0 %v345
        %v2353 = vpop.f32.mrf.mxu0
        %v2354 = vadd.f32 %v643, %v2353
        %v2355 = vpop.f32.mrf.mxu0
        %v2356 = vadd.f32 %v643, %v2355
        %2357 = vdwg.mxu0
        %2358 = vmatpush.bf16.msra.mxu0 %v1609
        %2359 = vmatpush.bf16.msra.mxu0 %v1603
        %2360 = vmatpush.bf16.msra.mxu0 %v1597
        %2361 = vmatpush.bf16.msra.mxu0 %v1591
        %2362 = vmatpush.bf16.msra.mxu0 %v1585
        %2363 = vmatpush.bf16.msra.mxu0 %v1579
        %2364 = vmatpush.bf16.msra.mxu0 %v1573
        %2365 = vmatpush.bf16.msra.mxu0 %v1567
        %2366 = vmatmul.bf16.gmra.mxu0 %v346
        %v2367 = vpop.f32.mrf.mxu0
        %v2368 = vadd.f32 %v2354, %v2367
        %v2369 = vpop.f32.mrf.mxu0
        %v2370 = vadd.f32 %v2356, %v2369
        %2371 = vdwg.mxu0
        %2372 = vmatpush.bf16.msra.mxu0 %v1657
        %2373 = vmatpush.bf16.msra.mxu0 %v1651
        %2374 = vmatpush.bf16.msra.mxu0 %v1645
        %2375 = vmatpush.bf16.msra.mxu0 %v1639
        %2376 = vmatpush.bf16.msra.mxu0 %v1633
        %2377 = vmatpush.bf16.msra.mxu0 %v1627
        %2378 = vmatpush.bf16.msra.mxu0 %v1621
        %2379 = vmatpush.bf16.msra.mxu0 %v1615
        %2380 = vmatmul.bf16.gmra.mxu0 %v347
        %v2381 = vpop.f32.mrf.mxu0
        %v2382 = vadd.f32 %v2368, %v2381
        %v2383 = vpop.f32.mrf.mxu0
        %v2384 = vadd.f32 %v2370, %v2383
        %2385 = vdwg.mxu0
        %2386 = vmatpush.bf16.msra.mxu0 %v1705
        %2387 = vmatpush.bf16.msra.mxu0 %v1699
        %2388 = vmatpush.bf16.msra.mxu0 %v1693
        %2389 = vmatpush.bf16.msra.mxu0 %v1687
        %2390 = vmatpush.bf16.msra.mxu0 %v1681
        %2391 = vmatpush.bf16.msra.mxu0 %v1675
        %2392 = vmatpush.bf16.msra.mxu0 %v1669
        %2393 = vmatpush.bf16.msra.mxu0 %v1663
        %2394 = vmatmul.bf16.gmra.mxu0 %v348
        %v2395 = vpop.f32.mrf.mxu0
        %v2396 = vadd.f32 %v2382, %v2395
        %v2397 = vpop.f32.mrf.mxu0
        %v2398 = vadd.f32 %v2384, %v2397
        %2399 = vdwg.mxu0
        %2400 = vmatpush.bf16.msra.mxu0 %v1753
        %2401 = vmatpush.bf16.msra.mxu0 %v1747
        %2402 = vmatpush.bf16.msra.mxu0 %v1741
        %2403 = vmatpush.bf16.msra.mxu0 %v1735
        %2404 = vmatpush.bf16.msra.mxu0 %v1729
        %2405 = vmatpush.bf16.msra.mxu0 %v1723
        %2406 = vmatpush.bf16.msra.mxu0 %v1717
        %2407 = vmatpush.bf16.msra.mxu0 %v1711
        %2408 = vmatmul.bf16.gmra.mxu0 %v349
        %v2409 = vpop.f32.mrf.mxu0
        %v2410 = vadd.f32 %v2396, %v2409
        %v2411 = vpop.f32.mrf.mxu0
        %v2412 = vadd.f32 %v2398, %v2411
        %2413 = vdwg.mxu0
        %2414 = vmatpush.bf16.msra.mxu0 %v1801
        %2415 = vmatpush.bf16.msra.mxu0 %v1795
        %2416 = vmatpush.bf16.msra.mxu0 %v1789
        %2417 = vmatpush.bf16.msra.mxu0 %v1783
        %2418 = vmatpush.bf16.msra.mxu0 %v1777
        %2419 = vmatpush.bf16.msra.mxu0 %v1771
        %2420 = vmatpush.bf16.msra.mxu0 %v1765
        %2421 = vmatpush.bf16.msra.mxu0 %v1759
        %2422 = vmatmul.bf16.gmra.mxu0 %v350
        %v2423 = vpop.f32.mrf.mxu0
        %v2424 = vadd.f32 %v2410, %v2423
        %v2425 = vpop.f32.mrf.mxu0
        %v2426 = vadd.f32 %v2412, %v2425
        %2427 = vdwg.mxu0
        %2428 = vmatpush.bf16.msra.mxu0 %v1562
        %2429 = vmatpush.bf16.msra.mxu0 %v1556
        %2430 = vmatpush.bf16.msra.mxu0 %v1550
        %2431 = vmatpush.bf16.msra.mxu0 %v1544
        %2432 = vmatpush.bf16.msra.mxu0 %v1538
        %2433 = vmatpush.bf16.msra.mxu0 %v1532
        %2434 = vmatpush.bf16.msra.mxu0 %v1526
        %2435 = vmatpush.bf16.msra.mxu0 %v1520
        %2436 = vmatmul.bf16.gmra.mxu0 %v345
        %v2437 = vpop.f32.mrf.mxu0
        %v2438 = vadd.f32 %v644, %v2437
        %v2439 = vpop.f32.mrf.mxu0
        %v2440 = vadd.f32 %v644, %v2439
        %2441 = vdwg.mxu0
        %2442 = vmatpush.bf16.msra.mxu0 %v1610
        %2443 = vmatpush.bf16.msra.mxu0 %v1604
        %2444 = vmatpush.bf16.msra.mxu0 %v1598
        %2445 = vmatpush.bf16.msra.mxu0 %v1592
        %2446 = vmatpush.bf16.msra.mxu0 %v1586
        %2447 = vmatpush.bf16.msra.mxu0 %v1580
        %2448 = vmatpush.bf16.msra.mxu0 %v1574
        %2449 = vmatpush.bf16.msra.mxu0 %v1568
        %2450 = vmatmul.bf16.gmra.mxu0 %v346
        %v2451 = vpop.f32.mrf.mxu0
        %v2452 = vadd.f32 %v2438, %v2451
        %v2453 = vpop.f32.mrf.mxu0
        %v2454 = vadd.f32 %v2440, %v2453
        %2455 = vdwg.mxu0
        %2456 = vmatpush.bf16.msra.mxu0 %v1658
        %2457 = vmatpush.bf16.msra.mxu0 %v1652
        %2458 = vmatpush.bf16.msra.mxu0 %v1646
        %2459 = vmatpush.bf16.msra.mxu0 %v1640
        %2460 = vmatpush.bf16.msra.mxu0 %v1634
        %2461 = vmatpush.bf16.msra.mxu0 %v1628
        %2462 = vmatpush.bf16.msra.mxu0 %v1622
        %2463 = vmatpush.bf16.msra.mxu0 %v1616
        %2464 = vmatmul.bf16.gmra.mxu0 %v347
        %v2465 = vpop.f32.mrf.mxu0
        %v2466 = vadd.f32 %v2452, %v2465
        %v2467 = vpop.f32.mrf.mxu0
        %v2468 = vadd.f32 %v2454, %v2467
        %2469 = vdwg.mxu0
        %2470 = vmatpush.bf16.msra.mxu0 %v1706
        %2471 = vmatpush.bf16.msra.mxu0 %v1700
        %2472 = vmatpush.bf16.msra.mxu0 %v1694
        %2473 = vmatpush.bf16.msra.mxu0 %v1688
        %2474 = vmatpush.bf16.msra.mxu0 %v1682
        %2475 = vmatpush.bf16.msra.mxu0 %v1676
        %2476 = vmatpush.bf16.msra.mxu0 %v1670
        %2477 = vmatpush.bf16.msra.mxu0 %v1664
        %2478 = vmatmul.bf16.gmra.mxu0 %v348
        %v2479 = vpop.f32.mrf.mxu0
        %v2480 = vadd.f32 %v2466, %v2479
        %v2481 = vpop.f32.mrf.mxu0
        %v2482 = vadd.f32 %v2468, %v2481
        %2483 = vdwg.mxu0
        %2484 = vmatpush.bf16.msra.mxu0 %v1754
        %2485 = vmatpush.bf16.msra.mxu0 %v1748
        %2486 = vmatpush.bf16.msra.mxu0 %v1742
        %2487 = vmatpush.bf16.msra.mxu0 %v1736
        %2488 = vmatpush.bf16.msra.mxu0 %v1730
        %2489 = vmatpush.bf16.msra.mxu0 %v1724
        %2490 = vmatpush.bf16.msra.mxu0 %v1718
        %2491 = vmatpush.bf16.msra.mxu0 %v1712
        %2492 = vmatmul.bf16.gmra.mxu0 %v349
        %v2493 = vpop.f32.mrf.mxu0
        %v2494 = vadd.f32 %v2480, %v2493
        %v2495 = vpop.f32.mrf.mxu0
        %v2496 = vadd.f32 %v2482, %v2495
        %2497 = vdwg.mxu0
        %2498 = vmatpush.bf16.msra.mxu0 %v1802
        %2499 = vmatpush.bf16.msra.mxu0 %v1796
        %2500 = vmatpush.bf16.msra.mxu0 %v1790
        %2501 = vmatpush.bf16.msra.mxu0 %v1784
        %2502 = vmatpush.bf16.msra.mxu0 %v1778
        %2503 = vmatpush.bf16.msra.mxu0 %v1772
        %2504 = vmatpush.bf16.msra.mxu0 %v1766
        %2505 = vmatpush.bf16.msra.mxu0 %v1760
        %2506 = vmatmul.bf16.gmra.mxu0 %v350
        %v2507 = vpop.f32.mrf.mxu0
        %v2508 = vadd.f32 %v2494, %v2507
        %v2509 = vpop.f32.mrf.mxu0
        %v2510 = vadd.f32 %v2496, %v2509
        %2511 = vdwg.mxu0
        %2512 = vmatpush.bf16.msra.mxu0 %v1563
        %2513 = vmatpush.bf16.msra.mxu0 %v1557
        %2514 = vmatpush.bf16.msra.mxu0 %v1551
        %2515 = vmatpush.bf16.msra.mxu0 %v1545
        %2516 = vmatpush.bf16.msra.mxu0 %v1539
        %2517 = vmatpush.bf16.msra.mxu0 %v1533
        %2518 = vmatpush.bf16.msra.mxu0 %v1527
        %2519 = vmatpush.bf16.msra.mxu0 %v1521
        %2520 = vmatmul.bf16.gmra.mxu0 %v345
        %v2521 = vpop.f32.mrf.mxu0
        %v2522 = vadd.f32 %v645, %v2521
        %v2523 = vpop.f32.mrf.mxu0
        %v2524 = vadd.f32 %v645, %v2523
        %2525 = vdwg.mxu0
        %2526 = vmatpush.bf16.msra.mxu0 %v1611
        %2527 = vmatpush.bf16.msra.mxu0 %v1605
        %2528 = vmatpush.bf16.msra.mxu0 %v1599
        %2529 = vmatpush.bf16.msra.mxu0 %v1593
        %2530 = vmatpush.bf16.msra.mxu0 %v1587
        %2531 = vmatpush.bf16.msra.mxu0 %v1581
        %2532 = vmatpush.bf16.msra.mxu0 %v1575
        %2533 = vmatpush.bf16.msra.mxu0 %v1569
        %2534 = vmatmul.bf16.gmra.mxu0 %v346
        %v2535 = vpop.f32.mrf.mxu0
        %v2536 = vadd.f32 %v2522, %v2535
        %v2537 = vpop.f32.mrf.mxu0
        %v2538 = vadd.f32 %v2524, %v2537
        %2539 = vdwg.mxu0
        %2540 = vmatpush.bf16.msra.mxu0 %v1659
        %2541 = vmatpush.bf16.msra.mxu0 %v1653
        %2542 = vmatpush.bf16.msra.mxu0 %v1647
        %2543 = vmatpush.bf16.msra.mxu0 %v1641
        %2544 = vmatpush.bf16.msra.mxu0 %v1635
        %2545 = vmatpush.bf16.msra.mxu0 %v1629
        %2546 = vmatpush.bf16.msra.mxu0 %v1623
        %2547 = vmatpush.bf16.msra.mxu0 %v1617
        %2548 = vmatmul.bf16.gmra.mxu0 %v347
        %v2549 = vpop.f32.mrf.mxu0
        %v2550 = vadd.f32 %v2536, %v2549
        %v2551 = vpop.f32.mrf.mxu0
        %v2552 = vadd.f32 %v2538, %v2551
        %2553 = vdwg.mxu0
        %2554 = vmatpush.bf16.msra.mxu0 %v1707
        %2555 = vmatpush.bf16.msra.mxu0 %v1701
        %2556 = vmatpush.bf16.msra.mxu0 %v1695
        %2557 = vmatpush.bf16.msra.mxu0 %v1689
        %2558 = vmatpush.bf16.msra.mxu0 %v1683
        %2559 = vmatpush.bf16.msra.mxu0 %v1677
        %2560 = vmatpush.bf16.msra.mxu0 %v1671
        %2561 = vmatpush.bf16.msra.mxu0 %v1665
        %2562 = vmatmul.bf16.gmra.mxu0 %v348
        %v2563 = vpop.f32.mrf.mxu0
        %v2564 = vadd.f32 %v2550, %v2563
        %v2565 = vpop.f32.mrf.mxu0
        %v2566 = vadd.f32 %v2552, %v2565
        %2567 = vdwg.mxu0
        %2568 = vmatpush.bf16.msra.mxu0 %v1755
        %2569 = vmatpush.bf16.msra.mxu0 %v1749
        %2570 = vmatpush.bf16.msra.mxu0 %v1743
        %2571 = vmatpush.bf16.msra.mxu0 %v1737
        %2572 = vmatpush.bf16.msra.mxu0 %v1731
        %2573 = vmatpush.bf16.msra.mxu0 %v1725
        %2574 = vmatpush.bf16.msra.mxu0 %v1719
        %2575 = vmatpush.bf16.msra.mxu0 %v1713
        %2576 = vmatmul.bf16.gmra.mxu0 %v349
        %v2577 = vpop.f32.mrf.mxu0
        %v2578 = vadd.f32 %v2564, %v2577
        %v2579 = vpop.f32.mrf.mxu0
        %v2580 = vadd.f32 %v2566, %v2579
        %2581 = vdwg.mxu0
        %2582 = vmatpush.bf16.msra.mxu0 %v1803
        %2583 = vmatpush.bf16.msra.mxu0 %v1797
        %2584 = vmatpush.bf16.msra.mxu0 %v1791
        %2585 = vmatpush.bf16.msra.mxu0 %v1785
        %2586 = vmatpush.bf16.msra.mxu0 %v1779
        %2587 = vmatpush.bf16.msra.mxu0 %v1773
        %2588 = vmatpush.bf16.msra.mxu0 %v1767
        %2589 = vmatpush.bf16.msra.mxu0 %v1761
        %2590 = vmatmul.bf16.gmra.mxu0 %v350
        %v2591 = vpop.f32.mrf.mxu0
        %v2592 = vadd.f32 %v2578, %v2591
        %v2593 = vpop.f32.mrf.mxu0
        %v2594 = vadd.f32 %v2580, %v2593
        %2595 = vdwg.mxu0
        %2596 = vst [vmem:[#allocation2] sm:$0xff] %v2172
        %2597 = vst [vmem:[#allocation2 + $0x8] sm:$0xff] %v2256
        %2598 = vst [vmem:[#allocation2 + $0x10] sm:$0xff] %v2340
        %2599 = vst [vmem:[#allocation2 + $0x18] sm:$0xff] %v2424
        %2600 = vst [vmem:[#allocation2 + $0x20] sm:$0xff] %v2508
        %2601 = vst [vmem:[#allocation2 + $0x28] sm:$0xff] %v2592
        %2602 = vst [vmem:[#allocation2 + $0x30] sm:$0xff] %v2174
        %2603 = vst [vmem:[#allocation2 + $0x38] sm:$0xff] %v2258
        %2604 = vst [vmem:[#allocation2 + $0x40] sm:$0xff] %v2342
        %2605 = vst [vmem:[#allocation2 + $0x48] sm:$0xff] %v2426
        %2606 = vst [vmem:[#allocation2 + $0x50] sm:$0xff] %v2510
        %2607 = vst [vmem:[#allocation2 + $0x58] sm:$0xff] %v2594
        %s2608 = scalar_lea.vmem %s270, 1 [#allocation8]
        %v2609 = vld [vmem:[%s2608] ss:$4 sm:$0x3f]
        %v2610 = vld [vmem:[#allocation2] sm:$0xff]
        %v2611 = vld [vmem:[#allocation2 + $0x8] sm:$0xff]
        %v2612 = vld [vmem:[#allocation2 + $0x10] sm:$0xff]
        %v2613 = vld [vmem:[#allocation2 + $0x18] sm:$0xff]
        %v2614 = vld [vmem:[#allocation2 + $0x20] sm:$0xff]
        %v2615 = vld [vmem:[#allocation2 + $0x28] sm:$0xff]
        %v2616 = vld [vmem:[#allocation2 + $0x30] sm:$0xff]
        %v2617 = vld [vmem:[#allocation2 + $0x38] sm:$0xff]
        %v2618 = vld [vmem:[#allocation2 + $0x40] sm:$0xff]
        %v2619 = vld [vmem:[#allocation2 + $0x48] sm:$0xff]
        %v2620 = vld [vmem:[#allocation2 + $0x50] sm:$0xff]
        %v2621 = vld [vmem:[#allocation2 + $0x58] sm:$0xff]
        %v2622 = vpack.c.bf16 %v2616, %v2610
        %v2623 = vpack.c.bf16 %v2617, %v2611
        %v2624 = vpack.c.bf16 %v2618, %v2612
        %v2625 = vpack.c.bf16 %v2619, %v2613
        %v2626 = vpack.c.bf16 %v2620, %v2614
        %v2627 = vpack.c.bf16 %v2621, %v2615
        %s2628 = scalar_lea.vmem %s260, 2304 [#allocation6]
        %v2629 = vld [vmem:[%s2628] sm:$0xff]
        %v2630 = vld [vmem:[%s2628 + $0x8] sm:$0xff]
        %v2631 = vld [vmem:[%s2628 + $0x10] sm:$0xff]
        %v2632 = vld [vmem:[%s2628 + $0x18] sm:$0xff]
        %v2633 = vld [vmem:[%s2628 + $0x20] sm:$0xff]
        %v2634 = vld [vmem:[%s2628 + $0x28] sm:$0xff]
        %v2635 = vld [vmem:[%s2628 + $0x30] sm:$0xff]
        %v2636 = vld [vmem:[%s2628 + $0x38] sm:$0xff]
        %v2637 = vld [vmem:[%s2628 + $0x40] sm:$0xff]
        %v2638 = vld [vmem:[%s2628 + $0x48] sm:$0xff]
        %v2639 = vld [vmem:[%s2628 + $0x50] sm:$0xff]
        %v2640 = vld [vmem:[%s2628 + $0x58] sm:$0xff]
        %v2641 = vld [vmem:[%s2628 + $0x60] sm:$0xff]
        %v2642 = vld [vmem:[%s2628 + $0x68] sm:$0xff]
        %v2643 = vld [vmem:[%s2628 + $0x70] sm:$0xff]
        %v2644 = vld [vmem:[%s2628 + $0x78] sm:$0xff]
        %v2645 = vld [vmem:[%s2628 + $0x80] sm:$0xff]
        %v2646 = vld [vmem:[%s2628 + $0x88] sm:$0xff]
        %v2647 = vld [vmem:[%s2628 + $0x90] sm:$0xff]
        %v2648 = vld [vmem:[%s2628 + $0x98] sm:$0xff]
        %v2649 = vld [vmem:[%s2628 + $0xa0] sm:$0xff]
        %v2650 = vld [vmem:[%s2628 + $0xa8] sm:$0xff]
        %v2651 = vld [vmem:[%s2628 + $0xb0] sm:$0xff]
        %v2652 = vld [vmem:[%s2628 + $0xb8] sm:$0xff]
        %v2653 = vld [vmem:[%s2628 + $0xc0] sm:$0xff]
        %v2654 = vld [vmem:[%s2628 + $0xc8] sm:$0xff]
        %v2655 = vld [vmem:[%s2628 + $0xd0] sm:$0xff]
        %v2656 = vld [vmem:[%s2628 + $0xd8] sm:$0xff]
        %v2657 = vld [vmem:[%s2628 + $0xe0] sm:$0xff]
        %v2658 = vld [vmem:[%s2628 + $0xe8] sm:$0xff]
        %v2659 = vld [vmem:[%s2628 + $0xf0] sm:$0xff]
        %v2660 = vld [vmem:[%s2628 + $0xf8] sm:$0xff]
        %v2661 = vld [vmem:[%s2628 + $0x100] sm:$0xff]
        %v2662 = vld [vmem:[%s2628 + $0x108] sm:$0xff]
        %v2663 = vld [vmem:[%s2628 + $0x110] sm:$0xff]
        %v2664 = vld [vmem:[%s2628 + $0x118] sm:$0xff]
        %v2665 = vld [vmem:[%s2628 + $0x120] sm:$0xff]
        %v2666 = vld [vmem:[%s2628 + $0x128] sm:$0xff]
        %v2667 = vld [vmem:[%s2628 + $0x130] sm:$0xff]
        %v2668 = vld [vmem:[%s2628 + $0x138] sm:$0xff]
        %v2669 = vld [vmem:[%s2628 + $0x140] sm:$0xff]
        %v2670 = vld [vmem:[%s2628 + $0x148] sm:$0xff]
        %v2671 = vld [vmem:[%s2628 + $0x150] sm:$0xff]
        %v2672 = vld [vmem:[%s2628 + $0x158] sm:$0xff]
        %v2673 = vld [vmem:[%s2628 + $0x160] sm:$0xff]
        %v2674 = vld [vmem:[%s2628 + $0x168] sm:$0xff]
        %v2675 = vld [vmem:[%s2628 + $0x170] sm:$0xff]
        %v2676 = vld [vmem:[%s2628 + $0x178] sm:$0xff]
        %v2677 = vld [vmem:[%s2628 + $0x180] sm:$0xff]
        %v2678 = vld [vmem:[%s2628 + $0x188] sm:$0xff]
        %v2679 = vld [vmem:[%s2628 + $0x190] sm:$0xff]
        %v2680 = vld [vmem:[%s2628 + $0x198] sm:$0xff]
        %v2681 = vld [vmem:[%s2628 + $0x1a0] sm:$0xff]
        %v2682 = vld [vmem:[%s2628 + $0x1a8] sm:$0xff]
        %v2683 = vld [vmem:[%s2628 + $0x1b0] sm:$0xff]
        %v2684 = vld [vmem:[%s2628 + $0x1b8] sm:$0xff]
        %v2685 = vld [vmem:[%s2628 + $0x1c0] sm:$0xff]
        %v2686 = vld [vmem:[%s2628 + $0x1c8] sm:$0xff]
        %v2687 = vld [vmem:[%s2628 + $0x1d0] sm:$0xff]
        %v2688 = vld [vmem:[%s2628 + $0x1d8] sm:$0xff]
        %v2689 = vld [vmem:[%s2628 + $0x1e0] sm:$0xff]
        %v2690 = vld [vmem:[%s2628 + $0x1e8] sm:$0xff]
        %v2691 = vld [vmem:[%s2628 + $0x1f0] sm:$0xff]
        %v2692 = vld [vmem:[%s2628 + $0x1f8] sm:$0xff]
        %v2693 = vld [vmem:[%s2628 + $0x200] sm:$0xff]
        %v2694 = vld [vmem:[%s2628 + $0x208] sm:$0xff]
        %v2695 = vld [vmem:[%s2628 + $0x210] sm:$0xff]
        %v2696 = vld [vmem:[%s2628 + $0x218] sm:$0xff]
        %v2697 = vld [vmem:[%s2628 + $0x220] sm:$0xff]
        %v2698 = vld [vmem:[%s2628 + $0x228] sm:$0xff]
        %v2699 = vld [vmem:[%s2628 + $0x230] sm:$0xff]
        %v2700 = vld [vmem:[%s2628 + $0x238] sm:$0xff]
        %v2701 = vld [vmem:[%s2628 + $0x240] sm:$0xff]
        %v2702 = vld [vmem:[%s2628 + $0x248] sm:$0xff]
        %v2703 = vld [vmem:[%s2628 + $0x250] sm:$0xff]
        %v2704 = vld [vmem:[%s2628 + $0x258] sm:$0xff]
        %v2705 = vld [vmem:[%s2628 + $0x260] sm:$0xff]
        %v2706 = vld [vmem:[%s2628 + $0x268] sm:$0xff]
        %v2707 = vld [vmem:[%s2628 + $0x270] sm:$0xff]
        %v2708 = vld [vmem:[%s2628 + $0x278] sm:$0xff]
        %v2709 = vld [vmem:[%s2628 + $0x280] sm:$0xff]
        %v2710 = vld [vmem:[%s2628 + $0x288] sm:$0xff]
        %v2711 = vld [vmem:[%s2628 + $0x290] sm:$0xff]
        %v2712 = vld [vmem:[%s2628 + $0x298] sm:$0xff]
        %v2713 = vld [vmem:[%s2628 + $0x2a0] sm:$0xff]
        %v2714 = vld [vmem:[%s2628 + $0x2a8] sm:$0xff]
        %v2715 = vld [vmem:[%s2628 + $0x2b0] sm:$0xff]
        %v2716 = vld [vmem:[%s2628 + $0x2b8] sm:$0xff]
        %v2717 = vld [vmem:[%s2628 + $0x2c0] sm:$0xff]
        %v2718 = vld [vmem:[%s2628 + $0x2c8] sm:$0xff]
        %v2719 = vld [vmem:[%s2628 + $0x2d0] sm:$0xff]
        %v2720 = vld [vmem:[%s2628 + $0x2d8] sm:$0xff]
        %v2721 = vld [vmem:[%s2628 + $0x2e0] sm:$0xff]
        %v2722 = vld [vmem:[%s2628 + $0x2e8] sm:$0xff]
        %v2723 = vld [vmem:[%s2628 + $0x2f0] sm:$0xff]
        %v2724 = vld [vmem:[%s2628 + $0x2f8] sm:$0xff]
        %v2725 = vld [vmem:[%s2628 + $0x300] sm:$0xff]
        %v2726 = vld [vmem:[%s2628 + $0x308] sm:$0xff]
        %v2727 = vld [vmem:[%s2628 + $0x310] sm:$0xff]
        %v2728 = vld [vmem:[%s2628 + $0x318] sm:$0xff]
        %v2729 = vld [vmem:[%s2628 + $0x320] sm:$0xff]
        %v2730 = vld [vmem:[%s2628 + $0x328] sm:$0xff]
        %v2731 = vld [vmem:[%s2628 + $0x330] sm:$0xff]
        %v2732 = vld [vmem:[%s2628 + $0x338] sm:$0xff]
        %v2733 = vld [vmem:[%s2628 + $0x340] sm:$0xff]
        %v2734 = vld [vmem:[%s2628 + $0x348] sm:$0xff]
        %v2735 = vld [vmem:[%s2628 + $0x350] sm:$0xff]
        %v2736 = vld [vmem:[%s2628 + $0x358] sm:$0xff]
        %v2737 = vld [vmem:[%s2628 + $0x360] sm:$0xff]
        %v2738 = vld [vmem:[%s2628 + $0x368] sm:$0xff]
        %v2739 = vld [vmem:[%s2628 + $0x370] sm:$0xff]
        %v2740 = vld [vmem:[%s2628 + $0x378] sm:$0xff]
        %v2741 = vld [vmem:[%s2628 + $0x380] sm:$0xff]
        %v2742 = vld [vmem:[%s2628 + $0x388] sm:$0xff]
        %v2743 = vld [vmem:[%s2628 + $0x390] sm:$0xff]
        %v2744 = vld [vmem:[%s2628 + $0x398] sm:$0xff]
        %v2745 = vld [vmem:[%s2628 + $0x3a0] sm:$0xff]
        %v2746 = vld [vmem:[%s2628 + $0x3a8] sm:$0xff]
        %v2747 = vld [vmem:[%s2628 + $0x3b0] sm:$0xff]
        %v2748 = vld [vmem:[%s2628 + $0x3b8] sm:$0xff]
        %v2749 = vld [vmem:[%s2628 + $0x3c0] sm:$0xff]
        %v2750 = vld [vmem:[%s2628 + $0x3c8] sm:$0xff]
        %v2751 = vld [vmem:[%s2628 + $0x3d0] sm:$0xff]
        %v2752 = vld [vmem:[%s2628 + $0x3d8] sm:$0xff]
        %v2753 = vld [vmem:[%s2628 + $0x3e0] sm:$0xff]
        %v2754 = vld [vmem:[%s2628 + $0x3e8] sm:$0xff]
        %v2755 = vld [vmem:[%s2628 + $0x3f0] sm:$0xff]
        %v2756 = vld [vmem:[%s2628 + $0x3f8] sm:$0xff]
        %v2757 = vld [vmem:[%s2628 + $0x400] sm:$0xff]
        %v2758 = vld [vmem:[%s2628 + $0x408] sm:$0xff]
        %v2759 = vld [vmem:[%s2628 + $0x410] sm:$0xff]
        %v2760 = vld [vmem:[%s2628 + $0x418] sm:$0xff]
        %v2761 = vld [vmem:[%s2628 + $0x420] sm:$0xff]
        %v2762 = vld [vmem:[%s2628 + $0x428] sm:$0xff]
        %v2763 = vld [vmem:[%s2628 + $0x430] sm:$0xff]
        %v2764 = vld [vmem:[%s2628 + $0x438] sm:$0xff]
        %v2765 = vld [vmem:[%s2628 + $0x440] sm:$0xff]
        %v2766 = vld [vmem:[%s2628 + $0x448] sm:$0xff]
        %v2767 = vld [vmem:[%s2628 + $0x450] sm:$0xff]
        %v2768 = vld [vmem:[%s2628 + $0x458] sm:$0xff]
        %v2769 = vld [vmem:[%s2628 + $0x460] sm:$0xff]
        %v2770 = vld [vmem:[%s2628 + $0x468] sm:$0xff]
        %v2771 = vld [vmem:[%s2628 + $0x470] sm:$0xff]
        %v2772 = vld [vmem:[%s2628 + $0x478] sm:$0xff]
        %v2773 = vld [vmem:[%s2628 + $0x480] sm:$0xff]
        %v2774 = vld [vmem:[%s2628 + $0x488] sm:$0xff]
        %v2775 = vld [vmem:[%s2628 + $0x490] sm:$0xff]
        %v2776 = vld [vmem:[%s2628 + $0x498] sm:$0xff]
        %v2777 = vld [vmem:[%s2628 + $0x4a0] sm:$0xff]
        %v2778 = vld [vmem:[%s2628 + $0x4a8] sm:$0xff]
        %v2779 = vld [vmem:[%s2628 + $0x4b0] sm:$0xff]
        %v2780 = vld [vmem:[%s2628 + $0x4b8] sm:$0xff]
        %v2781 = vld [vmem:[%s2628 + $0x4c0] sm:$0xff]
        %v2782 = vld [vmem:[%s2628 + $0x4c8] sm:$0xff]
        %v2783 = vld [vmem:[%s2628 + $0x4d0] sm:$0xff]
        %v2784 = vld [vmem:[%s2628 + $0x4d8] sm:$0xff]
        %v2785 = vld [vmem:[%s2628 + $0x4e0] sm:$0xff]
        %v2786 = vld [vmem:[%s2628 + $0x4e8] sm:$0xff]
        %v2787 = vld [vmem:[%s2628 + $0x4f0] sm:$0xff]
        %v2788 = vld [vmem:[%s2628 + $0x4f8] sm:$0xff]
        %v2789 = vld [vmem:[%s2628 + $0x500] sm:$0xff]
        %v2790 = vld [vmem:[%s2628 + $0x508] sm:$0xff]
        %v2791 = vld [vmem:[%s2628 + $0x510] sm:$0xff]
        %v2792 = vld [vmem:[%s2628 + $0x518] sm:$0xff]
        %v2793 = vld [vmem:[%s2628 + $0x520] sm:$0xff]
        %v2794 = vld [vmem:[%s2628 + $0x528] sm:$0xff]
        %v2795 = vld [vmem:[%s2628 + $0x530] sm:$0xff]
        %v2796 = vld [vmem:[%s2628 + $0x538] sm:$0xff]
        %v2797 = vld [vmem:[%s2628 + $0x540] sm:$0xff]
        %v2798 = vld [vmem:[%s2628 + $0x548] sm:$0xff]
        %v2799 = vld [vmem:[%s2628 + $0x550] sm:$0xff]
        %v2800 = vld [vmem:[%s2628 + $0x558] sm:$0xff]
        %v2801 = vld [vmem:[%s2628 + $0x560] sm:$0xff]
        %v2802 = vld [vmem:[%s2628 + $0x568] sm:$0xff]
        %v2803 = vld [vmem:[%s2628 + $0x570] sm:$0xff]
        %v2804 = vld [vmem:[%s2628 + $0x578] sm:$0xff]
        %v2805 = vld [vmem:[%s2628 + $0x580] sm:$0xff]
        %v2806 = vld [vmem:[%s2628 + $0x588] sm:$0xff]
        %v2807 = vld [vmem:[%s2628 + $0x590] sm:$0xff]
        %v2808 = vld [vmem:[%s2628 + $0x598] sm:$0xff]
        %v2809 = vld [vmem:[%s2628 + $0x5a0] sm:$0xff]
        %v2810 = vld [vmem:[%s2628 + $0x5a8] sm:$0xff]
        %v2811 = vld [vmem:[%s2628 + $0x5b0] sm:$0xff]
        %v2812 = vld [vmem:[%s2628 + $0x5b8] sm:$0xff]
        %v2813 = vld [vmem:[%s2628 + $0x5c0] sm:$0xff]
        %v2814 = vld [vmem:[%s2628 + $0x5c8] sm:$0xff]
        %v2815 = vld [vmem:[%s2628 + $0x5d0] sm:$0xff]
        %v2816 = vld [vmem:[%s2628 + $0x5d8] sm:$0xff]
        %v2817 = vld [vmem:[%s2628 + $0x5e0] sm:$0xff]
        %v2818 = vld [vmem:[%s2628 + $0x5e8] sm:$0xff]
        %v2819 = vld [vmem:[%s2628 + $0x5f0] sm:$0xff]
        %v2820 = vld [vmem:[%s2628 + $0x5f8] sm:$0xff]
        %v2821 = vld [vmem:[%s2628 + $0x600] sm:$0xff]
        %v2822 = vld [vmem:[%s2628 + $0x608] sm:$0xff]
        %v2823 = vld [vmem:[%s2628 + $0x610] sm:$0xff]
        %v2824 = vld [vmem:[%s2628 + $0x618] sm:$0xff]
        %v2825 = vld [vmem:[%s2628 + $0x620] sm:$0xff]
        %v2826 = vld [vmem:[%s2628 + $0x628] sm:$0xff]
        %v2827 = vld [vmem:[%s2628 + $0x630] sm:$0xff]
        %v2828 = vld [vmem:[%s2628 + $0x638] sm:$0xff]
        %v2829 = vld [vmem:[%s2628 + $0x640] sm:$0xff]
        %v2830 = vld [vmem:[%s2628 + $0x648] sm:$0xff]
        %v2831 = vld [vmem:[%s2628 + $0x650] sm:$0xff]
        %v2832 = vld [vmem:[%s2628 + $0x658] sm:$0xff]
        %v2833 = vld [vmem:[%s2628 + $0x660] sm:$0xff]
        %v2834 = vld [vmem:[%s2628 + $0x668] sm:$0xff]
        %v2835 = vld [vmem:[%s2628 + $0x670] sm:$0xff]
        %v2836 = vld [vmem:[%s2628 + $0x678] sm:$0xff]
        %v2837 = vld [vmem:[%s2628 + $0x680] sm:$0xff]
        %v2838 = vld [vmem:[%s2628 + $0x688] sm:$0xff]
        %v2839 = vld [vmem:[%s2628 + $0x690] sm:$0xff]
        %v2840 = vld [vmem:[%s2628 + $0x698] sm:$0xff]
        %v2841 = vld [vmem:[%s2628 + $0x6a0] sm:$0xff]
        %v2842 = vld [vmem:[%s2628 + $0x6a8] sm:$0xff]
        %v2843 = vld [vmem:[%s2628 + $0x6b0] sm:$0xff]
        %v2844 = vld [vmem:[%s2628 + $0x6b8] sm:$0xff]
        %v2845 = vld [vmem:[%s2628 + $0x6c0] sm:$0xff]
        %v2846 = vld [vmem:[%s2628 + $0x6c8] sm:$0xff]
        %v2847 = vld [vmem:[%s2628 + $0x6d0] sm:$0xff]
        %v2848 = vld [vmem:[%s2628 + $0x6d8] sm:$0xff]
        %v2849 = vld [vmem:[%s2628 + $0x6e0] sm:$0xff]
        %v2850 = vld [vmem:[%s2628 + $0x6e8] sm:$0xff]
        %v2851 = vld [vmem:[%s2628 + $0x6f0] sm:$0xff]
        %v2852 = vld [vmem:[%s2628 + $0x6f8] sm:$0xff]
        %v2853 = vld [vmem:[%s2628 + $0x700] sm:$0xff]
        %v2854 = vld [vmem:[%s2628 + $0x708] sm:$0xff]
        %v2855 = vld [vmem:[%s2628 + $0x710] sm:$0xff]
        %v2856 = vld [vmem:[%s2628 + $0x718] sm:$0xff]
        %v2857 = vld [vmem:[%s2628 + $0x720] sm:$0xff]
        %v2858 = vld [vmem:[%s2628 + $0x728] sm:$0xff]
        %v2859 = vld [vmem:[%s2628 + $0x730] sm:$0xff]
        %v2860 = vld [vmem:[%s2628 + $0x738] sm:$0xff]
        %v2861 = vld [vmem:[%s2628 + $0x740] sm:$0xff]
        %v2862 = vld [vmem:[%s2628 + $0x748] sm:$0xff]
        %v2863 = vld [vmem:[%s2628 + $0x750] sm:$0xff]
        %v2864 = vld [vmem:[%s2628 + $0x758] sm:$0xff]
        %v2865 = vld [vmem:[%s2628 + $0x760] sm:$0xff]
        %v2866 = vld [vmem:[%s2628 + $0x768] sm:$0xff]
        %v2867 = vld [vmem:[%s2628 + $0x770] sm:$0xff]
        %v2868 = vld [vmem:[%s2628 + $0x778] sm:$0xff]
        %v2869 = vld [vmem:[%s2628 + $0x780] sm:$0xff]
        %v2870 = vld [vmem:[%s2628 + $0x788] sm:$0xff]
        %v2871 = vld [vmem:[%s2628 + $0x790] sm:$0xff]
        %v2872 = vld [vmem:[%s2628 + $0x798] sm:$0xff]
        %v2873 = vld [vmem:[%s2628 + $0x7a0] sm:$0xff]
        %v2874 = vld [vmem:[%s2628 + $0x7a8] sm:$0xff]
        %v2875 = vld [vmem:[%s2628 + $0x7b0] sm:$0xff]
        %v2876 = vld [vmem:[%s2628 + $0x7b8] sm:$0xff]
        %v2877 = vld [vmem:[%s2628 + $0x7c0] sm:$0xff]
        %v2878 = vld [vmem:[%s2628 + $0x7c8] sm:$0xff]
        %v2879 = vld [vmem:[%s2628 + $0x7d0] sm:$0xff]
        %v2880 = vld [vmem:[%s2628 + $0x7d8] sm:$0xff]
        %v2881 = vld [vmem:[%s2628 + $0x7e0] sm:$0xff]
        %v2882 = vld [vmem:[%s2628 + $0x7e8] sm:$0xff]
        %v2883 = vld [vmem:[%s2628 + $0x7f0] sm:$0xff]
        %v2884 = vld [vmem:[%s2628 + $0x7f8] sm:$0xff]
        %v2885 = vld [vmem:[%s2628 + $0x800] sm:$0xff]
        %v2886 = vld [vmem:[%s2628 + $0x808] sm:$0xff]
        %v2887 = vld [vmem:[%s2628 + $0x810] sm:$0xff]
        %v2888 = vld [vmem:[%s2628 + $0x818] sm:$0xff]
        %v2889 = vld [vmem:[%s2628 + $0x820] sm:$0xff]
        %v2890 = vld [vmem:[%s2628 + $0x828] sm:$0xff]
        %v2891 = vld [vmem:[%s2628 + $0x830] sm:$0xff]
        %v2892 = vld [vmem:[%s2628 + $0x838] sm:$0xff]
        %v2893 = vld [vmem:[%s2628 + $0x840] sm:$0xff]
        %v2894 = vld [vmem:[%s2628 + $0x848] sm:$0xff]
        %v2895 = vld [vmem:[%s2628 + $0x850] sm:$0xff]
        %v2896 = vld [vmem:[%s2628 + $0x858] sm:$0xff]
        %v2897 = vld [vmem:[%s2628 + $0x860] sm:$0xff]
        %v2898 = vld [vmem:[%s2628 + $0x868] sm:$0xff]
        %v2899 = vld [vmem:[%s2628 + $0x870] sm:$0xff]
        %v2900 = vld [vmem:[%s2628 + $0x878] sm:$0xff]
        %v2901 = vld [vmem:[%s2628 + $0x880] sm:$0xff]
        %v2902 = vld [vmem:[%s2628 + $0x888] sm:$0xff]
        %v2903 = vld [vmem:[%s2628 + $0x890] sm:$0xff]
        %v2904 = vld [vmem:[%s2628 + $0x898] sm:$0xff]
        %v2905 = vld [vmem:[%s2628 + $0x8a0] sm:$0xff]
        %v2906 = vld [vmem:[%s2628 + $0x8a8] sm:$0xff]
        %v2907 = vld [vmem:[%s2628 + $0x8b0] sm:$0xff]
        %v2908 = vld [vmem:[%s2628 + $0x8b8] sm:$0xff]
        %v2909 = vld [vmem:[%s2628 + $0x8c0] sm:$0xff]
        %v2910 = vld [vmem:[%s2628 + $0x8c8] sm:$0xff]
        %v2911 = vld [vmem:[%s2628 + $0x8d0] sm:$0xff]
        %v2912 = vld [vmem:[%s2628 + $0x8d8] sm:$0xff]
        %v2913 = vld [vmem:[%s2628 + $0x8e0] sm:$0xff]
        %v2914 = vld [vmem:[%s2628 + $0x8e8] sm:$0xff]
        %v2915 = vld [vmem:[%s2628 + $0x8f0] sm:$0xff]
        %v2916 = vld [vmem:[%s2628 + $0x8f8] sm:$0xff]
        %v2918 = vperm.slane %v2609, 0
        %v2919 = vperm.slane %v2609, 1
        %v2920 = vperm.slane %v2609, 2
        %v2921 = vperm.slane %v2609, 3
        %v2922 = vperm.slane %v2609, 4
        %v2923 = vperm.slane %v2609, 5
        %v3218 = vunpack.c.l.b16 %v2629
        %v3219 = vunpack.c.h.b16 %v2629
        %v3220 = vunpack.c.l.b16 %v2630
        %v3221 = vunpack.c.h.b16 %v2630
        %v3222 = vunpack.c.l.b16 %v2631
        %v3223 = vunpack.c.h.b16 %v2631
        %v3224 = vunpack.c.l.b16 %v2632
        %v3225 = vunpack.c.h.b16 %v2632
        %v3226 = vunpack.c.l.b16 %v2633
        %v3227 = vunpack.c.h.b16 %v2633
        %v3228 = vunpack.c.l.b16 %v2634
        %v3229 = vunpack.c.h.b16 %v2634
        %v3230 = vunpack.c.l.b16 %v2635
        %v3231 = vunpack.c.h.b16 %v2635
        %v3232 = vunpack.c.l.b16 %v2636
        %v3233 = vunpack.c.h.b16 %v2636
        %v3234 = vunpack.c.l.b16 %v2637
        %v3235 = vunpack.c.h.b16 %v2637
        %v3236 = vunpack.c.l.b16 %v2638
        %v3237 = vunpack.c.h.b16 %v2638
        %v3238 = vunpack.c.l.b16 %v2639
        %v3239 = vunpack.c.h.b16 %v2639
        %v3240 = vunpack.c.l.b16 %v2640
        %v3241 = vunpack.c.h.b16 %v2640
        %v3242 = vunpack.c.l.b16 %v2641
        %v3243 = vunpack.c.h.b16 %v2641
        %v3244 = vunpack.c.l.b16 %v2642
        %v3245 = vunpack.c.h.b16 %v2642
        %v3246 = vunpack.c.l.b16 %v2643
        %v3247 = vunpack.c.h.b16 %v2643
        %v3248 = vunpack.c.l.b16 %v2644
        %v3249 = vunpack.c.h.b16 %v2644
        %v3250 = vunpack.c.l.b16 %v2645
        %v3251 = vunpack.c.h.b16 %v2645
        %v3252 = vunpack.c.l.b16 %v2646
        %v3253 = vunpack.c.h.b16 %v2646
        %v3254 = vunpack.c.l.b16 %v2647
        %v3255 = vunpack.c.h.b16 %v2647
        %v3256 = vunpack.c.l.b16 %v2648
        %v3257 = vunpack.c.h.b16 %v2648
        %v3258 = vunpack.c.l.b16 %v2649
        %v3259 = vunpack.c.h.b16 %v2649
        %v3260 = vunpack.c.l.b16 %v2650
        %v3261 = vunpack.c.h.b16 %v2650
        %v3262 = vunpack.c.l.b16 %v2651
        %v3263 = vunpack.c.h.b16 %v2651
        %v3264 = vunpack.c.l.b16 %v2652
        %v3265 = vunpack.c.h.b16 %v2652
        %v3266 = vunpack.c.l.b16 %v2653
        %v3267 = vunpack.c.h.b16 %v2653
        %v3268 = vunpack.c.l.b16 %v2654
        %v3269 = vunpack.c.h.b16 %v2654
        %v3270 = vunpack.c.l.b16 %v2655
        %v3271 = vunpack.c.h.b16 %v2655
        %v3272 = vunpack.c.l.b16 %v2656
        %v3273 = vunpack.c.h.b16 %v2656
        %v3274 = vunpack.c.l.b16 %v2657
        %v3275 = vunpack.c.h.b16 %v2657
        %v3276 = vunpack.c.l.b16 %v2658
        %v3277 = vunpack.c.h.b16 %v2658
        %v3278 = vunpack.c.l.b16 %v2659
        %v3279 = vunpack.c.h.b16 %v2659
        %v3280 = vunpack.c.l.b16 %v2660
        %v3281 = vunpack.c.h.b16 %v2660
        %v3282 = vunpack.c.l.b16 %v2661
        %v3283 = vunpack.c.h.b16 %v2661
        %v3284 = vunpack.c.l.b16 %v2662
        %v3285 = vunpack.c.h.b16 %v2662
        %v3286 = vunpack.c.l.b16 %v2663
        %v3287 = vunpack.c.h.b16 %v2663
        %v3288 = vunpack.c.l.b16 %v2664
        %v3289 = vunpack.c.h.b16 %v2664
        %v3290 = vunpack.c.l.b16 %v2665
        %v3291 = vunpack.c.h.b16 %v2665
        %v3292 = vunpack.c.l.b16 %v2666
        %v3293 = vunpack.c.h.b16 %v2666
        %v3294 = vunpack.c.l.b16 %v2667
        %v3295 = vunpack.c.h.b16 %v2667
        %v3296 = vunpack.c.l.b16 %v2668
        %v3297 = vunpack.c.h.b16 %v2668
        %v3298 = vunpack.c.l.b16 %v2669
        %v3299 = vunpack.c.h.b16 %v2669
        %v3300 = vunpack.c.l.b16 %v2670
        %v3301 = vunpack.c.h.b16 %v2670
        %v3302 = vunpack.c.l.b16 %v2671
        %v3303 = vunpack.c.h.b16 %v2671
        %v3304 = vunpack.c.l.b16 %v2672
        %v3305 = vunpack.c.h.b16 %v2672
        %v3306 = vunpack.c.l.b16 %v2673
        %v3307 = vunpack.c.h.b16 %v2673
        %v3308 = vunpack.c.l.b16 %v2674
        %v3309 = vunpack.c.h.b16 %v2674
        %v3310 = vunpack.c.l.b16 %v2675
        %v3311 = vunpack.c.h.b16 %v2675
        %v3312 = vunpack.c.l.b16 %v2676
        %v3313 = vunpack.c.h.b16 %v2676
        %v3314 = vunpack.c.l.b16 %v2677
        %v3315 = vunpack.c.h.b16 %v2677
        %v3316 = vunpack.c.l.b16 %v2678
        %v3317 = vunpack.c.h.b16 %v2678
        %v3318 = vunpack.c.l.b16 %v2679
        %v3319 = vunpack.c.h.b16 %v2679
        %v3320 = vunpack.c.l.b16 %v2680
        %v3321 = vunpack.c.h.b16 %v2680
        %v3322 = vunpack.c.l.b16 %v2681
        %v3323 = vunpack.c.h.b16 %v2681
        %v3324 = vunpack.c.l.b16 %v2682
        %v3325 = vunpack.c.h.b16 %v2682
        %v3326 = vunpack.c.l.b16 %v2683
        %v3327 = vunpack.c.h.b16 %v2683
        %v3328 = vunpack.c.l.b16 %v2684
        %v3329 = vunpack.c.h.b16 %v2684
        %v3330 = vunpack.c.l.b16 %v2685
        %v3331 = vunpack.c.h.b16 %v2685
        %v3332 = vunpack.c.l.b16 %v2686
        %v3333 = vunpack.c.h.b16 %v2686
        %v3334 = vunpack.c.l.b16 %v2687
        %v3335 = vunpack.c.h.b16 %v2687
        %v3336 = vunpack.c.l.b16 %v2688
        %v3337 = vunpack.c.h.b16 %v2688
        %v3338 = vunpack.c.l.b16 %v2689
        %v3339 = vunpack.c.h.b16 %v2689
        %v3340 = vunpack.c.l.b16 %v2690
        %v3341 = vunpack.c.h.b16 %v2690
        %v3342 = vunpack.c.l.b16 %v2691
        %v3343 = vunpack.c.h.b16 %v2691
        %v3344 = vunpack.c.l.b16 %v2692
        %v3345 = vunpack.c.h.b16 %v2692
        %v3346 = vunpack.c.l.b16 %v2693
        %v3347 = vunpack.c.h.b16 %v2693
        %v3348 = vunpack.c.l.b16 %v2694
        %v3349 = vunpack.c.h.b16 %v2694
        %v3350 = vunpack.c.l.b16 %v2695
        %v3351 = vunpack.c.h.b16 %v2695
        %v3352 = vunpack.c.l.b16 %v2696
        %v3353 = vunpack.c.h.b16 %v2696
        %v3354 = vunpack.c.l.b16 %v2697
        %v3355 = vunpack.c.h.b16 %v2697
        %v3356 = vunpack.c.l.b16 %v2698
        %v3357 = vunpack.c.h.b16 %v2698
        %v3358 = vunpack.c.l.b16 %v2699
        %v3359 = vunpack.c.h.b16 %v2699
        %v3360 = vunpack.c.l.b16 %v2700
        %v3361 = vunpack.c.h.b16 %v2700
        %v3362 = vunpack.c.l.b16 %v2701
        %v3363 = vunpack.c.h.b16 %v2701
        %v3364 = vunpack.c.l.b16 %v2702
        %v3365 = vunpack.c.h.b16 %v2702
        %v3366 = vunpack.c.l.b16 %v2703
        %v3367 = vunpack.c.h.b16 %v2703
        %v3368 = vunpack.c.l.b16 %v2704
        %v3369 = vunpack.c.h.b16 %v2704
        %v3370 = vunpack.c.l.b16 %v2705
        %v3371 = vunpack.c.h.b16 %v2705
        %v3372 = vunpack.c.l.b16 %v2706
        %v3373 = vunpack.c.h.b16 %v2706
        %v3374 = vunpack.c.l.b16 %v2707
        %v3375 = vunpack.c.h.b16 %v2707
        %v3376 = vunpack.c.l.b16 %v2708
        %v3377 = vunpack.c.h.b16 %v2708
        %v3378 = vunpack.c.l.b16 %v2709
        %v3379 = vunpack.c.h.b16 %v2709
        %v3380 = vunpack.c.l.b16 %v2710
        %v3381 = vunpack.c.h.b16 %v2710
        %v3382 = vunpack.c.l.b16 %v2711
        %v3383 = vunpack.c.h.b16 %v2711
        %v3384 = vunpack.c.l.b16 %v2712
        %v3385 = vunpack.c.h.b16 %v2712
        %v3386 = vunpack.c.l.b16 %v2713
        %v3387 = vunpack.c.h.b16 %v2713
        %v3388 = vunpack.c.l.b16 %v2714
        %v3389 = vunpack.c.h.b16 %v2714
        %v3390 = vunpack.c.l.b16 %v2715
        %v3391 = vunpack.c.h.b16 %v2715
        %v3392 = vunpack.c.l.b16 %v2716
        %v3393 = vunpack.c.h.b16 %v2716
        %v3394 = vunpack.c.l.b16 %v2717
        %v3395 = vunpack.c.h.b16 %v2717
        %v3396 = vunpack.c.l.b16 %v2718
        %v3397 = vunpack.c.h.b16 %v2718
        %v3398 = vunpack.c.l.b16 %v2719
        %v3399 = vunpack.c.h.b16 %v2719
        %v3400 = vunpack.c.l.b16 %v2720
        %v3401 = vunpack.c.h.b16 %v2720
        %v3402 = vunpack.c.l.b16 %v2721
        %v3403 = vunpack.c.h.b16 %v2721
        %v3404 = vunpack.c.l.b16 %v2722
        %v3405 = vunpack.c.h.b16 %v2722
        %v3406 = vunpack.c.l.b16 %v2723
        %v3407 = vunpack.c.h.b16 %v2723
        %v3408 = vunpack.c.l.b16 %v2724
        %v3409 = vunpack.c.h.b16 %v2724
        %v3410 = vunpack.c.l.b16 %v2725
        %v3411 = vunpack.c.h.b16 %v2725
        %v3412 = vunpack.c.l.b16 %v2726
        %v3413 = vunpack.c.h.b16 %v2726
        %v3414 = vunpack.c.l.b16 %v2727
        %v3415 = vunpack.c.h.b16 %v2727
        %v3416 = vunpack.c.l.b16 %v2728
        %v3417 = vunpack.c.h.b16 %v2728
        %v3418 = vunpack.c.l.b16 %v2729
        %v3419 = vunpack.c.h.b16 %v2729
        %v3420 = vunpack.c.l.b16 %v2730
        %v3421 = vunpack.c.h.b16 %v2730
        %v3422 = vunpack.c.l.b16 %v2731
        %v3423 = vunpack.c.h.b16 %v2731
        %v3424 = vunpack.c.l.b16 %v2732
        %v3425 = vunpack.c.h.b16 %v2732
        %v3426 = vunpack.c.l.b16 %v2733
        %v3427 = vunpack.c.h.b16 %v2733
        %v3428 = vunpack.c.l.b16 %v2734
        %v3429 = vunpack.c.h.b16 %v2734
        %v3430 = vunpack.c.l.b16 %v2735
        %v3431 = vunpack.c.h.b16 %v2735
        %v3432 = vunpack.c.l.b16 %v2736
        %v3433 = vunpack.c.h.b16 %v2736
        %v3434 = vunpack.c.l.b16 %v2737
        %v3435 = vunpack.c.h.b16 %v2737
        %v3436 = vunpack.c.l.b16 %v2738
        %v3437 = vunpack.c.h.b16 %v2738
        %v3438 = vunpack.c.l.b16 %v2739
        %v3439 = vunpack.c.h.b16 %v2739
        %v3440 = vunpack.c.l.b16 %v2740
        %v3441 = vunpack.c.h.b16 %v2740
        %v3442 = vunpack.c.l.b16 %v2741
        %v3443 = vunpack.c.h.b16 %v2741
        %v3444 = vunpack.c.l.b16 %v2742
        %v3445 = vunpack.c.h.b16 %v2742
        %v3446 = vunpack.c.l.b16 %v2743
        %v3447 = vunpack.c.h.b16 %v2743
        %v3448 = vunpack.c.l.b16 %v2744
        %v3449 = vunpack.c.h.b16 %v2744
        %v3450 = vunpack.c.l.b16 %v2745
        %v3451 = vunpack.c.h.b16 %v2745
        %v3452 = vunpack.c.l.b16 %v2746
        %v3453 = vunpack.c.h.b16 %v2746
        %v3454 = vunpack.c.l.b16 %v2747
        %v3455 = vunpack.c.h.b16 %v2747
        %v3456 = vunpack.c.l.b16 %v2748
        %v3457 = vunpack.c.h.b16 %v2748
        %v3458 = vunpack.c.l.b16 %v2749
        %v3459 = vunpack.c.h.b16 %v2749
        %v3460 = vunpack.c.l.b16 %v2750
        %v3461 = vunpack.c.h.b16 %v2750
        %v3462 = vunpack.c.l.b16 %v2751
        %v3463 = vunpack.c.h.b16 %v2751
        %v3464 = vunpack.c.l.b16 %v2752
        %v3465 = vunpack.c.h.b16 %v2752
        %v3466 = vunpack.c.l.b16 %v2753
        %v3467 = vunpack.c.h.b16 %v2753
        %v3468 = vunpack.c.l.b16 %v2754
        %v3469 = vunpack.c.h.b16 %v2754
        %v3470 = vunpack.c.l.b16 %v2755
        %v3471 = vunpack.c.h.b16 %v2755
        %v3472 = vunpack.c.l.b16 %v2756
        %v3473 = vunpack.c.h.b16 %v2756
        %v3474 = vunpack.c.l.b16 %v2757
        %v3475 = vunpack.c.h.b16 %v2757
        %v3476 = vunpack.c.l.b16 %v2758
        %v3477 = vunpack.c.h.b16 %v2758
        %v3478 = vunpack.c.l.b16 %v2759
        %v3479 = vunpack.c.h.b16 %v2759
        %v3480 = vunpack.c.l.b16 %v2760
        %v3481 = vunpack.c.h.b16 %v2760
        %v3482 = vunpack.c.l.b16 %v2761
        %v3483 = vunpack.c.h.b16 %v2761
        %v3484 = vunpack.c.l.b16 %v2762
        %v3485 = vunpack.c.h.b16 %v2762
        %v3486 = vunpack.c.l.b16 %v2763
        %v3487 = vunpack.c.h.b16 %v2763
        %v3488 = vunpack.c.l.b16 %v2764
        %v3489 = vunpack.c.h.b16 %v2764
        %v3490 = vunpack.c.l.b16 %v2765
        %v3491 = vunpack.c.h.b16 %v2765
        %v3492 = vunpack.c.l.b16 %v2766
        %v3493 = vunpack.c.h.b16 %v2766
        %v3494 = vunpack.c.l.b16 %v2767
        %v3495 = vunpack.c.h.b16 %v2767
        %v3496 = vunpack.c.l.b16 %v2768
        %v3497 = vunpack.c.h.b16 %v2768
        %v3498 = vunpack.c.l.b16 %v2769
        %v3499 = vunpack.c.h.b16 %v2769
        %v3500 = vunpack.c.l.b16 %v2770
        %v3501 = vunpack.c.h.b16 %v2770
        %v3502 = vunpack.c.l.b16 %v2771
        %v3503 = vunpack.c.h.b16 %v2771
        %v3504 = vunpack.c.l.b16 %v2772
        %v3505 = vunpack.c.h.b16 %v2772
        %v3506 = vunpack.c.l.b16 %v2773
        %v3507 = vunpack.c.h.b16 %v2773
        %v3508 = vunpack.c.l.b16 %v2774
        %v3509 = vunpack.c.h.b16 %v2774
        %v3510 = vunpack.c.l.b16 %v2775
        %v3511 = vunpack.c.h.b16 %v2775
        %v3512 = vunpack.c.l.b16 %v2776
        %v3513 = vunpack.c.h.b16 %v2776
        %v3514 = vunpack.c.l.b16 %v2777
        %v3515 = vunpack.c.h.b16 %v2777
        %v3516 = vunpack.c.l.b16 %v2778
        %v3517 = vunpack.c.h.b16 %v2778
        %v3518 = vunpack.c.l.b16 %v2779
        %v3519 = vunpack.c.h.b16 %v2779
        %v3520 = vunpack.c.l.b16 %v2780
        %v3521 = vunpack.c.h.b16 %v2780
        %v3522 = vunpack.c.l.b16 %v2781
        %v3523 = vunpack.c.h.b16 %v2781
        %v3524 = vunpack.c.l.b16 %v2782
        %v3525 = vunpack.c.h.b16 %v2782
        %v3526 = vunpack.c.l.b16 %v2783
        %v3527 = vunpack.c.h.b16 %v2783
        %v3528 = vunpack.c.l.b16 %v2784
        %v3529 = vunpack.c.h.b16 %v2784
        %v3530 = vunpack.c.l.b16 %v2785
        %v3531 = vunpack.c.h.b16 %v2785
        %v3532 = vunpack.c.l.b16 %v2786
        %v3533 = vunpack.c.h.b16 %v2786
        %v3534 = vunpack.c.l.b16 %v2787
        %v3535 = vunpack.c.h.b16 %v2787
        %v3536 = vunpack.c.l.b16 %v2788
        %v3537 = vunpack.c.h.b16 %v2788
        %v3538 = vunpack.c.l.b16 %v2789
        %v3539 = vunpack.c.h.b16 %v2789
        %v3540 = vunpack.c.l.b16 %v2790
        %v3541 = vunpack.c.h.b16 %v2790
        %v3542 = vunpack.c.l.b16 %v2791
        %v3543 = vunpack.c.h.b16 %v2791
        %v3544 = vunpack.c.l.b16 %v2792
        %v3545 = vunpack.c.h.b16 %v2792
        %v3546 = vunpack.c.l.b16 %v2793
        %v3547 = vunpack.c.h.b16 %v2793
        %v3548 = vunpack.c.l.b16 %v2794
        %v3549 = vunpack.c.h.b16 %v2794
        %v3550 = vunpack.c.l.b16 %v2795
        %v3551 = vunpack.c.h.b16 %v2795
        %v3552 = vunpack.c.l.b16 %v2796
        %v3553 = vunpack.c.h.b16 %v2796
        %v3554 = vunpack.c.l.b16 %v2797
        %v3555 = vunpack.c.h.b16 %v2797
        %v3556 = vunpack.c.l.b16 %v2798
        %v3557 = vunpack.c.h.b16 %v2798
        %v3558 = vunpack.c.l.b16 %v2799
        %v3559 = vunpack.c.h.b16 %v2799
        %v3560 = vunpack.c.l.b16 %v2800
        %v3561 = vunpack.c.h.b16 %v2800
        %v3562 = vunpack.c.l.b16 %v2801
        %v3563 = vunpack.c.h.b16 %v2801
        %v3564 = vunpack.c.l.b16 %v2802
        %v3565 = vunpack.c.h.b16 %v2802
        %v3566 = vunpack.c.l.b16 %v2803
        %v3567 = vunpack.c.h.b16 %v2803
        %v3568 = vunpack.c.l.b16 %v2804
        %v3569 = vunpack.c.h.b16 %v2804
        %v3570 = vunpack.c.l.b16 %v2805
        %v3571 = vunpack.c.h.b16 %v2805
        %v3572 = vunpack.c.l.b16 %v2806
        %v3573 = vunpack.c.h.b16 %v2806
        %v3574 = vunpack.c.l.b16 %v2807
        %v3575 = vunpack.c.h.b16 %v2807
        %v3576 = vunpack.c.l.b16 %v2808
        %v3577 = vunpack.c.h.b16 %v2808
        %v3578 = vunpack.c.l.b16 %v2809
        %v3579 = vunpack.c.h.b16 %v2809
        %v3580 = vunpack.c.l.b16 %v2810
        %v3581 = vunpack.c.h.b16 %v2810
        %v3582 = vunpack.c.l.b16 %v2811
        %v3583 = vunpack.c.h.b16 %v2811
        %v3584 = vunpack.c.l.b16 %v2812
        %v3585 = vunpack.c.h.b16 %v2812
        %v3586 = vunpack.c.l.b16 %v2813
        %v3587 = vunpack.c.h.b16 %v2813
        %v3588 = vunpack.c.l.b16 %v2814
        %v3589 = vunpack.c.h.b16 %v2814
        %v3590 = vunpack.c.l.b16 %v2815
        %v3591 = vunpack.c.h.b16 %v2815
        %v3592 = vunpack.c.l.b16 %v2816
        %v3593 = vunpack.c.h.b16 %v2816
        %v3594 = vunpack.c.l.b16 %v2817
        %v3595 = vunpack.c.h.b16 %v2817
        %v3596 = vunpack.c.l.b16 %v2818
        %v3597 = vunpack.c.h.b16 %v2818
        %v3598 = vunpack.c.l.b16 %v2819
        %v3599 = vunpack.c.h.b16 %v2819
        %v3600 = vunpack.c.l.b16 %v2820
        %v3601 = vunpack.c.h.b16 %v2820
        %v3602 = vunpack.c.l.b16 %v2821
        %v3603 = vunpack.c.h.b16 %v2821
        %v3604 = vunpack.c.l.b16 %v2822
        %v3605 = vunpack.c.h.b16 %v2822
        %v3606 = vunpack.c.l.b16 %v2823
        %v3607 = vunpack.c.h.b16 %v2823
        %v3608 = vunpack.c.l.b16 %v2824
        %v3609 = vunpack.c.h.b16 %v2824
        %v3610 = vunpack.c.l.b16 %v2825
        %v3611 = vunpack.c.h.b16 %v2825
        %v3612 = vunpack.c.l.b16 %v2826
        %v3613 = vunpack.c.h.b16 %v2826
        %v3614 = vunpack.c.l.b16 %v2827
        %v3615 = vunpack.c.h.b16 %v2827
        %v3616 = vunpack.c.l.b16 %v2828
        %v3617 = vunpack.c.h.b16 %v2828
        %v3618 = vunpack.c.l.b16 %v2829
        %v3619 = vunpack.c.h.b16 %v2829
        %v3620 = vunpack.c.l.b16 %v2830
        %v3621 = vunpack.c.h.b16 %v2830
        %v3622 = vunpack.c.l.b16 %v2831
        %v3623 = vunpack.c.h.b16 %v2831
        %v3624 = vunpack.c.l.b16 %v2832
        %v3625 = vunpack.c.h.b16 %v2832
        %v3626 = vunpack.c.l.b16 %v2833
        %v3627 = vunpack.c.h.b16 %v2833
        %v3628 = vunpack.c.l.b16 %v2834
        %v3629 = vunpack.c.h.b16 %v2834
        %v3630 = vunpack.c.l.b16 %v2835
        %v3631 = vunpack.c.h.b16 %v2835
        %v3632 = vunpack.c.l.b16 %v2836
        %v3633 = vunpack.c.h.b16 %v2836
        %v3634 = vunpack.c.l.b16 %v2837
        %v3635 = vunpack.c.h.b16 %v2837
        %v3636 = vunpack.c.l.b16 %v2838
        %v3637 = vunpack.c.h.b16 %v2838
        %v3638 = vunpack.c.l.b16 %v2839
        %v3639 = vunpack.c.h.b16 %v2839
        %v3640 = vunpack.c.l.b16 %v2840
        %v3641 = vunpack.c.h.b16 %v2840
        %v3642 = vunpack.c.l.b16 %v2841
        %v3643 = vunpack.c.h.b16 %v2841
        %v3644 = vunpack.c.l.b16 %v2842
        %v3645 = vunpack.c.h.b16 %v2842
        %v3646 = vunpack.c.l.b16 %v2843
        %v3647 = vunpack.c.h.b16 %v2843
        %v3648 = vunpack.c.l.b16 %v2844
        %v3649 = vunpack.c.h.b16 %v2844
        %v3650 = vunpack.c.l.b16 %v2845
        %v3651 = vunpack.c.h.b16 %v2845
        %v3652 = vunpack.c.l.b16 %v2846
        %v3653 = vunpack.c.h.b16 %v2846
        %v3654 = vunpack.c.l.b16 %v2847
        %v3655 = vunpack.c.h.b16 %v2847
        %v3656 = vunpack.c.l.b16 %v2848
        %v3657 = vunpack.c.h.b16 %v2848
        %v3658 = vunpack.c.l.b16 %v2849
        %v3659 = vunpack.c.h.b16 %v2849
        %v3660 = vunpack.c.l.b16 %v2850
        %v3661 = vunpack.c.h.b16 %v2850
        %v3662 = vunpack.c.l.b16 %v2851
        %v3663 = vunpack.c.h.b16 %v2851
        %v3664 = vunpack.c.l.b16 %v2852
        %v3665 = vunpack.c.h.b16 %v2852
        %v3666 = vunpack.c.l.b16 %v2853
        %v3667 = vunpack.c.h.b16 %v2853
        %v3668 = vunpack.c.l.b16 %v2854
        %v3669 = vunpack.c.h.b16 %v2854
        %v3670 = vunpack.c.l.b16 %v2855
        %v3671 = vunpack.c.h.b16 %v2855
        %v3672 = vunpack.c.l.b16 %v2856
        %v3673 = vunpack.c.h.b16 %v2856
        %v3674 = vunpack.c.l.b16 %v2857
        %v3675 = vunpack.c.h.b16 %v2857
        %v3676 = vunpack.c.l.b16 %v2858
        %v3677 = vunpack.c.h.b16 %v2858
        %v3678 = vunpack.c.l.b16 %v2859
        %v3679 = vunpack.c.h.b16 %v2859
        %v3680 = vunpack.c.l.b16 %v2860
        %v3681 = vunpack.c.h.b16 %v2860
        %v3682 = vunpack.c.l.b16 %v2861
        %v3683 = vunpack.c.h.b16 %v2861
        %v3684 = vunpack.c.l.b16 %v2862
        %v3685 = vunpack.c.h.b16 %v2862
        %v3686 = vunpack.c.l.b16 %v2863
        %v3687 = vunpack.c.h.b16 %v2863
        %v3688 = vunpack.c.l.b16 %v2864
        %v3689 = vunpack.c.h.b16 %v2864
        %v3690 = vunpack.c.l.b16 %v2865
        %v3691 = vunpack.c.h.b16 %v2865
        %v3692 = vunpack.c.l.b16 %v2866
        %v3693 = vunpack.c.h.b16 %v2866
        %v3694 = vunpack.c.l.b16 %v2867
        %v3695 = vunpack.c.h.b16 %v2867
        %v3696 = vunpack.c.l.b16 %v2868
        %v3697 = vunpack.c.h.b16 %v2868
        %v3698 = vunpack.c.l.b16 %v2869
        %v3699 = vunpack.c.h.b16 %v2869
        %v3700 = vunpack.c.l.b16 %v2870
        %v3701 = vunpack.c.h.b16 %v2870
        %v3702 = vunpack.c.l.b16 %v2871
        %v3703 = vunpack.c.h.b16 %v2871
        %v3704 = vunpack.c.l.b16 %v2872
        %v3705 = vunpack.c.h.b16 %v2872
        %v3706 = vunpack.c.l.b16 %v2873
        %v3707 = vunpack.c.h.b16 %v2873
        %v3708 = vunpack.c.l.b16 %v2874
        %v3709 = vunpack.c.h.b16 %v2874
        %v3710 = vunpack.c.l.b16 %v2875
        %v3711 = vunpack.c.h.b16 %v2875
        %v3712 = vunpack.c.l.b16 %v2876
        %v3713 = vunpack.c.h.b16 %v2876
        %v3714 = vunpack.c.l.b16 %v2877
        %v3715 = vunpack.c.h.b16 %v2877
        %v3716 = vunpack.c.l.b16 %v2878
        %v3717 = vunpack.c.h.b16 %v2878
        %v3718 = vunpack.c.l.b16 %v2879
        %v3719 = vunpack.c.h.b16 %v2879
        %v3720 = vunpack.c.l.b16 %v2880
        %v3721 = vunpack.c.h.b16 %v2880
        %v3722 = vunpack.c.l.b16 %v2881
        %v3723 = vunpack.c.h.b16 %v2881
        %v3724 = vunpack.c.l.b16 %v2882
        %v3725 = vunpack.c.h.b16 %v2882
        %v3726 = vunpack.c.l.b16 %v2883
        %v3727 = vunpack.c.h.b16 %v2883
        %v3728 = vunpack.c.l.b16 %v2884
        %v3729 = vunpack.c.h.b16 %v2884
        %v3730 = vunpack.c.l.b16 %v2885
        %v3731 = vunpack.c.h.b16 %v2885
        %v3732 = vunpack.c.l.b16 %v2886
        %v3733 = vunpack.c.h.b16 %v2886
        %v3734 = vunpack.c.l.b16 %v2887
        %v3735 = vunpack.c.h.b16 %v2887
        %v3736 = vunpack.c.l.b16 %v2888
        %v3737 = vunpack.c.h.b16 %v2888
        %v3738 = vunpack.c.l.b16 %v2889
        %v3739 = vunpack.c.h.b16 %v2889
        %v3740 = vunpack.c.l.b16 %v2890
        %v3741 = vunpack.c.h.b16 %v2890
        %v3742 = vunpack.c.l.b16 %v2891
        %v3743 = vunpack.c.h.b16 %v2891
        %v3744 = vunpack.c.l.b16 %v2892
        %v3745 = vunpack.c.h.b16 %v2892
        %v3746 = vunpack.c.l.b16 %v2893
        %v3747 = vunpack.c.h.b16 %v2893
        %v3748 = vunpack.c.l.b16 %v2894
        %v3749 = vunpack.c.h.b16 %v2894
        %v3750 = vunpack.c.l.b16 %v2895
        %v3751 = vunpack.c.h.b16 %v2895
        %v3752 = vunpack.c.l.b16 %v2896
        %v3753 = vunpack.c.h.b16 %v2896
        %v3754 = vunpack.c.l.b16 %v2897
        %v3755 = vunpack.c.h.b16 %v2897
        %v3756 = vunpack.c.l.b16 %v2898
        %v3757 = vunpack.c.h.b16 %v2898
        %v3758 = vunpack.c.l.b16 %v2899
        %v3759 = vunpack.c.h.b16 %v2899
        %v3760 = vunpack.c.l.b16 %v2900
        %v3761 = vunpack.c.h.b16 %v2900
        %v3762 = vunpack.c.l.b16 %v2901
        %v3763 = vunpack.c.h.b16 %v2901
        %v3764 = vunpack.c.l.b16 %v2902
        %v3765 = vunpack.c.h.b16 %v2902
        %v3766 = vunpack.c.l.b16 %v2903
        %v3767 = vunpack.c.h.b16 %v2903
        %v3768 = vunpack.c.l.b16 %v2904
        %v3769 = vunpack.c.h.b16 %v2904
        %v3770 = vunpack.c.l.b16 %v2905
        %v3771 = vunpack.c.h.b16 %v2905
        %v3772 = vunpack.c.l.b16 %v2906
        %v3773 = vunpack.c.h.b16 %v2906
        %v3774 = vunpack.c.l.b16 %v2907
        %v3775 = vunpack.c.h.b16 %v2907
        %v3776 = vunpack.c.l.b16 %v2908
        %v3777 = vunpack.c.h.b16 %v2908
        %v3778 = vunpack.c.l.b16 %v2909
        %v3779 = vunpack.c.h.b16 %v2909
        %v3780 = vunpack.c.l.b16 %v2910
        %v3781 = vunpack.c.h.b16 %v2910
        %v3782 = vunpack.c.l.b16 %v2911
        %v3783 = vunpack.c.h.b16 %v2911
        %v3784 = vunpack.c.l.b16 %v2912
        %v3785 = vunpack.c.h.b16 %v2912
        %v3786 = vunpack.c.l.b16 %v2913
        %v3787 = vunpack.c.h.b16 %v2913
        %v3788 = vunpack.c.l.b16 %v2914
        %v3789 = vunpack.c.h.b16 %v2914
        %v3790 = vunpack.c.l.b16 %v2915
        %v3791 = vunpack.c.h.b16 %v2915
        %v3792 = vunpack.c.l.b16 %v2916
        %v3793 = vunpack.c.h.b16 %v2916
        %v3794 = vpack.c.b16 %v3224, %v3218
        %v3795 = vpack.c.b16 %v3225, %v3219
        %v3796 = vpack.c.b16 %v3226, %v3220
        %v3797 = vpack.c.b16 %v3227, %v3221
        %v3798 = vpack.c.b16 %v3228, %v3222
        %v3799 = vpack.c.b16 %v3229, %v3223
        %v3800 = vpack.c.b16 %v3236, %v3230
        %v3801 = vpack.c.b16 %v3237, %v3231
        %v3802 = vpack.c.b16 %v3238, %v3232
        %v3803 = vpack.c.b16 %v3239, %v3233
        %v3804 = vpack.c.b16 %v3240, %v3234
        %v3805 = vpack.c.b16 %v3241, %v3235
        %v3806 = vpack.c.b16 %v3248, %v3242
        %v3807 = vpack.c.b16 %v3249, %v3243
        %v3808 = vpack.c.b16 %v3250, %v3244
        %v3809 = vpack.c.b16 %v3251, %v3245
        %v3810 = vpack.c.b16 %v3252, %v3246
        %v3811 = vpack.c.b16 %v3253, %v3247
        %v3812 = vpack.c.b16 %v3260, %v3254
        %v3813 = vpack.c.b16 %v3261, %v3255
        %v3814 = vpack.c.b16 %v3262, %v3256
        %v3815 = vpack.c.b16 %v3263, %v3257
        %v3816 = vpack.c.b16 %v3264, %v3258
        %v3817 = vpack.c.b16 %v3265, %v3259
        %v3818 = vpack.c.b16 %v3272, %v3266
        %v3819 = vpack.c.b16 %v3273, %v3267
        %v3820 = vpack.c.b16 %v3274, %v3268
        %v3821 = vpack.c.b16 %v3275, %v3269
        %v3822 = vpack.c.b16 %v3276, %v3270
        %v3823 = vpack.c.b16 %v3277, %v3271
        %v3824 = vpack.c.b16 %v3284, %v3278
        %v3825 = vpack.c.b16 %v3285, %v3279
        %v3826 = vpack.c.b16 %v3286, %v3280
        %v3827 = vpack.c.b16 %v3287, %v3281
        %v3828 = vpack.c.b16 %v3288, %v3282
        %v3829 = vpack.c.b16 %v3289, %v3283
        %v3830 = vpack.c.b16 %v3296, %v3290
        %v3831 = vpack.c.b16 %v3297, %v3291
        %v3832 = vpack.c.b16 %v3298, %v3292
        %v3833 = vpack.c.b16 %v3299, %v3293
        %v3834 = vpack.c.b16 %v3300, %v3294
        %v3835 = vpack.c.b16 %v3301, %v3295
        %v3836 = vpack.c.b16 %v3308, %v3302
        %v3837 = vpack.c.b16 %v3309, %v3303
        %v3838 = vpack.c.b16 %v3310, %v3304
        %v3839 = vpack.c.b16 %v3311, %v3305
        %v3840 = vpack.c.b16 %v3312, %v3306
        %v3841 = vpack.c.b16 %v3313, %v3307
        %v3842 = vpack.c.b16 %v3320, %v3314
        %v3843 = vpack.c.b16 %v3321, %v3315
        %v3844 = vpack.c.b16 %v3322, %v3316
        %v3845 = vpack.c.b16 %v3323, %v3317
        %v3846 = vpack.c.b16 %v3324, %v3318
        %v3847 = vpack.c.b16 %v3325, %v3319
        %v3848 = vpack.c.b16 %v3332, %v3326
        %v3849 = vpack.c.b16 %v3333, %v3327
        %v3850 = vpack.c.b16 %v3334, %v3328
        %v3851 = vpack.c.b16 %v3335, %v3329
        %v3852 = vpack.c.b16 %v3336, %v3330
        %v3853 = vpack.c.b16 %v3337, %v3331
        %v3854 = vpack.c.b16 %v3344, %v3338
        %v3855 = vpack.c.b16 %v3345, %v3339
        %v3856 = vpack.c.b16 %v3346, %v3340
        %v3857 = vpack.c.b16 %v3347, %v3341
        %v3858 = vpack.c.b16 %v3348, %v3342
        %v3859 = vpack.c.b16 %v3349, %v3343
        %v3860 = vpack.c.b16 %v3356, %v3350
        %v3861 = vpack.c.b16 %v3357, %v3351
        %v3862 = vpack.c.b16 %v3358, %v3352
        %v3863 = vpack.c.b16 %v3359, %v3353
        %v3864 = vpack.c.b16 %v3360, %v3354
        %v3865 = vpack.c.b16 %v3361, %v3355
        %v3866 = vpack.c.b16 %v3368, %v3362
        %v3867 = vpack.c.b16 %v3369, %v3363
        %v3868 = vpack.c.b16 %v3370, %v3364
        %v3869 = vpack.c.b16 %v3371, %v3365
        %v3870 = vpack.c.b16 %v3372, %v3366
        %v3871 = vpack.c.b16 %v3373, %v3367
        %v3872 = vpack.c.b16 %v3380, %v3374
        %v3873 = vpack.c.b16 %v3381, %v3375
        %v3874 = vpack.c.b16 %v3382, %v3376
        %v3875 = vpack.c.b16 %v3383, %v3377
        %v3876 = vpack.c.b16 %v3384, %v3378
        %v3877 = vpack.c.b16 %v3385, %v3379
        %v3878 = vpack.c.b16 %v3392, %v3386
        %v3879 = vpack.c.b16 %v3393, %v3387
        %v3880 = vpack.c.b16 %v3394, %v3388
        %v3881 = vpack.c.b16 %v3395, %v3389
        %v3882 = vpack.c.b16 %v3396, %v3390
        %v3883 = vpack.c.b16 %v3397, %v3391
        %v3884 = vpack.c.b16 %v3404, %v3398
        %v3885 = vpack.c.b16 %v3405, %v3399
        %v3886 = vpack.c.b16 %v3406, %v3400
        %v3887 = vpack.c.b16 %v3407, %v3401
        %v3888 = vpack.c.b16 %v3408, %v3402
        %v3889 = vpack.c.b16 %v3409, %v3403
        %v3890 = vpack.c.b16 %v3416, %v3410
        %v3891 = vpack.c.b16 %v3417, %v3411
        %v3892 = vpack.c.b16 %v3418, %v3412
        %v3893 = vpack.c.b16 %v3419, %v3413
        %v3894 = vpack.c.b16 %v3420, %v3414
        %v3895 = vpack.c.b16 %v3421, %v3415
        %v3896 = vpack.c.b16 %v3428, %v3422
        %v3897 = vpack.c.b16 %v3429, %v3423
        %v3898 = vpack.c.b16 %v3430, %v3424
        %v3899 = vpack.c.b16 %v3431, %v3425
        %v3900 = vpack.c.b16 %v3432, %v3426
        %v3901 = vpack.c.b16 %v3433, %v3427
        %v3902 = vpack.c.b16 %v3440, %v3434
        %v3903 = vpack.c.b16 %v3441, %v3435
        %v3904 = vpack.c.b16 %v3442, %v3436
        %v3905 = vpack.c.b16 %v3443, %v3437
        %v3906 = vpack.c.b16 %v3444, %v3438
        %v3907 = vpack.c.b16 %v3445, %v3439
        %v3908 = vpack.c.b16 %v3452, %v3446
        %v3909 = vpack.c.b16 %v3453, %v3447
        %v3910 = vpack.c.b16 %v3454, %v3448
        %v3911 = vpack.c.b16 %v3455, %v3449
        %v3912 = vpack.c.b16 %v3456, %v3450
        %v3913 = vpack.c.b16 %v3457, %v3451
        %v3914 = vpack.c.b16 %v3464, %v3458
        %v3915 = vpack.c.b16 %v3465, %v3459
        %v3916 = vpack.c.b16 %v3466, %v3460
        %v3917 = vpack.c.b16 %v3467, %v3461
        %v3918 = vpack.c.b16 %v3468, %v3462
        %v3919 = vpack.c.b16 %v3469, %v3463
        %v3920 = vpack.c.b16 %v3476, %v3470
        %v3921 = vpack.c.b16 %v3477, %v3471
        %v3922 = vpack.c.b16 %v3478, %v3472
        %v3923 = vpack.c.b16 %v3479, %v3473
        %v3924 = vpack.c.b16 %v3480, %v3474
        %v3925 = vpack.c.b16 %v3481, %v3475
        %v3926 = vpack.c.b16 %v3488, %v3482
        %v3927 = vpack.c.b16 %v3489, %v3483
        %v3928 = vpack.c.b16 %v3490, %v3484
        %v3929 = vpack.c.b16 %v3491, %v3485
        %v3930 = vpack.c.b16 %v3492, %v3486
        %v3931 = vpack.c.b16 %v3493, %v3487
        %v3932 = vpack.c.b16 %v3500, %v3494
        %v3933 = vpack.c.b16 %v3501, %v3495
        %v3934 = vpack.c.b16 %v3502, %v3496
        %v3935 = vpack.c.b16 %v3503, %v3497
        %v3936 = vpack.c.b16 %v3504, %v3498
        %v3937 = vpack.c.b16 %v3505, %v3499
        %v3938 = vpack.c.b16 %v3512, %v3506
        %v3939 = vpack.c.b16 %v3513, %v3507
        %v3940 = vpack.c.b16 %v3514, %v3508
        %v3941 = vpack.c.b16 %v3515, %v3509
        %v3942 = vpack.c.b16 %v3516, %v3510
        %v3943 = vpack.c.b16 %v3517, %v3511
        %v3944 = vpack.c.b16 %v3524, %v3518
        %v3945 = vpack.c.b16 %v3525, %v3519
        %v3946 = vpack.c.b16 %v3526, %v3520
        %v3947 = vpack.c.b16 %v3527, %v3521
        %v3948 = vpack.c.b16 %v3528, %v3522
        %v3949 = vpack.c.b16 %v3529, %v3523
        %v3950 = vpack.c.b16 %v3536, %v3530
        %v3951 = vpack.c.b16 %v3537, %v3531
        %v3952 = vpack.c.b16 %v3538, %v3532
        %v3953 = vpack.c.b16 %v3539, %v3533
        %v3954 = vpack.c.b16 %v3540, %v3534
        %v3955 = vpack.c.b16 %v3541, %v3535
        %v3956 = vpack.c.b16 %v3548, %v3542
        %v3957 = vpack.c.b16 %v3549, %v3543
        %v3958 = vpack.c.b16 %v3550, %v3544
        %v3959 = vpack.c.b16 %v3551, %v3545
        %v3960 = vpack.c.b16 %v3552, %v3546
        %v3961 = vpack.c.b16 %v3553, %v3547
        %v3962 = vpack.c.b16 %v3560, %v3554
        %v3963 = vpack.c.b16 %v3561, %v3555
        %v3964 = vpack.c.b16 %v3562, %v3556
        %v3965 = vpack.c.b16 %v3563, %v3557
        %v3966 = vpack.c.b16 %v3564, %v3558
        %v3967 = vpack.c.b16 %v3565, %v3559
        %v3968 = vpack.c.b16 %v3572, %v3566
        %v3969 = vpack.c.b16 %v3573, %v3567
        %v3970 = vpack.c.b16 %v3574, %v3568
        %v3971 = vpack.c.b16 %v3575, %v3569
        %v3972 = vpack.c.b16 %v3576, %v3570
        %v3973 = vpack.c.b16 %v3577, %v3571
        %v3974 = vpack.c.b16 %v3584, %v3578
        %v3975 = vpack.c.b16 %v3585, %v3579
        %v3976 = vpack.c.b16 %v3586, %v3580
        %v3977 = vpack.c.b16 %v3587, %v3581
        %v3978 = vpack.c.b16 %v3588, %v3582
        %v3979 = vpack.c.b16 %v3589, %v3583
        %v3980 = vpack.c.b16 %v3596, %v3590
        %v3981 = vpack.c.b16 %v3597, %v3591
        %v3982 = vpack.c.b16 %v3598, %v3592
        %v3983 = vpack.c.b16 %v3599, %v3593
        %v3984 = vpack.c.b16 %v3600, %v3594
        %v3985 = vpack.c.b16 %v3601, %v3595
        %v3986 = vpack.c.b16 %v3608, %v3602
        %v3987 = vpack.c.b16 %v3609, %v3603
        %v3988 = vpack.c.b16 %v3610, %v3604
        %v3989 = vpack.c.b16 %v3611, %v3605
        %v3990 = vpack.c.b16 %v3612, %v3606
        %v3991 = vpack.c.b16 %v3613, %v3607
        %v3992 = vpack.c.b16 %v3620, %v3614
        %v3993 = vpack.c.b16 %v3621, %v3615
        %v3994 = vpack.c.b16 %v3622, %v3616
        %v3995 = vpack.c.b16 %v3623, %v3617
        %v3996 = vpack.c.b16 %v3624, %v3618
        %v3997 = vpack.c.b16 %v3625, %v3619
        %v3998 = vpack.c.b16 %v3632, %v3626
        %v3999 = vpack.c.b16 %v3633, %v3627
        %v4000 = vpack.c.b16 %v3634, %v3628
        %v4001 = vpack.c.b16 %v3635, %v3629
        %v4002 = vpack.c.b16 %v3636, %v3630
        %v4003 = vpack.c.b16 %v3637, %v3631
        %v4004 = vpack.c.b16 %v3644, %v3638
        %v4005 = vpack.c.b16 %v3645, %v3639
        %v4006 = vpack.c.b16 %v3646, %v3640
        %v4007 = vpack.c.b16 %v3647, %v3641
        %v4008 = vpack.c.b16 %v3648, %v3642
        %v4009 = vpack.c.b16 %v3649, %v3643
        %v4010 = vpack.c.b16 %v3656, %v3650
        %v4011 = vpack.c.b16 %v3657, %v3651
        %v4012 = vpack.c.b16 %v3658, %v3652
        %v4013 = vpack.c.b16 %v3659, %v3653
        %v4014 = vpack.c.b16 %v3660, %v3654
        %v4015 = vpack.c.b16 %v3661, %v3655
        %v4016 = vpack.c.b16 %v3668, %v3662
        %v4017 = vpack.c.b16 %v3669, %v3663
        %v4018 = vpack.c.b16 %v3670, %v3664
        %v4019 = vpack.c.b16 %v3671, %v3665
        %v4020 = vpack.c.b16 %v3672, %v3666
        %v4021 = vpack.c.b16 %v3673, %v3667
        %v4022 = vpack.c.b16 %v3680, %v3674
        %v4023 = vpack.c.b16 %v3681, %v3675
        %v4024 = vpack.c.b16 %v3682, %v3676
        %v4025 = vpack.c.b16 %v3683, %v3677
        %v4026 = vpack.c.b16 %v3684, %v3678
        %v4027 = vpack.c.b16 %v3685, %v3679
        %v4028 = vpack.c.b16 %v3692, %v3686
        %v4029 = vpack.c.b16 %v3693, %v3687
        %v4030 = vpack.c.b16 %v3694, %v3688
        %v4031 = vpack.c.b16 %v3695, %v3689
        %v4032 = vpack.c.b16 %v3696, %v3690
        %v4033 = vpack.c.b16 %v3697, %v3691
        %v4034 = vpack.c.b16 %v3704, %v3698
        %v4035 = vpack.c.b16 %v3705, %v3699
        %v4036 = vpack.c.b16 %v3706, %v3700
        %v4037 = vpack.c.b16 %v3707, %v3701
        %v4038 = vpack.c.b16 %v3708, %v3702
        %v4039 = vpack.c.b16 %v3709, %v3703
        %v4040 = vpack.c.b16 %v3716, %v3710
        %v4041 = vpack.c.b16 %v3717, %v3711
        %v4042 = vpack.c.b16 %v3718, %v3712
        %v4043 = vpack.c.b16 %v3719, %v3713
        %v4044 = vpack.c.b16 %v3720, %v3714
        %v4045 = vpack.c.b16 %v3721, %v3715
        %v4046 = vpack.c.b16 %v3728, %v3722
        %v4047 = vpack.c.b16 %v3729, %v3723
        %v4048 = vpack.c.b16 %v3730, %v3724
        %v4049 = vpack.c.b16 %v3731, %v3725
        %v4050 = vpack.c.b16 %v3732, %v3726
        %v4051 = vpack.c.b16 %v3733, %v3727
        %v4052 = vpack.c.b16 %v3740, %v3734
        %v4053 = vpack.c.b16 %v3741, %v3735
        %v4054 = vpack.c.b16 %v3742, %v3736
        %v4055 = vpack.c.b16 %v3743, %v3737
        %v4056 = vpack.c.b16 %v3744, %v3738
        %v4057 = vpack.c.b16 %v3745, %v3739
        %v4058 = vpack.c.b16 %v3752, %v3746
        %v4059 = vpack.c.b16 %v3753, %v3747
        %v4060 = vpack.c.b16 %v3754, %v3748
        %v4061 = vpack.c.b16 %v3755, %v3749
        %v4062 = vpack.c.b16 %v3756, %v3750
        %v4063 = vpack.c.b16 %v3757, %v3751
        %v4064 = vpack.c.b16 %v3764, %v3758
        %v4065 = vpack.c.b16 %v3765, %v3759
        %v4066 = vpack.c.b16 %v3766, %v3760
        %v4067 = vpack.c.b16 %v3767, %v3761
        %v4068 = vpack.c.b16 %v3768, %v3762
        %v4069 = vpack.c.b16 %v3769, %v3763
        %v4070 = vpack.c.b16 %v3776, %v3770
        %v4071 = vpack.c.b16 %v3777, %v3771
        %v4072 = vpack.c.b16 %v3778, %v3772
        %v4073 = vpack.c.b16 %v3779, %v3773
        %v4074 = vpack.c.b16 %v3780, %v3774
        %v4075 = vpack.c.b16 %v3781, %v3775
        %v4076 = vpack.c.b16 %v3788, %v3782
        %v4077 = vpack.c.b16 %v3789, %v3783
        %v4078 = vpack.c.b16 %v3790, %v3784
        %v4079 = vpack.c.b16 %v3791, %v3785
        %v4080 = vpack.c.b16 %v3792, %v3786
        %v4081 = vpack.c.b16 %v3793, %v3787
        %4370 = vmatpush.bf16.msra.mxu0 %v3836
        %4371 = vmatpush.bf16.msra.mxu0 %v3830
        %4372 = vmatpush.bf16.msra.mxu0 %v3824
        %4373 = vmatpush.bf16.msra.mxu0 %v3818
        %4374 = vmatpush.bf16.msra.mxu0 %v3812
        %4375 = vmatpush.bf16.msra.mxu0 %v3806
        %4376 = vmatpush.bf16.msra.mxu0 %v3800
        %4377 = vmatpush.bf16.msra.mxu0 %v3794
        %4378 = vmatmul.bf16.gmra.mxu0 %v2622
        %v4379 = vpop.f32.mrf.mxu0
        %v4380 = vadd.f32 %v2918, %v4379
        %v4381 = vpop.f32.mrf.mxu0
        %v4382 = vadd.f32 %v2918, %v4381
        %4383 = vdwg.mxu0
        %4384 = vmatpush.bf16.msra.mxu0 %v3884
        %4385 = vmatpush.bf16.msra.mxu0 %v3878
        %4386 = vmatpush.bf16.msra.mxu0 %v3872
        %4387 = vmatpush.bf16.msra.mxu0 %v3866
        %4388 = vmatpush.bf16.msra.mxu0 %v3860
        %4389 = vmatpush.bf16.msra.mxu0 %v3854
        %4390 = vmatpush.bf16.msra.mxu0 %v3848
        %4391 = vmatpush.bf16.msra.mxu0 %v3842
        %4392 = vmatmul.bf16.gmra.mxu0 %v2623
        %v4393 = vpop.f32.mrf.mxu0
        %v4394 = vadd.f32 %v4380, %v4393
        %v4395 = vpop.f32.mrf.mxu0
        %v4396 = vadd.f32 %v4382, %v4395
        %4397 = vdwg.mxu0
        %4398 = vmatpush.bf16.msra.mxu0 %v3932
        %4399 = vmatpush.bf16.msra.mxu0 %v3926
        %4400 = vmatpush.bf16.msra.mxu0 %v3920
        %4401 = vmatpush.bf16.msra.mxu0 %v3914
        %4402 = vmatpush.bf16.msra.mxu0 %v3908
        %4403 = vmatpush.bf16.msra.mxu0 %v3902
        %4404 = vmatpush.bf16.msra.mxu0 %v3896
        %4405 = vmatpush.bf16.msra.mxu0 %v3890
        %4406 = vmatmul.bf16.gmra.mxu0 %v2624
        %v4407 = vpop.f32.mrf.mxu0
        %v4408 = vadd.f32 %v4394, %v4407
        %v4409 = vpop.f32.mrf.mxu0
        %v4410 = vadd.f32 %v4396, %v4409
        %4411 = vdwg.mxu0
        %4412 = vmatpush.bf16.msra.mxu0 %v3980
        %4413 = vmatpush.bf16.msra.mxu0 %v3974
        %4414 = vmatpush.bf16.msra.mxu0 %v3968
        %4415 = vmatpush.bf16.msra.mxu0 %v3962
        %4416 = vmatpush.bf16.msra.mxu0 %v3956
        %4417 = vmatpush.bf16.msra.mxu0 %v3950
        %4418 = vmatpush.bf16.msra.mxu0 %v3944
        %4419 = vmatpush.bf16.msra.mxu0 %v3938
        %4420 = vmatmul.bf16.gmra.mxu0 %v2625
        %v4421 = vpop.f32.mrf.mxu0
        %v4422 = vadd.f32 %v4408, %v4421
        %v4423 = vpop.f32.mrf.mxu0
        %v4424 = vadd.f32 %v4410, %v4423
        %4425 = vdwg.mxu0
        %4426 = vmatpush.bf16.msra.mxu0 %v4028
        %4427 = vmatpush.bf16.msra.mxu0 %v4022
        %4428 = vmatpush.bf16.msra.mxu0 %v4016
        %4429 = vmatpush.bf16.msra.mxu0 %v4010
        %4430 = vmatpush.bf16.msra.mxu0 %v4004
        %4431 = vmatpush.bf16.msra.mxu0 %v3998
        %4432 = vmatpush.bf16.msra.mxu0 %v3992
        %4433 = vmatpush.bf16.msra.mxu0 %v3986
        %4434 = vmatmul.bf16.gmra.mxu0 %v2626
        %v4435 = vpop.f32.mrf.mxu0
        %v4436 = vadd.f32 %v4422, %v4435
        %v4437 = vpop.f32.mrf.mxu0
        %v4438 = vadd.f32 %v4424, %v4437
        %4439 = vdwg.mxu0
        %4440 = vmatpush.bf16.msra.mxu0 %v4076
        %4441 = vmatpush.bf16.msra.mxu0 %v4070
        %4442 = vmatpush.bf16.msra.mxu0 %v4064
        %4443 = vmatpush.bf16.msra.mxu0 %v4058
        %4444 = vmatpush.bf16.msra.mxu0 %v4052
        %4445 = vmatpush.bf16.msra.mxu0 %v4046
        %4446 = vmatpush.bf16.msra.mxu0 %v4040
        %4447 = vmatpush.bf16.msra.mxu0 %v4034
        %4448 = vmatmul.bf16.gmra.mxu0 %v2627
        %v4449 = vpop.f32.mrf.mxu0
        %v4450 = vadd.f32 %v4436, %v4449
        %v4451 = vpop.f32.mrf.mxu0
        %v4452 = vadd.f32 %v4438, %v4451
        %4453 = vdwg.mxu0
        %4454 = vmatpush.bf16.msra.mxu0 %v3837
        %4455 = vmatpush.bf16.msra.mxu0 %v3831
        %4456 = vmatpush.bf16.msra.mxu0 %v3825
        %4457 = vmatpush.bf16.msra.mxu0 %v3819
        %4458 = vmatpush.bf16.msra.mxu0 %v3813
        %4459 = vmatpush.bf16.msra.mxu0 %v3807
        %4460 = vmatpush.bf16.msra.mxu0 %v3801
        %4461 = vmatpush.bf16.msra.mxu0 %v3795
        %4462 = vmatmul.bf16.gmra.mxu0 %v2622
        %v4463 = vpop.f32.mrf.mxu0
        %v4464 = vadd.f32 %v2919, %v4463
        %v4465 = vpop.f32.mrf.mxu0
        %v4466 = vadd.f32 %v2919, %v4465
        %4467 = vdwg.mxu0
        %4468 = vmatpush.bf16.msra.mxu0 %v3885
        %4469 = vmatpush.bf16.msra.mxu0 %v3879
        %4470 = vmatpush.bf16.msra.mxu0 %v3873
        %4471 = vmatpush.bf16.msra.mxu0 %v3867
        %4472 = vmatpush.bf16.msra.mxu0 %v3861
        %4473 = vmatpush.bf16.msra.mxu0 %v3855
        %4474 = vmatpush.bf16.msra.mxu0 %v3849
        %4475 = vmatpush.bf16.msra.mxu0 %v3843
        %4476 = vmatmul.bf16.gmra.mxu0 %v2623
        %v4477 = vpop.f32.mrf.mxu0
        %v4478 = vadd.f32 %v4464, %v4477
        %v4479 = vpop.f32.mrf.mxu0
        %v4480 = vadd.f32 %v4466, %v4479
        %4481 = vdwg.mxu0
        %4482 = vmatpush.bf16.msra.mxu0 %v3933
        %4483 = vmatpush.bf16.msra.mxu0 %v3927
        %4484 = vmatpush.bf16.msra.mxu0 %v3921
        %4485 = vmatpush.bf16.msra.mxu0 %v3915
        %4486 = vmatpush.bf16.msra.mxu0 %v3909
        %4487 = vmatpush.bf16.msra.mxu0 %v3903
        %4488 = vmatpush.bf16.msra.mxu0 %v3897
        %4489 = vmatpush.bf16.msra.mxu0 %v3891
        %4490 = vmatmul.bf16.gmra.mxu0 %v2624
        %v4491 = vpop.f32.mrf.mxu0
        %v4492 = vadd.f32 %v4478, %v4491
        %v4493 = vpop.f32.mrf.mxu0
        %v4494 = vadd.f32 %v4480, %v4493
        %4495 = vdwg.mxu0
        %4496 = vmatpush.bf16.msra.mxu0 %v3981
        %4497 = vmatpush.bf16.msra.mxu0 %v3975
        %4498 = vmatpush.bf16.msra.mxu0 %v3969
        %4499 = vmatpush.bf16.msra.mxu0 %v3963
        %4500 = vmatpush.bf16.msra.mxu0 %v3957
        %4501 = vmatpush.bf16.msra.mxu0 %v3951
        %4502 = vmatpush.bf16.msra.mxu0 %v3945
        %4503 = vmatpush.bf16.msra.mxu0 %v3939
        %4504 = vmatmul.bf16.gmra.mxu0 %v2625
        %v4505 = vpop.f32.mrf.mxu0
        %v4506 = vadd.f32 %v4492, %v4505
        %v4507 = vpop.f32.mrf.mxu0
        %v4508 = vadd.f32 %v4494, %v4507
        %4509 = vdwg.mxu0
        %4510 = vmatpush.bf16.msra.mxu0 %v4029
        %4511 = vmatpush.bf16.msra.mxu0 %v4023
        %4512 = vmatpush.bf16.msra.mxu0 %v4017
        %4513 = vmatpush.bf16.msra.mxu0 %v4011
        %4514 = vmatpush.bf16.msra.mxu0 %v4005
        %4515 = vmatpush.bf16.msra.mxu0 %v3999
        %4516 = vmatpush.bf16.msra.mxu0 %v3993
        %4517 = vmatpush.bf16.msra.mxu0 %v3987
        %4518 = vmatmul.bf16.gmra.mxu0 %v2626
        %v4519 = vpop.f32.mrf.mxu0
        %v4520 = vadd.f32 %v4506, %v4519
        %v4521 = vpop.f32.mrf.mxu0
        %v4522 = vadd.f32 %v4508, %v4521
        %4523 = vdwg.mxu0
        %4524 = vmatpush.bf16.msra.mxu0 %v4077
        %4525 = vmatpush.bf16.msra.mxu0 %v4071
        %4526 = vmatpush.bf16.msra.mxu0 %v4065
        %4527 = vmatpush.bf16.msra.mxu0 %v4059
        %4528 = vmatpush.bf16.msra.mxu0 %v4053
        %4529 = vmatpush.bf16.msra.mxu0 %v4047
        %4530 = vmatpush.bf16.msra.mxu0 %v4041
        %4531 = vmatpush.bf16.msra.mxu0 %v4035
        %4532 = vmatmul.bf16.gmra.mxu0 %v2627
        %v4533 = vpop.f32.mrf.mxu0
        %v4534 = vadd.f32 %v4520, %v4533
        %v4535 = vpop.f32.mrf.mxu0
        %v4536 = vadd.f32 %v4522, %v4535
        %4537 = vdwg.mxu0
        %4538 = vmatpush.bf16.msra.mxu0 %v3838
        %4539 = vmatpush.bf16.msra.mxu0 %v3832
        %4540 = vmatpush.bf16.msra.mxu0 %v3826
        %4541 = vmatpush.bf16.msra.mxu0 %v3820
        %4542 = vmatpush.bf16.msra.mxu0 %v3814
        %4543 = vmatpush.bf16.msra.mxu0 %v3808
        %4544 = vmatpush.bf16.msra.mxu0 %v3802
        %4545 = vmatpush.bf16.msra.mxu0 %v3796
        %4546 = vmatmul.bf16.gmra.mxu0 %v2622
        %v4547 = vpop.f32.mrf.mxu0
        %v4548 = vadd.f32 %v2920, %v4547
        %v4549 = vpop.f32.mrf.mxu0
        %v4550 = vadd.f32 %v2920, %v4549
        %4551 = vdwg.mxu0
        %4552 = vmatpush.bf16.msra.mxu0 %v3886
        %4553 = vmatpush.bf16.msra.mxu0 %v3880
        %4554 = vmatpush.bf16.msra.mxu0 %v3874
        %4555 = vmatpush.bf16.msra.mxu0 %v3868
        %4556 = vmatpush.bf16.msra.mxu0 %v3862
        %4557 = vmatpush.bf16.msra.mxu0 %v3856
        %4558 = vmatpush.bf16.msra.mxu0 %v3850
        %4559 = vmatpush.bf16.msra.mxu0 %v3844
        %4560 = vmatmul.bf16.gmra.mxu0 %v2623
        %v4561 = vpop.f32.mrf.mxu0
        %v4562 = vadd.f32 %v4548, %v4561
        %v4563 = vpop.f32.mrf.mxu0
        %v4564 = vadd.f32 %v4550, %v4563
        %4565 = vdwg.mxu0
        %4566 = vmatpush.bf16.msra.mxu0 %v3934
        %4567 = vmatpush.bf16.msra.mxu0 %v3928
        %4568 = vmatpush.bf16.msra.mxu0 %v3922
        %4569 = vmatpush.bf16.msra.mxu0 %v3916
        %4570 = vmatpush.bf16.msra.mxu0 %v3910
        %4571 = vmatpush.bf16.msra.mxu0 %v3904
        %4572 = vmatpush.bf16.msra.mxu0 %v3898
        %4573 = vmatpush.bf16.msra.mxu0 %v3892
        %4574 = vmatmul.bf16.gmra.mxu0 %v2624
        %v4575 = vpop.f32.mrf.mxu0
        %v4576 = vadd.f32 %v4562, %v4575
        %v4577 = vpop.f32.mrf.mxu0
        %v4578 = vadd.f32 %v4564, %v4577
        %4579 = vdwg.mxu0
        %4580 = vmatpush.bf16.msra.mxu0 %v3982
        %4581 = vmatpush.bf16.msra.mxu0 %v3976
        %4582 = vmatpush.bf16.msra.mxu0 %v3970
        %4583 = vmatpush.bf16.msra.mxu0 %v3964
        %4584 = vmatpush.bf16.msra.mxu0 %v3958
        %4585 = vmatpush.bf16.msra.mxu0 %v3952
        %4586 = vmatpush.bf16.msra.mxu0 %v3946
        %4587 = vmatpush.bf16.msra.mxu0 %v3940
        %4588 = vmatmul.bf16.gmra.mxu0 %v2625
        %v4589 = vpop.f32.mrf.mxu0
        %v4590 = vadd.f32 %v4576, %v4589
        %v4591 = vpop.f32.mrf.mxu0
        %v4592 = vadd.f32 %v4578, %v4591
        %4593 = vdwg.mxu0
        %4594 = vmatpush.bf16.msra.mxu0 %v4030
        %4595 = vmatpush.bf16.msra.mxu0 %v4024
        %4596 = vmatpush.bf16.msra.mxu0 %v4018
        %4597 = vmatpush.bf16.msra.mxu0 %v4012
        %4598 = vmatpush.bf16.msra.mxu0 %v4006
        %4599 = vmatpush.bf16.msra.mxu0 %v4000
        %4600 = vmatpush.bf16.msra.mxu0 %v3994
        %4601 = vmatpush.bf16.msra.mxu0 %v3988
        %4602 = vmatmul.bf16.gmra.mxu0 %v2626
        %v4603 = vpop.f32.mrf.mxu0
        %v4604 = vadd.f32 %v4590, %v4603
        %v4605 = vpop.f32.mrf.mxu0
        %v4606 = vadd.f32 %v4592, %v4605
        %4607 = vdwg.mxu0
        %4608 = vmatpush.bf16.msra.mxu0 %v4078
        %4609 = vmatpush.bf16.msra.mxu0 %v4072
        %4610 = vmatpush.bf16.msra.mxu0 %v4066
        %4611 = vmatpush.bf16.msra.mxu0 %v4060
        %4612 = vmatpush.bf16.msra.mxu0 %v4054
        %4613 = vmatpush.bf16.msra.mxu0 %v4048
        %4614 = vmatpush.bf16.msra.mxu0 %v4042
        %4615 = vmatpush.bf16.msra.mxu0 %v4036
        %4616 = vmatmul.bf16.gmra.mxu0 %v2627
        %v4617 = vpop.f32.mrf.mxu0
        %v4618 = vadd.f32 %v4604, %v4617
        %v4619 = vpop.f32.mrf.mxu0
        %v4620 = vadd.f32 %v4606, %v4619
        %4621 = vdwg.mxu0
        %4622 = vmatpush.bf16.msra.mxu0 %v3839
        %4623 = vmatpush.bf16.msra.mxu0 %v3833
        %4624 = vmatpush.bf16.msra.mxu0 %v3827
        %4625 = vmatpush.bf16.msra.mxu0 %v3821
        %4626 = vmatpush.bf16.msra.mxu0 %v3815
        %4627 = vmatpush.bf16.msra.mxu0 %v3809
        %4628 = vmatpush.bf16.msra.mxu0 %v3803
        %4629 = vmatpush.bf16.msra.mxu0 %v3797
        %4630 = vmatmul.bf16.gmra.mxu0 %v2622
        %v4631 = vpop.f32.mrf.mxu0
        %v4632 = vadd.f32 %v2921, %v4631
        %v4633 = vpop.f32.mrf.mxu0
        %v4634 = vadd.f32 %v2921, %v4633
        %4635 = vdwg.mxu0
        %4636 = vmatpush.bf16.msra.mxu0 %v3887
        %4637 = vmatpush.bf16.msra.mxu0 %v3881
        %4638 = vmatpush.bf16.msra.mxu0 %v3875
        %4639 = vmatpush.bf16.msra.mxu0 %v3869
        %4640 = vmatpush.bf16.msra.mxu0 %v3863
        %4641 = vmatpush.bf16.msra.mxu0 %v3857
        %4642 = vmatpush.bf16.msra.mxu0 %v3851
        %4643 = vmatpush.bf16.msra.mxu0 %v3845
        %4644 = vmatmul.bf16.gmra.mxu0 %v2623
        %v4645 = vpop.f32.mrf.mxu0
        %v4646 = vadd.f32 %v4632, %v4645
        %v4647 = vpop.f32.mrf.mxu0
        %v4648 = vadd.f32 %v4634, %v4647
        %4649 = vdwg.mxu0
        %4650 = vmatpush.bf16.msra.mxu0 %v3935
        %4651 = vmatpush.bf16.msra.mxu0 %v3929
        %4652 = vmatpush.bf16.msra.mxu0 %v3923
        %4653 = vmatpush.bf16.msra.mxu0 %v3917
        %4654 = vmatpush.bf16.msra.mxu0 %v3911
        %4655 = vmatpush.bf16.msra.mxu0 %v3905
        %4656 = vmatpush.bf16.msra.mxu0 %v3899
        %4657 = vmatpush.bf16.msra.mxu0 %v3893
        %4658 = vmatmul.bf16.gmra.mxu0 %v2624
        %v4659 = vpop.f32.mrf.mxu0
        %v4660 = vadd.f32 %v4646, %v4659
        %v4661 = vpop.f32.mrf.mxu0
        %v4662 = vadd.f32 %v4648, %v4661
        %4663 = vdwg.mxu0
        %4664 = vmatpush.bf16.msra.mxu0 %v3983
        %4665 = vmatpush.bf16.msra.mxu0 %v3977
        %4666 = vmatpush.bf16.msra.mxu0 %v3971
        %4667 = vmatpush.bf16.msra.mxu0 %v3965
        %4668 = vmatpush.bf16.msra.mxu0 %v3959
        %4669 = vmatpush.bf16.msra.mxu0 %v3953
        %4670 = vmatpush.bf16.msra.mxu0 %v3947
        %4671 = vmatpush.bf16.msra.mxu0 %v3941
        %4672 = vmatmul.bf16.gmra.mxu0 %v2625
        %v4673 = vpop.f32.mrf.mxu0
        %v4674 = vadd.f32 %v4660, %v4673
        %v4675 = vpop.f32.mrf.mxu0
        %v4676 = vadd.f32 %v4662, %v4675
        %4677 = vdwg.mxu0
        %4678 = vmatpush.bf16.msra.mxu0 %v4031
        %4679 = vmatpush.bf16.msra.mxu0 %v4025
        %4680 = vmatpush.bf16.msra.mxu0 %v4019
        %4681 = vmatpush.bf16.msra.mxu0 %v4013
        %4682 = vmatpush.bf16.msra.mxu0 %v4007
        %4683 = vmatpush.bf16.msra.mxu0 %v4001
        %4684 = vmatpush.bf16.msra.mxu0 %v3995
        %4685 = vmatpush.bf16.msra.mxu0 %v3989
        %4686 = vmatmul.bf16.gmra.mxu0 %v2626
        %v4687 = vpop.f32.mrf.mxu0
        %v4688 = vadd.f32 %v4674, %v4687
        %v4689 = vpop.f32.mrf.mxu0
        %v4690 = vadd.f32 %v4676, %v4689
        %4691 = vdwg.mxu0
        %4692 = vmatpush.bf16.msra.mxu0 %v4079
        %4693 = vmatpush.bf16.msra.mxu0 %v4073
        %4694 = vmatpush.bf16.msra.mxu0 %v4067
        %4695 = vmatpush.bf16.msra.mxu0 %v4061
        %4696 = vmatpush.bf16.msra.mxu0 %v4055
        %4697 = vmatpush.bf16.msra.mxu0 %v4049
        %4698 = vmatpush.bf16.msra.mxu0 %v4043
        %4699 = vmatpush.bf16.msra.mxu0 %v4037
        %4700 = vmatmul.bf16.gmra.mxu0 %v2627
        %v4701 = vpop.f32.mrf.mxu0
        %v4702 = vadd.f32 %v4688, %v4701
        %v4703 = vpop.f32.mrf.mxu0
        %v4704 = vadd.f32 %v4690, %v4703
        %4705 = vdwg.mxu0
        %4706 = vmatpush.bf16.msra.mxu0 %v3840
        %4707 = vmatpush.bf16.msra.mxu0 %v3834
        %4708 = vmatpush.bf16.msra.mxu0 %v3828
        %4709 = vmatpush.bf16.msra.mxu0 %v3822
        %4710 = vmatpush.bf16.msra.mxu0 %v3816
        %4711 = vmatpush.bf16.msra.mxu0 %v3810
        %4712 = vmatpush.bf16.msra.mxu0 %v3804
        %4713 = vmatpush.bf16.msra.mxu0 %v3798
        %4714 = vmatmul.bf16.gmra.mxu0 %v2622
        %v4715 = vpop.f32.mrf.mxu0
        %v4716 = vadd.f32 %v2922, %v4715
        %v4717 = vpop.f32.mrf.mxu0
        %v4718 = vadd.f32 %v2922, %v4717
        %4719 = vdwg.mxu0
        %4720 = vmatpush.bf16.msra.mxu0 %v3888
        %4721 = vmatpush.bf16.msra.mxu0 %v3882
        %4722 = vmatpush.bf16.msra.mxu0 %v3876
        %4723 = vmatpush.bf16.msra.mxu0 %v3870
        %4724 = vmatpush.bf16.msra.mxu0 %v3864
        %4725 = vmatpush.bf16.msra.mxu0 %v3858
        %4726 = vmatpush.bf16.msra.mxu0 %v3852
        %4727 = vmatpush.bf16.msra.mxu0 %v3846
        %4728 = vmatmul.bf16.gmra.mxu0 %v2623
        %v4729 = vpop.f32.mrf.mxu0
        %v4730 = vadd.f32 %v4716, %v4729
        %v4731 = vpop.f32.mrf.mxu0
        %v4732 = vadd.f32 %v4718, %v4731
        %4733 = vdwg.mxu0
        %4734 = vmatpush.bf16.msra.mxu0 %v3936
        %4735 = vmatpush.bf16.msra.mxu0 %v3930
        %4736 = vmatpush.bf16.msra.mxu0 %v3924
        %4737 = vmatpush.bf16.msra.mxu0 %v3918
        %4738 = vmatpush.bf16.msra.mxu0 %v3912
        %4739 = vmatpush.bf16.msra.mxu0 %v3906
        %4740 = vmatpush.bf16.msra.mxu0 %v3900
        %4741 = vmatpush.bf16.msra.mxu0 %v3894
        %4742 = vmatmul.bf16.gmra.mxu0 %v2624
        %v4743 = vpop.f32.mrf.mxu0
        %v4744 = vadd.f32 %v4730, %v4743
        %v4745 = vpop.f32.mrf.mxu0
        %v4746 = vadd.f32 %v4732, %v4745
        %4747 = vdwg.mxu0
        %4748 = vmatpush.bf16.msra.mxu0 %v3984
        %4749 = vmatpush.bf16.msra.mxu0 %v3978
        %4750 = vmatpush.bf16.msra.mxu0 %v3972
        %4751 = vmatpush.bf16.msra.mxu0 %v3966
        %4752 = vmatpush.bf16.msra.mxu0 %v3960
        %4753 = vmatpush.bf16.msra.mxu0 %v3954
        %4754 = vmatpush.bf16.msra.mxu0 %v3948
        %4755 = vmatpush.bf16.msra.mxu0 %v3942
        %4756 = vmatmul.bf16.gmra.mxu0 %v2625
        %v4757 = vpop.f32.mrf.mxu0
        %v4758 = vadd.f32 %v4744, %v4757
        %v4759 = vpop.f32.mrf.mxu0
        %v4760 = vadd.f32 %v4746, %v4759
        %4761 = vdwg.mxu0
        %4762 = vmatpush.bf16.msra.mxu0 %v4032
        %4763 = vmatpush.bf16.msra.mxu0 %v4026
        %4764 = vmatpush.bf16.msra.mxu0 %v4020
        %4765 = vmatpush.bf16.msra.mxu0 %v4014
        %4766 = vmatpush.bf16.msra.mxu0 %v4008
        %4767 = vmatpush.bf16.msra.mxu0 %v4002
        %4768 = vmatpush.bf16.msra.mxu0 %v3996
        %4769 = vmatpush.bf16.msra.mxu0 %v3990
        %4770 = vmatmul.bf16.gmra.mxu0 %v2626
        %v4771 = vpop.f32.mrf.mxu0
        %v4772 = vadd.f32 %v4758, %v4771
        %v4773 = vpop.f32.mrf.mxu0
        %v4774 = vadd.f32 %v4760, %v4773
        %4775 = vdwg.mxu0
        %4776 = vmatpush.bf16.msra.mxu0 %v4080
        %4777 = vmatpush.bf16.msra.mxu0 %v4074
        %4778 = vmatpush.bf16.msra.mxu0 %v4068
        %4779 = vmatpush.bf16.msra.mxu0 %v4062
        %4780 = vmatpush.bf16.msra.mxu0 %v4056
        %4781 = vmatpush.bf16.msra.mxu0 %v4050
        %4782 = vmatpush.bf16.msra.mxu0 %v4044
        %4783 = vmatpush.bf16.msra.mxu0 %v4038
        %4784 = vmatmul.bf16.gmra.mxu0 %v2627
        %v4785 = vpop.f32.mrf.mxu0
        %v4786 = vadd.f32 %v4772, %v4785
        %v4787 = vpop.f32.mrf.mxu0
        %v4788 = vadd.f32 %v4774, %v4787
        %4789 = vdwg.mxu0
        %4790 = vmatpush.bf16.msra.mxu0 %v3841
        %4791 = vmatpush.bf16.msra.mxu0 %v3835
        %4792 = vmatpush.bf16.msra.mxu0 %v3829
        %4793 = vmatpush.bf16.msra.mxu0 %v3823
        %4794 = vmatpush.bf16.msra.mxu0 %v3817
        %4795 = vmatpush.bf16.msra.mxu0 %v3811
        %4796 = vmatpush.bf16.msra.mxu0 %v3805
        %4797 = vmatpush.bf16.msra.mxu0 %v3799
        %4798 = vmatmul.bf16.gmra.mxu0 %v2622
        %v4799 = vpop.f32.mrf.mxu0
        %v4800 = vadd.f32 %v2923, %v4799
        %v4801 = vpop.f32.mrf.mxu0
        %v4802 = vadd.f32 %v2923, %v4801
        %4803 = vdwg.mxu0
        %4804 = vmatpush.bf16.msra.mxu0 %v3889
        %4805 = vmatpush.bf16.msra.mxu0 %v3883
        %4806 = vmatpush.bf16.msra.mxu0 %v3877
        %4807 = vmatpush.bf16.msra.mxu0 %v3871
        %4808 = vmatpush.bf16.msra.mxu0 %v3865
        %4809 = vmatpush.bf16.msra.mxu0 %v3859
        %4810 = vmatpush.bf16.msra.mxu0 %v3853
        %4811 = vmatpush.bf16.msra.mxu0 %v3847
        %4812 = vmatmul.bf16.gmra.mxu0 %v2623
        %v4813 = vpop.f32.mrf.mxu0
        %v4814 = vadd.f32 %v4800, %v4813
        %v4815 = vpop.f32.mrf.mxu0
        %v4816 = vadd.f32 %v4802, %v4815
        %4817 = vdwg.mxu0
        %4818 = vmatpush.bf16.msra.mxu0 %v3937
        %4819 = vmatpush.bf16.msra.mxu0 %v3931
        %4820 = vmatpush.bf16.msra.mxu0 %v3925
        %4821 = vmatpush.bf16.msra.mxu0 %v3919
        %4822 = vmatpush.bf16.msra.mxu0 %v3913
        %4823 = vmatpush.bf16.msra.mxu0 %v3907
        %4824 = vmatpush.bf16.msra.mxu0 %v3901
        %4825 = vmatpush.bf16.msra.mxu0 %v3895
        %4826 = vmatmul.bf16.gmra.mxu0 %v2624
        %v4827 = vpop.f32.mrf.mxu0
        %v4828 = vadd.f32 %v4814, %v4827
        %v4829 = vpop.f32.mrf.mxu0
        %v4830 = vadd.f32 %v4816, %v4829
        %4831 = vdwg.mxu0
        %4832 = vmatpush.bf16.msra.mxu0 %v3985
        %4833 = vmatpush.bf16.msra.mxu0 %v3979
        %4834 = vmatpush.bf16.msra.mxu0 %v3973
        %4835 = vmatpush.bf16.msra.mxu0 %v3967
        %4836 = vmatpush.bf16.msra.mxu0 %v3961
        %4837 = vmatpush.bf16.msra.mxu0 %v3955
        %4838 = vmatpush.bf16.msra.mxu0 %v3949
        %4839 = vmatpush.bf16.msra.mxu0 %v3943
        %4840 = vmatmul.bf16.gmra.mxu0 %v2625
        %v4841 = vpop.f32.mrf.mxu0
        %v4842 = vadd.f32 %v4828, %v4841
        %v4843 = vpop.f32.mrf.mxu0
        %v4844 = vadd.f32 %v4830, %v4843
        %4845 = vdwg.mxu0
        %4846 = vmatpush.bf16.msra.mxu0 %v4033
        %4847 = vmatpush.bf16.msra.mxu0 %v4027
        %4848 = vmatpush.bf16.msra.mxu0 %v4021
        %4849 = vmatpush.bf16.msra.mxu0 %v4015
        %4850 = vmatpush.bf16.msra.mxu0 %v4009
        %4851 = vmatpush.bf16.msra.mxu0 %v4003
        %4852 = vmatpush.bf16.msra.mxu0 %v3997
        %4853 = vmatpush.bf16.msra.mxu0 %v3991
        %4854 = vmatmul.bf16.gmra.mxu0 %v2626
        %v4855 = vpop.f32.mrf.mxu0
        %v4856 = vadd.f32 %v4842, %v4855
        %v4857 = vpop.f32.mrf.mxu0
        %v4858 = vadd.f32 %v4844, %v4857
        %4859 = vdwg.mxu0
        %4860 = vmatpush.bf16.msra.mxu0 %v4081
        %4861 = vmatpush.bf16.msra.mxu0 %v4075
        %4862 = vmatpush.bf16.msra.mxu0 %v4069
        %4863 = vmatpush.bf16.msra.mxu0 %v4063
        %4864 = vmatpush.bf16.msra.mxu0 %v4057
        %4865 = vmatpush.bf16.msra.mxu0 %v4051
        %4866 = vmatpush.bf16.msra.mxu0 %v4045
        %4867 = vmatpush.bf16.msra.mxu0 %v4039
        %4868 = vmatmul.bf16.gmra.mxu0 %v2627
        %v4869 = vpop.f32.mrf.mxu0
        %v4870 = vadd.f32 %v4856, %v4869
        %v4871 = vpop.f32.mrf.mxu0
        %v4872 = vadd.f32 %v4858, %v4871
        %4873 = vdwg.mxu0
        %4874 = vst [vmem:[#allocation2] sm:$0xff] %v4450
        %4875 = vst [vmem:[#allocation2 + $0x8] sm:$0xff] %v4534
        %4876 = vst [vmem:[#allocation2 + $0x10] sm:$0xff] %v4618
        %4877 = vst [vmem:[#allocation2 + $0x18] sm:$0xff] %v4702
        %4878 = vst [vmem:[#allocation2 + $0x20] sm:$0xff] %v4786
        %4879 = vst [vmem:[#allocation2 + $0x28] sm:$0xff] %v4870
        %4880 = vst [vmem:[#allocation2 + $0x30] sm:$0xff] %v4452
        %4881 = vst [vmem:[#allocation2 + $0x38] sm:$0xff] %v4536
        %4882 = vst [vmem:[#allocation2 + $0x40] sm:$0xff] %v4620
        %4883 = vst [vmem:[#allocation2 + $0x48] sm:$0xff] %v4704
        %4884 = vst [vmem:[#allocation2 + $0x50] sm:$0xff] %v4788
        %4885 = vst [vmem:[#allocation2 + $0x58] sm:$0xff] %v4872
        %s4886 = scalar_lea.vmem %s270, 2 [#allocation8]
        %v4887 = vld [vmem:[%s4886] ss:$4 sm:$0x3f]
        %v4888 = vld [vmem:[#allocation2] sm:$0xff]
        %v4889 = vld [vmem:[#allocation2 + $0x8] sm:$0xff]
        %v4890 = vld [vmem:[#allocation2 + $0x10] sm:$0xff]
        %v4891 = vld [vmem:[#allocation2 + $0x18] sm:$0xff]
        %v4892 = vld [vmem:[#allocation2 + $0x20] sm:$0xff]
        %v4893 = vld [vmem:[#allocation2 + $0x28] sm:$0xff]
        %v4894 = vld [vmem:[#allocation2 + $0x30] sm:$0xff]
        %v4895 = vld [vmem:[#allocation2 + $0x38] sm:$0xff]
        %v4896 = vld [vmem:[#allocation2 + $0x40] sm:$0xff]
        %v4897 = vld [vmem:[#allocation2 + $0x48] sm:$0xff]
        %v4898 = vld [vmem:[#allocation2 + $0x50] sm:$0xff]
        %v4899 = vld [vmem:[#allocation2 + $0x58] sm:$0xff]
        %v4900 = vpack.c.bf16 %v4894, %v4888
        %v4901 = vpack.c.bf16 %v4895, %v4889
        %v4902 = vpack.c.bf16 %v4896, %v4890
        %v4903 = vpack.c.bf16 %v4897, %v4891
        %v4904 = vpack.c.bf16 %v4898, %v4892
        %v4905 = vpack.c.bf16 %v4899, %v4893
        %s4906 = scalar_lea.vmem %s260, 4608 [#allocation6]
        %v4907 = vld [vmem:[%s4906] sm:$0xff]
        %v4908 = vld [vmem:[%s4906 + $0x8] sm:$0xff]
        %v4909 = vld [vmem:[%s4906 + $0x10] sm:$0xff]
        %v4910 = vld [vmem:[%s4906 + $0x18] sm:$0xff]
        %v4911 = vld [vmem:[%s4906 + $0x20] sm:$0xff]
        %v4912 = vld [vmem:[%s4906 + $0x28] sm:$0xff]
        %v4913 = vld [vmem:[%s4906 + $0x30] sm:$0xff]
        %v4914 = vld [vmem:[%s4906 + $0x38] sm:$0xff]
        %v4915 = vld [vmem:[%s4906 + $0x40] sm:$0xff]
        %v4916 = vld [vmem:[%s4906 + $0x48] sm:$0xff]
        %v4917 = vld [vmem:[%s4906 + $0x50] sm:$0xff]
        %v4918 = vld [vmem:[%s4906 + $0x58] sm:$0xff]
        %v4919 = vld [vmem:[%s4906 + $0x60] sm:$0xff]
        %v4920 = vld [vmem:[%s4906 + $0x68] sm:$0xff]
        %v4921 = vld [vmem:[%s4906 + $0x70] sm:$0xff]
        %v4922 = vld [vmem:[%s4906 + $0x78] sm:$0xff]
        %v4923 = vld [vmem:[%s4906 + $0x80] sm:$0xff]
        %v4924 = vld [vmem:[%s4906 + $0x88] sm:$0xff]
        %v4925 = vld [vmem:[%s4906 + $0x90] sm:$0xff]
        %v4926 = vld [vmem:[%s4906 + $0x98] sm:$0xff]
        %v4927 = vld [vmem:[%s4906 + $0xa0] sm:$0xff]
        %v4928 = vld [vmem:[%s4906 + $0xa8] sm:$0xff]
        %v4929 = vld [vmem:[%s4906 + $0xb0] sm:$0xff]
        %v4930 = vld [vmem:[%s4906 + $0xb8] sm:$0xff]
        %v4931 = vld [vmem:[%s4906 + $0xc0] sm:$0xff]
        %v4932 = vld [vmem:[%s4906 + $0xc8] sm:$0xff]
        %v4933 = vld [vmem:[%s4906 + $0xd0] sm:$0xff]
        %v4934 = vld [vmem:[%s4906 + $0xd8] sm:$0xff]
        %v4935 = vld [vmem:[%s4906 + $0xe0] sm:$0xff]
        %v4936 = vld [vmem:[%s4906 + $0xe8] sm:$0xff]
        %v4937 = vld [vmem:[%s4906 + $0xf0] sm:$0xff]
        %v4938 = vld [vmem:[%s4906 + $0xf8] sm:$0xff]
        %v4939 = vld [vmem:[%s4906 + $0x100] sm:$0xff]
        %v4940 = vld [vmem:[%s4906 + $0x108] sm:$0xff]
        %v4941 = vld [vmem:[%s4906 + $0x110] sm:$0xff]
        %v4942 = vld [vmem:[%s4906 + $0x118] sm:$0xff]
        %v4943 = vld [vmem:[%s4906 + $0x120] sm:$0xff]
        %v4944 = vld [vmem:[%s4906 + $0x128] sm:$0xff]
        %v4945 = vld [vmem:[%s4906 + $0x130] sm:$0xff]
        %v4946 = vld [vmem:[%s4906 + $0x138] sm:$0xff]
        %v4947 = vld [vmem:[%s4906 + $0x140] sm:$0xff]
        %v4948 = vld [vmem:[%s4906 + $0x148] sm:$0xff]
        %v4949 = vld [vmem:[%s4906 + $0x150] sm:$0xff]
        %v4950 = vld [vmem:[%s4906 + $0x158] sm:$0xff]
        %v4951 = vld [vmem:[%s4906 + $0x160] sm:$0xff]
        %v4952 = vld [vmem:[%s4906 + $0x168] sm:$0xff]
        %v4953 = vld [vmem:[%s4906 + $0x170] sm:$0xff]
        %v4954 = vld [vmem:[%s4906 + $0x178] sm:$0xff]
        %v4955 = vld [vmem:[%s4906 + $0x180] sm:$0xff]
        %v4956 = vld [vmem:[%s4906 + $0x188] sm:$0xff]
        %v4957 = vld [vmem:[%s4906 + $0x190] sm:$0xff]
        %v4958 = vld [vmem:[%s4906 + $0x198] sm:$0xff]
        %v4959 = vld [vmem:[%s4906 + $0x1a0] sm:$0xff]
        %v4960 = vld [vmem:[%s4906 + $0x1a8] sm:$0xff]
        %v4961 = vld [vmem:[%s4906 + $0x1b0] sm:$0xff]
        %v4962 = vld [vmem:[%s4906 + $0x1b8] sm:$0xff]
        %v4963 = vld [vmem:[%s4906 + $0x1c0] sm:$0xff]
        %v4964 = vld [vmem:[%s4906 + $0x1c8] sm:$0xff]
        %v4965 = vld [vmem:[%s4906 + $0x1d0] sm:$0xff]
        %v4966 = vld [vmem:[%s4906 + $0x1d8] sm:$0xff]
        %v4967 = vld [vmem:[%s4906 + $0x1e0] sm:$0xff]
        %v4968 = vld [vmem:[%s4906 + $0x1e8] sm:$0xff]
        %v4969 = vld [vmem:[%s4906 + $0x1f0] sm:$0xff]
        %v4970 = vld [vmem:[%s4906 + $0x1f8] sm:$0xff]
        %v4971 = vld [vmem:[%s4906 + $0x200] sm:$0xff]
        %v4972 = vld [vmem:[%s4906 + $0x208] sm:$0xff]
        %v4973 = vld [vmem:[%s4906 + $0x210] sm:$0xff]
        %v4974 = vld [vmem:[%s4906 + $0x218] sm:$0xff]
        %v4975 = vld [vmem:[%s4906 + $0x220] sm:$0xff]
        %v4976 = vld [vmem:[%s4906 + $0x228] sm:$0xff]
        %v4977 = vld [vmem:[%s4906 + $0x230] sm:$0xff]
        %v4978 = vld [vmem:[%s4906 + $0x238] sm:$0xff]
        %v4979 = vld [vmem:[%s4906 + $0x240] sm:$0xff]
        %v4980 = vld [vmem:[%s4906 + $0x248] sm:$0xff]
        %v4981 = vld [vmem:[%s4906 + $0x250] sm:$0xff]
        %v4982 = vld [vmem:[%s4906 + $0x258] sm:$0xff]
        %v4983 = vld [vmem:[%s4906 + $0x260] sm:$0xff]
        %v4984 = vld [vmem:[%s4906 + $0x268] sm:$0xff]
        %v4985 = vld [vmem:[%s4906 + $0x270] sm:$0xff]
        %v4986 = vld [vmem:[%s4906 + $0x278] sm:$0xff]
        %v4987 = vld [vmem:[%s4906 + $0x280] sm:$0xff]
        %v4988 = vld [vmem:[%s4906 + $0x288] sm:$0xff]
        %v4989 = vld [vmem:[%s4906 + $0x290] sm:$0xff]
        %v4990 = vld [vmem:[%s4906 + $0x298] sm:$0xff]
        %v4991 = vld [vmem:[%s4906 + $0x2a0] sm:$0xff]
        %v4992 = vld [vmem:[%s4906 + $0x2a8] sm:$0xff]
        %v4993 = vld [vmem:[%s4906 + $0x2b0] sm:$0xff]
        %v4994 = vld [vmem:[%s4906 + $0x2b8] sm:$0xff]
        %v4995 = vld [vmem:[%s4906 + $0x2c0] sm:$0xff]
        %v4996 = vld [vmem:[%s4906 + $0x2c8] sm:$0xff]
        %v4997 = vld [vmem:[%s4906 + $0x2d0] sm:$0xff]
        %v4998 = vld [vmem:[%s4906 + $0x2d8] sm:$0xff]
        %v4999 = vld [vmem:[%s4906 + $0x2e0] sm:$0xff]
        %v5000 = vld [vmem:[%s4906 + $0x2e8] sm:$0xff]
        %v5001 = vld [vmem:[%s4906 + $0x2f0] sm:$0xff]
        %v5002 = vld [vmem:[%s4906 + $0x2f8] sm:$0xff]
        %v5003 = vld [vmem:[%s4906 + $0x300] sm:$0xff]
        %v5004 = vld [vmem:[%s4906 + $0x308] sm:$0xff]
        %v5005 = vld [vmem:[%s4906 + $0x310] sm:$0xff]
        %v5006 = vld [vmem:[%s4906 + $0x318] sm:$0xff]
        %v5007 = vld [vmem:[%s4906 + $0x320] sm:$0xff]
        %v5008 = vld [vmem:[%s4906 + $0x328] sm:$0xff]
        %v5009 = vld [vmem:[%s4906 + $0x330] sm:$0xff]
        %v5010 = vld [vmem:[%s4906 + $0x338] sm:$0xff]
        %v5011 = vld [vmem:[%s4906 + $0x340] sm:$0xff]
        %v5012 = vld [vmem:[%s4906 + $0x348] sm:$0xff]
        %v5013 = vld [vmem:[%s4906 + $0x350] sm:$0xff]
        %v5014 = vld [vmem:[%s4906 + $0x358] sm:$0xff]
        %v5015 = vld [vmem:[%s4906 + $0x360] sm:$0xff]
        %v5016 = vld [vmem:[%s4906 + $0x368] sm:$0xff]
        %v5017 = vld [vmem:[%s4906 + $0x370] sm:$0xff]
        %v5018 = vld [vmem:[%s4906 + $0x378] sm:$0xff]
        %v5019 = vld [vmem:[%s4906 + $0x380] sm:$0xff]
        %v5020 = vld [vmem:[%s4906 + $0x388] sm:$0xff]
        %v5021 = vld [vmem:[%s4906 + $0x390] sm:$0xff]
        %v5022 = vld [vmem:[%s4906 + $0x398] sm:$0xff]
        %v5023 = vld [vmem:[%s4906 + $0x3a0] sm:$0xff]
        %v5024 = vld [vmem:[%s4906 + $0x3a8] sm:$0xff]
        %v5025 = vld [vmem:[%s4906 + $0x3b0] sm:$0xff]
        %v5026 = vld [vmem:[%s4906 + $0x3b8] sm:$0xff]
        %v5027 = vld [vmem:[%s4906 + $0x3c0] sm:$0xff]
        %v5028 = vld [vmem:[%s4906 + $0x3c8] sm:$0xff]
        %v5029 = vld [vmem:[%s4906 + $0x3d0] sm:$0xff]
        %v5030 = vld [vmem:[%s4906 + $0x3d8] sm:$0xff]
        %v5031 = vld [vmem:[%s4906 + $0x3e0] sm:$0xff]
        %v5032 = vld [vmem:[%s4906 + $0x3e8] sm:$0xff]
        %v5033 = vld [vmem:[%s4906 + $0x3f0] sm:$0xff]
        %v5034 = vld [vmem:[%s4906 + $0x3f8] sm:$0xff]
        %v5035 = vld [vmem:[%s4906 + $0x400] sm:$0xff]
        %v5036 = vld [vmem:[%s4906 + $0x408] sm:$0xff]
        %v5037 = vld [vmem:[%s4906 + $0x410] sm:$0xff]
        %v5038 = vld [vmem:[%s4906 + $0x418] sm:$0xff]
        %v5039 = vld [vmem:[%s4906 + $0x420] sm:$0xff]
        %v5040 = vld [vmem:[%s4906 + $0x428] sm:$0xff]
        %v5041 = vld [vmem:[%s4906 + $0x430] sm:$0xff]
        %v5042 = vld [vmem:[%s4906 + $0x438] sm:$0xff]
        %v5043 = vld [vmem:[%s4906 + $0x440] sm:$0xff]
        %v5044 = vld [vmem:[%s4906 + $0x448] sm:$0xff]
        %v5045 = vld [vmem:[%s4906 + $0x450] sm:$0xff]
        %v5046 = vld [vmem:[%s4906 + $0x458] sm:$0xff]
        %v5047 = vld [vmem:[%s4906 + $0x460] sm:$0xff]
        %v5048 = vld [vmem:[%s4906 + $0x468] sm:$0xff]
        %v5049 = vld [vmem:[%s4906 + $0x470] sm:$0xff]
        %v5050 = vld [vmem:[%s4906 + $0x478] sm:$0xff]
        %v5051 = vld [vmem:[%s4906 + $0x480] sm:$0xff]
        %v5052 = vld [vmem:[%s4906 + $0x488] sm:$0xff]
        %v5053 = vld [vmem:[%s4906 + $0x490] sm:$0xff]
        %v5054 = vld [vmem:[%s4906 + $0x498] sm:$0xff]
        %v5055 = vld [vmem:[%s4906 + $0x4a0] sm:$0xff]
        %v5056 = vld [vmem:[%s4906 + $0x4a8] sm:$0xff]
        %v5057 = vld [vmem:[%s4906 + $0x4b0] sm:$0xff]
        %v5058 = vld [vmem:[%s4906 + $0x4b8] sm:$0xff]
        %v5059 = vld [vmem:[%s4906 + $0x4c0] sm:$0xff]
        %v5060 = vld [vmem:[%s4906 + $0x4c8] sm:$0xff]
        %v5061 = vld [vmem:[%s4906 + $0x4d0] sm:$0xff]
        %v5062 = vld [vmem:[%s4906 + $0x4d8] sm:$0xff]
        %v5063 = vld [vmem:[%s4906 + $0x4e0] sm:$0xff]
        %v5064 = vld [vmem:[%s4906 + $0x4e8] sm:$0xff]
        %v5065 = vld [vmem:[%s4906 + $0x4f0] sm:$0xff]
        %v5066 = vld [vmem:[%s4906 + $0x4f8] sm:$0xff]
        %v5067 = vld [vmem:[%s4906 + $0x500] sm:$0xff]
        %v5068 = vld [vmem:[%s4906 + $0x508] sm:$0xff]
        %v5069 = vld [vmem:[%s4906 + $0x510] sm:$0xff]
        %v5070 = vld [vmem:[%s4906 + $0x518] sm:$0xff]
        %v5071 = vld [vmem:[%s4906 + $0x520] sm:$0xff]
        %v5072 = vld [vmem:[%s4906 + $0x528] sm:$0xff]
        %v5073 = vld [vmem:[%s4906 + $0x530] sm:$0xff]
        %v5074 = vld [vmem:[%s4906 + $0x538] sm:$0xff]
        %v5075 = vld [vmem:[%s4906 + $0x540] sm:$0xff]
        %v5076 = vld [vmem:[%s4906 + $0x548] sm:$0xff]
        %v5077 = vld [vmem:[%s4906 + $0x550] sm:$0xff]
        %v5078 = vld [vmem:[%s4906 + $0x558] sm:$0xff]
        %v5079 = vld [vmem:[%s4906 + $0x560] sm:$0xff]
        %v5080 = vld [vmem:[%s4906 + $0x568] sm:$0xff]
        %v5081 = vld [vmem:[%s4906 + $0x570] sm:$0xff]
        %v5082 = vld [vmem:[%s4906 + $0x578] sm:$0xff]
        %v5083 = vld [vmem:[%s4906 + $0x580] sm:$0xff]
        %v5084 = vld [vmem:[%s4906 + $0x588] sm:$0xff]
        %v5085 = vld [vmem:[%s4906 + $0x590] sm:$0xff]
        %v5086 = vld [vmem:[%s4906 + $0x598] sm:$0xff]
        %v5087 = vld [vmem:[%s4906 + $0x5a0] sm:$0xff]
        %v5088 = vld [vmem:[%s4906 + $0x5a8] sm:$0xff]
        %v5089 = vld [vmem:[%s4906 + $0x5b0] sm:$0xff]
        %v5090 = vld [vmem:[%s4906 + $0x5b8] sm:$0xff]
        %v5091 = vld [vmem:[%s4906 + $0x5c0] sm:$0xff]
        %v5092 = vld [vmem:[%s4906 + $0x5c8] sm:$0xff]
        %v5093 = vld [vmem:[%s4906 + $0x5d0] sm:$0xff]
        %v5094 = vld [vmem:[%s4906 + $0x5d8] sm:$0xff]
        %v5095 = vld [vmem:[%s4906 + $0x5e0] sm:$0xff]
        %v5096 = vld [vmem:[%s4906 + $0x5e8] sm:$0xff]
        %v5097 = vld [vmem:[%s4906 + $0x5f0] sm:$0xff]
        %v5098 = vld [vmem:[%s4906 + $0x5f8] sm:$0xff]
        %v5099 = vld [vmem:[%s4906 + $0x600] sm:$0xff]
        %v5100 = vld [vmem:[%s4906 + $0x608] sm:$0xff]
        %v5101 = vld [vmem:[%s4906 + $0x610] sm:$0xff]
        %v5102 = vld [vmem:[%s4906 + $0x618] sm:$0xff]
        %v5103 = vld [vmem:[%s4906 + $0x620] sm:$0xff]
        %v5104 = vld [vmem:[%s4906 + $0x628] sm:$0xff]
        %v5105 = vld [vmem:[%s4906 + $0x630] sm:$0xff]
        %v5106 = vld [vmem:[%s4906 + $0x638] sm:$0xff]
        %v5107 = vld [vmem:[%s4906 + $0x640] sm:$0xff]
        %v5108 = vld [vmem:[%s4906 + $0x648] sm:$0xff]
        %v5109 = vld [vmem:[%s4906 + $0x650] sm:$0xff]
        %v5110 = vld [vmem:[%s4906 + $0x658] sm:$0xff]
        %v5111 = vld [vmem:[%s4906 + $0x660] sm:$0xff]
        %v5112 = vld [vmem:[%s4906 + $0x668] sm:$0xff]
        %v5113 = vld [vmem:[%s4906 + $0x670] sm:$0xff]
        %v5114 = vld [vmem:[%s4906 + $0x678] sm:$0xff]
        %v5115 = vld [vmem:[%s4906 + $0x680] sm:$0xff]
        %v5116 = vld [vmem:[%s4906 + $0x688] sm:$0xff]
        %v5117 = vld [vmem:[%s4906 + $0x690] sm:$0xff]
        %v5118 = vld [vmem:[%s4906 + $0x698] sm:$0xff]
        %v5119 = vld [vmem:[%s4906 + $0x6a0] sm:$0xff]
        %v5120 = vld [vmem:[%s4906 + $0x6a8] sm:$0xff]
        %v5121 = vld [vmem:[%s4906 + $0x6b0] sm:$0xff]
        %v5122 = vld [vmem:[%s4906 + $0x6b8] sm:$0xff]
        %v5123 = vld [vmem:[%s4906 + $0x6c0] sm:$0xff]
        %v5124 = vld [vmem:[%s4906 + $0x6c8] sm:$0xff]
        %v5125 = vld [vmem:[%s4906 + $0x6d0] sm:$0xff]
        %v5126 = vld [vmem:[%s4906 + $0x6d8] sm:$0xff]
        %v5127 = vld [vmem:[%s4906 + $0x6e0] sm:$0xff]
        %v5128 = vld [vmem:[%s4906 + $0x6e8] sm:$0xff]
        %v5129 = vld [vmem:[%s4906 + $0x6f0] sm:$0xff]
        %v5130 = vld [vmem:[%s4906 + $0x6f8] sm:$0xff]
        %v5131 = vld [vmem:[%s4906 + $0x700] sm:$0xff]
        %v5132 = vld [vmem:[%s4906 + $0x708] sm:$0xff]
        %v5133 = vld [vmem:[%s4906 + $0x710] sm:$0xff]
        %v5134 = vld [vmem:[%s4906 + $0x718] sm:$0xff]
        %v5135 = vld [vmem:[%s4906 + $0x720] sm:$0xff]
        %v5136 = vld [vmem:[%s4906 + $0x728] sm:$0xff]
        %v5137 = vld [vmem:[%s4906 + $0x730] sm:$0xff]
        %v5138 = vld [vmem:[%s4906 + $0x738] sm:$0xff]
        %v5139 = vld [vmem:[%s4906 + $0x740] sm:$0xff]
        %v5140 = vld [vmem:[%s4906 + $0x748] sm:$0xff]
        %v5141 = vld [vmem:[%s4906 + $0x750] sm:$0xff]
        %v5142 = vld [vmem:[%s4906 + $0x758] sm:$0xff]
        %v5143 = vld [vmem:[%s4906 + $0x760] sm:$0xff]
        %v5144 = vld [vmem:[%s4906 + $0x768] sm:$0xff]
        %v5145 = vld [vmem:[%s4906 + $0x770] sm:$0xff]
        %v5146 = vld [vmem:[%s4906 + $0x778] sm:$0xff]
        %v5147 = vld [vmem:[%s4906 + $0x780] sm:$0xff]
        %v5148 = vld [vmem:[%s4906 + $0x788] sm:$0xff]
        %v5149 = vld [vmem:[%s4906 + $0x790] sm:$0xff]
        %v5150 = vld [vmem:[%s4906 + $0x798] sm:$0xff]
        %v5151 = vld [vmem:[%s4906 + $0x7a0] sm:$0xff]
        %v5152 = vld [vmem:[%s4906 + $0x7a8] sm:$0xff]
        %v5153 = vld [vmem:[%s4906 + $0x7b0] sm:$0xff]
        %v5154 = vld [vmem:[%s4906 + $0x7b8] sm:$0xff]
        %v5155 = vld [vmem:[%s4906 + $0x7c0] sm:$0xff]
        %v5156 = vld [vmem:[%s4906 + $0x7c8] sm:$0xff]
        %v5157 = vld [vmem:[%s4906 + $0x7d0] sm:$0xff]
        %v5158 = vld [vmem:[%s4906 + $0x7d8] sm:$0xff]
        %v5159 = vld [vmem:[%s4906 + $0x7e0] sm:$0xff]
        %v5160 = vld [vmem:[%s4906 + $0x7e8] sm:$0xff]
        %v5161 = vld [vmem:[%s4906 + $0x7f0] sm:$0xff]
        %v5162 = vld [vmem:[%s4906 + $0x7f8] sm:$0xff]
        %v5163 = vld [vmem:[%s4906 + $0x800] sm:$0xff]
        %v5164 = vld [vmem:[%s4906 + $0x808] sm:$0xff]
        %v5165 = vld [vmem:[%s4906 + $0x810] sm:$0xff]
        %v5166 = vld [vmem:[%s4906 + $0x818] sm:$0xff]
        %v5167 = vld [vmem:[%s4906 + $0x820] sm:$0xff]
        %v5168 = vld [vmem:[%s4906 + $0x828] sm:$0xff]
        %v5169 = vld [vmem:[%s4906 + $0x830] sm:$0xff]
        %v5170 = vld [vmem:[%s4906 + $0x838] sm:$0xff]
        %v5171 = vld [vmem:[%s4906 + $0x840] sm:$0xff]
        %v5172 = vld [vmem:[%s4906 + $0x848] sm:$0xff]
        %v5173 = vld [vmem:[%s4906 + $0x850] sm:$0xff]
        %v5174 = vld [vmem:[%s4906 + $0x858] sm:$0xff]
        %v5175 = vld [vmem:[%s4906 + $0x860] sm:$0xff]
        %v5176 = vld [vmem:[%s4906 + $0x868] sm:$0xff]
        %v5177 = vld [vmem:[%s4906 + $0x870] sm:$0xff]
        %v5178 = vld [vmem:[%s4906 + $0x878] sm:$0xff]
        %v5179 = vld [vmem:[%s4906 + $0x880] sm:$0xff]
        %v5180 = vld [vmem:[%s4906 + $0x888] sm:$0xff]
        %v5181 = vld [vmem:[%s4906 + $0x890] sm:$0xff]
        %v5182 = vld [vmem:[%s4906 + $0x898] sm:$0xff]
        %v5183 = vld [vmem:[%s4906 + $0x8a0] sm:$0xff]
        %v5184 = vld [vmem:[%s4906 + $0x8a8] sm:$0xff]
        %v5185 = vld [vmem:[%s4906 + $0x8b0] sm:$0xff]
        %v5186 = vld [vmem:[%s4906 + $0x8b8] sm:$0xff]
        %v5187 = vld [vmem:[%s4906 + $0x8c0] sm:$0xff]
        %v5188 = vld [vmem:[%s4906 + $0x8c8] sm:$0xff]
        %v5189 = vld [vmem:[%s4906 + $0x8d0] sm:$0xff]
        %v5190 = vld [vmem:[%s4906 + $0x8d8] sm:$0xff]
        %v5191 = vld [vmem:[%s4906 + $0x8e0] sm:$0xff]
        %v5192 = vld [vmem:[%s4906 + $0x8e8] sm:$0xff]
        %v5193 = vld [vmem:[%s4906 + $0x8f0] sm:$0xff]
        %v5194 = vld [vmem:[%s4906 + $0x8f8] sm:$0xff]
        %v5196 = vperm.slane %v4887, 0
        %v5197 = vperm.slane %v4887, 1
        %v5198 = vperm.slane %v4887, 2
        %v5199 = vperm.slane %v4887, 3
        %v5200 = vperm.slane %v4887, 4
        %v5201 = vperm.slane %v4887, 5
        %v5496 = vunpack.c.l.b16 %v4907
        %v5497 = vunpack.c.h.b16 %v4907
        %v5498 = vunpack.c.l.b16 %v4908
        %v5499 = vunpack.c.h.b16 %v4908
        %v5500 = vunpack.c.l.b16 %v4909
        %v5501 = vunpack.c.h.b16 %v4909
        %v5502 = vunpack.c.l.b16 %v4910
        %v5503 = vunpack.c.h.b16 %v4910
        %v5504 = vunpack.c.l.b16 %v4911
        %v5505 = vunpack.c.h.b16 %v4911
        %v5506 = vunpack.c.l.b16 %v4912
        %v5507 = vunpack.c.h.b16 %v4912
        %v5508 = vunpack.c.l.b16 %v4913
        %v5509 = vunpack.c.h.b16 %v4913
        %v5510 = vunpack.c.l.b16 %v4914
        %v5511 = vunpack.c.h.b16 %v4914
        %v5512 = vunpack.c.l.b16 %v4915
        %v5513 = vunpack.c.h.b16 %v4915
        %v5514 = vunpack.c.l.b16 %v4916
        %v5515 = vunpack.c.h.b16 %v4916
        %v5516 = vunpack.c.l.b16 %v4917
        %v5517 = vunpack.c.h.b16 %v4917
        %v5518 = vunpack.c.l.b16 %v4918
        %v5519 = vunpack.c.h.b16 %v4918
        %v5520 = vunpack.c.l.b16 %v4919
        %v5521 = vunpack.c.h.b16 %v4919
        %v5522 = vunpack.c.l.b16 %v4920
        %v5523 = vunpack.c.h.b16 %v4920
        %v5524 = vunpack.c.l.b16 %v4921
        %v5525 = vunpack.c.h.b16 %v4921
        %v5526 = vunpack.c.l.b16 %v4922
        %v5527 = vunpack.c.h.b16 %v4922
        %v5528 = vunpack.c.l.b16 %v4923
        %v5529 = vunpack.c.h.b16 %v4923
        %v5530 = vunpack.c.l.b16 %v4924
        %v5531 = vunpack.c.h.b16 %v4924
        %v5532 = vunpack.c.l.b16 %v4925
        %v5533 = vunpack.c.h.b16 %v4925
        %v5534 = vunpack.c.l.b16 %v4926
        %v5535 = vunpack.c.h.b16 %v4926
        %v5536 = vunpack.c.l.b16 %v4927
        %v5537 = vunpack.c.h.b16 %v4927
        %v5538 = vunpack.c.l.b16 %v4928
        %v5539 = vunpack.c.h.b16 %v4928
        %v5540 = vunpack.c.l.b16 %v4929
        %v5541 = vunpack.c.h.b16 %v4929
        %v5542 = vunpack.c.l.b16 %v4930
        %v5543 = vunpack.c.h.b16 %v4930
        %v5544 = vunpack.c.l.b16 %v4931
        %v5545 = vunpack.c.h.b16 %v4931
        %v5546 = vunpack.c.l.b16 %v4932
        %v5547 = vunpack.c.h.b16 %v4932
        %v5548 = vunpack.c.l.b16 %v4933
        %v5549 = vunpack.c.h.b16 %v4933
        %v5550 = vunpack.c.l.b16 %v4934
        %v5551 = vunpack.c.h.b16 %v4934
        %v5552 = vunpack.c.l.b16 %v4935
        %v5553 = vunpack.c.h.b16 %v4935
        %v5554 = vunpack.c.l.b16 %v4936
        %v5555 = vunpack.c.h.b16 %v4936
        %v5556 = vunpack.c.l.b16 %v4937
        %v5557 = vunpack.c.h.b16 %v4937
        %v5558 = vunpack.c.l.b16 %v4938
        %v5559 = vunpack.c.h.b16 %v4938
        %v5560 = vunpack.c.l.b16 %v4939
        %v5561 = vunpack.c.h.b16 %v4939
        %v5562 = vunpack.c.l.b16 %v4940
        %v5563 = vunpack.c.h.b16 %v4940
        %v5564 = vunpack.c.l.b16 %v4941
        %v5565 = vunpack.c.h.b16 %v4941
        %v5566 = vunpack.c.l.b16 %v4942
        %v5567 = vunpack.c.h.b16 %v4942
        %v5568 = vunpack.c.l.b16 %v4943
        %v5569 = vunpack.c.h.b16 %v4943
        %v5570 = vunpack.c.l.b16 %v4944
        %v5571 = vunpack.c.h.b16 %v4944
        %v5572 = vunpack.c.l.b16 %v4945
        %v5573 = vunpack.c.h.b16 %v4945
        %v5574 = vunpack.c.l.b16 %v4946
        %v5575 = vunpack.c.h.b16 %v4946
        %v5576 = vunpack.c.l.b16 %v4947
        %v5577 = vunpack.c.h.b16 %v4947
        %v5578 = vunpack.c.l.b16 %v4948
        %v5579 = vunpack.c.h.b16 %v4948
        %v5580 = vunpack.c.l.b16 %v4949
        %v5581 = vunpack.c.h.b16 %v4949
        %v5582 = vunpack.c.l.b16 %v4950
        %v5583 = vunpack.c.h.b16 %v4950
        %v5584 = vunpack.c.l.b16 %v4951
        %v5585 = vunpack.c.h.b16 %v4951
        %v5586 = vunpack.c.l.b16 %v4952
        %v5587 = vunpack.c.h.b16 %v4952
        %v5588 = vunpack.c.l.b16 %v4953
        %v5589 = vunpack.c.h.b16 %v4953
        %v5590 = vunpack.c.l.b16 %v4954
        %v5591 = vunpack.c.h.b16 %v4954
        %v5592 = vunpack.c.l.b16 %v4955
        %v5593 = vunpack.c.h.b16 %v4955
        %v5594 = vunpack.c.l.b16 %v4956
        %v5595 = vunpack.c.h.b16 %v4956
        %v5596 = vunpack.c.l.b16 %v4957
        %v5597 = vunpack.c.h.b16 %v4957
        %v5598 = vunpack.c.l.b16 %v4958
        %v5599 = vunpack.c.h.b16 %v4958
        %v5600 = vunpack.c.l.b16 %v4959
        %v5601 = vunpack.c.h.b16 %v4959
        %v5602 = vunpack.c.l.b16 %v4960
        %v5603 = vunpack.c.h.b16 %v4960
        %v5604 = vunpack.c.l.b16 %v4961
        %v5605 = vunpack.c.h.b16 %v4961
        %v5606 = vunpack.c.l.b16 %v4962
        %v5607 = vunpack.c.h.b16 %v4962
        %v5608 = vunpack.c.l.b16 %v4963
        %v5609 = vunpack.c.h.b16 %v4963
        %v5610 = vunpack.c.l.b16 %v4964
        %v5611 = vunpack.c.h.b16 %v4964
        %v5612 = vunpack.c.l.b16 %v4965
        %v5613 = vunpack.c.h.b16 %v4965
        %v5614 = vunpack.c.l.b16 %v4966
        %v5615 = vunpack.c.h.b16 %v4966
        %v5616 = vunpack.c.l.b16 %v4967
        %v5617 = vunpack.c.h.b16 %v4967
        %v5618 = vunpack.c.l.b16 %v4968
        %v5619 = vunpack.c.h.b16 %v4968
        %v5620 = vunpack.c.l.b16 %v4969
        %v5621 = vunpack.c.h.b16 %v4969
        %v5622 = vunpack.c.l.b16 %v4970
        %v5623 = vunpack.c.h.b16 %v4970
        %v5624 = vunpack.c.l.b16 %v4971
        %v5625 = vunpack.c.h.b16 %v4971
        %v5626 = vunpack.c.l.b16 %v4972
        %v5627 = vunpack.c.h.b16 %v4972
        %v5628 = vunpack.c.l.b16 %v4973
        %v5629 = vunpack.c.h.b16 %v4973
        %v5630 = vunpack.c.l.b16 %v4974
        %v5631 = vunpack.c.h.b16 %v4974
        %v5632 = vunpack.c.l.b16 %v4975
        %v5633 = vunpack.c.h.b16 %v4975
        %v5634 = vunpack.c.l.b16 %v4976
        %v5635 = vunpack.c.h.b16 %v4976
        %v5636 = vunpack.c.l.b16 %v4977
        %v5637 = vunpack.c.h.b16 %v4977
        %v5638 = vunpack.c.l.b16 %v4978
        %v5639 = vunpack.c.h.b16 %v4978
        %v5640 = vunpack.c.l.b16 %v4979
        %v5641 = vunpack.c.h.b16 %v4979
        %v5642 = vunpack.c.l.b16 %v4980
        %v5643 = vunpack.c.h.b16 %v4980
        %v5644 = vunpack.c.l.b16 %v4981
        %v5645 = vunpack.c.h.b16 %v4981
        %v5646 = vunpack.c.l.b16 %v4982
        %v5647 = vunpack.c.h.b16 %v4982
        %v5648 = vunpack.c.l.b16 %v4983
        %v5649 = vunpack.c.h.b16 %v4983
        %v5650 = vunpack.c.l.b16 %v4984
        %v5651 = vunpack.c.h.b16 %v4984
        %v5652 = vunpack.c.l.b16 %v4985
        %v5653 = vunpack.c.h.b16 %v4985
        %v5654 = vunpack.c.l.b16 %v4986
        %v5655 = vunpack.c.h.b16 %v4986
        %v5656 = vunpack.c.l.b16 %v4987
        %v5657 = vunpack.c.h.b16 %v4987
        %v5658 = vunpack.c.l.b16 %v4988
        %v5659 = vunpack.c.h.b16 %v4988
        %v5660 = vunpack.c.l.b16 %v4989
        %v5661 = vunpack.c.h.b16 %v4989
        %v5662 = vunpack.c.l.b16 %v4990
        %v5663 = vunpack.c.h.b16 %v4990
        %v5664 = vunpack.c.l.b16 %v4991
        %v5665 = vunpack.c.h.b16 %v4991
        %v5666 = vunpack.c.l.b16 %v4992
        %v5667 = vunpack.c.h.b16 %v4992
        %v5668 = vunpack.c.l.b16 %v4993
        %v5669 = vunpack.c.h.b16 %v4993
        %v5670 = vunpack.c.l.b16 %v4994
        %v5671 = vunpack.c.h.b16 %v4994
        %v5672 = vunpack.c.l.b16 %v4995
        %v5673 = vunpack.c.h.b16 %v4995
        %v5674 = vunpack.c.l.b16 %v4996
        %v5675 = vunpack.c.h.b16 %v4996
        %v5676 = vunpack.c.l.b16 %v4997
        %v5677 = vunpack.c.h.b16 %v4997
        %v5678 = vunpack.c.l.b16 %v4998
        %v5679 = vunpack.c.h.b16 %v4998
        %v5680 = vunpack.c.l.b16 %v4999
        %v5681 = vunpack.c.h.b16 %v4999
        %v5682 = vunpack.c.l.b16 %v5000
        %v5683 = vunpack.c.h.b16 %v5000
        %v5684 = vunpack.c.l.b16 %v5001
        %v5685 = vunpack.c.h.b16 %v5001
        %v5686 = vunpack.c.l.b16 %v5002
        %v5687 = vunpack.c.h.b16 %v5002
        %v5688 = vunpack.c.l.b16 %v5003
        %v5689 = vunpack.c.h.b16 %v5003
        %v5690 = vunpack.c.l.b16 %v5004
        %v5691 = vunpack.c.h.b16 %v5004
        %v5692 = vunpack.c.l.b16 %v5005
        %v5693 = vunpack.c.h.b16 %v5005
        %v5694 = vunpack.c.l.b16 %v5006
        %v5695 = vunpack.c.h.b16 %v5006
        %v5696 = vunpack.c.l.b16 %v5007
        %v5697 = vunpack.c.h.b16 %v5007
        %v5698 = vunpack.c.l.b16 %v5008
        %v5699 = vunpack.c.h.b16 %v5008
        %v5700 = vunpack.c.l.b16 %v5009
        %v5701 = vunpack.c.h.b16 %v5009
        %v5702 = vunpack.c.l.b16 %v5010
        %v5703 = vunpack.c.h.b16 %v5010
        %v5704 = vunpack.c.l.b16 %v5011
        %v5705 = vunpack.c.h.b16 %v5011
        %v5706 = vunpack.c.l.b16 %v5012
        %v5707 = vunpack.c.h.b16 %v5012
        %v5708 = vunpack.c.l.b16 %v5013
        %v5709 = vunpack.c.h.b16 %v5013
        %v5710 = vunpack.c.l.b16 %v5014
        %v5711 = vunpack.c.h.b16 %v5014
        %v5712 = vunpack.c.l.b16 %v5015
        %v5713 = vunpack.c.h.b16 %v5015
        %v5714 = vunpack.c.l.b16 %v5016
        %v5715 = vunpack.c.h.b16 %v5016
        %v5716 = vunpack.c.l.b16 %v5017
        %v5717 = vunpack.c.h.b16 %v5017
        %v5718 = vunpack.c.l.b16 %v5018
        %v5719 = vunpack.c.h.b16 %v5018
        %v5720 = vunpack.c.l.b16 %v5019
        %v5721 = vunpack.c.h.b16 %v5019
        %v5722 = vunpack.c.l.b16 %v5020
        %v5723 = vunpack.c.h.b16 %v5020
        %v5724 = vunpack.c.l.b16 %v5021
        %v5725 = vunpack.c.h.b16 %v5021
        %v5726 = vunpack.c.l.b16 %v5022
        %v5727 = vunpack.c.h.b16 %v5022
        %v5728 = vunpack.c.l.b16 %v5023
        %v5729 = vunpack.c.h.b16 %v5023
        %v5730 = vunpack.c.l.b16 %v5024
        %v5731 = vunpack.c.h.b16 %v5024
        %v5732 = vunpack.c.l.b16 %v5025
        %v5733 = vunpack.c.h.b16 %v5025
        %v5734 = vunpack.c.l.b16 %v5026
        %v5735 = vunpack.c.h.b16 %v5026
        %v5736 = vunpack.c.l.b16 %v5027
        %v5737 = vunpack.c.h.b16 %v5027
        %v5738 = vunpack.c.l.b16 %v5028
        %v5739 = vunpack.c.h.b16 %v5028
        %v5740 = vunpack.c.l.b16 %v5029
        %v5741 = vunpack.c.h.b16 %v5029
        %v5742 = vunpack.c.l.b16 %v5030
        %v5743 = vunpack.c.h.b16 %v5030
        %v5744 = vunpack.c.l.b16 %v5031
        %v5745 = vunpack.c.h.b16 %v5031
        %v5746 = vunpack.c.l.b16 %v5032
        %v5747 = vunpack.c.h.b16 %v5032
        %v5748 = vunpack.c.l.b16 %v5033
        %v5749 = vunpack.c.h.b16 %v5033
        %v5750 = vunpack.c.l.b16 %v5034
        %v5751 = vunpack.c.h.b16 %v5034
        %v5752 = vunpack.c.l.b16 %v5035
        %v5753 = vunpack.c.h.b16 %v5035
        %v5754 = vunpack.c.l.b16 %v5036
        %v5755 = vunpack.c.h.b16 %v5036
        %v5756 = vunpack.c.l.b16 %v5037
        %v5757 = vunpack.c.h.b16 %v5037
        %v5758 = vunpack.c.l.b16 %v5038
        %v5759 = vunpack.c.h.b16 %v5038
        %v5760 = vunpack.c.l.b16 %v5039
        %v5761 = vunpack.c.h.b16 %v5039
        %v5762 = vunpack.c.l.b16 %v5040
        %v5763 = vunpack.c.h.b16 %v5040
        %v5764 = vunpack.c.l.b16 %v5041
        %v5765 = vunpack.c.h.b16 %v5041
        %v5766 = vunpack.c.l.b16 %v5042
        %v5767 = vunpack.c.h.b16 %v5042
        %v5768 = vunpack.c.l.b16 %v5043
        %v5769 = vunpack.c.h.b16 %v5043
        %v5770 = vunpack.c.l.b16 %v5044
        %v5771 = vunpack.c.h.b16 %v5044
        %v5772 = vunpack.c.l.b16 %v5045
        %v5773 = vunpack.c.h.b16 %v5045
        %v5774 = vunpack.c.l.b16 %v5046
        %v5775 = vunpack.c.h.b16 %v5046
        %v5776 = vunpack.c.l.b16 %v5047
        %v5777 = vunpack.c.h.b16 %v5047
        %v5778 = vunpack.c.l.b16 %v5048
        %v5779 = vunpack.c.h.b16 %v5048
        %v5780 = vunpack.c.l.b16 %v5049
        %v5781 = vunpack.c.h.b16 %v5049
        %v5782 = vunpack.c.l.b16 %v5050
        %v5783 = vunpack.c.h.b16 %v5050
        %v5784 = vunpack.c.l.b16 %v5051
        %v5785 = vunpack.c.h.b16 %v5051
        %v5786 = vunpack.c.l.b16 %v5052
        %v5787 = vunpack.c.h.b16 %v5052
        %v5788 = vunpack.c.l.b16 %v5053
        %v5789 = vunpack.c.h.b16 %v5053
        %v5790 = vunpack.c.l.b16 %v5054
        %v5791 = vunpack.c.h.b16 %v5054
        %v5792 = vunpack.c.l.b16 %v5055
        %v5793 = vunpack.c.h.b16 %v5055
        %v5794 = vunpack.c.l.b16 %v5056
        %v5795 = vunpack.c.h.b16 %v5056
        %v5796 = vunpack.c.l.b16 %v5057
        %v5797 = vunpack.c.h.b16 %v5057
        %v5798 = vunpack.c.l.b16 %v5058
        %v5799 = vunpack.c.h.b16 %v5058
        %v5800 = vunpack.c.l.b16 %v5059
        %v5801 = vunpack.c.h.b16 %v5059
        %v5802 = vunpack.c.l.b16 %v5060
        %v5803 = vunpack.c.h.b16 %v5060
        %v5804 = vunpack.c.l.b16 %v5061
        %v5805 = vunpack.c.h.b16 %v5061
        %v5806 = vunpack.c.l.b16 %v5062
        %v5807 = vunpack.c.h.b16 %v5062
        %v5808 = vunpack.c.l.b16 %v5063
        %v5809 = vunpack.c.h.b16 %v5063
        %v5810 = vunpack.c.l.b16 %v5064
        %v5811 = vunpack.c.h.b16 %v5064
        %v5812 = vunpack.c.l.b16 %v5065
        %v5813 = vunpack.c.h.b16 %v5065
        %v5814 = vunpack.c.l.b16 %v5066
        %v5815 = vunpack.c.h.b16 %v5066
        %v5816 = vunpack.c.l.b16 %v5067
        %v5817 = vunpack.c.h.b16 %v5067
        %v5818 = vunpack.c.l.b16 %v5068
        %v5819 = vunpack.c.h.b16 %v5068
        %v5820 = vunpack.c.l.b16 %v5069
        %v5821 = vunpack.c.h.b16 %v5069
        %v5822 = vunpack.c.l.b16 %v5070
        %v5823 = vunpack.c.h.b16 %v5070
        %v5824 = vunpack.c.l.b16 %v5071
        %v5825 = vunpack.c.h.b16 %v5071
        %v5826 = vunpack.c.l.b16 %v5072
        %v5827 = vunpack.c.h.b16 %v5072
        %v5828 = vunpack.c.l.b16 %v5073
        %v5829 = vunpack.c.h.b16 %v5073
        %v5830 = vunpack.c.l.b16 %v5074
        %v5831 = vunpack.c.h.b16 %v5074
        %v5832 = vunpack.c.l.b16 %v5075
        %v5833 = vunpack.c.h.b16 %v5075
        %v5834 = vunpack.c.l.b16 %v5076
        %v5835 = vunpack.c.h.b16 %v5076
        %v5836 = vunpack.c.l.b16 %v5077
        %v5837 = vunpack.c.h.b16 %v5077
        %v5838 = vunpack.c.l.b16 %v5078
        %v5839 = vunpack.c.h.b16 %v5078
        %v5840 = vunpack.c.l.b16 %v5079
        %v5841 = vunpack.c.h.b16 %v5079
        %v5842 = vunpack.c.l.b16 %v5080
        %v5843 = vunpack.c.h.b16 %v5080
        %v5844 = vunpack.c.l.b16 %v5081
        %v5845 = vunpack.c.h.b16 %v5081
        %v5846 = vunpack.c.l.b16 %v5082
        %v5847 = vunpack.c.h.b16 %v5082
        %v5848 = vunpack.c.l.b16 %v5083
        %v5849 = vunpack.c.h.b16 %v5083
        %v5850 = vunpack.c.l.b16 %v5084
        %v5851 = vunpack.c.h.b16 %v5084
        %v5852 = vunpack.c.l.b16 %v5085
        %v5853 = vunpack.c.h.b16 %v5085
        %v5854 = vunpack.c.l.b16 %v5086
        %v5855 = vunpack.c.h.b16 %v5086
        %v5856 = vunpack.c.l.b16 %v5087
        %v5857 = vunpack.c.h.b16 %v5087
        %v5858 = vunpack.c.l.b16 %v5088
        %v5859 = vunpack.c.h.b16 %v5088
        %v5860 = vunpack.c.l.b16 %v5089
        %v5861 = vunpack.c.h.b16 %v5089
        %v5862 = vunpack.c.l.b16 %v5090
        %v5863 = vunpack.c.h.b16 %v5090
        %v5864 = vunpack.c.l.b16 %v5091
        %v5865 = vunpack.c.h.b16 %v5091
        %v5866 = vunpack.c.l.b16 %v5092
        %v5867 = vunpack.c.h.b16 %v5092
        %v5868 = vunpack.c.l.b16 %v5093
        %v5869 = vunpack.c.h.b16 %v5093
        %v5870 = vunpack.c.l.b16 %v5094
        %v5871 = vunpack.c.h.b16 %v5094
        %v5872 = vunpack.c.l.b16 %v5095
        %v5873 = vunpack.c.h.b16 %v5095
        %v5874 = vunpack.c.l.b16 %v5096
        %v5875 = vunpack.c.h.b16 %v5096
        %v5876 = vunpack.c.l.b16 %v5097
        %v5877 = vunpack.c.h.b16 %v5097
        %v5878 = vunpack.c.l.b16 %v5098
        %v5879 = vunpack.c.h.b16 %v5098
        %v5880 = vunpack.c.l.b16 %v5099
        %v5881 = vunpack.c.h.b16 %v5099
        %v5882 = vunpack.c.l.b16 %v5100
        %v5883 = vunpack.c.h.b16 %v5100
        %v5884 = vunpack.c.l.b16 %v5101
        %v5885 = vunpack.c.h.b16 %v5101
        %v5886 = vunpack.c.l.b16 %v5102
        %v5887 = vunpack.c.h.b16 %v5102
        %v5888 = vunpack.c.l.b16 %v5103
        %v5889 = vunpack.c.h.b16 %v5103
        %v5890 = vunpack.c.l.b16 %v5104
        %v5891 = vunpack.c.h.b16 %v5104
        %v5892 = vunpack.c.l.b16 %v5105
        %v5893 = vunpack.c.h.b16 %v5105
        %v5894 = vunpack.c.l.b16 %v5106
        %v5895 = vunpack.c.h.b16 %v5106
        %v5896 = vunpack.c.l.b16 %v5107
        %v5897 = vunpack.c.h.b16 %v5107
        %v5898 = vunpack.c.l.b16 %v5108
        %v5899 = vunpack.c.h.b16 %v5108
        %v5900 = vunpack.c.l.b16 %v5109
        %v5901 = vunpack.c.h.b16 %v5109
        %v5902 = vunpack.c.l.b16 %v5110
        %v5903 = vunpack.c.h.b16 %v5110
        %v5904 = vunpack.c.l.b16 %v5111
        %v5905 = vunpack.c.h.b16 %v5111
        %v5906 = vunpack.c.l.b16 %v5112
        %v5907 = vunpack.c.h.b16 %v5112
        %v5908 = vunpack.c.l.b16 %v5113
        %v5909 = vunpack.c.h.b16 %v5113
        %v5910 = vunpack.c.l.b16 %v5114
        %v5911 = vunpack.c.h.b16 %v5114
        %v5912 = vunpack.c.l.b16 %v5115
        %v5913 = vunpack.c.h.b16 %v5115
        %v5914 = vunpack.c.l.b16 %v5116
        %v5915 = vunpack.c.h.b16 %v5116
        %v5916 = vunpack.c.l.b16 %v5117
        %v5917 = vunpack.c.h.b16 %v5117
        %v5918 = vunpack.c.l.b16 %v5118
        %v5919 = vunpack.c.h.b16 %v5118
        %v5920 = vunpack.c.l.b16 %v5119
        %v5921 = vunpack.c.h.b16 %v5119
        %v5922 = vunpack.c.l.b16 %v5120
        %v5923 = vunpack.c.h.b16 %v5120
        %v5924 = vunpack.c.l.b16 %v5121
        %v5925 = vunpack.c.h.b16 %v5121
        %v5926 = vunpack.c.l.b16 %v5122
        %v5927 = vunpack.c.h.b16 %v5122
        %v5928 = vunpack.c.l.b16 %v5123
        %v5929 = vunpack.c.h.b16 %v5123
        %v5930 = vunpack.c.l.b16 %v5124
        %v5931 = vunpack.c.h.b16 %v5124
        %v5932 = vunpack.c.l.b16 %v5125
        %v5933 = vunpack.c.h.b16 %v5125
        %v5934 = vunpack.c.l.b16 %v5126
        %v5935 = vunpack.c.h.b16 %v5126
        %v5936 = vunpack.c.l.b16 %v5127
        %v5937 = vunpack.c.h.b16 %v5127
        %v5938 = vunpack.c.l.b16 %v5128
        %v5939 = vunpack.c.h.b16 %v5128
        %v5940 = vunpack.c.l.b16 %v5129
        %v5941 = vunpack.c.h.b16 %v5129
        %v5942 = vunpack.c.l.b16 %v5130
        %v5943 = vunpack.c.h.b16 %v5130
        %v5944 = vunpack.c.l.b16 %v5131
        %v5945 = vunpack.c.h.b16 %v5131
        %v5946 = vunpack.c.l.b16 %v5132
        %v5947 = vunpack.c.h.b16 %v5132
        %v5948 = vunpack.c.l.b16 %v5133
        %v5949 = vunpack.c.h.b16 %v5133
        %v5950 = vunpack.c.l.b16 %v5134
        %v5951 = vunpack.c.h.b16 %v5134
        %v5952 = vunpack.c.l.b16 %v5135
        %v5953 = vunpack.c.h.b16 %v5135
        %v5954 = vunpack.c.l.b16 %v5136
        %v5955 = vunpack.c.h.b16 %v5136
        %v5956 = vunpack.c.l.b16 %v5137
        %v5957 = vunpack.c.h.b16 %v5137
        %v5958 = vunpack.c.l.b16 %v5138
        %v5959 = vunpack.c.h.b16 %v5138
        %v5960 = vunpack.c.l.b16 %v5139
        %v5961 = vunpack.c.h.b16 %v5139
        %v5962 = vunpack.c.l.b16 %v5140
        %v5963 = vunpack.c.h.b16 %v5140
        %v5964 = vunpack.c.l.b16 %v5141
        %v5965 = vunpack.c.h.b16 %v5141
        %v5966 = vunpack.c.l.b16 %v5142
        %v5967 = vunpack.c.h.b16 %v5142
        %v5968 = vunpack.c.l.b16 %v5143
        %v5969 = vunpack.c.h.b16 %v5143
        %v5970 = vunpack.c.l.b16 %v5144
        %v5971 = vunpack.c.h.b16 %v5144
        %v5972 = vunpack.c.l.b16 %v5145
        %v5973 = vunpack.c.h.b16 %v5145
        %v5974 = vunpack.c.l.b16 %v5146
        %v5975 = vunpack.c.h.b16 %v5146
        %v5976 = vunpack.c.l.b16 %v5147
        %v5977 = vunpack.c.h.b16 %v5147
        %v5978 = vunpack.c.l.b16 %v5148
        %v5979 = vunpack.c.h.b16 %v5148
        %v5980 = vunpack.c.l.b16 %v5149
        %v5981 = vunpack.c.h.b16 %v5149
        %v5982 = vunpack.c.l.b16 %v5150
        %v5983 = vunpack.c.h.b16 %v5150
        %v5984 = vunpack.c.l.b16 %v5151
        %v5985 = vunpack.c.h.b16 %v5151
        %v5986 = vunpack.c.l.b16 %v5152
        %v5987 = vunpack.c.h.b16 %v5152
        %v5988 = vunpack.c.l.b16 %v5153
        %v5989 = vunpack.c.h.b16 %v5153
        %v5990 = vunpack.c.l.b16 %v5154
        %v5991 = vunpack.c.h.b16 %v5154
        %v5992 = vunpack.c.l.b16 %v5155
        %v5993 = vunpack.c.h.b16 %v5155
        %v5994 = vunpack.c.l.b16 %v5156
        %v5995 = vunpack.c.h.b16 %v5156
        %v5996 = vunpack.c.l.b16 %v5157
        %v5997 = vunpack.c.h.b16 %v5157
        %v5998 = vunpack.c.l.b16 %v5158
        %v5999 = vunpack.c.h.b16 %v5158
        %v6000 = vunpack.c.l.b16 %v5159
        %v6001 = vunpack.c.h.b16 %v5159
        %v6002 = vunpack.c.l.b16 %v5160
        %v6003 = vunpack.c.h.b16 %v5160
        %v6004 = vunpack.c.l.b16 %v5161
        %v6005 = vunpack.c.h.b16 %v5161
        %v6006 = vunpack.c.l.b16 %v5162
        %v6007 = vunpack.c.h.b16 %v5162
        %v6008 = vunpack.c.l.b16 %v5163
        %v6009 = vunpack.c.h.b16 %v5163
        %v6010 = vunpack.c.l.b16 %v5164
        %v6011 = vunpack.c.h.b16 %v5164
        %v6012 = vunpack.c.l.b16 %v5165
        %v6013 = vunpack.c.h.b16 %v5165
        %v6014 = vunpack.c.l.b16 %v5166
        %v6015 = vunpack.c.h.b16 %v5166
        %v6016 = vunpack.c.l.b16 %v5167
        %v6017 = vunpack.c.h.b16 %v5167
        %v6018 = vunpack.c.l.b16 %v5168
        %v6019 = vunpack.c.h.b16 %v5168
        %v6020 = vunpack.c.l.b16 %v5169
        %v6021 = vunpack.c.h.b16 %v5169
        %v6022 = vunpack.c.l.b16 %v5170
        %v6023 = vunpack.c.h.b16 %v5170
        %v6024 = vunpack.c.l.b16 %v5171
        %v6025 = vunpack.c.h.b16 %v5171
        %v6026 = vunpack.c.l.b16 %v5172
        %v6027 = vunpack.c.h.b16 %v5172
        %v6028 = vunpack.c.l.b16 %v5173
        %v6029 = vunpack.c.h.b16 %v5173
        %v6030 = vunpack.c.l.b16 %v5174
        %v6031 = vunpack.c.h.b16 %v5174
        %v6032 = vunpack.c.l.b16 %v5175
        %v6033 = vunpack.c.h.b16 %v5175
        %v6034 = vunpack.c.l.b16 %v5176
        %v6035 = vunpack.c.h.b16 %v5176
        %v6036 = vunpack.c.l.b16 %v5177
        %v6037 = vunpack.c.h.b16 %v5177
        %v6038 = vunpack.c.l.b16 %v5178
        %v6039 = vunpack.c.h.b16 %v5178
        %v6040 = vunpack.c.l.b16 %v5179
        %v6041 = vunpack.c.h.b16 %v5179
        %v6042 = vunpack.c.l.b16 %v5180
        %v6043 = vunpack.c.h.b16 %v5180
        %v6044 = vunpack.c.l.b16 %v5181
        %v6045 = vunpack.c.h.b16 %v5181
        %v6046 = vunpack.c.l.b16 %v5182
        %v6047 = vunpack.c.h.b16 %v5182
        %v6048 = vunpack.c.l.b16 %v5183
        %v6049 = vunpack.c.h.b16 %v5183
        %v6050 = vunpack.c.l.b16 %v5184
        %v6051 = vunpack.c.h.b16 %v5184
        %v6052 = vunpack.c.l.b16 %v5185
        %v6053 = vunpack.c.h.b16 %v5185
        %v6054 = vunpack.c.l.b16 %v5186
        %v6055 = vunpack.c.h.b16 %v5186
        %v6056 = vunpack.c.l.b16 %v5187
        %v6057 = vunpack.c.h.b16 %v5187
        %v6058 = vunpack.c.l.b16 %v5188
        %v6059 = vunpack.c.h.b16 %v5188
        %v6060 = vunpack.c.l.b16 %v5189
        %v6061 = vunpack.c.h.b16 %v5189
        %v6062 = vunpack.c.l.b16 %v5190
        %v6063 = vunpack.c.h.b16 %v5190
        %v6064 = vunpack.c.l.b16 %v5191
        %v6065 = vunpack.c.h.b16 %v5191
        %v6066 = vunpack.c.l.b16 %v5192
        %v6067 = vunpack.c.h.b16 %v5192
        %v6068 = vunpack.c.l.b16 %v5193
        %v6069 = vunpack.c.h.b16 %v5193
        %v6070 = vunpack.c.l.b16 %v5194
        %v6071 = vunpack.c.h.b16 %v5194
        %v6072 = vpack.c.b16 %v5502, %v5496
        %v6073 = vpack.c.b16 %v5503, %v5497
        %v6074 = vpack.c.b16 %v5504, %v5498
        %v6075 = vpack.c.b16 %v5505, %v5499
        %v6076 = vpack.c.b16 %v5506, %v5500
        %v6077 = vpack.c.b16 %v5507, %v5501
        %v6078 = vpack.c.b16 %v5514, %v5508
        %v6079 = vpack.c.b16 %v5515, %v5509
        %v6080 = vpack.c.b16 %v5516, %v5510
        %v6081 = vpack.c.b16 %v5517, %v5511
        %v6082 = vpack.c.b16 %v5518, %v5512
        %v6083 = vpack.c.b16 %v5519, %v5513
        %v6084 = vpack.c.b16 %v5526, %v5520
        %v6085 = vpack.c.b16 %v5527, %v5521
        %v6086 = vpack.c.b16 %v5528, %v5522
        %v6087 = vpack.c.b16 %v5529, %v5523
        %v6088 = vpack.c.b16 %v5530, %v5524
        %v6089 = vpack.c.b16 %v5531, %v5525
        %v6090 = vpack.c.b16 %v5538, %v5532
        %v6091 = vpack.c.b16 %v5539, %v5533
        %v6092 = vpack.c.b16 %v5540, %v5534
        %v6093 = vpack.c.b16 %v5541, %v5535
        %v6094 = vpack.c.b16 %v5542, %v5536
        %v6095 = vpack.c.b16 %v5543, %v5537
        %v6096 = vpack.c.b16 %v5550, %v5544
        %v6097 = vpack.c.b16 %v5551, %v5545
        %v6098 = vpack.c.b16 %v5552, %v5546
        %v6099 = vpack.c.b16 %v5553, %v5547
        %v6100 = vpack.c.b16 %v5554, %v5548
        %v6101 = vpack.c.b16 %v5555, %v5549
        %v6102 = vpack.c.b16 %v5562, %v5556
        %v6103 = vpack.c.b16 %v5563, %v5557
        %v6104 = vpack.c.b16 %v5564, %v5558
        %v6105 = vpack.c.b16 %v5565, %v5559
        %v6106 = vpack.c.b16 %v5566, %v5560
        %v6107 = vpack.c.b16 %v5567, %v5561
        %v6108 = vpack.c.b16 %v5574, %v5568
        %v6109 = vpack.c.b16 %v5575, %v5569
        %v6110 = vpack.c.b16 %v5576, %v5570
        %v6111 = vpack.c.b16 %v5577, %v5571
        %v6112 = vpack.c.b16 %v5578, %v5572
        %v6113 = vpack.c.b16 %v5579, %v5573
        %v6114 = vpack.c.b16 %v5586, %v5580
        %v6115 = vpack.c.b16 %v5587, %v5581
        %v6116 = vpack.c.b16 %v5588, %v5582
        %v6117 = vpack.c.b16 %v5589, %v5583
        %v6118 = vpack.c.b16 %v5590, %v5584
        %v6119 = vpack.c.b16 %v5591, %v5585
        %v6120 = vpack.c.b16 %v5598, %v5592
        %v6121 = vpack.c.b16 %v5599, %v5593
        %v6122 = vpack.c.b16 %v5600, %v5594
        %v6123 = vpack.c.b16 %v5601, %v5595
        %v6124 = vpack.c.b16 %v5602, %v5596
        %v6125 = vpack.c.b16 %v5603, %v5597
        %v6126 = vpack.c.b16 %v5610, %v5604
        %v6127 = vpack.c.b16 %v5611, %v5605
        %v6128 = vpack.c.b16 %v5612, %v5606
        %v6129 = vpack.c.b16 %v5613, %v5607
        %v6130 = vpack.c.b16 %v5614, %v5608
        %v6131 = vpack.c.b16 %v5615, %v5609
        %v6132 = vpack.c.b16 %v5622, %v5616
        %v6133 = vpack.c.b16 %v5623, %v5617
        %v6134 = vpack.c.b16 %v5624, %v5618
        %v6135 = vpack.c.b16 %v5625, %v5619
        %v6136 = vpack.c.b16 %v5626, %v5620
        %v6137 = vpack.c.b16 %v5627, %v5621
        %v6138 = vpack.c.b16 %v5634, %v5628
        %v6139 = vpack.c.b16 %v5635, %v5629
        %v6140 = vpack.c.b16 %v5636, %v5630
        %v6141 = vpack.c.b16 %v5637, %v5631
        %v6142 = vpack.c.b16 %v5638, %v5632
        %v6143 = vpack.c.b16 %v5639, %v5633
        %v6144 = vpack.c.b16 %v5646, %v5640
        %v6145 = vpack.c.b16 %v5647, %v5641
        %v6146 = vpack.c.b16 %v5648, %v5642
        %v6147 = vpack.c.b16 %v5649, %v5643
        %v6148 = vpack.c.b16 %v5650, %v5644
        %v6149 = vpack.c.b16 %v5651, %v5645
        %v6150 = vpack.c.b16 %v5658, %v5652
        %v6151 = vpack.c.b16 %v5659, %v5653
        %v6152 = vpack.c.b16 %v5660, %v5654
        %v6153 = vpack.c.b16 %v5661, %v5655
        %v6154 = vpack.c.b16 %v5662, %v5656
        %v6155 = vpack.c.b16 %v5663, %v5657
        %v6156 = vpack.c.b16 %v5670, %v5664
        %v6157 = vpack.c.b16 %v5671, %v5665
        %v6158 = vpack.c.b16 %v5672, %v5666
        %v6159 = vpack.c.b16 %v5673, %v5667
        %v6160 = vpack.c.b16 %v5674, %v5668
        %v6161 = vpack.c.b16 %v5675, %v5669
        %v6162 = vpack.c.b16 %v5682, %v5676
        %v6163 = vpack.c.b16 %v5683, %v5677
        %v6164 = vpack.c.b16 %v5684, %v5678
        %v6165 = vpack.c.b16 %v5685, %v5679
        %v6166 = vpack.c.b16 %v5686, %v5680
        %v6167 = vpack.c.b16 %v5687, %v5681
        %v6168 = vpack.c.b16 %v5694, %v5688
        %v6169 = vpack.c.b16 %v5695, %v5689
        %v6170 = vpack.c.b16 %v5696, %v5690
        %v6171 = vpack.c.b16 %v5697, %v5691
        %v6172 = vpack.c.b16 %v5698, %v5692
        %v6173 = vpack.c.b16 %v5699, %v5693
        %v6174 = vpack.c.b16 %v5706, %v5700
        %v6175 = vpack.c.b16 %v5707, %v5701
        %v6176 = vpack.c.b16 %v5708, %v5702
        %v6177 = vpack.c.b16 %v5709, %v5703
        %v6178 = vpack.c.b16 %v5710, %v5704
        %v6179 = vpack.c.b16 %v5711, %v5705
        %v6180 = vpack.c.b16 %v5718, %v5712
        %v6181 = vpack.c.b16 %v5719, %v5713
        %v6182 = vpack.c.b16 %v5720, %v5714
        %v6183 = vpack.c.b16 %v5721, %v5715
        %v6184 = vpack.c.b16 %v5722, %v5716
        %v6185 = vpack.c.b16 %v5723, %v5717
        %v6186 = vpack.c.b16 %v5730, %v5724
        %v6187 = vpack.c.b16 %v5731, %v5725
        %v6188 = vpack.c.b16 %v5732, %v5726
        %v6189 = vpack.c.b16 %v5733, %v5727
        %v6190 = vpack.c.b16 %v5734, %v5728
        %v6191 = vpack.c.b16 %v5735, %v5729
        %v6192 = vpack.c.b16 %v5742, %v5736
        %v6193 = vpack.c.b16 %v5743, %v5737
        %v6194 = vpack.c.b16 %v5744, %v5738
        %v6195 = vpack.c.b16 %v5745, %v5739
        %v6196 = vpack.c.b16 %v5746, %v5740
        %v6197 = vpack.c.b16 %v5747, %v5741
        %v6198 = vpack.c.b16 %v5754, %v5748
        %v6199 = vpack.c.b16 %v5755, %v5749
        %v6200 = vpack.c.b16 %v5756, %v5750
        %v6201 = vpack.c.b16 %v5757, %v5751
        %v6202 = vpack.c.b16 %v5758, %v5752
        %v6203 = vpack.c.b16 %v5759, %v5753
        %v6204 = vpack.c.b16 %v5766, %v5760
        %v6205 = vpack.c.b16 %v5767, %v5761
        %v6206 = vpack.c.b16 %v5768, %v5762
        %v6207 = vpack.c.b16 %v5769, %v5763
        %v6208 = vpack.c.b16 %v5770, %v5764
        %v6209 = vpack.c.b16 %v5771, %v5765
        %v6210 = vpack.c.b16 %v5778, %v5772
        %v6211 = vpack.c.b16 %v5779, %v5773
        %v6212 = vpack.c.b16 %v5780, %v5774
        %v6213 = vpack.c.b16 %v5781, %v5775
        %v6214 = vpack.c.b16 %v5782, %v5776
        %v6215 = vpack.c.b16 %v5783, %v5777
        %v6216 = vpack.c.b16 %v5790, %v5784
        %v6217 = vpack.c.b16 %v5791, %v5785
        %v6218 = vpack.c.b16 %v5792, %v5786
        %v6219 = vpack.c.b16 %v5793, %v5787
        %v6220 = vpack.c.b16 %v5794, %v5788
        %v6221 = vpack.c.b16 %v5795, %v5789
        %v6222 = vpack.c.b16 %v5802, %v5796
        %v6223 = vpack.c.b16 %v5803, %v5797
        %v6224 = vpack.c.b16 %v5804, %v5798
        %v6225 = vpack.c.b16 %v5805, %v5799
        %v6226 = vpack.c.b16 %v5806, %v5800
        %v6227 = vpack.c.b16 %v5807, %v5801
        %v6228 = vpack.c.b16 %v5814, %v5808
        %v6229 = vpack.c.b16 %v5815, %v5809
        %v6230 = vpack.c.b16 %v5816, %v5810
        %v6231 = vpack.c.b16 %v5817, %v5811
        %v6232 = vpack.c.b16 %v5818, %v5812
        %v6233 = vpack.c.b16 %v5819, %v5813
        %v6234 = vpack.c.b16 %v5826, %v5820
        %v6235 = vpack.c.b16 %v5827, %v5821
        %v6236 = vpack.c.b16 %v5828, %v5822
        %v6237 = vpack.c.b16 %v5829, %v5823
        %v6238 = vpack.c.b16 %v5830, %v5824
        %v6239 = vpack.c.b16 %v5831, %v5825
        %v6240 = vpack.c.b16 %v5838, %v5832
        %v6241 = vpack.c.b16 %v5839, %v5833
        %v6242 = vpack.c.b16 %v5840, %v5834
        %v6243 = vpack.c.b16 %v5841, %v5835
        %v6244 = vpack.c.b16 %v5842, %v5836
        %v6245 = vpack.c.b16 %v5843, %v5837
        %v6246 = vpack.c.b16 %v5850, %v5844
        %v6247 = vpack.c.b16 %v5851, %v5845
        %v6248 = vpack.c.b16 %v5852, %v5846
        %v6249 = vpack.c.b16 %v5853, %v5847
        %v6250 = vpack.c.b16 %v5854, %v5848
        %v6251 = vpack.c.b16 %v5855, %v5849
        %v6252 = vpack.c.b16 %v5862, %v5856
        %v6253 = vpack.c.b16 %v5863, %v5857
        %v6254 = vpack.c.b16 %v5864, %v5858
        %v6255 = vpack.c.b16 %v5865, %v5859
        %v6256 = vpack.c.b16 %v5866, %v5860
        %v6257 = vpack.c.b16 %v5867, %v5861
        %v6258 = vpack.c.b16 %v5874, %v5868
        %v6259 = vpack.c.b16 %v5875, %v5869
        %v6260 = vpack.c.b16 %v5876, %v5870
        %v6261 = vpack.c.b16 %v5877, %v5871
        %v6262 = vpack.c.b16 %v5878, %v5872
        %v6263 = vpack.c.b16 %v5879, %v5873
        %v6264 = vpack.c.b16 %v5886, %v5880
        %v6265 = vpack.c.b16 %v5887, %v5881
        %v6266 = vpack.c.b16 %v5888, %v5882
        %v6267 = vpack.c.b16 %v5889, %v5883
        %v6268 = vpack.c.b16 %v5890, %v5884
        %v6269 = vpack.c.b16 %v5891, %v5885
        %v6270 = vpack.c.b16 %v5898, %v5892
        %v6271 = vpack.c.b16 %v5899, %v5893
        %v6272 = vpack.c.b16 %v5900, %v5894
        %v6273 = vpack.c.b16 %v5901, %v5895
        %v6274 = vpack.c.b16 %v5902, %v5896
        %v6275 = vpack.c.b16 %v5903, %v5897
        %v6276 = vpack.c.b16 %v5910, %v5904
        %v6277 = vpack.c.b16 %v5911, %v5905
        %v6278 = vpack.c.b16 %v5912, %v5906
        %v6279 = vpack.c.b16 %v5913, %v5907
        %v6280 = vpack.c.b16 %v5914, %v5908
        %v6281 = vpack.c.b16 %v5915, %v5909
        %v6282 = vpack.c.b16 %v5922, %v5916
        %v6283 = vpack.c.b16 %v5923, %v5917
        %v6284 = vpack.c.b16 %v5924, %v5918
        %v6285 = vpack.c.b16 %v5925, %v5919
        %v6286 = vpack.c.b16 %v5926, %v5920
        %v6287 = vpack.c.b16 %v5927, %v5921
        %v6288 = vpack.c.b16 %v5934, %v5928
        %v6289 = vpack.c.b16 %v5935, %v5929
        %v6290 = vpack.c.b16 %v5936, %v5930
        %v6291 = vpack.c.b16 %v5937, %v5931
        %v6292 = vpack.c.b16 %v5938, %v5932
        %v6293 = vpack.c.b16 %v5939, %v5933
        %v6294 = vpack.c.b16 %v5946, %v5940
        %v6295 = vpack.c.b16 %v5947, %v5941
        %v6296 = vpack.c.b16 %v5948, %v5942
        %v6297 = vpack.c.b16 %v5949, %v5943
        %v6298 = vpack.c.b16 %v5950, %v5944
        %v6299 = vpack.c.b16 %v5951, %v5945
        %v6300 = vpack.c.b16 %v5958, %v5952
        %v6301 = vpack.c.b16 %v5959, %v5953
        %v6302 = vpack.c.b16 %v5960, %v5954
        %v6303 = vpack.c.b16 %v5961, %v5955
        %v6304 = vpack.c.b16 %v5962, %v5956
        %v6305 = vpack.c.b16 %v5963, %v5957
        %v6306 = vpack.c.b16 %v5970, %v5964
        %v6307 = vpack.c.b16 %v5971, %v5965
        %v6308 = vpack.c.b16 %v5972, %v5966
        %v6309 = vpack.c.b16 %v5973, %v5967
        %v6310 = vpack.c.b16 %v5974, %v5968
        %v6311 = vpack.c.b16 %v5975, %v5969
        %v6312 = vpack.c.b16 %v5982, %v5976
        %v6313 = vpack.c.b16 %v5983, %v5977
        %v6314 = vpack.c.b16 %v5984, %v5978
        %v6315 = vpack.c.b16 %v5985, %v5979
        %v6316 = vpack.c.b16 %v5986, %v5980
        %v6317 = vpack.c.b16 %v5987, %v5981
        %v6318 = vpack.c.b16 %v5994, %v5988
        %v6319 = vpack.c.b16 %v5995, %v5989
        %v6320 = vpack.c.b16 %v5996, %v5990
        %v6321 = vpack.c.b16 %v5997, %v5991
        %v6322 = vpack.c.b16 %v5998, %v5992
        %v6323 = vpack.c.b16 %v5999, %v5993
        %v6324 = vpack.c.b16 %v6006, %v6000
        %v6325 = vpack.c.b16 %v6007, %v6001
        %v6326 = vpack.c.b16 %v6008, %v6002
        %v6327 = vpack.c.b16 %v6009, %v6003
        %v6328 = vpack.c.b16 %v6010, %v6004
        %v6329 = vpack.c.b16 %v6011, %v6005
        %v6330 = vpack.c.b16 %v6018, %v6012
        %v6331 = vpack.c.b16 %v6019, %v6013
        %v6332 = vpack.c.b16 %v6020, %v6014
        %v6333 = vpack.c.b16 %v6021, %v6015
        %v6334 = vpack.c.b16 %v6022, %v6016
        %v6335 = vpack.c.b16 %v6023, %v6017
        %v6336 = vpack.c.b16 %v6030, %v6024
        %v6337 = vpack.c.b16 %v6031, %v6025
        %v6338 = vpack.c.b16 %v6032, %v6026
        %v6339 = vpack.c.b16 %v6033, %v6027
        %v6340 = vpack.c.b16 %v6034, %v6028
        %v6341 = vpack.c.b16 %v6035, %v6029
        %v6342 = vpack.c.b16 %v6042, %v6036
        %v6343 = vpack.c.b16 %v6043, %v6037
        %v6344 = vpack.c.b16 %v6044, %v6038
        %v6345 = vpack.c.b16 %v6045, %v6039
        %v6346 = vpack.c.b16 %v6046, %v6040
        %v6347 = vpack.c.b16 %v6047, %v6041
        %v6348 = vpack.c.b16 %v6054, %v6048
        %v6349 = vpack.c.b16 %v6055, %v6049
        %v6350 = vpack.c.b16 %v6056, %v6050
        %v6351 = vpack.c.b16 %v6057, %v6051
        %v6352 = vpack.c.b16 %v6058, %v6052
        %v6353 = vpack.c.b16 %v6059, %v6053
        %v6354 = vpack.c.b16 %v6066, %v6060
        %v6355 = vpack.c.b16 %v6067, %v6061
        %v6356 = vpack.c.b16 %v6068, %v6062
        %v6357 = vpack.c.b16 %v6069, %v6063
        %v6358 = vpack.c.b16 %v6070, %v6064
        %v6359 = vpack.c.b16 %v6071, %v6065
        %6648 = vmatpush.bf16.msra.mxu0 %v6114
        %6649 = vmatpush.bf16.msra.mxu0 %v6108
        %6650 = vmatpush.bf16.msra.mxu0 %v6102
        %6651 = vmatpush.bf16.msra.mxu0 %v6096
        %6652 = vmatpush.bf16.msra.mxu0 %v6090
        %6653 = vmatpush.bf16.msra.mxu0 %v6084
        %6654 = vmatpush.bf16.msra.mxu0 %v6078
        %6655 = vmatpush.bf16.msra.mxu0 %v6072
        %6656 = vmatmul.bf16.gmra.mxu0 %v4900
        %v6657 = vpop.f32.mrf.mxu0
        %v6658 = vadd.f32 %v5196, %v6657
        %v6659 = vpop.f32.mrf.mxu0
        %v6660 = vadd.f32 %v5196, %v6659
        %6661 = vdwg.mxu0
        %6662 = vmatpush.bf16.msra.mxu0 %v6162
        %6663 = vmatpush.bf16.msra.mxu0 %v6156
        %6664 = vmatpush.bf16.msra.mxu0 %v6150
        %6665 = vmatpush.bf16.msra.mxu0 %v6144
        %6666 = vmatpush.bf16.msra.mxu0 %v6138
        %6667 = vmatpush.bf16.msra.mxu0 %v6132
        %6668 = vmatpush.bf16.msra.mxu0 %v6126
        %6669 = vmatpush.bf16.msra.mxu0 %v6120
        %6670 = vmatmul.bf16.gmra.mxu0 %v4901
        %v6671 = vpop.f32.mrf.mxu0
        %v6672 = vadd.f32 %v6658, %v6671
        %v6673 = vpop.f32.mrf.mxu0
        %v6674 = vadd.f32 %v6660, %v6673
        %6675 = vdwg.mxu0
        %6676 = vmatpush.bf16.msra.mxu0 %v6210
        %6677 = vmatpush.bf16.msra.mxu0 %v6204
        %6678 = vmatpush.bf16.msra.mxu0 %v6198
        %6679 = vmatpush.bf16.msra.mxu0 %v6192
        %6680 = vmatpush.bf16.msra.mxu0 %v6186
        %6681 = vmatpush.bf16.msra.mxu0 %v6180
        %6682 = vmatpush.bf16.msra.mxu0 %v6174
        %6683 = vmatpush.bf16.msra.mxu0 %v6168
        %6684 = vmatmul.bf16.gmra.mxu0 %v4902
        %v6685 = vpop.f32.mrf.mxu0
        %v6686 = vadd.f32 %v6672, %v6685
        %v6687 = vpop.f32.mrf.mxu0
        %v6688 = vadd.f32 %v6674, %v6687
        %6689 = vdwg.mxu0
        %6690 = vmatpush.bf16.msra.mxu0 %v6258
        %6691 = vmatpush.bf16.msra.mxu0 %v6252
        %6692 = vmatpush.bf16.msra.mxu0 %v6246
        %6693 = vmatpush.bf16.msra.mxu0 %v6240
        %6694 = vmatpush.bf16.msra.mxu0 %v6234
        %6695 = vmatpush.bf16.msra.mxu0 %v6228
        %6696 = vmatpush.bf16.msra.mxu0 %v6222
        %6697 = vmatpush.bf16.msra.mxu0 %v6216
        %6698 = vmatmul.bf16.gmra.mxu0 %v4903
        %v6699 = vpop.f32.mrf.mxu0
        %v6700 = vadd.f32 %v6686, %v6699
        %v6701 = vpop.f32.mrf.mxu0
        %v6702 = vadd.f32 %v6688, %v6701
        %6703 = vdwg.mxu0
        %6704 = vmatpush.bf16.msra.mxu0 %v6306
        %6705 = vmatpush.bf16.msra.mxu0 %v6300
        %6706 = vmatpush.bf16.msra.mxu0 %v6294
        %6707 = vmatpush.bf16.msra.mxu0 %v6288
        %6708 = vmatpush.bf16.msra.mxu0 %v6282
        %6709 = vmatpush.bf16.msra.mxu0 %v6276
        %6710 = vmatpush.bf16.msra.mxu0 %v6270
        %6711 = vmatpush.bf16.msra.mxu0 %v6264
        %6712 = vmatmul.bf16.gmra.mxu0 %v4904
        %v6713 = vpop.f32.mrf.mxu0
        %v6714 = vadd.f32 %v6700, %v6713
        %v6715 = vpop.f32.mrf.mxu0
        %v6716 = vadd.f32 %v6702, %v6715
        %6717 = vdwg.mxu0
        %6718 = vmatpush.bf16.msra.mxu0 %v6354
        %6719 = vmatpush.bf16.msra.mxu0 %v6348
        %6720 = vmatpush.bf16.msra.mxu0 %v6342
        %6721 = vmatpush.bf16.msra.mxu0 %v6336
        %6722 = vmatpush.bf16.msra.mxu0 %v6330
        %6723 = vmatpush.bf16.msra.mxu0 %v6324
        %6724 = vmatpush.bf16.msra.mxu0 %v6318
        %6725 = vmatpush.bf16.msra.mxu0 %v6312
        %6726 = vmatmul.bf16.gmra.mxu0 %v4905
        %v6727 = vpop.f32.mrf.mxu0
        %v6728 = vadd.f32 %v6714, %v6727
        %v6729 = vpop.f32.mrf.mxu0
        %v6730 = vadd.f32 %v6716, %v6729
        %6731 = vdwg.mxu0
        %6732 = vmatpush.bf16.msra.mxu0 %v6115
        %6733 = vmatpush.bf16.msra.mxu0 %v6109
        %6734 = vmatpush.bf16.msra.mxu0 %v6103
        %6735 = vmatpush.bf16.msra.mxu0 %v6097
        %6736 = vmatpush.bf16.msra.mxu0 %v6091
        %6737 = vmatpush.bf16.msra.mxu0 %v6085
        %6738 = vmatpush.bf16.msra.mxu0 %v6079
        %6739 = vmatpush.bf16.msra.mxu0 %v6073
        %6740 = vmatmul.bf16.gmra.mxu0 %v4900
        %v6741 = vpop.f32.mrf.mxu0
        %v6742 = vadd.f32 %v5197, %v6741
        %v6743 = vpop.f32.mrf.mxu0
        %v6744 = vadd.f32 %v5197, %v6743
        %6745 = vdwg.mxu0
        %6746 = vmatpush.bf16.msra.mxu0 %v6163
        %6747 = vmatpush.bf16.msra.mxu0 %v6157
        %6748 = vmatpush.bf16.msra.mxu0 %v6151
        %6749 = vmatpush.bf16.msra.mxu0 %v6145
        %6750 = vmatpush.bf16.msra.mxu0 %v6139
        %6751 = vmatpush.bf16.msra.mxu0 %v6133
        %6752 = vmatpush.bf16.msra.mxu0 %v6127
        %6753 = vmatpush.bf16.msra.mxu0 %v6121
        %6754 = vmatmul.bf16.gmra.mxu0 %v4901
        %v6755 = vpop.f32.mrf.mxu0
        %v6756 = vadd.f32 %v6742, %v6755
        %v6757 = vpop.f32.mrf.mxu0
        %v6758 = vadd.f32 %v6744, %v6757
        %6759 = vdwg.mxu0
        %6760 = vmatpush.bf16.msra.mxu0 %v6211
        %6761 = vmatpush.bf16.msra.mxu0 %v6205
        %6762 = vmatpush.bf16.msra.mxu0 %v6199
        %6763 = vmatpush.bf16.msra.mxu0 %v6193
        %6764 = vmatpush.bf16.msra.mxu0 %v6187
        %6765 = vmatpush.bf16.msra.mxu0 %v6181
        %6766 = vmatpush.bf16.msra.mxu0 %v6175
        %6767 = vmatpush.bf16.msra.mxu0 %v6169
        %6768 = vmatmul.bf16.gmra.mxu0 %v4902
        %v6769 = vpop.f32.mrf.mxu0
        %v6770 = vadd.f32 %v6756, %v6769
        %v6771 = vpop.f32.mrf.mxu0
        %v6772 = vadd.f32 %v6758, %v6771
        %6773 = vdwg.mxu0
        %6774 = vmatpush.bf16.msra.mxu0 %v6259
        %6775 = vmatpush.bf16.msra.mxu0 %v6253
        %6776 = vmatpush.bf16.msra.mxu0 %v6247
        %6777 = vmatpush.bf16.msra.mxu0 %v6241
        %6778 = vmatpush.bf16.msra.mxu0 %v6235
        %6779 = vmatpush.bf16.msra.mxu0 %v6229
        %6780 = vmatpush.bf16.msra.mxu0 %v6223
        %6781 = vmatpush.bf16.msra.mxu0 %v6217
        %6782 = vmatmul.bf16.gmra.mxu0 %v4903
        %v6783 = vpop.f32.mrf.mxu0
        %v6784 = vadd.f32 %v6770, %v6783
        %v6785 = vpop.f32.mrf.mxu0
        %v6786 = vadd.f32 %v6772, %v6785
        %6787 = vdwg.mxu0
        %6788 = vmatpush.bf16.msra.mxu0 %v6307
        %6789 = vmatpush.bf16.msra.mxu0 %v6301
        %6790 = vmatpush.bf16.msra.mxu0 %v6295
        %6791 = vmatpush.bf16.msra.mxu0 %v6289
        %6792 = vmatpush.bf16.msra.mxu0 %v6283
        %6793 = vmatpush.bf16.msra.mxu0 %v6277
        %6794 = vmatpush.bf16.msra.mxu0 %v6271
        %6795 = vmatpush.bf16.msra.mxu0 %v6265
        %6796 = vmatmul.bf16.gmra.mxu0 %v4904
        %v6797 = vpop.f32.mrf.mxu0
        %v6798 = vadd.f32 %v6784, %v6797
        %v6799 = vpop.f32.mrf.mxu0
        %v6800 = vadd.f32 %v6786, %v6799
        %6801 = vdwg.mxu0
        %6802 = vmatpush.bf16.msra.mxu0 %v6355
        %6803 = vmatpush.bf16.msra.mxu0 %v6349
        %6804 = vmatpush.bf16.msra.mxu0 %v6343
        %6805 = vmatpush.bf16.msra.mxu0 %v6337
        %6806 = vmatpush.bf16.msra.mxu0 %v6331
        %6807 = vmatpush.bf16.msra.mxu0 %v6325
        %6808 = vmatpush.bf16.msra.mxu0 %v6319
        %6809 = vmatpush.bf16.msra.mxu0 %v6313
        %6810 = vmatmul.bf16.gmra.mxu0 %v4905
        %v6811 = vpop.f32.mrf.mxu0
        %v6812 = vadd.f32 %v6798, %v6811
        %v6813 = vpop.f32.mrf.mxu0
        %v6814 = vadd.f32 %v6800, %v6813
        %6815 = vdwg.mxu0
        %6816 = vmatpush.bf16.msra.mxu0 %v6116
        %6817 = vmatpush.bf16.msra.mxu0 %v6110
        %6818 = vmatpush.bf16.msra.mxu0 %v6104
        %6819 = vmatpush.bf16.msra.mxu0 %v6098
        %6820 = vmatpush.bf16.msra.mxu0 %v6092
        %6821 = vmatpush.bf16.msra.mxu0 %v6086
        %6822 = vmatpush.bf16.msra.mxu0 %v6080
        %6823 = vmatpush.bf16.msra.mxu0 %v6074
        %6824 = vmatmul.bf16.gmra.mxu0 %v4900
        %v6825 = vpop.f32.mrf.mxu0
        %v6826 = vadd.f32 %v5198, %v6825
        %v6827 = vpop.f32.mrf.mxu0
        %v6828 = vadd.f32 %v5198, %v6827
        %6829 = vdwg.mxu0
        %6830 = vmatpush.bf16.msra.mxu0 %v6164
        %6831 = vmatpush.bf16.msra.mxu0 %v6158
        %6832 = vmatpush.bf16.msra.mxu0 %v6152
        %6833 = vmatpush.bf16.msra.mxu0 %v6146
        %6834 = vmatpush.bf16.msra.mxu0 %v6140
        %6835 = vmatpush.bf16.msra.mxu0 %v6134
        %6836 = vmatpush.bf16.msra.mxu0 %v6128
        %6837 = vmatpush.bf16.msra.mxu0 %v6122
        %6838 = vmatmul.bf16.gmra.mxu0 %v4901
        %v6839 = vpop.f32.mrf.mxu0
        %v6840 = vadd.f32 %v6826, %v6839
        %v6841 = vpop.f32.mrf.mxu0
        %v6842 = vadd.f32 %v6828, %v6841
        %6843 = vdwg.mxu0
        %6844 = vmatpush.bf16.msra.mxu0 %v6212
        %6845 = vmatpush.bf16.msra.mxu0 %v6206
        %6846 = vmatpush.bf16.msra.mxu0 %v6200
        %6847 = vmatpush.bf16.msra.mxu0 %v6194
        %6848 = vmatpush.bf16.msra.mxu0 %v6188
        %6849 = vmatpush.bf16.msra.mxu0 %v6182
        %6850 = vmatpush.bf16.msra.mxu0 %v6176
        %6851 = vmatpush.bf16.msra.mxu0 %v6170
        %6852 = vmatmul.bf16.gmra.mxu0 %v4902
        %v6853 = vpop.f32.mrf.mxu0
        %v6854 = vadd.f32 %v6840, %v6853
        %v6855 = vpop.f32.mrf.mxu0
        %v6856 = vadd.f32 %v6842, %v6855
        %6857 = vdwg.mxu0
        %6858 = vmatpush.bf16.msra.mxu0 %v6260
        %6859 = vmatpush.bf16.msra.mxu0 %v6254
        %6860 = vmatpush.bf16.msra.mxu0 %v6248
        %6861 = vmatpush.bf16.msra.mxu0 %v6242
        %6862 = vmatpush.bf16.msra.mxu0 %v6236
        %6863 = vmatpush.bf16.msra.mxu0 %v6230
        %6864 = vmatpush.bf16.msra.mxu0 %v6224
        %6865 = vmatpush.bf16.msra.mxu0 %v6218
        %6866 = vmatmul.bf16.gmra.mxu0 %v4903
        %v6867 = vpop.f32.mrf.mxu0
        %v6868 = vadd.f32 %v6854, %v6867
        %v6869 = vpop.f32.mrf.mxu0
        %v6870 = vadd.f32 %v6856, %v6869
        %6871 = vdwg.mxu0
        %6872 = vmatpush.bf16.msra.mxu0 %v6308
        %6873 = vmatpush.bf16.msra.mxu0 %v6302
        %6874 = vmatpush.bf16.msra.mxu0 %v6296
        %6875 = vmatpush.bf16.msra.mxu0 %v6290
        %6876 = vmatpush.bf16.msra.mxu0 %v6284
        %6877 = vmatpush.bf16.msra.mxu0 %v6278
        %6878 = vmatpush.bf16.msra.mxu0 %v6272
        %6879 = vmatpush.bf16.msra.mxu0 %v6266
        %6880 = vmatmul.bf16.gmra.mxu0 %v4904
        %v6881 = vpop.f32.mrf.mxu0
        %v6882 = vadd.f32 %v6868, %v6881
        %v6883 = vpop.f32.mrf.mxu0
        %v6884 = vadd.f32 %v6870, %v6883
        %6885 = vdwg.mxu0
        %6886 = vmatpush.bf16.msra.mxu0 %v6356
        %6887 = vmatpush.bf16.msra.mxu0 %v6350
        %6888 = vmatpush.bf16.msra.mxu0 %v6344
        %6889 = vmatpush.bf16.msra.mxu0 %v6338
        %6890 = vmatpush.bf16.msra.mxu0 %v6332
        %6891 = vmatpush.bf16.msra.mxu0 %v6326
        %6892 = vmatpush.bf16.msra.mxu0 %v6320
        %6893 = vmatpush.bf16.msra.mxu0 %v6314
        %6894 = vmatmul.bf16.gmra.mxu0 %v4905
        %v6895 = vpop.f32.mrf.mxu0
        %v6896 = vadd.f32 %v6882, %v6895
        %v6897 = vpop.f32.mrf.mxu0
        %v6898 = vadd.f32 %v6884, %v6897
        %6899 = vdwg.mxu0
        %6900 = vmatpush.bf16.msra.mxu0 %v6117
        %6901 = vmatpush.bf16.msra.mxu0 %v6111
        %6902 = vmatpush.bf16.msra.mxu0 %v6105
        %6903 = vmatpush.bf16.msra.mxu0 %v6099
        %6904 = vmatpush.bf16.msra.mxu0 %v6093
        %6905 = vmatpush.bf16.msra.mxu0 %v6087
        %6906 = vmatpush.bf16.msra.mxu0 %v6081
        %6907 = vmatpush.bf16.msra.mxu0 %v6075
        %6908 = vmatmul.bf16.gmra.mxu0 %v4900
        %v6909 = vpop.f32.mrf.mxu0
        %v6910 = vadd.f32 %v5199, %v6909
        %v6911 = vpop.f32.mrf.mxu0
        %v6912 = vadd.f32 %v5199, %v6911
        %6913 = vdwg.mxu0
        %6914 = vmatpush.bf16.msra.mxu0 %v6165
        %6915 = vmatpush.bf16.msra.mxu0 %v6159
        %6916 = vmatpush.bf16.msra.mxu0 %v6153
        %6917 = vmatpush.bf16.msra.mxu0 %v6147
        %6918 = vmatpush.bf16.msra.mxu0 %v6141
        %6919 = vmatpush.bf16.msra.mxu0 %v6135
        %6920 = vmatpush.bf16.msra.mxu0 %v6129
        %6921 = vmatpush.bf16.msra.mxu0 %v6123
        %6922 = vmatmul.bf16.gmra.mxu0 %v4901
        %v6923 = vpop.f32.mrf.mxu0
        %v6924 = vadd.f32 %v6910, %v6923
        %v6925 = vpop.f32.mrf.mxu0
        %v6926 = vadd.f32 %v6912, %v6925
        %6927 = vdwg.mxu0
        %6928 = vmatpush.bf16.msra.mxu0 %v6213
        %6929 = vmatpush.bf16.msra.mxu0 %v6207
        %6930 = vmatpush.bf16.msra.mxu0 %v6201
        %6931 = vmatpush.bf16.msra.mxu0 %v6195
        %6932 = vmatpush.bf16.msra.mxu0 %v6189
        %6933 = vmatpush.bf16.msra.mxu0 %v6183
        %6934 = vmatpush.bf16.msra.mxu0 %v6177
        %6935 = vmatpush.bf16.msra.mxu0 %v6171
        %6936 = vmatmul.bf16.gmra.mxu0 %v4902
        %v6937 = vpop.f32.mrf.mxu0
        %v6938 = vadd.f32 %v6924, %v6937
        %v6939 = vpop.f32.mrf.mxu0
        %v6940 = vadd.f32 %v6926, %v6939
        %6941 = vdwg.mxu0
        %6942 = vmatpush.bf16.msra.mxu0 %v6261
        %6943 = vmatpush.bf16.msra.mxu0 %v6255
        %6944 = vmatpush.bf16.msra.mxu0 %v6249
        %6945 = vmatpush.bf16.msra.mxu0 %v6243
        %6946 = vmatpush.bf16.msra.mxu0 %v6237
        %6947 = vmatpush.bf16.msra.mxu0 %v6231
        %6948 = vmatpush.bf16.msra.mxu0 %v6225
        %6949 = vmatpush.bf16.msra.mxu0 %v6219
        %6950 = vmatmul.bf16.gmra.mxu0 %v4903
        %v6951 = vpop.f32.mrf.mxu0
        %v6952 = vadd.f32 %v6938, %v6951
        %v6953 = vpop.f32.mrf.mxu0
        %v6954 = vadd.f32 %v6940, %v6953
        %6955 = vdwg.mxu0
        %6956 = vmatpush.bf16.msra.mxu0 %v6309
        %6957 = vmatpush.bf16.msra.mxu0 %v6303
        %6958 = vmatpush.bf16.msra.mxu0 %v6297
        %6959 = vmatpush.bf16.msra.mxu0 %v6291
        %6960 = vmatpush.bf16.msra.mxu0 %v6285
        %6961 = vmatpush.bf16.msra.mxu0 %v6279
        %6962 = vmatpush.bf16.msra.mxu0 %v6273
        %6963 = vmatpush.bf16.msra.mxu0 %v6267
        %6964 = vmatmul.bf16.gmra.mxu0 %v4904
        %v6965 = vpop.f32.mrf.mxu0
        %v6966 = vadd.f32 %v6952, %v6965
        %v6967 = vpop.f32.mrf.mxu0
        %v6968 = vadd.f32 %v6954, %v6967
        %6969 = vdwg.mxu0
        %6970 = vmatpush.bf16.msra.mxu0 %v6357
        %6971 = vmatpush.bf16.msra.mxu0 %v6351
        %6972 = vmatpush.bf16.msra.mxu0 %v6345
        %6973 = vmatpush.bf16.msra.mxu0 %v6339
        %6974 = vmatpush.bf16.msra.mxu0 %v6333
        %6975 = vmatpush.bf16.msra.mxu0 %v6327
        %6976 = vmatpush.bf16.msra.mxu0 %v6321
        %6977 = vmatpush.bf16.msra.mxu0 %v6315
        %6978 = vmatmul.bf16.gmra.mxu0 %v4905
        %v6979 = vpop.f32.mrf.mxu0
        %v6980 = vadd.f32 %v6966, %v6979
        %v6981 = vpop.f32.mrf.mxu0
        %v6982 = vadd.f32 %v6968, %v6981
        %6983 = vdwg.mxu0
        %6984 = vmatpush.bf16.msra.mxu0 %v6118
        %6985 = vmatpush.bf16.msra.mxu0 %v6112
        %6986 = vmatpush.bf16.msra.mxu0 %v6106
        %6987 = vmatpush.bf16.msra.mxu0 %v6100
        %6988 = vmatpush.bf16.msra.mxu0 %v6094
        %6989 = vmatpush.bf16.msra.mxu0 %v6088
        %6990 = vmatpush.bf16.msra.mxu0 %v6082
        %6991 = vmatpush.bf16.msra.mxu0 %v6076
        %6992 = vmatmul.bf16.gmra.mxu0 %v4900
        %v6993 = vpop.f32.mrf.mxu0
        %v6994 = vadd.f32 %v5200, %v6993
        %v6995 = vpop.f32.mrf.mxu0
        %v6996 = vadd.f32 %v5200, %v6995
        %6997 = vdwg.mxu0
        %6998 = vmatpush.bf16.msra.mxu0 %v6166
        %6999 = vmatpush.bf16.msra.mxu0 %v6160
        %7000 = vmatpush.bf16.msra.mxu0 %v6154
        %7001 = vmatpush.bf16.msra.mxu0 %v6148
        %7002 = vmatpush.bf16.msra.mxu0 %v6142
        %7003 = vmatpush.bf16.msra.mxu0 %v6136
        %7004 = vmatpush.bf16.msra.mxu0 %v6130
        %7005 = vmatpush.bf16.msra.mxu0 %v6124
        %7006 = vmatmul.bf16.gmra.mxu0 %v4901
        %v7007 = vpop.f32.mrf.mxu0
        %v7008 = vadd.f32 %v6994, %v7007
        %v7009 = vpop.f32.mrf.mxu0
        %v7010 = vadd.f32 %v6996, %v7009
        %7011 = vdwg.mxu0
        %7012 = vmatpush.bf16.msra.mxu0 %v6214
        %7013 = vmatpush.bf16.msra.mxu0 %v6208
        %7014 = vmatpush.bf16.msra.mxu0 %v6202
        %7015 = vmatpush.bf16.msra.mxu0 %v6196
        %7016 = vmatpush.bf16.msra.mxu0 %v6190
        %7017 = vmatpush.bf16.msra.mxu0 %v6184
        %7018 = vmatpush.bf16.msra.mxu0 %v6178
        %7019 = vmatpush.bf16.msra.mxu0 %v6172
        %7020 = vmatmul.bf16.gmra.mxu0 %v4902
        %v7021 = vpop.f32.mrf.mxu0
        %v7022 = vadd.f32 %v7008, %v7021
        %v7023 = vpop.f32.mrf.mxu0
        %v7024 = vadd.f32 %v7010, %v7023
        %7025 = vdwg.mxu0
        %7026 = vmatpush.bf16.msra.mxu0 %v6262
        %7027 = vmatpush.bf16.msra.mxu0 %v6256
        %7028 = vmatpush.bf16.msra.mxu0 %v6250
        %7029 = vmatpush.bf16.msra.mxu0 %v6244
        %7030 = vmatpush.bf16.msra.mxu0 %v6238
        %7031 = vmatpush.bf16.msra.mxu0 %v6232
        %7032 = vmatpush.bf16.msra.mxu0 %v6226
        %7033 = vmatpush.bf16.msra.mxu0 %v6220
        %7034 = vmatmul.bf16.gmra.mxu0 %v4903
        %v7035 = vpop.f32.mrf.mxu0
        %v7036 = vadd.f32 %v7022, %v7035
        %v7037 = vpop.f32.mrf.mxu0
        %v7038 = vadd.f32 %v7024, %v7037
        %7039 = vdwg.mxu0
        %7040 = vmatpush.bf16.msra.mxu0 %v6310
        %7041 = vmatpush.bf16.msra.mxu0 %v6304
        %7042 = vmatpush.bf16.msra.mxu0 %v6298
        %7043 = vmatpush.bf16.msra.mxu0 %v6292
        %7044 = vmatpush.bf16.msra.mxu0 %v6286
        %7045 = vmatpush.bf16.msra.mxu0 %v6280
        %7046 = vmatpush.bf16.msra.mxu0 %v6274
        %7047 = vmatpush.bf16.msra.mxu0 %v6268
        %7048 = vmatmul.bf16.gmra.mxu0 %v4904
        %v7049 = vpop.f32.mrf.mxu0
        %v7050 = vadd.f32 %v7036, %v7049
        %v7051 = vpop.f32.mrf.mxu0
        %v7052 = vadd.f32 %v7038, %v7051
        %7053 = vdwg.mxu0
        %7054 = vmatpush.bf16.msra.mxu0 %v6358
        %7055 = vmatpush.bf16.msra.mxu0 %v6352
        %7056 = vmatpush.bf16.msra.mxu0 %v6346
        %7057 = vmatpush.bf16.msra.mxu0 %v6340
        %7058 = vmatpush.bf16.msra.mxu0 %v6334
        %7059 = vmatpush.bf16.msra.mxu0 %v6328
        %7060 = vmatpush.bf16.msra.mxu0 %v6322
        %7061 = vmatpush.bf16.msra.mxu0 %v6316
        %7062 = vmatmul.bf16.gmra.mxu0 %v4905
        %v7063 = vpop.f32.mrf.mxu0
        %v7064 = vadd.f32 %v7050, %v7063
        %v7065 = vpop.f32.mrf.mxu0
        %v7066 = vadd.f32 %v7052, %v7065
        %7067 = vdwg.mxu0
        %7068 = vmatpush.bf16.msra.mxu0 %v6119
        %7069 = vmatpush.bf16.msra.mxu0 %v6113
        %7070 = vmatpush.bf16.msra.mxu0 %v6107
        %7071 = vmatpush.bf16.msra.mxu0 %v6101
        %7072 = vmatpush.bf16.msra.mxu0 %v6095
        %7073 = vmatpush.bf16.msra.mxu0 %v6089
        %7074 = vmatpush.bf16.msra.mxu0 %v6083
        %7075 = vmatpush.bf16.msra.mxu0 %v6077
        %7076 = vmatmul.bf16.gmra.mxu0 %v4900
        %v7077 = vpop.f32.mrf.mxu0
        %v7078 = vadd.f32 %v5201, %v7077
        %v7079 = vpop.f32.mrf.mxu0
        %v7080 = vadd.f32 %v5201, %v7079
        %7081 = vdwg.mxu0
        %7082 = vmatpush.bf16.msra.mxu0 %v6167
        %7083 = vmatpush.bf16.msra.mxu0 %v6161
        %7084 = vmatpush.bf16.msra.mxu0 %v6155
        %7085 = vmatpush.bf16.msra.mxu0 %v6149
        %7086 = vmatpush.bf16.msra.mxu0 %v6143
        %7087 = vmatpush.bf16.msra.mxu0 %v6137
        %7088 = vmatpush.bf16.msra.mxu0 %v6131
        %7089 = vmatpush.bf16.msra.mxu0 %v6125
        %7090 = vmatmul.bf16.gmra.mxu0 %v4901
        %v7091 = vpop.f32.mrf.mxu0
        %v7092 = vadd.f32 %v7078, %v7091
        %v7093 = vpop.f32.mrf.mxu0
        %v7094 = vadd.f32 %v7080, %v7093
        %7095 = vdwg.mxu0
        %7096 = vmatpush.bf16.msra.mxu0 %v6215
        %7097 = vmatpush.bf16.msra.mxu0 %v6209
        %7098 = vmatpush.bf16.msra.mxu0 %v6203
        %7099 = vmatpush.bf16.msra.mxu0 %v6197
        %7100 = vmatpush.bf16.msra.mxu0 %v6191
        %7101 = vmatpush.bf16.msra.mxu0 %v6185
        %7102 = vmatpush.bf16.msra.mxu0 %v6179
        %7103 = vmatpush.bf16.msra.mxu0 %v6173
        %7104 = vmatmul.bf16.gmra.mxu0 %v4902
        %v7105 = vpop.f32.mrf.mxu0
        %v7106 = vadd.f32 %v7092, %v7105
        %v7107 = vpop.f32.mrf.mxu0
        %v7108 = vadd.f32 %v7094, %v7107
        %7109 = vdwg.mxu0
        %7110 = vmatpush.bf16.msra.mxu0 %v6263
        %7111 = vmatpush.bf16.msra.mxu0 %v6257
        %7112 = vmatpush.bf16.msra.mxu0 %v6251
        %7113 = vmatpush.bf16.msra.mxu0 %v6245
        %7114 = vmatpush.bf16.msra.mxu0 %v6239
        %7115 = vmatpush.bf16.msra.mxu0 %v6233
        %7116 = vmatpush.bf16.msra.mxu0 %v6227
        %7117 = vmatpush.bf16.msra.mxu0 %v6221
        %7118 = vmatmul.bf16.gmra.mxu0 %v4903
        %v7119 = vpop.f32.mrf.mxu0
        %v7120 = vadd.f32 %v7106, %v7119
        %v7121 = vpop.f32.mrf.mxu0
        %v7122 = vadd.f32 %v7108, %v7121
        %7123 = vdwg.mxu0
        %7124 = vmatpush.bf16.msra.mxu0 %v6311
        %7125 = vmatpush.bf16.msra.mxu0 %v6305
        %7126 = vmatpush.bf16.msra.mxu0 %v6299
        %7127 = vmatpush.bf16.msra.mxu0 %v6293
        %7128 = vmatpush.bf16.msra.mxu0 %v6287
        %7129 = vmatpush.bf16.msra.mxu0 %v6281
        %7130 = vmatpush.bf16.msra.mxu0 %v6275
        %7131 = vmatpush.bf16.msra.mxu0 %v6269
        %7132 = vmatmul.bf16.gmra.mxu0 %v4904
        %v7133 = vpop.f32.mrf.mxu0
        %v7134 = vadd.f32 %v7120, %v7133
        %v7135 = vpop.f32.mrf.mxu0
        %v7136 = vadd.f32 %v7122, %v7135
        %7137 = vdwg.mxu0
        %7138 = vmatpush.bf16.msra.mxu0 %v6359
        %7139 = vmatpush.bf16.msra.mxu0 %v6353
        %7140 = vmatpush.bf16.msra.mxu0 %v6347
        %7141 = vmatpush.bf16.msra.mxu0 %v6341
        %7142 = vmatpush.bf16.msra.mxu0 %v6335
        %7143 = vmatpush.bf16.msra.mxu0 %v6329
        %7144 = vmatpush.bf16.msra.mxu0 %v6323
        %7145 = vmatpush.bf16.msra.mxu0 %v6317
        %7146 = vmatmul.bf16.gmra.mxu0 %v4905
        %v7147 = vpop.f32.mrf.mxu0
        %v7148 = vadd.f32 %v7134, %v7147
        %v7149 = vpop.f32.mrf.mxu0
        %v7150 = vadd.f32 %v7136, %v7149
        %7151 = vdwg.mxu0
        %7152 = vst [vmem:[#allocation2] sm:$0xff] %v6728
        %7153 = vst [vmem:[#allocation2 + $0x8] sm:$0xff] %v6812
        %7154 = vst [vmem:[#allocation2 + $0x10] sm:$0xff] %v6896
        %7155 = vst [vmem:[#allocation2 + $0x18] sm:$0xff] %v6980
        %7156 = vst [vmem:[#allocation2 + $0x20] sm:$0xff] %v7064
        %7157 = vst [vmem:[#allocation2 + $0x28] sm:$0xff] %v7148
        %7158 = vst [vmem:[#allocation2 + $0x30] sm:$0xff] %v6730
        %7159 = vst [vmem:[#allocation2 + $0x38] sm:$0xff] %v6814
        %7160 = vst [vmem:[#allocation2 + $0x40] sm:$0xff] %v6898
        %7161 = vst [vmem:[#allocation2 + $0x48] sm:$0xff] %v6982
        %7162 = vst [vmem:[#allocation2 + $0x50] sm:$0xff] %v7066
        %7163 = vst [vmem:[#allocation2 + $0x58] sm:$0xff] %v7150
        %s7164 = scalar_lea.vmem %s270, 3 [#allocation8]
        %v7165 = vld [vmem:[%s7164] ss:$4 sm:$0x3f]
        %v7166 = vld [vmem:[#allocation2] sm:$0xff]
        %v7167 = vld [vmem:[#allocation2 + $0x8] sm:$0xff]
        %v7168 = vld [vmem:[#allocation2 + $0x10] sm:$0xff]
        %v7169 = vld [vmem:[#allocation2 + $0x18] sm:$0xff]
        %v7170 = vld [vmem:[#allocation2 + $0x20] sm:$0xff]
        %v7171 = vld [vmem:[#allocation2 + $0x28] sm:$0xff]
        %v7172 = vld [vmem:[#allocation2 + $0x30] sm:$0xff]
        %v7173 = vld [vmem:[#allocation2 + $0x38] sm:$0xff]
        %v7174 = vld [vmem:[#allocation2 + $0x40] sm:$0xff]
        %v7175 = vld [vmem:[#allocation2 + $0x48] sm:$0xff]
        %v7176 = vld [vmem:[#allocation2 + $0x50] sm:$0xff]
        %v7177 = vld [vmem:[#allocation2 + $0x58] sm:$0xff]
        %v7178 = vpack.c.bf16 %v7172, %v7166
        %v7179 = vpack.c.bf16 %v7173, %v7167
        %v7180 = vpack.c.bf16 %v7174, %v7168
        %v7181 = vpack.c.bf16 %v7175, %v7169
        %v7182 = vpack.c.bf16 %v7176, %v7170
        %v7183 = vpack.c.bf16 %v7177, %v7171
        %s7184 = scalar_lea.vmem %s260, 6912 [#allocation6]
        %v7185 = vld [vmem:[%s7184] sm:$0xff]
        %v7186 = vld [vmem:[%s7184 + $0x8] sm:$0xff]
        %v7187 = vld [vmem:[%s7184 + $0x10] sm:$0xff]
        %v7188 = vld [vmem:[%s7184 + $0x18] sm:$0xff]
        %v7189 = vld [vmem:[%s7184 + $0x20] sm:$0xff]
        %v7190 = vld [vmem:[%s7184 + $0x28] sm:$0xff]
        %v7191 = vld [vmem:[%s7184 + $0x30] sm:$0xff]
        %v7192 = vld [vmem:[%s7184 + $0x38] sm:$0xff]
        %v7193 = vld [vmem:[%s7184 + $0x40] sm:$0xff]
        %v7194 = vld [vmem:[%s7184 + $0x48] sm:$0xff]
        %v7195 = vld [vmem:[%s7184 + $0x50] sm:$0xff]
        %v7196 = vld [vmem:[%s7184 + $0x58] sm:$0xff]
        %v7197 = vld [vmem:[%s7184 + $0x60] sm:$0xff]
        %v7198 = vld [vmem:[%s7184 + $0x68] sm:$0xff]
        %v7199 = vld [vmem:[%s7184 + $0x70] sm:$0xff]
        %v7200 = vld [vmem:[%s7184 + $0x78] sm:$0xff]
        %v7201 = vld [vmem:[%s7184 + $0x80] sm:$0xff]
        %v7202 = vld [vmem:[%s7184 + $0x88] sm:$0xff]
        %v7203 = vld [vmem:[%s7184 + $0x90] sm:$0xff]
        %v7204 = vld [vmem:[%s7184 + $0x98] sm:$0xff]
        %v7205 = vld [vmem:[%s7184 + $0xa0] sm:$0xff]
        %v7206 = vld [vmem:[%s7184 + $0xa8] sm:$0xff]
        %v7207 = vld [vmem:[%s7184 + $0xb0] sm:$0xff]
        %v7208 = vld [vmem:[%s7184 + $0xb8] sm:$0xff]
        %v7209 = vld [vmem:[%s7184 + $0xc0] sm:$0xff]
        %v7210 = vld [vmem:[%s7184 + $0xc8] sm:$0xff]
        %v7211 = vld [vmem:[%s7184 + $0xd0] sm:$0xff]
        %v7212 = vld [vmem:[%s7184 + $0xd8] sm:$0xff]
        %v7213 = vld [vmem:[%s7184 + $0xe0] sm:$0xff]
        %v7214 = vld [vmem:[%s7184 + $0xe8] sm:$0xff]
        %v7215 = vld [vmem:[%s7184 + $0xf0] sm:$0xff]
        %v7216 = vld [vmem:[%s7184 + $0xf8] sm:$0xff]
        %v7217 = vld [vmem:[%s7184 + $0x100] sm:$0xff]
        %v7218 = vld [vmem:[%s7184 + $0x108] sm:$0xff]
        %v7219 = vld [vmem:[%s7184 + $0x110] sm:$0xff]
        %v7220 = vld [vmem:[%s7184 + $0x118] sm:$0xff]
        %v7221 = vld [vmem:[%s7184 + $0x120] sm:$0xff]
        %v7222 = vld [vmem:[%s7184 + $0x128] sm:$0xff]
        %v7223 = vld [vmem:[%s7184 + $0x130] sm:$0xff]
        %v7224 = vld [vmem:[%s7184 + $0x138] sm:$0xff]
        %v7225 = vld [vmem:[%s7184 + $0x140] sm:$0xff]
        %v7226 = vld [vmem:[%s7184 + $0x148] sm:$0xff]
        %v7227 = vld [vmem:[%s7184 + $0x150] sm:$0xff]
        %v7228 = vld [vmem:[%s7184 + $0x158] sm:$0xff]
        %v7229 = vld [vmem:[%s7184 + $0x160] sm:$0xff]
        %v7230 = vld [vmem:[%s7184 + $0x168] sm:$0xff]
        %v7231 = vld [vmem:[%s7184 + $0x170] sm:$0xff]
        %v7232 = vld [vmem:[%s7184 + $0x178] sm:$0xff]
        %v7233 = vld [vmem:[%s7184 + $0x180] sm:$0xff]
        %v7234 = vld [vmem:[%s7184 + $0x188] sm:$0xff]
        %v7235 = vld [vmem:[%s7184 + $0x190] sm:$0xff]
        %v7236 = vld [vmem:[%s7184 + $0x198] sm:$0xff]
        %v7237 = vld [vmem:[%s7184 + $0x1a0] sm:$0xff]
        %v7238 = vld [vmem:[%s7184 + $0x1a8] sm:$0xff]
        %v7239 = vld [vmem:[%s7184 + $0x1b0] sm:$0xff]
        %v7240 = vld [vmem:[%s7184 + $0x1b8] sm:$0xff]
        %v7241 = vld [vmem:[%s7184 + $0x1c0] sm:$0xff]
        %v7242 = vld [vmem:[%s7184 + $0x1c8] sm:$0xff]
        %v7243 = vld [vmem:[%s7184 + $0x1d0] sm:$0xff]
        %v7244 = vld [vmem:[%s7184 + $0x1d8] sm:$0xff]
        %v7245 = vld [vmem:[%s7184 + $0x1e0] sm:$0xff]
        %v7246 = vld [vmem:[%s7184 + $0x1e8] sm:$0xff]
        %v7247 = vld [vmem:[%s7184 + $0x1f0] sm:$0xff]
        %v7248 = vld [vmem:[%s7184 + $0x1f8] sm:$0xff]
        %v7249 = vld [vmem:[%s7184 + $0x200] sm:$0xff]
        %v7250 = vld [vmem:[%s7184 + $0x208] sm:$0xff]
        %v7251 = vld [vmem:[%s7184 + $0x210] sm:$0xff]
        %v7252 = vld [vmem:[%s7184 + $0x218] sm:$0xff]
        %v7253 = vld [vmem:[%s7184 + $0x220] sm:$0xff]
        %v7254 = vld [vmem:[%s7184 + $0x228] sm:$0xff]
        %v7255 = vld [vmem:[%s7184 + $0x230] sm:$0xff]
        %v7256 = vld [vmem:[%s7184 + $0x238] sm:$0xff]
        %v7257 = vld [vmem:[%s7184 + $0x240] sm:$0xff]
        %v7258 = vld [vmem:[%s7184 + $0x248] sm:$0xff]
        %v7259 = vld [vmem:[%s7184 + $0x250] sm:$0xff]
        %v7260 = vld [vmem:[%s7184 + $0x258] sm:$0xff]
        %v7261 = vld [vmem:[%s7184 + $0x260] sm:$0xff]
        %v7262 = vld [vmem:[%s7184 + $0x268] sm:$0xff]
        %v7263 = vld [vmem:[%s7184 + $0x270] sm:$0xff]
        %v7264 = vld [vmem:[%s7184 + $0x278] sm:$0xff]
        %v7265 = vld [vmem:[%s7184 + $0x280] sm:$0xff]
        %v7266 = vld [vmem:[%s7184 + $0x288] sm:$0xff]
        %v7267 = vld [vmem:[%s7184 + $0x290] sm:$0xff]
        %v7268 = vld [vmem:[%s7184 + $0x298] sm:$0xff]
        %v7269 = vld [vmem:[%s7184 + $0x2a0] sm:$0xff]
        %v7270 = vld [vmem:[%s7184 + $0x2a8] sm:$0xff]
        %v7271 = vld [vmem:[%s7184 + $0x2b0] sm:$0xff]
        %v7272 = vld [vmem:[%s7184 + $0x2b8] sm:$0xff]
        %v7273 = vld [vmem:[%s7184 + $0x2c0] sm:$0xff]
        %v7274 = vld [vmem:[%s7184 + $0x2c8] sm:$0xff]
        %v7275 = vld [vmem:[%s7184 + $0x2d0] sm:$0xff]
        %v7276 = vld [vmem:[%s7184 + $0x2d8] sm:$0xff]
        %v7277 = vld [vmem:[%s7184 + $0x2e0] sm:$0xff]
        %v7278 = vld [vmem:[%s7184 + $0x2e8] sm:$0xff]
        %v7279 = vld [vmem:[%s7184 + $0x2f0] sm:$0xff]
        %v7280 = vld [vmem:[%s7184 + $0x2f8] sm:$0xff]
        %v7281 = vld [vmem:[%s7184 + $0x300] sm:$0xff]
        %v7282 = vld [vmem:[%s7184 + $0x308] sm:$0xff]
        %v7283 = vld [vmem:[%s7184 + $0x310] sm:$0xff]
        %v7284 = vld [vmem:[%s7184 + $0x318] sm:$0xff]
        %v7285 = vld [vmem:[%s7184 + $0x320] sm:$0xff]
        %v7286 = vld [vmem:[%s7184 + $0x328] sm:$0xff]
        %v7287 = vld [vmem:[%s7184 + $0x330] sm:$0xff]
        %v7288 = vld [vmem:[%s7184 + $0x338] sm:$0xff]
        %v7289 = vld [vmem:[%s7184 + $0x340] sm:$0xff]
        %v7290 = vld [vmem:[%s7184 + $0x348] sm:$0xff]
        %v7291 = vld [vmem:[%s7184 + $0x350] sm:$0xff]
        %v7292 = vld [vmem:[%s7184 + $0x358] sm:$0xff]
        %v7293 = vld [vmem:[%s7184 + $0x360] sm:$0xff]
        %v7294 = vld [vmem:[%s7184 + $0x368] sm:$0xff]
        %v7295 = vld [vmem:[%s7184 + $0x370] sm:$0xff]
        %v7296 = vld [vmem:[%s7184 + $0x378] sm:$0xff]
        %v7297 = vld [vmem:[%s7184 + $0x380] sm:$0xff]
        %v7298 = vld [vmem:[%s7184 + $0x388] sm:$0xff]
        %v7299 = vld [vmem:[%s7184 + $0x390] sm:$0xff]
        %v7300 = vld [vmem:[%s7184 + $0x398] sm:$0xff]
        %v7301 = vld [vmem:[%s7184 + $0x3a0] sm:$0xff]
        %v7302 = vld [vmem:[%s7184 + $0x3a8] sm:$0xff]
        %v7303 = vld [vmem:[%s7184 + $0x3b0] sm:$0xff]
        %v7304 = vld [vmem:[%s7184 + $0x3b8] sm:$0xff]
        %v7305 = vld [vmem:[%s7184 + $0x3c0] sm:$0xff]
        %v7306 = vld [vmem:[%s7184 + $0x3c8] sm:$0xff]
        %v7307 = vld [vmem:[%s7184 + $0x3d0] sm:$0xff]
        %v7308 = vld [vmem:[%s7184 + $0x3d8] sm:$0xff]
        %v7309 = vld [vmem:[%s7184 + $0x3e0] sm:$0xff]
        %v7310 = vld [vmem:[%s7184 + $0x3e8] sm:$0xff]
        %v7311 = vld [vmem:[%s7184 + $0x3f0] sm:$0xff]
        %v7312 = vld [vmem:[%s7184 + $0x3f8] sm:$0xff]
        %v7313 = vld [vmem:[%s7184 + $0x400] sm:$0xff]
        %v7314 = vld [vmem:[%s7184 + $0x408] sm:$0xff]
        %v7315 = vld [vmem:[%s7184 + $0x410] sm:$0xff]
        %v7316 = vld [vmem:[%s7184 + $0x418] sm:$0xff]
        %v7317 = vld [vmem:[%s7184 + $0x420] sm:$0xff]
        %v7318 = vld [vmem:[%s7184 + $0x428] sm:$0xff]
        %v7319 = vld [vmem:[%s7184 + $0x430] sm:$0xff]
        %v7320 = vld [vmem:[%s7184 + $0x438] sm:$0xff]
        %v7321 = vld [vmem:[%s7184 + $0x440] sm:$0xff]
        %v7322 = vld [vmem:[%s7184 + $0x448] sm:$0xff]
        %v7323 = vld [vmem:[%s7184 + $0x450] sm:$0xff]
        %v7324 = vld [vmem:[%s7184 + $0x458] sm:$0xff]
        %v7325 = vld [vmem:[%s7184 + $0x460] sm:$0xff]
        %v7326 = vld [vmem:[%s7184 + $0x468] sm:$0xff]
        %v7327 = vld [vmem:[%s7184 + $0x470] sm:$0xff]
        %v7328 = vld [vmem:[%s7184 + $0x478] sm:$0xff]
        %v7329 = vld [vmem:[%s7184 + $0x480] sm:$0xff]
        %v7330 = vld [vmem:[%s7184 + $0x488] sm:$0xff]
        %v7331 = vld [vmem:[%s7184 + $0x490] sm:$0xff]
        %v7332 = vld [vmem:[%s7184 + $0x498] sm:$0xff]
        %v7333 = vld [vmem:[%s7184 + $0x4a0] sm:$0xff]
        %v7334 = vld [vmem:[%s7184 + $0x4a8] sm:$0xff]
        %v7335 = vld [vmem:[%s7184 + $0x4b0] sm:$0xff]
        %v7336 = vld [vmem:[%s7184 + $0x4b8] sm:$0xff]
        %v7337 = vld [vmem:[%s7184 + $0x4c0] sm:$0xff]
        %v7338 = vld [vmem:[%s7184 + $0x4c8] sm:$0xff]
        %v7339 = vld [vmem:[%s7184 + $0x4d0] sm:$0xff]
        %v7340 = vld [vmem:[%s7184 + $0x4d8] sm:$0xff]
        %v7341 = vld [vmem:[%s7184 + $0x4e0] sm:$0xff]
        %v7342 = vld [vmem:[%s7184 + $0x4e8] sm:$0xff]
        %v7343 = vld [vmem:[%s7184 + $0x4f0] sm:$0xff]
        %v7344 = vld [vmem:[%s7184 + $0x4f8] sm:$0xff]
        %v7345 = vld [vmem:[%s7184 + $0x500] sm:$0xff]
        %v7346 = vld [vmem:[%s7184 + $0x508] sm:$0xff]
        %v7347 = vld [vmem:[%s7184 + $0x510] sm:$0xff]
        %v7348 = vld [vmem:[%s7184 + $0x518] sm:$0xff]
        %v7349 = vld [vmem:[%s7184 + $0x520] sm:$0xff]
        %v7350 = vld [vmem:[%s7184 + $0x528] sm:$0xff]
        %v7351 = vld [vmem:[%s7184 + $0x530] sm:$0xff]
        %v7352 = vld [vmem:[%s7184 + $0x538] sm:$0xff]
        %v7353 = vld [vmem:[%s7184 + $0x540] sm:$0xff]
        %v7354 = vld [vmem:[%s7184 + $0x548] sm:$0xff]
        %v7355 = vld [vmem:[%s7184 + $0x550] sm:$0xff]
        %v7356 = vld [vmem:[%s7184 + $0x558] sm:$0xff]
        %v7357 = vld [vmem:[%s7184 + $0x560] sm:$0xff]
        %v7358 = vld [vmem:[%s7184 + $0x568] sm:$0xff]
        %v7359 = vld [vmem:[%s7184 + $0x570] sm:$0xff]
        %v7360 = vld [vmem:[%s7184 + $0x578] sm:$0xff]
        %v7361 = vld [vmem:[%s7184 + $0x580] sm:$0xff]
        %v7362 = vld [vmem:[%s7184 + $0x588] sm:$0xff]
        %v7363 = vld [vmem:[%s7184 + $0x590] sm:$0xff]
        %v7364 = vld [vmem:[%s7184 + $0x598] sm:$0xff]
        %v7365 = vld [vmem:[%s7184 + $0x5a0] sm:$0xff]
        %v7366 = vld [vmem:[%s7184 + $0x5a8] sm:$0xff]
        %v7367 = vld [vmem:[%s7184 + $0x5b0] sm:$0xff]
        %v7368 = vld [vmem:[%s7184 + $0x5b8] sm:$0xff]
        %v7369 = vld [vmem:[%s7184 + $0x5c0] sm:$0xff]
        %v7370 = vld [vmem:[%s7184 + $0x5c8] sm:$0xff]
        %v7371 = vld [vmem:[%s7184 + $0x5d0] sm:$0xff]
        %v7372 = vld [vmem:[%s7184 + $0x5d8] sm:$0xff]
        %v7373 = vld [vmem:[%s7184 + $0x5e0] sm:$0xff]
        %v7374 = vld [vmem:[%s7184 + $0x5e8] sm:$0xff]
        %v7375 = vld [vmem:[%s7184 + $0x5f0] sm:$0xff]
        %v7376 = vld [vmem:[%s7184 + $0x5f8] sm:$0xff]
        %v7377 = vld [vmem:[%s7184 + $0x600] sm:$0xff]
        %v7378 = vld [vmem:[%s7184 + $0x608] sm:$0xff]
        %v7379 = vld [vmem:[%s7184 + $0x610] sm:$0xff]
        %v7380 = vld [vmem:[%s7184 + $0x618] sm:$0xff]
        %v7381 = vld [vmem:[%s7184 + $0x620] sm:$0xff]
        %v7382 = vld [vmem:[%s7184 + $0x628] sm:$0xff]
        %v7383 = vld [vmem:[%s7184 + $0x630] sm:$0xff]
        %v7384 = vld [vmem:[%s7184 + $0x638] sm:$0xff]
        %v7385 = vld [vmem:[%s7184 + $0x640] sm:$0xff]
        %v7386 = vld [vmem:[%s7184 + $0x648] sm:$0xff]
        %v7387 = vld [vmem:[%s7184 + $0x650] sm:$0xff]
        %v7388 = vld [vmem:[%s7184 + $0x658] sm:$0xff]
        %v7389 = vld [vmem:[%s7184 + $0x660] sm:$0xff]
        %v7390 = vld [vmem:[%s7184 + $0x668] sm:$0xff]
        %v7391 = vld [vmem:[%s7184 + $0x670] sm:$0xff]
        %v7392 = vld [vmem:[%s7184 + $0x678] sm:$0xff]
        %v7393 = vld [vmem:[%s7184 + $0x680] sm:$0xff]
        %v7394 = vld [vmem:[%s7184 + $0x688] sm:$0xff]
        %v7395 = vld [vmem:[%s7184 + $0x690] sm:$0xff]
        %v7396 = vld [vmem:[%s7184 + $0x698] sm:$0xff]
        %v7397 = vld [vmem:[%s7184 + $0x6a0] sm:$0xff]
        %v7398 = vld [vmem:[%s7184 + $0x6a8] sm:$0xff]
        %v7399 = vld [vmem:[%s7184 + $0x6b0] sm:$0xff]
        %v7400 = vld [vmem:[%s7184 + $0x6b8] sm:$0xff]
        %v7401 = vld [vmem:[%s7184 + $0x6c0] sm:$0xff]
        %v7402 = vld [vmem:[%s7184 + $0x6c8] sm:$0xff]
        %v7403 = vld [vmem:[%s7184 + $0x6d0] sm:$0xff]
        %v7404 = vld [vmem:[%s7184 + $0x6d8] sm:$0xff]
        %v7405 = vld [vmem:[%s7184 + $0x6e0] sm:$0xff]
        %v7406 = vld [vmem:[%s7184 + $0x6e8] sm:$0xff]
        %v7407 = vld [vmem:[%s7184 + $0x6f0] sm:$0xff]
        %v7408 = vld [vmem:[%s7184 + $0x6f8] sm:$0xff]
        %v7409 = vld [vmem:[%s7184 + $0x700] sm:$0xff]
        %v7410 = vld [vmem:[%s7184 + $0x708] sm:$0xff]
        %v7411 = vld [vmem:[%s7184 + $0x710] sm:$0xff]
        %v7412 = vld [vmem:[%s7184 + $0x718] sm:$0xff]
        %v7413 = vld [vmem:[%s7184 + $0x720] sm:$0xff]
        %v7414 = vld [vmem:[%s7184 + $0x728] sm:$0xff]
        %v7415 = vld [vmem:[%s7184 + $0x730] sm:$0xff]
        %v7416 = vld [vmem:[%s7184 + $0x738] sm:$0xff]
        %v7417 = vld [vmem:[%s7184 + $0x740] sm:$0xff]
        %v7418 = vld [vmem:[%s7184 + $0x748] sm:$0xff]
        %v7419 = vld [vmem:[%s7184 + $0x750] sm:$0xff]
        %v7420 = vld [vmem:[%s7184 + $0x758] sm:$0xff]
        %v7421 = vld [vmem:[%s7184 + $0x760] sm:$0xff]
        %v7422 = vld [vmem:[%s7184 + $0x768] sm:$0xff]
        %v7423 = vld [vmem:[%s7184 + $0x770] sm:$0xff]
        %v7424 = vld [vmem:[%s7184 + $0x778] sm:$0xff]
        %v7425 = vld [vmem:[%s7184 + $0x780] sm:$0xff]
        %v7426 = vld [vmem:[%s7184 + $0x788] sm:$0xff]
        %v7427 = vld [vmem:[%s7184 + $0x790] sm:$0xff]
        %v7428 = vld [vmem:[%s7184 + $0x798] sm:$0xff]
        %v7429 = vld [vmem:[%s7184 + $0x7a0] sm:$0xff]
        %v7430 = vld [vmem:[%s7184 + $0x7a8] sm:$0xff]
        %v7431 = vld [vmem:[%s7184 + $0x7b0] sm:$0xff]
        %v7432 = vld [vmem:[%s7184 + $0x7b8] sm:$0xff]
        %v7433 = vld [vmem:[%s7184 + $0x7c0] sm:$0xff]
        %v7434 = vld [vmem:[%s7184 + $0x7c8] sm:$0xff]
        %v7435 = vld [vmem:[%s7184 + $0x7d0] sm:$0xff]
        %v7436 = vld [vmem:[%s7184 + $0x7d8] sm:$0xff]
        %v7437 = vld [vmem:[%s7184 + $0x7e0] sm:$0xff]
        %v7438 = vld [vmem:[%s7184 + $0x7e8] sm:$0xff]
        %v7439 = vld [vmem:[%s7184 + $0x7f0] sm:$0xff]
        %v7440 = vld [vmem:[%s7184 + $0x7f8] sm:$0xff]
        %v7441 = vld [vmem:[%s7184 + $0x800] sm:$0xff]
        %v7442 = vld [vmem:[%s7184 + $0x808] sm:$0xff]
        %v7443 = vld [vmem:[%s7184 + $0x810] sm:$0xff]
        %v7444 = vld [vmem:[%s7184 + $0x818] sm:$0xff]
        %v7445 = vld [vmem:[%s7184 + $0x820] sm:$0xff]
        %v7446 = vld [vmem:[%s7184 + $0x828] sm:$0xff]
        %v7447 = vld [vmem:[%s7184 + $0x830] sm:$0xff]
        %v7448 = vld [vmem:[%s7184 + $0x838] sm:$0xff]
        %v7449 = vld [vmem:[%s7184 + $0x840] sm:$0xff]
        %v7450 = vld [vmem:[%s7184 + $0x848] sm:$0xff]
        %v7451 = vld [vmem:[%s7184 + $0x850] sm:$0xff]
        %v7452 = vld [vmem:[%s7184 + $0x858] sm:$0xff]
        %v7453 = vld [vmem:[%s7184 + $0x860] sm:$0xff]
        %v7454 = vld [vmem:[%s7184 + $0x868] sm:$0xff]
        %v7455 = vld [vmem:[%s7184 + $0x870] sm:$0xff]
        %v7456 = vld [vmem:[%s7184 + $0x878] sm:$0xff]
        %v7457 = vld [vmem:[%s7184 + $0x880] sm:$0xff]
        %v7458 = vld [vmem:[%s7184 + $0x888] sm:$0xff]
        %v7459 = vld [vmem:[%s7184 + $0x890] sm:$0xff]
        %v7460 = vld [vmem:[%s7184 + $0x898] sm:$0xff]
        %v7461 = vld [vmem:[%s7184 + $0x8a0] sm:$0xff]
        %v7462 = vld [vmem:[%s7184 + $0x8a8] sm:$0xff]
        %v7463 = vld [vmem:[%s7184 + $0x8b0] sm:$0xff]
        %v7464 = vld [vmem:[%s7184 + $0x8b8] sm:$0xff]
        %v7465 = vld [vmem:[%s7184 + $0x8c0] sm:$0xff]
        %v7466 = vld [vmem:[%s7184 + $0x8c8] sm:$0xff]
        %v7467 = vld [vmem:[%s7184 + $0x8d0] sm:$0xff]
        %v7468 = vld [vmem:[%s7184 + $0x8d8] sm:$0xff]
        %v7469 = vld [vmem:[%s7184 + $0x8e0] sm:$0xff]
        %v7470 = vld [vmem:[%s7184 + $0x8e8] sm:$0xff]
        %v7471 = vld [vmem:[%s7184 + $0x8f0] sm:$0xff]
        %v7472 = vld [vmem:[%s7184 + $0x8f8] sm:$0xff]
        %v7474 = vperm.slane %v7165, 0
        %v7475 = vperm.slane %v7165, 1
        %v7476 = vperm.slane %v7165, 2
        %v7477 = vperm.slane %v7165, 3
        %v7478 = vperm.slane %v7165, 4
        %v7479 = vperm.slane %v7165, 5
        %v7774 = vunpack.c.l.b16 %v7185
        %v7775 = vunpack.c.h.b16 %v7185
        %v7776 = vunpack.c.l.b16 %v7186
        %v7777 = vunpack.c.h.b16 %v7186
        %v7778 = vunpack.c.l.b16 %v7187
        %v7779 = vunpack.c.h.b16 %v7187
        %v7780 = vunpack.c.l.b16 %v7188
        %v7781 = vunpack.c.h.b16 %v7188
        %v7782 = vunpack.c.l.b16 %v7189
        %v7783 = vunpack.c.h.b16 %v7189
        %v7784 = vunpack.c.l.b16 %v7190
        %v7785 = vunpack.c.h.b16 %v7190
        %v7786 = vunpack.c.l.b16 %v7191
        %v7787 = vunpack.c.h.b16 %v7191
        %v7788 = vunpack.c.l.b16 %v7192
        %v7789 = vunpack.c.h.b16 %v7192
        %v7790 = vunpack.c.l.b16 %v7193
        %v7791 = vunpack.c.h.b16 %v7193
        %v7792 = vunpack.c.l.b16 %v7194
        %v7793 = vunpack.c.h.b16 %v7194
        %v7794 = vunpack.c.l.b16 %v7195
        %v7795 = vunpack.c.h.b16 %v7195
        %v7796 = vunpack.c.l.b16 %v7196
        %v7797 = vunpack.c.h.b16 %v7196
        %v7798 = vunpack.c.l.b16 %v7197
        %v7799 = vunpack.c.h.b16 %v7197
        %v7800 = vunpack.c.l.b16 %v7198
        %v7801 = vunpack.c.h.b16 %v7198
        %v7802 = vunpack.c.l.b16 %v7199
        %v7803 = vunpack.c.h.b16 %v7199
        %v7804 = vunpack.c.l.b16 %v7200
        %v7805 = vunpack.c.h.b16 %v7200
        %v7806 = vunpack.c.l.b16 %v7201
        %v7807 = vunpack.c.h.b16 %v7201
        %v7808 = vunpack.c.l.b16 %v7202
        %v7809 = vunpack.c.h.b16 %v7202
        %v7810 = vunpack.c.l.b16 %v7203
        %v7811 = vunpack.c.h.b16 %v7203
        %v7812 = vunpack.c.l.b16 %v7204
        %v7813 = vunpack.c.h.b16 %v7204
        %v7814 = vunpack.c.l.b16 %v7205
        %v7815 = vunpack.c.h.b16 %v7205
        %v7816 = vunpack.c.l.b16 %v7206
        %v7817 = vunpack.c.h.b16 %v7206
        %v7818 = vunpack.c.l.b16 %v7207
        %v7819 = vunpack.c.h.b16 %v7207
        %v7820 = vunpack.c.l.b16 %v7208
        %v7821 = vunpack.c.h.b16 %v7208
        %v7822 = vunpack.c.l.b16 %v7209
        %v7823 = vunpack.c.h.b16 %v7209
        %v7824 = vunpack.c.l.b16 %v7210
        %v7825 = vunpack.c.h.b16 %v7210
        %v7826 = vunpack.c.l.b16 %v7211
        %v7827 = vunpack.c.h.b16 %v7211
        %v7828 = vunpack.c.l.b16 %v7212
        %v7829 = vunpack.c.h.b16 %v7212
        %v7830 = vunpack.c.l.b16 %v7213
        %v7831 = vunpack.c.h.b16 %v7213
        %v7832 = vunpack.c.l.b16 %v7214
        %v7833 = vunpack.c.h.b16 %v7214
        %v7834 = vunpack.c.l.b16 %v7215
        %v7835 = vunpack.c.h.b16 %v7215
        %v7836 = vunpack.c.l.b16 %v7216
        %v7837 = vunpack.c.h.b16 %v7216
        %v7838 = vunpack.c.l.b16 %v7217
        %v7839 = vunpack.c.h.b16 %v7217
        %v7840 = vunpack.c.l.b16 %v7218
        %v7841 = vunpack.c.h.b16 %v7218
        %v7842 = vunpack.c.l.b16 %v7219
        %v7843 = vunpack.c.h.b16 %v7219
        %v7844 = vunpack.c.l.b16 %v7220
        %v7845 = vunpack.c.h.b16 %v7220
        %v7846 = vunpack.c.l.b16 %v7221
        %v7847 = vunpack.c.h.b16 %v7221
        %v7848 = vunpack.c.l.b16 %v7222
        %v7849 = vunpack.c.h.b16 %v7222
        %v7850 = vunpack.c.l.b16 %v7223
        %v7851 = vunpack.c.h.b16 %v7223
        %v7852 = vunpack.c.l.b16 %v7224
        %v7853 = vunpack.c.h.b16 %v7224
        %v7854 = vunpack.c.l.b16 %v7225
        %v7855 = vunpack.c.h.b16 %v7225
        %v7856 = vunpack.c.l.b16 %v7226
        %v7857 = vunpack.c.h.b16 %v7226
        %v7858 = vunpack.c.l.b16 %v7227
        %v7859 = vunpack.c.h.b16 %v7227
        %v7860 = vunpack.c.l.b16 %v7228
        %v7861 = vunpack.c.h.b16 %v7228
        %v7862 = vunpack.c.l.b16 %v7229
        %v7863 = vunpack.c.h.b16 %v7229
        %v7864 = vunpack.c.l.b16 %v7230
        %v7865 = vunpack.c.h.b16 %v7230
        %v7866 = vunpack.c.l.b16 %v7231
        %v7867 = vunpack.c.h.b16 %v7231
        %v7868 = vunpack.c.l.b16 %v7232
        %v7869 = vunpack.c.h.b16 %v7232
        %v7870 = vunpack.c.l.b16 %v7233
        %v7871 = vunpack.c.h.b16 %v7233
        %v7872 = vunpack.c.l.b16 %v7234
        %v7873 = vunpack.c.h.b16 %v7234
        %v7874 = vunpack.c.l.b16 %v7235
        %v7875 = vunpack.c.h.b16 %v7235
        %v7876 = vunpack.c.l.b16 %v7236
        %v7877 = vunpack.c.h.b16 %v7236
        %v7878 = vunpack.c.l.b16 %v7237
        %v7879 = vunpack.c.h.b16 %v7237
        %v7880 = vunpack.c.l.b16 %v7238
        %v7881 = vunpack.c.h.b16 %v7238
        %v7882 = vunpack.c.l.b16 %v7239
        %v7883 = vunpack.c.h.b16 %v7239
        %v7884 = vunpack.c.l.b16 %v7240
        %v7885 = vunpack.c.h.b16 %v7240
        %v7886 = vunpack.c.l.b16 %v7241
        %v7887 = vunpack.c.h.b16 %v7241
        %v7888 = vunpack.c.l.b16 %v7242
        %v7889 = vunpack.c.h.b16 %v7242
        %v7890 = vunpack.c.l.b16 %v7243
        %v7891 = vunpack.c.h.b16 %v7243
        %v7892 = vunpack.c.l.b16 %v7244
        %v7893 = vunpack.c.h.b16 %v7244
        %v7894 = vunpack.c.l.b16 %v7245
        %v7895 = vunpack.c.h.b16 %v7245
        %v7896 = vunpack.c.l.b16 %v7246
        %v7897 = vunpack.c.h.b16 %v7246
        %v7898 = vunpack.c.l.b16 %v7247
        %v7899 = vunpack.c.h.b16 %v7247
        %v7900 = vunpack.c.l.b16 %v7248
        %v7901 = vunpack.c.h.b16 %v7248
        %v7902 = vunpack.c.l.b16 %v7249
        %v7903 = vunpack.c.h.b16 %v7249
        %v7904 = vunpack.c.l.b16 %v7250
        %v7905 = vunpack.c.h.b16 %v7250
        %v7906 = vunpack.c.l.b16 %v7251
        %v7907 = vunpack.c.h.b16 %v7251
        %v7908 = vunpack.c.l.b16 %v7252
        %v7909 = vunpack.c.h.b16 %v7252
        %v7910 = vunpack.c.l.b16 %v7253
        %v7911 = vunpack.c.h.b16 %v7253
        %v7912 = vunpack.c.l.b16 %v7254
        %v7913 = vunpack.c.h.b16 %v7254
        %v7914 = vunpack.c.l.b16 %v7255
        %v7915 = vunpack.c.h.b16 %v7255
        %v7916 = vunpack.c.l.b16 %v7256
        %v7917 = vunpack.c.h.b16 %v7256
        %v7918 = vunpack.c.l.b16 %v7257
        %v7919 = vunpack.c.h.b16 %v7257
        %v7920 = vunpack.c.l.b16 %v7258
        %v7921 = vunpack.c.h.b16 %v7258
        %v7922 = vunpack.c.l.b16 %v7259
        %v7923 = vunpack.c.h.b16 %v7259
        %v7924 = vunpack.c.l.b16 %v7260
        %v7925 = vunpack.c.h.b16 %v7260
        %v7926 = vunpack.c.l.b16 %v7261
        %v7927 = vunpack.c.h.b16 %v7261
        %v7928 = vunpack.c.l.b16 %v7262
        %v7929 = vunpack.c.h.b16 %v7262
        %v7930 = vunpack.c.l.b16 %v7263
        %v7931 = vunpack.c.h.b16 %v7263
        %v7932 = vunpack.c.l.b16 %v7264
        %v7933 = vunpack.c.h.b16 %v7264
        %v7934 = vunpack.c.l.b16 %v7265
        %v7935 = vunpack.c.h.b16 %v7265
        %v7936 = vunpack.c.l.b16 %v7266
        %v7937 = vunpack.c.h.b16 %v7266
        %v7938 = vunpack.c.l.b16 %v7267
        %v7939 = vunpack.c.h.b16 %v7267
        %v7940 = vunpack.c.l.b16 %v7268
        %v7941 = vunpack.c.h.b16 %v7268
        %v7942 = vunpack.c.l.b16 %v7269
        %v7943 = vunpack.c.h.b16 %v7269
        %v7944 = vunpack.c.l.b16 %v7270
        %v7945 = vunpack.c.h.b16 %v7270
        %v7946 = vunpack.c.l.b16 %v7271
        %v7947 = vunpack.c.h.b16 %v7271
        %v7948 = vunpack.c.l.b16 %v7272
        %v7949 = vunpack.c.h.b16 %v7272
        %v7950 = vunpack.c.l.b16 %v7273
        %v7951 = vunpack.c.h.b16 %v7273
        %v7952 = vunpack.c.l.b16 %v7274
        %v7953 = vunpack.c.h.b16 %v7274
        %v7954 = vunpack.c.l.b16 %v7275
        %v7955 = vunpack.c.h.b16 %v7275
        %v7956 = vunpack.c.l.b16 %v7276
        %v7957 = vunpack.c.h.b16 %v7276
        %v7958 = vunpack.c.l.b16 %v7277
        %v7959 = vunpack.c.h.b16 %v7277
        %v7960 = vunpack.c.l.b16 %v7278
        %v7961 = vunpack.c.h.b16 %v7278
        %v7962 = vunpack.c.l.b16 %v7279
        %v7963 = vunpack.c.h.b16 %v7279
        %v7964 = vunpack.c.l.b16 %v7280
        %v7965 = vunpack.c.h.b16 %v7280
        %v7966 = vunpack.c.l.b16 %v7281
        %v7967 = vunpack.c.h.b16 %v7281
        %v7968 = vunpack.c.l.b16 %v7282
        %v7969 = vunpack.c.h.b16 %v7282
        %v7970 = vunpack.c.l.b16 %v7283
        %v7971 = vunpack.c.h.b16 %v7283
        %v7972 = vunpack.c.l.b16 %v7284
        %v7973 = vunpack.c.h.b16 %v7284
        %v7974 = vunpack.c.l.b16 %v7285
        %v7975 = vunpack.c.h.b16 %v7285
        %v7976 = vunpack.c.l.b16 %v7286
        %v7977 = vunpack.c.h.b16 %v7286
        %v7978 = vunpack.c.l.b16 %v7287
        %v7979 = vunpack.c.h.b16 %v7287
        %v7980 = vunpack.c.l.b16 %v7288
        %v7981 = vunpack.c.h.b16 %v7288
        %v7982 = vunpack.c.l.b16 %v7289
        %v7983 = vunpack.c.h.b16 %v7289
        %v7984 = vunpack.c.l.b16 %v7290
        %v7985 = vunpack.c.h.b16 %v7290
        %v7986 = vunpack.c.l.b16 %v7291
        %v7987 = vunpack.c.h.b16 %v7291
        %v7988 = vunpack.c.l.b16 %v7292
        %v7989 = vunpack.c.h.b16 %v7292
        %v7990 = vunpack.c.l.b16 %v7293
        %v7991 = vunpack.c.h.b16 %v7293
        %v7992 = vunpack.c.l.b16 %v7294
        %v7993 = vunpack.c.h.b16 %v7294
        %v7994 = vunpack.c.l.b16 %v7295
        %v7995 = vunpack.c.h.b16 %v7295
        %v7996 = vunpack.c.l.b16 %v7296
        %v7997 = vunpack.c.h.b16 %v7296
        %v7998 = vunpack.c.l.b16 %v7297
        %v7999 = vunpack.c.h.b16 %v7297
        %v8000 = vunpack.c.l.b16 %v7298
        %v8001 = vunpack.c.h.b16 %v7298
        %v8002 = vunpack.c.l.b16 %v7299
        %v8003 = vunpack.c.h.b16 %v7299
        %v8004 = vunpack.c.l.b16 %v7300
        %v8005 = vunpack.c.h.b16 %v7300
        %v8006 = vunpack.c.l.b16 %v7301
        %v8007 = vunpack.c.h.b16 %v7301
        %v8008 = vunpack.c.l.b16 %v7302
        %v8009 = vunpack.c.h.b16 %v7302
        %v8010 = vunpack.c.l.b16 %v7303
        %v8011 = vunpack.c.h.b16 %v7303
        %v8012 = vunpack.c.l.b16 %v7304
        %v8013 = vunpack.c.h.b16 %v7304
        %v8014 = vunpack.c.l.b16 %v7305
        %v8015 = vunpack.c.h.b16 %v7305
        %v8016 = vunpack.c.l.b16 %v7306
        %v8017 = vunpack.c.h.b16 %v7306
        %v8018 = vunpack.c.l.b16 %v7307
        %v8019 = vunpack.c.h.b16 %v7307
        %v8020 = vunpack.c.l.b16 %v7308
        %v8021 = vunpack.c.h.b16 %v7308
        %v8022 = vunpack.c.l.b16 %v7309
        %v8023 = vunpack.c.h.b16 %v7309
        %v8024 = vunpack.c.l.b16 %v7310
        %v8025 = vunpack.c.h.b16 %v7310
        %v8026 = vunpack.c.l.b16 %v7311
        %v8027 = vunpack.c.h.b16 %v7311
        %v8028 = vunpack.c.l.b16 %v7312
        %v8029 = vunpack.c.h.b16 %v7312
        %v8030 = vunpack.c.l.b16 %v7313
        %v8031 = vunpack.c.h.b16 %v7313
        %v8032 = vunpack.c.l.b16 %v7314
        %v8033 = vunpack.c.h.b16 %v7314
        %v8034 = vunpack.c.l.b16 %v7315
        %v8035 = vunpack.c.h.b16 %v7315
        %v8036 = vunpack.c.l.b16 %v7316
        %v8037 = vunpack.c.h.b16 %v7316
        %v8038 = vunpack.c.l.b16 %v7317
        %v8039 = vunpack.c.h.b16 %v7317
        %v8040 = vunpack.c.l.b16 %v7318
        %v8041 = vunpack.c.h.b16 %v7318
        %v8042 = vunpack.c.l.b16 %v7319
        %v8043 = vunpack.c.h.b16 %v7319
        %v8044 = vunpack.c.l.b16 %v7320
        %v8045 = vunpack.c.h.b16 %v7320
        %v8046 = vunpack.c.l.b16 %v7321
        %v8047 = vunpack.c.h.b16 %v7321
        %v8048 = vunpack.c.l.b16 %v7322
        %v8049 = vunpack.c.h.b16 %v7322
        %v8050 = vunpack.c.l.b16 %v7323
        %v8051 = vunpack.c.h.b16 %v7323
        %v8052 = vunpack.c.l.b16 %v7324
        %v8053 = vunpack.c.h.b16 %v7324
        %v8054 = vunpack.c.l.b16 %v7325
        %v8055 = vunpack.c.h.b16 %v7325
        %v8056 = vunpack.c.l.b16 %v7326
        %v8057 = vunpack.c.h.b16 %v7326
        %v8058 = vunpack.c.l.b16 %v7327
        %v8059 = vunpack.c.h.b16 %v7327
        %v8060 = vunpack.c.l.b16 %v7328
        %v8061 = vunpack.c.h.b16 %v7328
        %v8062 = vunpack.c.l.b16 %v7329
        %v8063 = vunpack.c.h.b16 %v7329
        %v8064 = vunpack.c.l.b16 %v7330
        %v8065 = vunpack.c.h.b16 %v7330
        %v8066 = vunpack.c.l.b16 %v7331
        %v8067 = vunpack.c.h.b16 %v7331
        %v8068 = vunpack.c.l.b16 %v7332
        %v8069 = vunpack.c.h.b16 %v7332
        %v8070 = vunpack.c.l.b16 %v7333
        %v8071 = vunpack.c.h.b16 %v7333
        %v8072 = vunpack.c.l.b16 %v7334
        %v8073 = vunpack.c.h.b16 %v7334
        %v8074 = vunpack.c.l.b16 %v7335
        %v8075 = vunpack.c.h.b16 %v7335
        %v8076 = vunpack.c.l.b16 %v7336
        %v8077 = vunpack.c.h.b16 %v7336
        %v8078 = vunpack.c.l.b16 %v7337
        %v8079 = vunpack.c.h.b16 %v7337
        %v8080 = vunpack.c.l.b16 %v7338
        %v8081 = vunpack.c.h.b16 %v7338
        %v8082 = vunpack.c.l.b16 %v7339
        %v8083 = vunpack.c.h.b16 %v7339
        %v8084 = vunpack.c.l.b16 %v7340
        %v8085 = vunpack.c.h.b16 %v7340
        %v8086 = vunpack.c.l.b16 %v7341
        %v8087 = vunpack.c.h.b16 %v7341
        %v8088 = vunpack.c.l.b16 %v7342
        %v8089 = vunpack.c.h.b16 %v7342
        %v8090 = vunpack.c.l.b16 %v7343
        %v8091 = vunpack.c.h.b16 %v7343
        %v8092 = vunpack.c.l.b16 %v7344
        %v8093 = vunpack.c.h.b16 %v7344
        %v8094 = vunpack.c.l.b16 %v7345
        %v8095 = vunpack.c.h.b16 %v7345
        %v8096 = vunpack.c.l.b16 %v7346
        %v8097 = vunpack.c.h.b16 %v7346
        %v8098 = vunpack.c.l.b16 %v7347
        %v8099 = vunpack.c.h.b16 %v7347
        %v8100 = vunpack.c.l.b16 %v7348
        %v8101 = vunpack.c.h.b16 %v7348
        %v8102 = vunpack.c.l.b16 %v7349
        %v8103 = vunpack.c.h.b16 %v7349
        %v8104 = vunpack.c.l.b16 %v7350
        %v8105 = vunpack.c.h.b16 %v7350
        %v8106 = vunpack.c.l.b16 %v7351
        %v8107 = vunpack.c.h.b16 %v7351
        %v8108 = vunpack.c.l.b16 %v7352
        %v8109 = vunpack.c.h.b16 %v7352
        %v8110 = vunpack.c.l.b16 %v7353
        %v8111 = vunpack.c.h.b16 %v7353
        %v8112 = vunpack.c.l.b16 %v7354
        %v8113 = vunpack.c.h.b16 %v7354
        %v8114 = vunpack.c.l.b16 %v7355
        %v8115 = vunpack.c.h.b16 %v7355
        %v8116 = vunpack.c.l.b16 %v7356
        %v8117 = vunpack.c.h.b16 %v7356
        %v8118 = vunpack.c.l.b16 %v7357
        %v8119 = vunpack.c.h.b16 %v7357
        %v8120 = vunpack.c.l.b16 %v7358
        %v8121 = vunpack.c.h.b16 %v7358
        %v8122 = vunpack.c.l.b16 %v7359
        %v8123 = vunpack.c.h.b16 %v7359
        %v8124 = vunpack.c.l.b16 %v7360
        %v8125 = vunpack.c.h.b16 %v7360
        %v8126 = vunpack.c.l.b16 %v7361
        %v8127 = vunpack.c.h.b16 %v7361
        %v8128 = vunpack.c.l.b16 %v7362
        %v8129 = vunpack.c.h.b16 %v7362
        %v8130 = vunpack.c.l.b16 %v7363
        %v8131 = vunpack.c.h.b16 %v7363
        %v8132 = vunpack.c.l.b16 %v7364
        %v8133 = vunpack.c.h.b16 %v7364
        %v8134 = vunpack.c.l.b16 %v7365
        %v8135 = vunpack.c.h.b16 %v7365
        %v8136 = vunpack.c.l.b16 %v7366
        %v8137 = vunpack.c.h.b16 %v7366
        %v8138 = vunpack.c.l.b16 %v7367
        %v8139 = vunpack.c.h.b16 %v7367
        %v8140 = vunpack.c.l.b16 %v7368
        %v8141 = vunpack.c.h.b16 %v7368
        %v8142 = vunpack.c.l.b16 %v7369
        %v8143 = vunpack.c.h.b16 %v7369
        %v8144 = vunpack.c.l.b16 %v7370
        %v8145 = vunpack.c.h.b16 %v7370
        %v8146 = vunpack.c.l.b16 %v7371
        %v8147 = vunpack.c.h.b16 %v7371
        %v8148 = vunpack.c.l.b16 %v7372
        %v8149 = vunpack.c.h.b16 %v7372
        %v8150 = vunpack.c.l.b16 %v7373
        %v8151 = vunpack.c.h.b16 %v7373
        %v8152 = vunpack.c.l.b16 %v7374
        %v8153 = vunpack.c.h.b16 %v7374
        %v8154 = vunpack.c.l.b16 %v7375
        %v8155 = vunpack.c.h.b16 %v7375
        %v8156 = vunpack.c.l.b16 %v7376
        %v8157 = vunpack.c.h.b16 %v7376
        %v8158 = vunpack.c.l.b16 %v7377
        %v8159 = vunpack.c.h.b16 %v7377
        %v8160 = vunpack.c.l.b16 %v7378
        %v8161 = vunpack.c.h.b16 %v7378
        %v8162 = vunpack.c.l.b16 %v7379
        %v8163 = vunpack.c.h.b16 %v7379
        %v8164 = vunpack.c.l.b16 %v7380
        %v8165 = vunpack.c.h.b16 %v7380
        %v8166 = vunpack.c.l.b16 %v7381
        %v8167 = vunpack.c.h.b16 %v7381
        %v8168 = vunpack.c.l.b16 %v7382
        %v8169 = vunpack.c.h.b16 %v7382
        %v8170 = vunpack.c.l.b16 %v7383
        %v8171 = vunpack.c.h.b16 %v7383
        %v8172 = vunpack.c.l.b16 %v7384
        %v8173 = vunpack.c.h.b16 %v7384
        %v8174 = vunpack.c.l.b16 %v7385
        %v8175 = vunpack.c.h.b16 %v7385
        %v8176 = vunpack.c.l.b16 %v7386
        %v8177 = vunpack.c.h.b16 %v7386
        %v8178 = vunpack.c.l.b16 %v7387
        %v8179 = vunpack.c.h.b16 %v7387
        %v8180 = vunpack.c.l.b16 %v7388
        %v8181 = vunpack.c.h.b16 %v7388
        %v8182 = vunpack.c.l.b16 %v7389
        %v8183 = vunpack.c.h.b16 %v7389
        %v8184 = vunpack.c.l.b16 %v7390
        %v8185 = vunpack.c.h.b16 %v7390
        %v8186 = vunpack.c.l.b16 %v7391
        %v8187 = vunpack.c.h.b16 %v7391
        %v8188 = vunpack.c.l.b16 %v7392
        %v8189 = vunpack.c.h.b16 %v7392
        %v8190 = vunpack.c.l.b16 %v7393
        %v8191 = vunpack.c.h.b16 %v7393
        %v8192 = vunpack.c.l.b16 %v7394
        %v8193 = vunpack.c.h.b16 %v7394
        %v8194 = vunpack.c.l.b16 %v7395
        %v8195 = vunpack.c.h.b16 %v7395
        %v8196 = vunpack.c.l.b16 %v7396
        %v8197 = vunpack.c.h.b16 %v7396
        %v8198 = vunpack.c.l.b16 %v7397
        %v8199 = vunpack.c.h.b16 %v7397
        %v8200 = vunpack.c.l.b16 %v7398
        %v8201 = vunpack.c.h.b16 %v7398
        %v8202 = vunpack.c.l.b16 %v7399
        %v8203 = vunpack.c.h.b16 %v7399
        %v8204 = vunpack.c.l.b16 %v7400
        %v8205 = vunpack.c.h.b16 %v7400
        %v8206 = vunpack.c.l.b16 %v7401
        %v8207 = vunpack.c.h.b16 %v7401
        %v8208 = vunpack.c.l.b16 %v7402
        %v8209 = vunpack.c.h.b16 %v7402
        %v8210 = vunpack.c.l.b16 %v7403
        %v8211 = vunpack.c.h.b16 %v7403
        %v8212 = vunpack.c.l.b16 %v7404
        %v8213 = vunpack.c.h.b16 %v7404
        %v8214 = vunpack.c.l.b16 %v7405
        %v8215 = vunpack.c.h.b16 %v7405
        %v8216 = vunpack.c.l.b16 %v7406
        %v8217 = vunpack.c.h.b16 %v7406
        %v8218 = vunpack.c.l.b16 %v7407
        %v8219 = vunpack.c.h.b16 %v7407
        %v8220 = vunpack.c.l.b16 %v7408
        %v8221 = vunpack.c.h.b16 %v7408
        %v8222 = vunpack.c.l.b16 %v7409
        %v8223 = vunpack.c.h.b16 %v7409
        %v8224 = vunpack.c.l.b16 %v7410
        %v8225 = vunpack.c.h.b16 %v7410
        %v8226 = vunpack.c.l.b16 %v7411
        %v8227 = vunpack.c.h.b16 %v7411
        %v8228 = vunpack.c.l.b16 %v7412
        %v8229 = vunpack.c.h.b16 %v7412
        %v8230 = vunpack.c.l.b16 %v7413
        %v8231 = vunpack.c.h.b16 %v7413
        %v8232 = vunpack.c.l.b16 %v7414
        %v8233 = vunpack.c.h.b16 %v7414
        %v8234 = vunpack.c.l.b16 %v7415
        %v8235 = vunpack.c.h.b16 %v7415
        %v8236 = vunpack.c.l.b16 %v7416
        %v8237 = vunpack.c.h.b16 %v7416
        %v8238 = vunpack.c.l.b16 %v7417
        %v8239 = vunpack.c.h.b16 %v7417
        %v8240 = vunpack.c.l.b16 %v7418
        %v8241 = vunpack.c.h.b16 %v7418
        %v8242 = vunpack.c.l.b16 %v7419
        %v8243 = vunpack.c.h.b16 %v7419
        %v8244 = vunpack.c.l.b16 %v7420
        %v8245 = vunpack.c.h.b16 %v7420
        %v8246 = vunpack.c.l.b16 %v7421
        %v8247 = vunpack.c.h.b16 %v7421
        %v8248 = vunpack.c.l.b16 %v7422
        %v8249 = vunpack.c.h.b16 %v7422
        %v8250 = vunpack.c.l.b16 %v7423
        %v8251 = vunpack.c.h.b16 %v7423
        %v8252 = vunpack.c.l.b16 %v7424
        %v8253 = vunpack.c.h.b16 %v7424
        %v8254 = vunpack.c.l.b16 %v7425
        %v8255 = vunpack.c.h.b16 %v7425
        %v8256 = vunpack.c.l.b16 %v7426
        %v8257 = vunpack.c.h.b16 %v7426
        %v8258 = vunpack.c.l.b16 %v7427
        %v8259 = vunpack.c.h.b16 %v7427
        %v8260 = vunpack.c.l.b16 %v7428
        %v8261 = vunpack.c.h.b16 %v7428
        %v8262 = vunpack.c.l.b16 %v7429
        %v8263 = vunpack.c.h.b16 %v7429
        %v8264 = vunpack.c.l.b16 %v7430
        %v8265 = vunpack.c.h.b16 %v7430
        %v8266 = vunpack.c.l.b16 %v7431
        %v8267 = vunpack.c.h.b16 %v7431
        %v8268 = vunpack.c.l.b16 %v7432
        %v8269 = vunpack.c.h.b16 %v7432
        %v8270 = vunpack.c.l.b16 %v7433
        %v8271 = vunpack.c.h.b16 %v7433
        %v8272 = vunpack.c.l.b16 %v7434
        %v8273 = vunpack.c.h.b16 %v7434
        %v8274 = vunpack.c.l.b16 %v7435
        %v8275 = vunpack.c.h.b16 %v7435
        %v8276 = vunpack.c.l.b16 %v7436
        %v8277 = vunpack.c.h.b16 %v7436
        %v8278 = vunpack.c.l.b16 %v7437
        %v8279 = vunpack.c.h.b16 %v7437
        %v8280 = vunpack.c.l.b16 %v7438
        %v8281 = vunpack.c.h.b16 %v7438
        %v8282 = vunpack.c.l.b16 %v7439
        %v8283 = vunpack.c.h.b16 %v7439
        %v8284 = vunpack.c.l.b16 %v7440
        %v8285 = vunpack.c.h.b16 %v7440
        %v8286 = vunpack.c.l.b16 %v7441
        %v8287 = vunpack.c.h.b16 %v7441
        %v8288 = vunpack.c.l.b16 %v7442
        %v8289 = vunpack.c.h.b16 %v7442
        %v8290 = vunpack.c.l.b16 %v7443
        %v8291 = vunpack.c.h.b16 %v7443
        %v8292 = vunpack.c.l.b16 %v7444
        %v8293 = vunpack.c.h.b16 %v7444
        %v8294 = vunpack.c.l.b16 %v7445
        %v8295 = vunpack.c.h.b16 %v7445
        %v8296 = vunpack.c.l.b16 %v7446
        %v8297 = vunpack.c.h.b16 %v7446
        %v8298 = vunpack.c.l.b16 %v7447
        %v8299 = vunpack.c.h.b16 %v7447
        %v8300 = vunpack.c.l.b16 %v7448
        %v8301 = vunpack.c.h.b16 %v7448
        %v8302 = vunpack.c.l.b16 %v7449
        %v8303 = vunpack.c.h.b16 %v7449
        %v8304 = vunpack.c.l.b16 %v7450
        %v8305 = vunpack.c.h.b16 %v7450
        %v8306 = vunpack.c.l.b16 %v7451
        %v8307 = vunpack.c.h.b16 %v7451
        %v8308 = vunpack.c.l.b16 %v7452
        %v8309 = vunpack.c.h.b16 %v7452
        %v8310 = vunpack.c.l.b16 %v7453
        %v8311 = vunpack.c.h.b16 %v7453
        %v8312 = vunpack.c.l.b16 %v7454
        %v8313 = vunpack.c.h.b16 %v7454
        %v8314 = vunpack.c.l.b16 %v7455
        %v8315 = vunpack.c.h.b16 %v7455
        %v8316 = vunpack.c.l.b16 %v7456
        %v8317 = vunpack.c.h.b16 %v7456
        %v8318 = vunpack.c.l.b16 %v7457
        %v8319 = vunpack.c.h.b16 %v7457
        %v8320 = vunpack.c.l.b16 %v7458
        %v8321 = vunpack.c.h.b16 %v7458
        %v8322 = vunpack.c.l.b16 %v7459
        %v8323 = vunpack.c.h.b16 %v7459
        %v8324 = vunpack.c.l.b16 %v7460
        %v8325 = vunpack.c.h.b16 %v7460
        %v8326 = vunpack.c.l.b16 %v7461
        %v8327 = vunpack.c.h.b16 %v7461
        %v8328 = vunpack.c.l.b16 %v7462
        %v8329 = vunpack.c.h.b16 %v7462
        %v8330 = vunpack.c.l.b16 %v7463
        %v8331 = vunpack.c.h.b16 %v7463
        %v8332 = vunpack.c.l.b16 %v7464
        %v8333 = vunpack.c.h.b16 %v7464
        %v8334 = vunpack.c.l.b16 %v7465
        %v8335 = vunpack.c.h.b16 %v7465
        %v8336 = vunpack.c.l.b16 %v7466
        %v8337 = vunpack.c.h.b16 %v7466
        %v8338 = vunpack.c.l.b16 %v7467
        %v8339 = vunpack.c.h.b16 %v7467
        %v8340 = vunpack.c.l.b16 %v7468
        %v8341 = vunpack.c.h.b16 %v7468
        %v8342 = vunpack.c.l.b16 %v7469
        %v8343 = vunpack.c.h.b16 %v7469
        %v8344 = vunpack.c.l.b16 %v7470
        %v8345 = vunpack.c.h.b16 %v7470
        %v8346 = vunpack.c.l.b16 %v7471
        %v8347 = vunpack.c.h.b16 %v7471
        %v8348 = vunpack.c.l.b16 %v7472
        %v8349 = vunpack.c.h.b16 %v7472
        %v8350 = vpack.c.b16 %v7780, %v7774
        %v8351 = vpack.c.b16 %v7781, %v7775
        %v8352 = vpack.c.b16 %v7782, %v7776
        %v8353 = vpack.c.b16 %v7783, %v7777
        %v8354 = vpack.c.b16 %v7784, %v7778
        %v8355 = vpack.c.b16 %v7785, %v7779
        %v8356 = vpack.c.b16 %v7792, %v7786
        %v8357 = vpack.c.b16 %v7793, %v7787
        %v8358 = vpack.c.b16 %v7794, %v7788
        %v8359 = vpack.c.b16 %v7795, %v7789
        %v8360 = vpack.c.b16 %v7796, %v7790
        %v8361 = vpack.c.b16 %v7797, %v7791
        %v8362 = vpack.c.b16 %v7804, %v7798
        %v8363 = vpack.c.b16 %v7805, %v7799
        %v8364 = vpack.c.b16 %v7806, %v7800
        %v8365 = vpack.c.b16 %v7807, %v7801
        %v8366 = vpack.c.b16 %v7808, %v7802
        %v8367 = vpack.c.b16 %v7809, %v7803
        %v8368 = vpack.c.b16 %v7816, %v7810
        %v8369 = vpack.c.b16 %v7817, %v7811
        %v8370 = vpack.c.b16 %v7818, %v7812
        %v8371 = vpack.c.b16 %v7819, %v7813
        %v8372 = vpack.c.b16 %v7820, %v7814
        %v8373 = vpack.c.b16 %v7821, %v7815
        %v8374 = vpack.c.b16 %v7828, %v7822
        %v8375 = vpack.c.b16 %v7829, %v7823
        %v8376 = vpack.c.b16 %v7830, %v7824
        %v8377 = vpack.c.b16 %v7831, %v7825
        %v8378 = vpack.c.b16 %v7832, %v7826
        %v8379 = vpack.c.b16 %v7833, %v7827
        %v8380 = vpack.c.b16 %v7840, %v7834
        %v8381 = vpack.c.b16 %v7841, %v7835
        %v8382 = vpack.c.b16 %v7842, %v7836
        %v8383 = vpack.c.b16 %v7843, %v7837
        %v8384 = vpack.c.b16 %v7844, %v7838
        %v8385 = vpack.c.b16 %v7845, %v7839
        %v8386 = vpack.c.b16 %v7852, %v7846
        %v8387 = vpack.c.b16 %v7853, %v7847
        %v8388 = vpack.c.b16 %v7854, %v7848
        %v8389 = vpack.c.b16 %v7855, %v7849
        %v8390 = vpack.c.b16 %v7856, %v7850
        %v8391 = vpack.c.b16 %v7857, %v7851
        %v8392 = vpack.c.b16 %v7864, %v7858
        %v8393 = vpack.c.b16 %v7865, %v7859
        %v8394 = vpack.c.b16 %v7866, %v7860
        %v8395 = vpack.c.b16 %v7867, %v7861
        %v8396 = vpack.c.b16 %v7868, %v7862
        %v8397 = vpack.c.b16 %v7869, %v7863
        %v8398 = vpack.c.b16 %v7876, %v7870
        %v8399 = vpack.c.b16 %v7877, %v7871
        %v8400 = vpack.c.b16 %v7878, %v7872
        %v8401 = vpack.c.b16 %v7879, %v7873
        %v8402 = vpack.c.b16 %v7880, %v7874
        %v8403 = vpack.c.b16 %v7881, %v7875
        %v8404 = vpack.c.b16 %v7888, %v7882
        %v8405 = vpack.c.b16 %v7889, %v7883
        %v8406 = vpack.c.b16 %v7890, %v7884
        %v8407 = vpack.c.b16 %v7891, %v7885
        %v8408 = vpack.c.b16 %v7892, %v7886
        %v8409 = vpack.c.b16 %v7893, %v7887
        %v8410 = vpack.c.b16 %v7900, %v7894
        %v8411 = vpack.c.b16 %v7901, %v7895
        %v8412 = vpack.c.b16 %v7902, %v7896
        %v8413 = vpack.c.b16 %v7903, %v7897
        %v8414 = vpack.c.b16 %v7904, %v7898
        %v8415 = vpack.c.b16 %v7905, %v7899
        %v8416 = vpack.c.b16 %v7912, %v7906
        %v8417 = vpack.c.b16 %v7913, %v7907
        %v8418 = vpack.c.b16 %v7914, %v7908
        %v8419 = vpack.c.b16 %v7915, %v7909
        %v8420 = vpack.c.b16 %v7916, %v7910
        %v8421 = vpack.c.b16 %v7917, %v7911
        %v8422 = vpack.c.b16 %v7924, %v7918
        %v8423 = vpack.c.b16 %v7925, %v7919
        %v8424 = vpack.c.b16 %v7926, %v7920
        %v8425 = vpack.c.b16 %v7927, %v7921
        %v8426 = vpack.c.b16 %v7928, %v7922
        %v8427 = vpack.c.b16 %v7929, %v7923
        %v8428 = vpack.c.b16 %v7936, %v7930
        %v8429 = vpack.c.b16 %v7937, %v7931
        %v8430 = vpack.c.b16 %v7938, %v7932
        %v8431 = vpack.c.b16 %v7939, %v7933
        %v8432 = vpack.c.b16 %v7940, %v7934
        %v8433 = vpack.c.b16 %v7941, %v7935
        %v8434 = vpack.c.b16 %v7948, %v7942
        %v8435 = vpack.c.b16 %v7949, %v7943
        %v8436 = vpack.c.b16 %v7950, %v7944
        %v8437 = vpack.c.b16 %v7951, %v7945
        %v8438 = vpack.c.b16 %v7952, %v7946
        %v8439 = vpack.c.b16 %v7953, %v7947
        %v8440 = vpack.c.b16 %v7960, %v7954
        %v8441 = vpack.c.b16 %v7961, %v7955
        %v8442 = vpack.c.b16 %v7962, %v7956
        %v8443 = vpack.c.b16 %v7963, %v7957
        %v8444 = vpack.c.b16 %v7964, %v7958
        %v8445 = vpack.c.b16 %v7965, %v7959
        %v8446 = vpack.c.b16 %v7972, %v7966
        %v8447 = vpack.c.b16 %v7973, %v7967
        %v8448 = vpack.c.b16 %v7974, %v7968
        %v8449 = vpack.c.b16 %v7975, %v7969
        %v8450 = vpack.c.b16 %v7976, %v7970
        %v8451 = vpack.c.b16 %v7977, %v7971
        %v8452 = vpack.c.b16 %v7984, %v7978
        %v8453 = vpack.c.b16 %v7985, %v7979
        %v8454 = vpack.c.b16 %v7986, %v7980
        %v8455 = vpack.c.b16 %v7987, %v7981
        %v8456 = vpack.c.b16 %v7988, %v7982
        %v8457 = vpack.c.b16 %v7989, %v7983
        %v8458 = vpack.c.b16 %v7996, %v7990
        %v8459 = vpack.c.b16 %v7997, %v7991
        %v8460 = vpack.c.b16 %v7998, %v7992
        %v8461 = vpack.c.b16 %v7999, %v7993
        %v8462 = vpack.c.b16 %v8000, %v7994
        %v8463 = vpack.c.b16 %v8001, %v7995
        %v8464 = vpack.c.b16 %v8008, %v8002
        %v8465 = vpack.c.b16 %v8009, %v8003
        %v8466 = vpack.c.b16 %v8010, %v8004
        %v8467 = vpack.c.b16 %v8011, %v8005
        %v8468 = vpack.c.b16 %v8012, %v8006
        %v8469 = vpack.c.b16 %v8013, %v8007
        %v8470 = vpack.c.b16 %v8020, %v8014
        %v8471 = vpack.c.b16 %v8021, %v8015
        %v8472 = vpack.c.b16 %v8022, %v8016
        %v8473 = vpack.c.b16 %v8023, %v8017
        %v8474 = vpack.c.b16 %v8024, %v8018
        %v8475 = vpack.c.b16 %v8025, %v8019
        %v8476 = vpack.c.b16 %v8032, %v8026
        %v8477 = vpack.c.b16 %v8033, %v8027
        %v8478 = vpack.c.b16 %v8034, %v8028
        %v8479 = vpack.c.b16 %v8035, %v8029
        %v8480 = vpack.c.b16 %v8036, %v8030
        %v8481 = vpack.c.b16 %v8037, %v8031
        %v8482 = vpack.c.b16 %v8044, %v8038
        %v8483 = vpack.c.b16 %v8045, %v8039
        %v8484 = vpack.c.b16 %v8046, %v8040
        %v8485 = vpack.c.b16 %v8047, %v8041
        %v8486 = vpack.c.b16 %v8048, %v8042
        %v8487 = vpack.c.b16 %v8049, %v8043
        %v8488 = vpack.c.b16 %v8056, %v8050
        %v8489 = vpack.c.b16 %v8057, %v8051
        %v8490 = vpack.c.b16 %v8058, %v8052
        %v8491 = vpack.c.b16 %v8059, %v8053
        %v8492 = vpack.c.b16 %v8060, %v8054
        %v8493 = vpack.c.b16 %v8061, %v8055
        %v8494 = vpack.c.b16 %v8068, %v8062
        %v8495 = vpack.c.b16 %v8069, %v8063
        %v8496 = vpack.c.b16 %v8070, %v8064
        %v8497 = vpack.c.b16 %v8071, %v8065
        %v8498 = vpack.c.b16 %v8072, %v8066
        %v8499 = vpack.c.b16 %v8073, %v8067
        %v8500 = vpack.c.b16 %v8080, %v8074
        %v8501 = vpack.c.b16 %v8081, %v8075
        %v8502 = vpack.c.b16 %v8082, %v8076
        %v8503 = vpack.c.b16 %v8083, %v8077
        %v8504 = vpack.c.b16 %v8084, %v8078
        %v8505 = vpack.c.b16 %v8085, %v8079
        %v8506 = vpack.c.b16 %v8092, %v8086
        %v8507 = vpack.c.b16 %v8093, %v8087
        %v8508 = vpack.c.b16 %v8094, %v8088
        %v8509 = vpack.c.b16 %v8095, %v8089
        %v8510 = vpack.c.b16 %v8096, %v8090
        %v8511 = vpack.c.b16 %v8097, %v8091
        %v8512 = vpack.c.b16 %v8104, %v8098
        %v8513 = vpack.c.b16 %v8105, %v8099
        %v8514 = vpack.c.b16 %v8106, %v8100
        %v8515 = vpack.c.b16 %v8107, %v8101
        %v8516 = vpack.c.b16 %v8108, %v8102
        %v8517 = vpack.c.b16 %v8109, %v8103
        %v8518 = vpack.c.b16 %v8116, %v8110
        %v8519 = vpack.c.b16 %v8117, %v8111
        %v8520 = vpack.c.b16 %v8118, %v8112
        %v8521 = vpack.c.b16 %v8119, %v8113
        %v8522 = vpack.c.b16 %v8120, %v8114
        %v8523 = vpack.c.b16 %v8121, %v8115
        %v8524 = vpack.c.b16 %v8128, %v8122
        %v8525 = vpack.c.b16 %v8129, %v8123
        %v8526 = vpack.c.b16 %v8130, %v8124
        %v8527 = vpack.c.b16 %v8131, %v8125
        %v8528 = vpack.c.b16 %v8132, %v8126
        %v8529 = vpack.c.b16 %v8133, %v8127
        %v8530 = vpack.c.b16 %v8140, %v8134
        %v8531 = vpack.c.b16 %v8141, %v8135
        %v8532 = vpack.c.b16 %v8142, %v8136
        %v8533 = vpack.c.b16 %v8143, %v8137
        %v8534 = vpack.c.b16 %v8144, %v8138
        %v8535 = vpack.c.b16 %v8145, %v8139
        %v8536 = vpack.c.b16 %v8152, %v8146
        %v8537 = vpack.c.b16 %v8153, %v8147
        %v8538 = vpack.c.b16 %v8154, %v8148
        %v8539 = vpack.c.b16 %v8155, %v8149
        %v8540 = vpack.c.b16 %v8156, %v8150
        %v8541 = vpack.c.b16 %v8157, %v8151
        %v8542 = vpack.c.b16 %v8164, %v8158
        %v8543 = vpack.c.b16 %v8165, %v8159
        %v8544 = vpack.c.b16 %v8166, %v8160
        %v8545 = vpack.c.b16 %v8167, %v8161
        %v8546 = vpack.c.b16 %v8168, %v8162
        %v8547 = vpack.c.b16 %v8169, %v8163
        %v8548 = vpack.c.b16 %v8176, %v8170
        %v8549 = vpack.c.b16 %v8177, %v8171
        %v8550 = vpack.c.b16 %v8178, %v8172
        %v8551 = vpack.c.b16 %v8179, %v8173
        %v8552 = vpack.c.b16 %v8180, %v8174
        %v8553 = vpack.c.b16 %v8181, %v8175
        %v8554 = vpack.c.b16 %v8188, %v8182
        %v8555 = vpack.c.b16 %v8189, %v8183
        %v8556 = vpack.c.b16 %v8190, %v8184
        %v8557 = vpack.c.b16 %v8191, %v8185
        %v8558 = vpack.c.b16 %v8192, %v8186
        %v8559 = vpack.c.b16 %v8193, %v8187
        %v8560 = vpack.c.b16 %v8200, %v8194
        %v8561 = vpack.c.b16 %v8201, %v8195
        %v8562 = vpack.c.b16 %v8202, %v8196
        %v8563 = vpack.c.b16 %v8203, %v8197
        %v8564 = vpack.c.b16 %v8204, %v8198
        %v8565 = vpack.c.b16 %v8205, %v8199
        %v8566 = vpack.c.b16 %v8212, %v8206
        %v8567 = vpack.c.b16 %v8213, %v8207
        %v8568 = vpack.c.b16 %v8214, %v8208
        %v8569 = vpack.c.b16 %v8215, %v8209
        %v8570 = vpack.c.b16 %v8216, %v8210
        %v8571 = vpack.c.b16 %v8217, %v8211
        %v8572 = vpack.c.b16 %v8224, %v8218
        %v8573 = vpack.c.b16 %v8225, %v8219
        %v8574 = vpack.c.b16 %v8226, %v8220
        %v8575 = vpack.c.b16 %v8227, %v8221
        %v8576 = vpack.c.b16 %v8228, %v8222
        %v8577 = vpack.c.b16 %v8229, %v8223
        %v8578 = vpack.c.b16 %v8236, %v8230
        %v8579 = vpack.c.b16 %v8237, %v8231
        %v8580 = vpack.c.b16 %v8238, %v8232
        %v8581 = vpack.c.b16 %v8239, %v8233
        %v8582 = vpack.c.b16 %v8240, %v8234
        %v8583 = vpack.c.b16 %v8241, %v8235
        %v8584 = vpack.c.b16 %v8248, %v8242
        %v8585 = vpack.c.b16 %v8249, %v8243
        %v8586 = vpack.c.b16 %v8250, %v8244
        %v8587 = vpack.c.b16 %v8251, %v8245
        %v8588 = vpack.c.b16 %v8252, %v8246
        %v8589 = vpack.c.b16 %v8253, %v8247
        %v8590 = vpack.c.b16 %v8260, %v8254
        %v8591 = vpack.c.b16 %v8261, %v8255
        %v8592 = vpack.c.b16 %v8262, %v8256
        %v8593 = vpack.c.b16 %v8263, %v8257
        %v8594 = vpack.c.b16 %v8264, %v8258
        %v8595 = vpack.c.b16 %v8265, %v8259
        %v8596 = vpack.c.b16 %v8272, %v8266
        %v8597 = vpack.c.b16 %v8273, %v8267
        %v8598 = vpack.c.b16 %v8274, %v8268
        %v8599 = vpack.c.b16 %v8275, %v8269
        %v8600 = vpack.c.b16 %v8276, %v8270
        %v8601 = vpack.c.b16 %v8277, %v8271
        %v8602 = vpack.c.b16 %v8284, %v8278
        %v8603 = vpack.c.b16 %v8285, %v8279
        %v8604 = vpack.c.b16 %v8286, %v8280
        %v8605 = vpack.c.b16 %v8287, %v8281
        %v8606 = vpack.c.b16 %v8288, %v8282
        %v8607 = vpack.c.b16 %v8289, %v8283
        %v8608 = vpack.c.b16 %v8296, %v8290
        %v8609 = vpack.c.b16 %v8297, %v8291
        %v8610 = vpack.c.b16 %v8298, %v8292
        %v8611 = vpack.c.b16 %v8299, %v8293
        %v8612 = vpack.c.b16 %v8300, %v8294
        %v8613 = vpack.c.b16 %v8301, %v8295
        %v8614 = vpack.c.b16 %v8308, %v8302
        %v8615 = vpack.c.b16 %v8309, %v8303
        %v8616 = vpack.c.b16 %v8310, %v8304
        %v8617 = vpack.c.b16 %v8311, %v8305
        %v8618 = vpack.c.b16 %v8312, %v8306
        %v8619 = vpack.c.b16 %v8313, %v8307
        %v8620 = vpack.c.b16 %v8320, %v8314
        %v8621 = vpack.c.b16 %v8321, %v8315
        %v8622 = vpack.c.b16 %v8322, %v8316
        %v8623 = vpack.c.b16 %v8323, %v8317
        %v8624 = vpack.c.b16 %v8324, %v8318
        %v8625 = vpack.c.b16 %v8325, %v8319
        %v8626 = vpack.c.b16 %v8332, %v8326
        %v8627 = vpack.c.b16 %v8333, %v8327
        %v8628 = vpack.c.b16 %v8334, %v8328
        %v8629 = vpack.c.b16 %v8335, %v8329
        %v8630 = vpack.c.b16 %v8336, %v8330
        %v8631 = vpack.c.b16 %v8337, %v8331
        %v8632 = vpack.c.b16 %v8344, %v8338
        %v8633 = vpack.c.b16 %v8345, %v8339
        %v8634 = vpack.c.b16 %v8346, %v8340
        %v8635 = vpack.c.b16 %v8347, %v8341
        %v8636 = vpack.c.b16 %v8348, %v8342
        %v8637 = vpack.c.b16 %v8349, %v8343
        %8926 = vmatpush.bf16.msra.mxu0 %v8392
        %8927 = vmatpush.bf16.msra.mxu0 %v8386
        %8928 = vmatpush.bf16.msra.mxu0 %v8380
        %8929 = vmatpush.bf16.msra.mxu0 %v8374
        %8930 = vmatpush.bf16.msra.mxu0 %v8368
        %8931 = vmatpush.bf16.msra.mxu0 %v8362
        %8932 = vmatpush.bf16.msra.mxu0 %v8356
        %8933 = vmatpush.bf16.msra.mxu0 %v8350
        %8934 = vmatmul.bf16.gmra.mxu0 %v7178
        %v8935 = vpop.f32.mrf.mxu0
        %v8936 = vadd.f32 %v7474, %v8935
        %v8937 = vpop.f32.mrf.mxu0
        %v8938 = vadd.f32 %v7474, %v8937
        %8939 = vdwg.mxu0
        %8940 = vmatpush.bf16.msra.mxu0 %v8440
        %8941 = vmatpush.bf16.msra.mxu0 %v8434
        %8942 = vmatpush.bf16.msra.mxu0 %v8428
        %8943 = vmatpush.bf16.msra.mxu0 %v8422
        %8944 = vmatpush.bf16.msra.mxu0 %v8416
        %8945 = vmatpush.bf16.msra.mxu0 %v8410
        %8946 = vmatpush.bf16.msra.mxu0 %v8404
        %8947 = vmatpush.bf16.msra.mxu0 %v8398
        %8948 = vmatmul.bf16.gmra.mxu0 %v7179
        %v8949 = vpop.f32.mrf.mxu0
        %v8950 = vadd.f32 %v8936, %v8949
        %v8951 = vpop.f32.mrf.mxu0
        %v8952 = vadd.f32 %v8938, %v8951
        %8953 = vdwg.mxu0
        %8954 = vmatpush.bf16.msra.mxu0 %v8488
        %8955 = vmatpush.bf16.msra.mxu0 %v8482
        %8956 = vmatpush.bf16.msra.mxu0 %v8476
        %8957 = vmatpush.bf16.msra.mxu0 %v8470
        %8958 = vmatpush.bf16.msra.mxu0 %v8464
        %8959 = vmatpush.bf16.msra.mxu0 %v8458
        %8960 = vmatpush.bf16.msra.mxu0 %v8452
        %8961 = vmatpush.bf16.msra.mxu0 %v8446
        %8962 = vmatmul.bf16.gmra.mxu0 %v7180
        %v8963 = vpop.f32.mrf.mxu0
        %v8964 = vadd.f32 %v8950, %v8963
        %v8965 = vpop.f32.mrf.mxu0
        %v8966 = vadd.f32 %v8952, %v8965
        %8967 = vdwg.mxu0
        %8968 = vmatpush.bf16.msra.mxu0 %v8536
        %8969 = vmatpush.bf16.msra.mxu0 %v8530
        %8970 = vmatpush.bf16.msra.mxu0 %v8524
        %8971 = vmatpush.bf16.msra.mxu0 %v8518
        %8972 = vmatpush.bf16.msra.mxu0 %v8512
        %8973 = vmatpush.bf16.msra.mxu0 %v8506
        %8974 = vmatpush.bf16.msra.mxu0 %v8500
        %8975 = vmatpush.bf16.msra.mxu0 %v8494
        %8976 = vmatmul.bf16.gmra.mxu0 %v7181
        %v8977 = vpop.f32.mrf.mxu0
        %v8978 = vadd.f32 %v8964, %v8977
        %v8979 = vpop.f32.mrf.mxu0
        %v8980 = vadd.f32 %v8966, %v8979
        %8981 = vdwg.mxu0
        %8982 = vmatpush.bf16.msra.mxu0 %v8584
        %8983 = vmatpush.bf16.msra.mxu0 %v8578
        %8984 = vmatpush.bf16.msra.mxu0 %v8572
        %8985 = vmatpush.bf16.msra.mxu0 %v8566
        %8986 = vmatpush.bf16.msra.mxu0 %v8560
        %8987 = vmatpush.bf16.msra.mxu0 %v8554
        %8988 = vmatpush.bf16.msra.mxu0 %v8548
        %8989 = vmatpush.bf16.msra.mxu0 %v8542
        %8990 = vmatmul.bf16.gmra.mxu0 %v7182
        %v8991 = vpop.f32.mrf.mxu0
        %v8992 = vadd.f32 %v8978, %v8991
        %v8993 = vpop.f32.mrf.mxu0
        %v8994 = vadd.f32 %v8980, %v8993
        %8995 = vdwg.mxu0
        %8996 = vmatpush.bf16.msra.mxu0 %v8632
        %8997 = vmatpush.bf16.msra.mxu0 %v8626
        %8998 = vmatpush.bf16.msra.mxu0 %v8620
        %8999 = vmatpush.bf16.msra.mxu0 %v8614
        %9000 = vmatpush.bf16.msra.mxu0 %v8608
        %9001 = vmatpush.bf16.msra.mxu0 %v8602
        %9002 = vmatpush.bf16.msra.mxu0 %v8596
        %9003 = vmatpush.bf16.msra.mxu0 %v8590
        %9004 = vmatmul.bf16.gmra.mxu0 %v7183
        %v9005 = vpop.f32.mrf.mxu0
        %v9006 = vadd.f32 %v8992, %v9005
        %v9007 = vpop.f32.mrf.mxu0
        %v9008 = vadd.f32 %v8994, %v9007
        %9009 = vdwg.mxu0
        %9010 = vmatpush.bf16.msra.mxu0 %v8393
        %9011 = vmatpush.bf16.msra.mxu0 %v8387
        %9012 = vmatpush.bf16.msra.mxu0 %v8381
        %9013 = vmatpush.bf16.msra.mxu0 %v8375
        %9014 = vmatpush.bf16.msra.mxu0 %v8369
        %9015 = vmatpush.bf16.msra.mxu0 %v8363
        %9016 = vmatpush.bf16.msra.mxu0 %v8357
        %9017 = vmatpush.bf16.msra.mxu0 %v8351
        %9018 = vmatmul.bf16.gmra.mxu0 %v7178
        %v9019 = vpop.f32.mrf.mxu0
        %v9020 = vadd.f32 %v7475, %v9019
        %v9021 = vpop.f32.mrf.mxu0
        %v9022 = vadd.f32 %v7475, %v9021
        %9023 = vdwg.mxu0
        %9024 = vmatpush.bf16.msra.mxu0 %v8441
        %9025 = vmatpush.bf16.msra.mxu0 %v8435
        %9026 = vmatpush.bf16.msra.mxu0 %v8429
        %9027 = vmatpush.bf16.msra.mxu0 %v8423
        %9028 = vmatpush.bf16.msra.mxu0 %v8417
        %9029 = vmatpush.bf16.msra.mxu0 %v8411
        %9030 = vmatpush.bf16.msra.mxu0 %v8405
        %9031 = vmatpush.bf16.msra.mxu0 %v8399
        %9032 = vmatmul.bf16.gmra.mxu0 %v7179
        %v9033 = vpop.f32.mrf.mxu0
        %v9034 = vadd.f32 %v9020, %v9033
        %v9035 = vpop.f32.mrf.mxu0
        %v9036 = vadd.f32 %v9022, %v9035
        %9037 = vdwg.mxu0
        %9038 = vmatpush.bf16.msra.mxu0 %v8489
        %9039 = vmatpush.bf16.msra.mxu0 %v8483
        %9040 = vmatpush.bf16.msra.mxu0 %v8477
        %9041 = vmatpush.bf16.msra.mxu0 %v8471
        %9042 = vmatpush.bf16.msra.mxu0 %v8465
        %9043 = vmatpush.bf16.msra.mxu0 %v8459
        %9044 = vmatpush.bf16.msra.mxu0 %v8453
        %9045 = vmatpush.bf16.msra.mxu0 %v8447
        %9046 = vmatmul.bf16.gmra.mxu0 %v7180
        %v9047 = vpop.f32.mrf.mxu0
        %v9048 = vadd.f32 %v9034, %v9047
        %v9049 = vpop.f32.mrf.mxu0
        %v9050 = vadd.f32 %v9036, %v9049
        %9051 = vdwg.mxu0
        %9052 = vmatpush.bf16.msra.mxu0 %v8537
        %9053 = vmatpush.bf16.msra.mxu0 %v8531
        %9054 = vmatpush.bf16.msra.mxu0 %v8525
        %9055 = vmatpush.bf16.msra.mxu0 %v8519
        %9056 = vmatpush.bf16.msra.mxu0 %v8513
        %9057 = vmatpush.bf16.msra.mxu0 %v8507
        %9058 = vmatpush.bf16.msra.mxu0 %v8501
        %9059 = vmatpush.bf16.msra.mxu0 %v8495
        %9060 = vmatmul.bf16.gmra.mxu0 %v7181
        %v9061 = vpop.f32.mrf.mxu0
        %v9062 = vadd.f32 %v9048, %v9061
        %v9063 = vpop.f32.mrf.mxu0
        %v9064 = vadd.f32 %v9050, %v9063
        %9065 = vdwg.mxu0
        %9066 = vmatpush.bf16.msra.mxu0 %v8585
        %9067 = vmatpush.bf16.msra.mxu0 %v8579
        %9068 = vmatpush.bf16.msra.mxu0 %v8573
        %9069 = vmatpush.bf16.msra.mxu0 %v8567
        %9070 = vmatpush.bf16.msra.mxu0 %v8561
        %9071 = vmatpush.bf16.msra.mxu0 %v8555
        %9072 = vmatpush.bf16.msra.mxu0 %v8549
        %9073 = vmatpush.bf16.msra.mxu0 %v8543
        %9074 = vmatmul.bf16.gmra.mxu0 %v7182
        %v9075 = vpop.f32.mrf.mxu0
        %v9076 = vadd.f32 %v9062, %v9075
        %v9077 = vpop.f32.mrf.mxu0
        %v9078 = vadd.f32 %v9064, %v9077
        %9079 = vdwg.mxu0
        %9080 = vmatpush.bf16.msra.mxu0 %v8633
        %9081 = vmatpush.bf16.msra.mxu0 %v8627
        %9082 = vmatpush.bf16.msra.mxu0 %v8621
        %9083 = vmatpush.bf16.msra.mxu0 %v8615
        %9084 = vmatpush.bf16.msra.mxu0 %v8609
        %9085 = vmatpush.bf16.msra.mxu0 %v8603
        %9086 = vmatpush.bf16.msra.mxu0 %v8597
        %9087 = vmatpush.bf16.msra.mxu0 %v8591
        %9088 = vmatmul.bf16.gmra.mxu0 %v7183
        %v9089 = vpop.f32.mrf.mxu0
        %v9090 = vadd.f32 %v9076, %v9089
        %v9091 = vpop.f32.mrf.mxu0
        %v9092 = vadd.f32 %v9078, %v9091
        %9093 = vdwg.mxu0
        %9094 = vmatpush.bf16.msra.mxu0 %v8394
        %9095 = vmatpush.bf16.msra.mxu0 %v8388
        %9096 = vmatpush.bf16.msra.mxu0 %v8382
        %9097 = vmatpush.bf16.msra.mxu0 %v8376
        %9098 = vmatpush.bf16.msra.mxu0 %v8370
        %9099 = vmatpush.bf16.msra.mxu0 %v8364
        %9100 = vmatpush.bf16.msra.mxu0 %v8358
        %9101 = vmatpush.bf16.msra.mxu0 %v8352
        %9102 = vmatmul.bf16.gmra.mxu0 %v7178
        %v9103 = vpop.f32.mrf.mxu0
        %v9104 = vadd.f32 %v7476, %v9103
        %v9105 = vpop.f32.mrf.mxu0
        %v9106 = vadd.f32 %v7476, %v9105
        %9107 = vdwg.mxu0
        %9108 = vmatpush.bf16.msra.mxu0 %v8442
        %9109 = vmatpush.bf16.msra.mxu0 %v8436
        %9110 = vmatpush.bf16.msra.mxu0 %v8430
        %9111 = vmatpush.bf16.msra.mxu0 %v8424
        %9112 = vmatpush.bf16.msra.mxu0 %v8418
        %9113 = vmatpush.bf16.msra.mxu0 %v8412
        %9114 = vmatpush.bf16.msra.mxu0 %v8406
        %9115 = vmatpush.bf16.msra.mxu0 %v8400
        %9116 = vmatmul.bf16.gmra.mxu0 %v7179
        %v9117 = vpop.f32.mrf.mxu0
        %v9118 = vadd.f32 %v9104, %v9117
        %v9119 = vpop.f32.mrf.mxu0
        %v9120 = vadd.f32 %v9106, %v9119
        %9121 = vdwg.mxu0
        %9122 = vmatpush.bf16.msra.mxu0 %v8490
        %9123 = vmatpush.bf16.msra.mxu0 %v8484
        %9124 = vmatpush.bf16.msra.mxu0 %v8478
        %9125 = vmatpush.bf16.msra.mxu0 %v8472
        %9126 = vmatpush.bf16.msra.mxu0 %v8466
        %9127 = vmatpush.bf16.msra.mxu0 %v8460
        %9128 = vmatpush.bf16.msra.mxu0 %v8454
        %9129 = vmatpush.bf16.msra.mxu0 %v8448
        %9130 = vmatmul.bf16.gmra.mxu0 %v7180
        %v9131 = vpop.f32.mrf.mxu0
        %v9132 = vadd.f32 %v9118, %v9131
        %v9133 = vpop.f32.mrf.mxu0
        %v9134 = vadd.f32 %v9120, %v9133
        %9135 = vdwg.mxu0
        %9136 = vmatpush.bf16.msra.mxu0 %v8538
        %9137 = vmatpush.bf16.msra.mxu0 %v8532
        %9138 = vmatpush.bf16.msra.mxu0 %v8526
        %9139 = vmatpush.bf16.msra.mxu0 %v8520
        %9140 = vmatpush.bf16.msra.mxu0 %v8514
        %9141 = vmatpush.bf16.msra.mxu0 %v8508
        %9142 = vmatpush.bf16.msra.mxu0 %v8502
        %9143 = vmatpush.bf16.msra.mxu0 %v8496
        %9144 = vmatmul.bf16.gmra.mxu0 %v7181
        %v9145 = vpop.f32.mrf.mxu0
        %v9146 = vadd.f32 %v9132, %v9145
        %v9147 = vpop.f32.mrf.mxu0
        %v9148 = vadd.f32 %v9134, %v9147
        %9149 = vdwg.mxu0
        %9150 = vmatpush.bf16.msra.mxu0 %v8586
        %9151 = vmatpush.bf16.msra.mxu0 %v8580
        %9152 = vmatpush.bf16.msra.mxu0 %v8574
        %9153 = vmatpush.bf16.msra.mxu0 %v8568
        %9154 = vmatpush.bf16.msra.mxu0 %v8562
        %9155 = vmatpush.bf16.msra.mxu0 %v8556
        %9156 = vmatpush.bf16.msra.mxu0 %v8550
        %9157 = vmatpush.bf16.msra.mxu0 %v8544
        %9158 = vmatmul.bf16.gmra.mxu0 %v7182
        %v9159 = vpop.f32.mrf.mxu0
        %v9160 = vadd.f32 %v9146, %v9159
        %v9161 = vpop.f32.mrf.mxu0
        %v9162 = vadd.f32 %v9148, %v9161
        %9163 = vdwg.mxu0
        %9164 = vmatpush.bf16.msra.mxu0 %v8634
        %9165 = vmatpush.bf16.msra.mxu0 %v8628
        %9166 = vmatpush.bf16.msra.mxu0 %v8622
        %9167 = vmatpush.bf16.msra.mxu0 %v8616
        %9168 = vmatpush.bf16.msra.mxu0 %v8610
        %9169 = vmatpush.bf16.msra.mxu0 %v8604
        %9170 = vmatpush.bf16.msra.mxu0 %v8598
        %9171 = vmatpush.bf16.msra.mxu0 %v8592
        %9172 = vmatmul.bf16.gmra.mxu0 %v7183
        %v9173 = vpop.f32.mrf.mxu0
        %v9174 = vadd.f32 %v9160, %v9173
        %v9175 = vpop.f32.mrf.mxu0
        %v9176 = vadd.f32 %v9162, %v9175
        %9177 = vdwg.mxu0
        %9178 = vmatpush.bf16.msra.mxu0 %v8395
        %9179 = vmatpush.bf16.msra.mxu0 %v8389
        %9180 = vmatpush.bf16.msra.mxu0 %v8383
        %9181 = vmatpush.bf16.msra.mxu0 %v8377
        %9182 = vmatpush.bf16.msra.mxu0 %v8371
        %9183 = vmatpush.bf16.msra.mxu0 %v8365
        %9184 = vmatpush.bf16.msra.mxu0 %v8359
        %9185 = vmatpush.bf16.msra.mxu0 %v8353
        %9186 = vmatmul.bf16.gmra.mxu0 %v7178
        %v9187 = vpop.f32.mrf.mxu0
        %v9188 = vadd.f32 %v7477, %v9187
        %v9189 = vpop.f32.mrf.mxu0
        %v9190 = vadd.f32 %v7477, %v9189
        %9191 = vdwg.mxu0
        %9192 = vmatpush.bf16.msra.mxu0 %v8443
        %9193 = vmatpush.bf16.msra.mxu0 %v8437
        %9194 = vmatpush.bf16.msra.mxu0 %v8431
        %9195 = vmatpush.bf16.msra.mxu0 %v8425
        %9196 = vmatpush.bf16.msra.mxu0 %v8419
        %9197 = vmatpush.bf16.msra.mxu0 %v8413
        %9198 = vmatpush.bf16.msra.mxu0 %v8407
        %9199 = vmatpush.bf16.msra.mxu0 %v8401
        %9200 = vmatmul.bf16.gmra.mxu0 %v7179
        %v9201 = vpop.f32.mrf.mxu0
        %v9202 = vadd.f32 %v9188, %v9201
        %v9203 = vpop.f32.mrf.mxu0
        %v9204 = vadd.f32 %v9190, %v9203
        %9205 = vdwg.mxu0
        %9206 = vmatpush.bf16.msra.mxu0 %v8491
        %9207 = vmatpush.bf16.msra.mxu0 %v8485
        %9208 = vmatpush.bf16.msra.mxu0 %v8479
        %9209 = vmatpush.bf16.msra.mxu0 %v8473
        %9210 = vmatpush.bf16.msra.mxu0 %v8467
        %9211 = vmatpush.bf16.msra.mxu0 %v8461
        %9212 = vmatpush.bf16.msra.mxu0 %v8455
        %9213 = vmatpush.bf16.msra.mxu0 %v8449
        %9214 = vmatmul.bf16.gmra.mxu0 %v7180
        %v9215 = vpop.f32.mrf.mxu0
        %v9216 = vadd.f32 %v9202, %v9215
        %v9217 = vpop.f32.mrf.mxu0
        %v9218 = vadd.f32 %v9204, %v9217
        %9219 = vdwg.mxu0
        %9220 = vmatpush.bf16.msra.mxu0 %v8539
        %9221 = vmatpush.bf16.msra.mxu0 %v8533
        %9222 = vmatpush.bf16.msra.mxu0 %v8527
        %9223 = vmatpush.bf16.msra.mxu0 %v8521
        %9224 = vmatpush.bf16.msra.mxu0 %v8515
        %9225 = vmatpush.bf16.msra.mxu0 %v8509
        %9226 = vmatpush.bf16.msra.mxu0 %v8503
        %9227 = vmatpush.bf16.msra.mxu0 %v8497
        %9228 = vmatmul.bf16.gmra.mxu0 %v7181
        %v9229 = vpop.f32.mrf.mxu0
        %v9230 = vadd.f32 %v9216, %v9229
        %v9231 = vpop.f32.mrf.mxu0
        %v9232 = vadd.f32 %v9218, %v9231
        %9233 = vdwg.mxu0
        %9234 = vmatpush.bf16.msra.mxu0 %v8587
        %9235 = vmatpush.bf16.msra.mxu0 %v8581
        %9236 = vmatpush.bf16.msra.mxu0 %v8575
        %9237 = vmatpush.bf16.msra.mxu0 %v8569
        %9238 = vmatpush.bf16.msra.mxu0 %v8563
        %9239 = vmatpush.bf16.msra.mxu0 %v8557
        %9240 = vmatpush.bf16.msra.mxu0 %v8551
        %9241 = vmatpush.bf16.msra.mxu0 %v8545
        %9242 = vmatmul.bf16.gmra.mxu0 %v7182
        %v9243 = vpop.f32.mrf.mxu0
        %v9244 = vadd.f32 %v9230, %v9243
        %v9245 = vpop.f32.mrf.mxu0
        %v9246 = vadd.f32 %v9232, %v9245
        %9247 = vdwg.mxu0
        %9248 = vmatpush.bf16.msra.mxu0 %v8635
        %9249 = vmatpush.bf16.msra.mxu0 %v8629
        %9250 = vmatpush.bf16.msra.mxu0 %v8623
        %9251 = vmatpush.bf16.msra.mxu0 %v8617
        %9252 = vmatpush.bf16.msra.mxu0 %v8611
        %9253 = vmatpush.bf16.msra.mxu0 %v8605
        %9254 = vmatpush.bf16.msra.mxu0 %v8599
        %9255 = vmatpush.bf16.msra.mxu0 %v8593
        %9256 = vmatmul.bf16.gmra.mxu0 %v7183
        %v9257 = vpop.f32.mrf.mxu0
        %v9258 = vadd.f32 %v9244, %v9257
        %v9259 = vpop.f32.mrf.mxu0
        %v9260 = vadd.f32 %v9246, %v9259
        %9261 = vdwg.mxu0
        %9262 = vmatpush.bf16.msra.mxu0 %v8396
        %9263 = vmatpush.bf16.msra.mxu0 %v8390
        %9264 = vmatpush.bf16.msra.mxu0 %v8384
        %9265 = vmatpush.bf16.msra.mxu0 %v8378
        %9266 = vmatpush.bf16.msra.mxu0 %v8372
        %9267 = vmatpush.bf16.msra.mxu0 %v8366
        %9268 = vmatpush.bf16.msra.mxu0 %v8360
        %9269 = vmatpush.bf16.msra.mxu0 %v8354
        %9270 = vmatmul.bf16.gmra.mxu0 %v7178
        %v9271 = vpop.f32.mrf.mxu0
        %v9272 = vadd.f32 %v7478, %v9271
        %v9273 = vpop.f32.mrf.mxu0
        %v9274 = vadd.f32 %v7478, %v9273
        %9275 = vdwg.mxu0
        %9276 = vmatpush.bf16.msra.mxu0 %v8444
        %9277 = vmatpush.bf16.msra.mxu0 %v8438
        %9278 = vmatpush.bf16.msra.mxu0 %v8432
        %9279 = vmatpush.bf16.msra.mxu0 %v8426
        %9280 = vmatpush.bf16.msra.mxu0 %v8420
        %9281 = vmatpush.bf16.msra.mxu0 %v8414
        %9282 = vmatpush.bf16.msra.mxu0 %v8408
        %9283 = vmatpush.bf16.msra.mxu0 %v8402
        %9284 = vmatmul.bf16.gmra.mxu0 %v7179
        %v9285 = vpop.f32.mrf.mxu0
        %v9286 = vadd.f32 %v9272, %v9285
        %v9287 = vpop.f32.mrf.mxu0
        %v9288 = vadd.f32 %v9274, %v9287
        %9289 = vdwg.mxu0
        %9290 = vmatpush.bf16.msra.mxu0 %v8492
        %9291 = vmatpush.bf16.msra.mxu0 %v8486
        %9292 = vmatpush.bf16.msra.mxu0 %v8480
        %9293 = vmatpush.bf16.msra.mxu0 %v8474
        %9294 = vmatpush.bf16.msra.mxu0 %v8468
        %9295 = vmatpush.bf16.msra.mxu0 %v8462
        %9296 = vmatpush.bf16.msra.mxu0 %v8456
        %9297 = vmatpush.bf16.msra.mxu0 %v8450
        %9298 = vmatmul.bf16.gmra.mxu0 %v7180
        %v9299 = vpop.f32.mrf.mxu0
        %v9300 = vadd.f32 %v9286, %v9299
        %v9301 = vpop.f32.mrf.mxu0
        %v9302 = vadd.f32 %v9288, %v9301
        %9303 = vdwg.mxu0
        %9304 = vmatpush.bf16.msra.mxu0 %v8540
        %9305 = vmatpush.bf16.msra.mxu0 %v8534
        %9306 = vmatpush.bf16.msra.mxu0 %v8528
        %9307 = vmatpush.bf16.msra.mxu0 %v8522
        %9308 = vmatpush.bf16.msra.mxu0 %v8516
        %9309 = vmatpush.bf16.msra.mxu0 %v8510
        %9310 = vmatpush.bf16.msra.mxu0 %v8504
        %9311 = vmatpush.bf16.msra.mxu0 %v8498
        %9312 = vmatmul.bf16.gmra.mxu0 %v7181
        %v9313 = vpop.f32.mrf.mxu0
        %v9314 = vadd.f32 %v9300, %v9313
        %v9315 = vpop.f32.mrf.mxu0
        %v9316 = vadd.f32 %v9302, %v9315
        %9317 = vdwg.mxu0
        %9318 = vmatpush.bf16.msra.mxu0 %v8588
        %9319 = vmatpush.bf16.msra.mxu0 %v8582
        %9320 = vmatpush.bf16.msra.mxu0 %v8576
        %9321 = vmatpush.bf16.msra.mxu0 %v8570
        %9322 = vmatpush.bf16.msra.mxu0 %v8564
        %9323 = vmatpush.bf16.msra.mxu0 %v8558
        %9324 = vmatpush.bf16.msra.mxu0 %v8552
        %9325 = vmatpush.bf16.msra.mxu0 %v8546
        %9326 = vmatmul.bf16.gmra.mxu0 %v7182
        %v9327 = vpop.f32.mrf.mxu0
        %v9328 = vadd.f32 %v9314, %v9327
        %v9329 = vpop.f32.mrf.mxu0
        %v9330 = vadd.f32 %v9316, %v9329
        %9331 = vdwg.mxu0
        %9332 = vmatpush.bf16.msra.mxu0 %v8636
        %9333 = vmatpush.bf16.msra.mxu0 %v8630
        %9334 = vmatpush.bf16.msra.mxu0 %v8624
        %9335 = vmatpush.bf16.msra.mxu0 %v8618
        %9336 = vmatpush.bf16.msra.mxu0 %v8612
        %9337 = vmatpush.bf16.msra.mxu0 %v8606
        %9338 = vmatpush.bf16.msra.mxu0 %v8600
        %9339 = vmatpush.bf16.msra.mxu0 %v8594
        %9340 = vmatmul.bf16.gmra.mxu0 %v7183
        %v9341 = vpop.f32.mrf.mxu0
        %v9342 = vadd.f32 %v9328, %v9341
        %v9343 = vpop.f32.mrf.mxu0
        %v9344 = vadd.f32 %v9330, %v9343
        %9345 = vdwg.mxu0
        %9346 = vmatpush.bf16.msra.mxu0 %v8397
        %9347 = vmatpush.bf16.msra.mxu0 %v8391
        %9348 = vmatpush.bf16.msra.mxu0 %v8385
        %9349 = vmatpush.bf16.msra.mxu0 %v8379
        %9350 = vmatpush.bf16.msra.mxu0 %v8373
        %9351 = vmatpush.bf16.msra.mxu0 %v8367
        %9352 = vmatpush.bf16.msra.mxu0 %v8361
        %9353 = vmatpush.bf16.msra.mxu0 %v8355
        %9354 = vmatmul.bf16.gmra.mxu0 %v7178
        %v9355 = vpop.f32.mrf.mxu0
        %v9356 = vadd.f32 %v7479, %v9355
        %v9357 = vpop.f32.mrf.mxu0
        %v9358 = vadd.f32 %v7479, %v9357
        %9359 = vdwg.mxu0
        %9360 = vmatpush.bf16.msra.mxu0 %v8445
        %9361 = vmatpush.bf16.msra.mxu0 %v8439
        %9362 = vmatpush.bf16.msra.mxu0 %v8433
        %9363 = vmatpush.bf16.msra.mxu0 %v8427
        %9364 = vmatpush.bf16.msra.mxu0 %v8421
        %9365 = vmatpush.bf16.msra.mxu0 %v8415
        %9366 = vmatpush.bf16.msra.mxu0 %v8409
        %9367 = vmatpush.bf16.msra.mxu0 %v8403
        %9368 = vmatmul.bf16.gmra.mxu0 %v7179
        %v9369 = vpop.f32.mrf.mxu0
        %v9370 = vadd.f32 %v9356, %v9369
        %v9371 = vpop.f32.mrf.mxu0
        %v9372 = vadd.f32 %v9358, %v9371
        %9373 = vdwg.mxu0
        %9374 = vmatpush.bf16.msra.mxu0 %v8493
        %9375 = vmatpush.bf16.msra.mxu0 %v8487
        %9376 = vmatpush.bf16.msra.mxu0 %v8481
        %9377 = vmatpush.bf16.msra.mxu0 %v8475
        %9378 = vmatpush.bf16.msra.mxu0 %v8469
        %9379 = vmatpush.bf16.msra.mxu0 %v8463
        %9380 = vmatpush.bf16.msra.mxu0 %v8457
        %9381 = vmatpush.bf16.msra.mxu0 %v8451
        %9382 = vmatmul.bf16.gmra.mxu0 %v7180
        %v9383 = vpop.f32.mrf.mxu0
        %v9384 = vadd.f32 %v9370, %v9383
        %v9385 = vpop.f32.mrf.mxu0
        %v9386 = vadd.f32 %v9372, %v9385
        %9387 = vdwg.mxu0
        %9388 = vmatpush.bf16.msra.mxu0 %v8541
        %9389 = vmatpush.bf16.msra.mxu0 %v8535
        %9390 = vmatpush.bf16.msra.mxu0 %v8529
        %9391 = vmatpush.bf16.msra.mxu0 %v8523
        %9392 = vmatpush.bf16.msra.mxu0 %v8517
        %9393 = vmatpush.bf16.msra.mxu0 %v8511
        %9394 = vmatpush.bf16.msra.mxu0 %v8505
        %9395 = vmatpush.bf16.msra.mxu0 %v8499
        %9396 = vmatmul.bf16.gmra.mxu0 %v7181
        %v9397 = vpop.f32.mrf.mxu0
        %v9398 = vadd.f32 %v9384, %v9397
        %v9399 = vpop.f32.mrf.mxu0
        %v9400 = vadd.f32 %v9386, %v9399
        %9401 = vdwg.mxu0
        %9402 = vmatpush.bf16.msra.mxu0 %v8589
        %9403 = vmatpush.bf16.msra.mxu0 %v8583
        %9404 = vmatpush.bf16.msra.mxu0 %v8577
        %9405 = vmatpush.bf16.msra.mxu0 %v8571
        %9406 = vmatpush.bf16.msra.mxu0 %v8565
        %9407 = vmatpush.bf16.msra.mxu0 %v8559
        %9408 = vmatpush.bf16.msra.mxu0 %v8553
        %9409 = vmatpush.bf16.msra.mxu0 %v8547
        %9410 = vmatmul.bf16.gmra.mxu0 %v7182
        %v9411 = vpop.f32.mrf.mxu0
        %v9412 = vadd.f32 %v9398, %v9411
        %v9413 = vpop.f32.mrf.mxu0
        %v9414 = vadd.f32 %v9400, %v9413
        %9415 = vdwg.mxu0
        %9416 = vmatpush.bf16.msra.mxu0 %v8637
        %9417 = vmatpush.bf16.msra.mxu0 %v8631
        %9418 = vmatpush.bf16.msra.mxu0 %v8625
        %9419 = vmatpush.bf16.msra.mxu0 %v8619
        %9420 = vmatpush.bf16.msra.mxu0 %v8613
        %9421 = vmatpush.bf16.msra.mxu0 %v8607
        %9422 = vmatpush.bf16.msra.mxu0 %v8601
        %9423 = vmatpush.bf16.msra.mxu0 %v8595
        %9424 = vmatmul.bf16.gmra.mxu0 %v7183
        %v9425 = vpop.f32.mrf.mxu0
        %v9426 = vadd.f32 %v9412, %v9425
        %v9427 = vpop.f32.mrf.mxu0
        %v9428 = vadd.f32 %v9414, %v9427
        %9429 = vdwg.mxu0
        %9430 = vst [vmem:[#allocation2] sm:$0xff] %v9006
        %9431 = vst [vmem:[#allocation2 + $0x8] sm:$0xff] %v9090
        %9432 = vst [vmem:[#allocation2 + $0x10] sm:$0xff] %v9174
        %9433 = vst [vmem:[#allocation2 + $0x18] sm:$0xff] %v9258
        %9434 = vst [vmem:[#allocation2 + $0x20] sm:$0xff] %v9342
        %9435 = vst [vmem:[#allocation2 + $0x28] sm:$0xff] %v9426
        %9436 = vst [vmem:[#allocation2 + $0x30] sm:$0xff] %v9008
        %9437 = vst [vmem:[#allocation2 + $0x38] sm:$0xff] %v9092
        %9438 = vst [vmem:[#allocation2 + $0x40] sm:$0xff] %v9176
        %9439 = vst [vmem:[#allocation2 + $0x48] sm:$0xff] %v9260
        %9440 = vst [vmem:[#allocation2 + $0x50] sm:$0xff] %v9344
        %9441 = vst [vmem:[#allocation2 + $0x58] sm:$0xff] %v9428
        %p9442 = scmp.eq.s32.totalorder %s22, 2
        // Predicated region
        $region61: #{tpu_custom_call.1} parent=39 // pred_check
          %p9443 = pneg %p9442
        $region62: #{tpu_custom_call.1} parent=39 // pred_check_branch
          %9445 = sbr.rel (%p9443) target = $region64
        $region63: #{tpu_custom_call.1} parent=39 // pred_region
          %v9446 = vld [vmem:[#allocation2] sm:$0xff]
          %v9447 = vld [vmem:[#allocation2 + $0x8] sm:$0xff]
          %v9448 = vld [vmem:[#allocation2 + $0x10] sm:$0xff]
          %v9449 = vld [vmem:[#allocation2 + $0x18] sm:$0xff]
          %v9450 = vld [vmem:[#allocation2 + $0x20] sm:$0xff]
          %v9451 = vld [vmem:[#allocation2 + $0x28] sm:$0xff]
          %v9452 = vld [vmem:[#allocation2 + $0x30] sm:$0xff]
          %v9453 = vld [vmem:[#allocation2 + $0x38] sm:$0xff]
          %v9454 = vld [vmem:[#allocation2 + $0x40] sm:$0xff]
          %v9455 = vld [vmem:[#allocation2 + $0x48] sm:$0xff]
          %v9456 = vld [vmem:[#allocation2 + $0x50] sm:$0xff]
          %v9457 = vld [vmem:[#allocation2 + $0x58] sm:$0xff]
          %v9458 = vrot.slane %v9446, 4
          %v9459 = vadd.f32 %v9446, %v9458
          %v9460 = vrot.slane %v9459, 2
          %v9461 = vadd.f32 %v9459, %v9460
          %v9462 = vrot.slane %v9461, 1
          %v9463 = vadd.f32 %v9461, %v9462
          %v9464 = vrot.slane %v9447, 4
          %v9465 = vadd.f32 %v9447, %v9464
          %v9466 = vrot.slane %v9465, 2
          %v9467 = vadd.f32 %v9465, %v9466
          %v9468 = vrot.slane %v9467, 1
          %v9469 = vadd.f32 %v9467, %v9468
          %v9470 = vrot.slane %v9448, 4
          %v9471 = vadd.f32 %v9448, %v9470
          %v9472 = vrot.slane %v9471, 2
          %v9473 = vadd.f32 %v9471, %v9472
          %v9474 = vrot.slane %v9473, 1
          %v9475 = vadd.f32 %v9473, %v9474
          %v9476 = vrot.slane %v9449, 4
          %v9477 = vadd.f32 %v9449, %v9476
          %v9478 = vrot.slane %v9477, 2
          %v9479 = vadd.f32 %v9477, %v9478
          %v9480 = vrot.slane %v9479, 1
          %v9481 = vadd.f32 %v9479, %v9480
          %v9482 = vrot.slane %v9450, 4
          %v9483 = vadd.f32 %v9450, %v9482
          %v9484 = vrot.slane %v9483, 2
          %v9485 = vadd.f32 %v9483, %v9484
          %v9486 = vrot.slane %v9485, 1
          %v9487 = vadd.f32 %v9485, %v9486
          %v9488 = vrot.slane %v9451, 4
          %v9489 = vadd.f32 %v9451, %v9488
          %v9490 = vrot.slane %v9489, 2
          %v9491 = vadd.f32 %v9489, %v9490
          %v9492 = vrot.slane %v9491, 1
          %v9493 = vadd.f32 %v9491, %v9492
          %v9494 = vrot.slane %v9452, 4
          %v9495 = vadd.f32 %v9452, %v9494
          %v9496 = vrot.slane %v9495, 2
          %v9497 = vadd.f32 %v9495, %v9496
          %v9498 = vrot.slane %v9497, 1
          %v9499 = vadd.f32 %v9497, %v9498
          %v9500 = vrot.slane %v9453, 4
          %v9501 = vadd.f32 %v9453, %v9500
          %v9502 = vrot.slane %v9501, 2
          %v9503 = vadd.f32 %v9501, %v9502
          %v9504 = vrot.slane %v9503, 1
          %v9505 = vadd.f32 %v9503, %v9504
          %v9506 = vrot.slane %v9454, 4
          %v9507 = vadd.f32 %v9454, %v9506
          %v9508 = vrot.slane %v9507, 2
          %v9509 = vadd.f32 %v9507, %v9508
          %v9510 = vrot.slane %v9509, 1
          %v9511 = vadd.f32 %v9509, %v9510
          %v9512 = vrot.slane %v9455, 4
          %v9513 = vadd.f32 %v9455, %v9512
          %v9514 = vrot.slane %v9513, 2
          %v9515 = vadd.f32 %v9513, %v9514
          %v9516 = vrot.slane %v9515, 1
          %v9517 = vadd.f32 %v9515, %v9516
          %v9518 = vrot.slane %v9456, 4
          %v9519 = vadd.f32 %v9456, %v9518
          %v9520 = vrot.slane %v9519, 2
          %v9521 = vadd.f32 %v9519, %v9520
          %v9522 = vrot.slane %v9521, 1
          %v9523 = vadd.f32 %v9521, %v9522
          %v9524 = vrot.slane %v9457, 4
          %v9525 = vadd.f32 %v9457, %v9524
          %v9526 = vrot.slane %v9525, 2
          %v9527 = vadd.f32 %v9525, %v9526
          %v9528 = vrot.slane %v9527, 1
          %v9529 = vadd.f32 %v9527, %v9528
          %v9530 = vrcp.pop 8.0
          %v9531 = vmul.f32 8.0, %v9530
          %v9532 = vsub.f32 1.0, %v9531
          %v9533 = vmul.f32 %v9530, %v9532
          %v9534 = vadd.f32 %v9530, %v9533
          %vm9535 = vweird.f32 %v9530
          %v9536 = vsel %vm9535, %v9530, %v9534
          %v9537 = vmul.f32 %v9463, %v9536
          %v9538 = vmul.f32 %v9469, %v9536
          %v9539 = vmul.f32 %v9475, %v9536
          %v9540 = vmul.f32 %v9481, %v9536
          %v9541 = vmul.f32 %v9487, %v9536
          %v9542 = vmul.f32 %v9493, %v9536
          %v9543 = vmul.f32 %v9499, %v9536
          %v9544 = vmul.f32 %v9505, %v9536
          %v9545 = vmul.f32 %v9511, %v9536
          %v9546 = vmul.f32 %v9517, %v9536
          %v9547 = vmul.f32 %v9523, %v9536
          %v9548 = vmul.f32 %v9529, %v9536
          %v9549 = vld [vmem:[%s3] sm:$0xff]
          %v9550 = vld [vmem:[%s3 + $0x8] sm:$0xff]
          %v9551 = vld [vmem:[%s3 + $0x10] sm:$0xff]
          %v9552 = vld [vmem:[%s3 + $0x18] sm:$0xff]
          %v9553 = vld [vmem:[%s3 + $0x20] sm:$0xff]
          %v9554 = vld [vmem:[%s3 + $0x28] sm:$0xff]
          %v9555 = vld [vmem:[%s3 + $0x30] sm:$0xff]
          %v9556 = vld [vmem:[%s3 + $0x38] sm:$0xff]
          %v9557 = vld [vmem:[%s3 + $0x40] sm:$0xff]
          %v9558 = vld [vmem:[%s3 + $0x48] sm:$0xff]
          %v9559 = vld [vmem:[%s3 + $0x50] sm:$0xff]
          %v9560 = vld [vmem:[%s3 + $0x58] sm:$0xff]
          %v9561 = vld [vmem:[%s3 + $0x60] sm:$0xff]
          %v9562 = vld [vmem:[%s3 + $0x68] sm:$0xff]
          %v9563 = vld [vmem:[%s3 + $0x70] sm:$0xff]
          %v9564 = vld [vmem:[%s3 + $0x78] sm:$0xff]
          %v9565 = vld [vmem:[%s3 + $0x80] sm:$0xff]
          %v9566 = vld [vmem:[%s3 + $0x88] sm:$0xff]
          %v9567 = vld [vmem:[%s3 + $0x90] sm:$0xff]
          %v9568 = vld [vmem:[%s3 + $0x98] sm:$0xff]
          %v9569 = vld [vmem:[%s3 + $0xa0] sm:$0xff]
          %v9570 = vld [vmem:[%s3 + $0xa8] sm:$0xff]
          %v9571 = vld [vmem:[%s3 + $0xb0] sm:$0xff]
          %v9572 = vld [vmem:[%s3 + $0xb8] sm:$0xff]
          %v9573 = vld [vmem:[%s3 + $0xc0] sm:$0xff]
          %v9574 = vld [vmem:[%s3 + $0xc8] sm:$0xff]
          %v9575 = vld [vmem:[%s3 + $0xd0] sm:$0xff]
          %v9576 = vld [vmem:[%s3 + $0xd8] sm:$0xff]
          %v9577 = vld [vmem:[%s3 + $0xe0] sm:$0xff]
          %v9578 = vld [vmem:[%s3 + $0xe8] sm:$0xff]
          %v9579 = vld [vmem:[%s3 + $0xf0] sm:$0xff]
          %v9580 = vld [vmem:[%s3 + $0xf8] sm:$0xff]
          %v9581 = vld [vmem:[%s3 + $0x100] sm:$0xff]
          %v9582 = vld [vmem:[%s3 + $0x108] sm:$0xff]
          %v9583 = vld [vmem:[%s3 + $0x110] sm:$0xff]
          %v9584 = vld [vmem:[%s3 + $0x118] sm:$0xff]
          %v9585 = vld [vmem:[%s3 + $0x120] sm:$0xff]
          %v9586 = vld [vmem:[%s3 + $0x128] sm:$0xff]
          %v9587 = vld [vmem:[%s3 + $0x130] sm:$0xff]
          %v9588 = vld [vmem:[%s3 + $0x138] sm:$0xff]
          %v9589 = vld [vmem:[%s3 + $0x140] sm:$0xff]
          %v9590 = vld [vmem:[%s3 + $0x148] sm:$0xff]
          %v9591 = vld [vmem:[%s3 + $0x150] sm:$0xff]
          %v9592 = vld [vmem:[%s3 + $0x158] sm:$0xff]
          %v9593 = vld [vmem:[%s3 + $0x160] sm:$0xff]
          %v9594 = vld [vmem:[%s3 + $0x168] sm:$0xff]
          %v9595 = vld [vmem:[%s3 + $0x170] sm:$0xff]
          %v9596 = vld [vmem:[%s3 + $0x178] sm:$0xff]
          %v9597 = vld [vmem:[%s3 + $0x180] sm:$0xff]
          %v9598 = vld [vmem:[%s3 + $0x188] sm:$0xff]
          %v9599 = vld [vmem:[%s3 + $0x190] sm:$0xff]
          %v9600 = vld [vmem:[%s3 + $0x198] sm:$0xff]
          %v9601 = vld [vmem:[%s3 + $0x1a0] sm:$0xff]
          %v9602 = vld [vmem:[%s3 + $0x1a8] sm:$0xff]
          %v9603 = vld [vmem:[%s3 + $0x1b0] sm:$0xff]
          %v9604 = vld [vmem:[%s3 + $0x1b8] sm:$0xff]
          %v9605 = vld [vmem:[%s3 + $0x1c0] sm:$0xff]
          %v9606 = vld [vmem:[%s3 + $0x1c8] sm:$0xff]
          %v9607 = vld [vmem:[%s3 + $0x1d0] sm:$0xff]
          %v9608 = vld [vmem:[%s3 + $0x1d8] sm:$0xff]
          %v9609 = vld [vmem:[%s3 + $0x1e0] sm:$0xff]
          %v9610 = vld [vmem:[%s3 + $0x1e8] sm:$0xff]
          %v9611 = vld [vmem:[%s3 + $0x1f0] sm:$0xff]
          %v9612 = vld [vmem:[%s3 + $0x1f8] sm:$0xff]
          %v9613 = vld [vmem:[%s3 + $0x200] sm:$0xff]
          %v9614 = vld [vmem:[%s3 + $0x208] sm:$0xff]
          %v9615 = vld [vmem:[%s3 + $0x210] sm:$0xff]
          %v9616 = vld [vmem:[%s3 + $0x218] sm:$0xff]
          %v9617 = vld [vmem:[%s3 + $0x220] sm:$0xff]
          %v9618 = vld [vmem:[%s3 + $0x228] sm:$0xff]
          %v9619 = vld [vmem:[%s3 + $0x230] sm:$0xff]
          %v9620 = vld [vmem:[%s3 + $0x238] sm:$0xff]
          %v9621 = vld [vmem:[%s3 + $0x240] sm:$0xff]
          %v9622 = vld [vmem:[%s3 + $0x248] sm:$0xff]
          %v9623 = vld [vmem:[%s3 + $0x250] sm:$0xff]
          %v9624 = vld [vmem:[%s3 + $0x258] sm:$0xff]
          %v9625 = vld [vmem:[%s3 + $0x260] sm:$0xff]
          %v9626 = vld [vmem:[%s3 + $0x268] sm:$0xff]
          %v9627 = vld [vmem:[%s3 + $0x270] sm:$0xff]
          %v9628 = vld [vmem:[%s3 + $0x278] sm:$0xff]
          %v9629 = vld [vmem:[%s3 + $0x280] sm:$0xff]
          %v9630 = vld [vmem:[%s3 + $0x288] sm:$0xff]
          %v9631 = vld [vmem:[%s3 + $0x290] sm:$0xff]
          %v9632 = vld [vmem:[%s3 + $0x298] sm:$0xff]
          %v9633 = vld [vmem:[%s3 + $0x2a0] sm:$0xff]
          %v9634 = vld [vmem:[%s3 + $0x2a8] sm:$0xff]
          %v9635 = vld [vmem:[%s3 + $0x2b0] sm:$0xff]
          %v9636 = vld [vmem:[%s3 + $0x2b8] sm:$0xff]
          %v9637 = vld [vmem:[%s3 + $0x2c0] sm:$0xff]
          %v9638 = vld [vmem:[%s3 + $0x2c8] sm:$0xff]
          %v9639 = vld [vmem:[%s3 + $0x2d0] sm:$0xff]
          %v9640 = vld [vmem:[%s3 + $0x2d8] sm:$0xff]
          %v9641 = vld [vmem:[%s3 + $0x2e0] sm:$0xff]
          %v9642 = vld [vmem:[%s3 + $0x2e8] sm:$0xff]
          %v9643 = vld [vmem:[%s3 + $0x2f0] sm:$0xff]
          %v9644 = vld [vmem:[%s3 + $0x2f8] sm:$0xff]
          %v9645 = vld [vmem:[#allocation9] sm:$0x1]
          %v9647 = vperm.slane %v9645, 0
          %vm9661 = vcmask 1041409
          %v9662 = vsel %vm9661, %v9543, %v9537
          %v9663 = vsel %vm9661, %v9544, %v9538
          %v9664 = vsel %vm9661, %v9545, %v9539
          %v9665 = vsel %vm9661, %v9546, %v9540
          %v9666 = vsel %vm9661, %v9547, %v9541
          %v9667 = vsel %vm9661, %v9548, %v9542
          %9674 = vmatpush.msra.mxu0 %v9564
          %9675 = vmatpush.msra.mxu0 %v9563
          %9676 = vmatpush.msra.mxu0 %v9562
          %9677 = vmatpush.msra.mxu0 %v9561
          %9678 = vmatpush.msra.mxu0 %v9560
          %9679 = vmatpush.msra.mxu0 %v9559
          %9680 = vmatpush.msra.mxu0 %v9558
          %9681 = vmatpush.msra.mxu0 %v9557
          %9682 = vmatpush.msra.mxu0 %v9556
          %9683 = vmatpush.msra.mxu0 %v9555
          %9684 = vmatpush.msra.mxu0 %v9554
          %9685 = vmatpush.msra.mxu0 %v9553
          %9686 = vmatpush.msra.mxu0 %v9552
          %9687 = vmatpush.msra.mxu0 %v9551
          %9688 = vmatpush.msra.mxu0 %v9550
          %9689 = vmatpush.msra.mxu0 %v9549
          %9690 = vmatmul.f32.gmra.mxu0 %v9662
          %v9691 = vpop.f32.mrf.mxu0
          %v9692 = vadd.f32 %v9647, %v9691
          %9693 = vdwg.mxu0
          %9694 = vmatpush.msra.mxu0 %v9580
          %9695 = vmatpush.msra.mxu0 %v9579
          %9696 = vmatpush.msra.mxu0 %v9578
          %9697 = vmatpush.msra.mxu0 %v9577
          %9698 = vmatpush.msra.mxu0 %v9576
          %9699 = vmatpush.msra.mxu0 %v9575
          %9700 = vmatpush.msra.mxu0 %v9574
          %9701 = vmatpush.msra.mxu0 %v9573
          %9702 = vmatpush.msra.mxu0 %v9572
          %9703 = vmatpush.msra.mxu0 %v9571
          %9704 = vmatpush.msra.mxu0 %v9570
          %9705 = vmatpush.msra.mxu0 %v9569
          %9706 = vmatpush.msra.mxu0 %v9568
          %9707 = vmatpush.msra.mxu0 %v9567
          %9708 = vmatpush.msra.mxu0 %v9566
          %9709 = vmatpush.msra.mxu0 %v9565
          %9710 = vmatmul.f32.gmra.mxu0 %v9663
          %v9711 = vpop.f32.mrf.mxu0
          %v9712 = vadd.f32 %v9692, %v9711
          %9713 = vdwg.mxu0
          %9714 = vmatpush.msra.mxu0 %v9596
          %9715 = vmatpush.msra.mxu0 %v9595
          %9716 = vmatpush.msra.mxu0 %v9594
          %9717 = vmatpush.msra.mxu0 %v9593
          %9718 = vmatpush.msra.mxu0 %v9592
          %9719 = vmatpush.msra.mxu0 %v9591
          %9720 = vmatpush.msra.mxu0 %v9590
          %9721 = vmatpush.msra.mxu0 %v9589
          %9722 = vmatpush.msra.mxu0 %v9588
          %9723 = vmatpush.msra.mxu0 %v9587
          %9724 = vmatpush.msra.mxu0 %v9586
          %9725 = vmatpush.msra.mxu0 %v9585
          %9726 = vmatpush.msra.mxu0 %v9584
          %9727 = vmatpush.msra.mxu0 %v9583
          %9728 = vmatpush.msra.mxu0 %v9582
          %9729 = vmatpush.msra.mxu0 %v9581
          %9730 = vmatmul.f32.gmra.mxu0 %v9664
          %v9731 = vpop.f32.mrf.mxu0
          %v9732 = vadd.f32 %v9712, %v9731
          %9733 = vdwg.mxu0
          %9734 = vmatpush.msra.mxu0 %v9612
          %9735 = vmatpush.msra.mxu0 %v9611
          %9736 = vmatpush.msra.mxu0 %v9610
          %9737 = vmatpush.msra.mxu0 %v9609
          %9738 = vmatpush.msra.mxu0 %v9608
          %9739 = vmatpush.msra.mxu0 %v9607
          %9740 = vmatpush.msra.mxu0 %v9606
          %9741 = vmatpush.msra.mxu0 %v9605
          %9742 = vmatpush.msra.mxu0 %v9604
          %9743 = vmatpush.msra.mxu0 %v9603
          %9744 = vmatpush.msra.mxu0 %v9602
          %9745 = vmatpush.msra.mxu0 %v9601
          %9746 = vmatpush.msra.mxu0 %v9600
          %9747 = vmatpush.msra.mxu0 %v9599
          %9748 = vmatpush.msra.mxu0 %v9598
          %9749 = vmatpush.msra.mxu0 %v9597
          %9750 = vmatmul.f32.gmra.mxu0 %v9665
          %v9751 = vpop.f32.mrf.mxu0
          %v9752 = vadd.f32 %v9732, %v9751
          %9753 = vdwg.mxu0
          %9754 = vmatpush.msra.mxu0 %v9628
          %9755 = vmatpush.msra.mxu0 %v9627
          %9756 = vmatpush.msra.mxu0 %v9626
          %9757 = vmatpush.msra.mxu0 %v9625
          %9758 = vmatpush.msra.mxu0 %v9624
          %9759 = vmatpush.msra.mxu0 %v9623
          %9760 = vmatpush.msra.mxu0 %v9622
          %9761 = vmatpush.msra.mxu0 %v9621
          %9762 = vmatpush.msra.mxu0 %v9620
          %9763 = vmatpush.msra.mxu0 %v9619
          %9764 = vmatpush.msra.mxu0 %v9618
          %9765 = vmatpush.msra.mxu0 %v9617
          %9766 = vmatpush.msra.mxu0 %v9616
          %9767 = vmatpush.msra.mxu0 %v9615
          %9768 = vmatpush.msra.mxu0 %v9614
          %9769 = vmatpush.msra.mxu0 %v9613
          %9770 = vmatmul.f32.gmra.mxu0 %v9666
          %v9771 = vpop.f32.mrf.mxu0
          %v9772 = vadd.f32 %v9752, %v9771
          %9773 = vdwg.mxu0
          %9774 = vmatpush.msra.mxu0 %v9644
          %9775 = vmatpush.msra.mxu0 %v9643
          %9776 = vmatpush.msra.mxu0 %v9642
          %9777 = vmatpush.msra.mxu0 %v9641
          %9778 = vmatpush.msra.mxu0 %v9640
          %9779 = vmatpush.msra.mxu0 %v9639
          %9780 = vmatpush.msra.mxu0 %v9638
          %9781 = vmatpush.msra.mxu0 %v9637
          %9782 = vmatpush.msra.mxu0 %v9636
          %9783 = vmatpush.msra.mxu0 %v9635
          %9784 = vmatpush.msra.mxu0 %v9634
          %9785 = vmatpush.msra.mxu0 %v9633
          %9786 = vmatpush.msra.mxu0 %v9632
          %9787 = vmatpush.msra.mxu0 %v9631
          %9788 = vmatpush.msra.mxu0 %v9630
          %9789 = vmatpush.msra.mxu0 %v9629
          %9790 = vmatmul.f32.gmra.mxu0 %v9667
          %v9791 = vpop.f32.mrf.mxu0
          %v9792 = vadd.f32 %v9772, %v9791
          %9793 = vdwg.mxu0
          %vm9794 = vcmask 9216
          %9795 = vst.msk [vmem:[#allocation11] sm:$0x3] %vm9794, %v9792
        $region64: #{tpu_custom_call.1} parent=39 // pred_fallthru
          _
        // Predicated region
        $region65: #{tpu_custom_call.1} parent=39 // pred_check
          %p9796 = pneg %p150
        $region66: #{tpu_custom_call.1} parent=39 // pred_check_branch
          %9798 = sbr.rel (%p9796) target = $region68
        $region67: #{tpu_custom_call.1} parent=39 // pred_region
          %9800 = vsyncadd [#allocation5], 0
          %s9802 = sshll.u32 [#allocation11], 4
          %s9803 = int_to_ptr.vmem [resolvable:$true] %s9802
          %s9804 = sshll.u32 %s5, 4
          %s9805 = int_to_ptr.hbm [resolvable:$true] %s9804
          %9807 = dma.vmem_to_hbm [thread:$0]  %s9803, 32, %s9805, [#allocation5]
        $region68: #{tpu_custom_call.1} parent=39 // pred_fallthru
          _
        // Predicated region
        $region69: #{tpu_custom_call.1} parent=39 // pred_check
          %p9808 = pneg %p150
        $region70: #{tpu_custom_call.1} parent=39 // pred_check_branch
          %9810 = sbr.rel (%p9808) target = $region72
        $region71: #{tpu_custom_call.1} parent=39 // pred_region
          %9812 = dma.done [#allocation5], 32
        $region72: #{tpu_custom_call.1} parent=39 // pred_fallthru
          _
      $region40: #{tpu_custom_call.1} parent=5 // pred_fallthru
        _
      %p9813 = scmp.le.s32.totalorder 2, %s17
      // Predicated region
      $region73: #{tpu_custom_call.1} parent=5 // pred_check
        %p9814 = pneg %p9813
      $region74: #{tpu_custom_call.1} parent=5 // pred_check_branch
        %9816 = sbr.rel (%p9814) target = $region76
      $region75: #{tpu_custom_call.1} parent=5 // pred_region
        %s9817 = ssub.s32 %s17, 2
      $region76: #{tpu_custom_call.1} parent=5 // pred_fallthru
        _
    $region6: #{tpu_custom_call.1} parent=1 // loop_footer
      %s21 = sadd.s32 1, %s17
    $region7: #{tpu_custom_call.1} parent=1 // loop_footer_branch
      %16 = sbr.rel target = $region3
    $region8: #{tpu_custom_call.1} parent=1 // loop_exit
      _
    %9818 = vsyncpa [#allocation4], 1
    %s9819 = scalar_lea.sflag [#allocation4], 1
    %9820 = vsyncpa %s9819, 1
    %9821 = vsyncpa [#allocation7], 1
    %s9822 = scalar_lea.sflag [#allocation7], 1
    %9823 = vsyncpa %s9822, 1
    %9824 = vsyncpa [#allocation10], 1
    %9825 = vsyncpa [#allocation5], 1
    %s9826 = scalar_lea.sflag [#allocation5], 1
    %9827 = vsyncpa %s9826, 1

</llo_original>
